<compile_context>
chip_gen: v7x
topology: tpu7x:2x2x1
jax: 0.10.0
libtpu: 0.0.40
codegen_flags: <defaults>
</compile_context>

<pallas_src>
import functools

import jax
import jax.numpy as jnp
from jax.experimental import pallas as pl
from jax.experimental.pallas import tpu as pltpu

n_embd = 384
num_heads = 6
head_size = n_embd // num_heads   # 64
ffn_hidden = 4 * n_embd           # 1536
LN_EPS = 1e-5


def _layer_norm(x, gamma, beta):
    # x: (N, C) f32, gamma/beta: (1, C) f32
    mu = jnp.mean(x, axis=-1, keepdims=True)
    xc = x - mu
    var = jnp.mean(xc * xc, axis=-1, keepdims=True)
    return xc * jax.lax.rsqrt(var + LN_EPS) * gamma + beta


def _block_kernel(x_ref, wqkv_ref, wproj_ref, bproj_ref,
                  g1_ref, b1_ref, g2_ref, b2_ref,
                  wff1_ref, bff1_ref, wff2_ref, bff2_ref,
                  o_ref, qkv_ref, att_ref, *, block_b, T, C, H, hs):
    N = block_b * T
    x = x_ref[...].reshape(N, C).astype(jnp.float32)          # (N, C) f32

    # ---------------- LayerNorm 1 ----------------
    h1 = _layer_norm(x, g1_ref[...], b1_ref[...])

    # ------ fused QKV projection (one wide bf16 matmul), staged bf16 in VMEM ------
    qkv = jnp.dot(h1.astype(jnp.bfloat16), wqkv_ref[...],
                  preferred_element_type=jnp.float32)          # (N, 3C) f32
    qkv_ref[...] = qkv.reshape(block_b, T, 3 * C).astype(jnp.bfloat16)

    # causal mask shared by all batch rows / heads
    rows = jax.lax.broadcasted_iota(jnp.int32, (T, T), 0)
    cols = jax.lax.broadcasted_iota(jnp.int32, (T, T), 1)
    keep = cols <= rows
    neg = jnp.float32(-1e30)             # finite; diagonal always unmasked

    # ---- attention: batched over batch rows, heads processed in lane-aligned pairs ----
    for pair in range(H // 2):
        outs = []
        for hh in range(2):
            h = 2 * pair + hh
            c0 = h * hs
            k = qkv_ref[:, :, c0:c0 + hs]                       # (block_b, T, hs) bf16
            q = qkv_ref[:, :, C + c0:C + c0 + hs]               # scale already folded in
            v = qkv_ref[:, :, 2 * C + c0:2 * C + c0 + hs]

            # NOTE: reference computes k @ q^T (not q @ k^T) — reproduced exactly.
            wei = jnp.einsum('bid,bjd->bij', k, q,
                             preferred_element_type=jnp.float32)   # (block_b, T, T)
            wei = jnp.where(keep, wei, neg)

            m = jnp.max(wei, axis=-1, keepdims=True)
            e = jnp.exp(wei - m)
            p = e * pl.reciprocal(jnp.sum(e, axis=-1, keepdims=True), approx=True)

            outs.append(jnp.einsum('bij,bjd->bid', p.astype(jnp.bfloat16), v,
                                   preferred_element_type=jnp.float32))
        # one lane-dense (block_b, T, 2*hs=128) store per head pair
        att_ref[:, :, pair * 2 * hs:(pair + 1) * 2 * hs] = jnp.concatenate(outs, axis=-1)

    # ---------------- output projection + residual ----------------
    att = att_ref[...].reshape(N, C).astype(jnp.bfloat16)
    sa = jnp.dot(att, wproj_ref[...],
                 preferred_element_type=jnp.float32) + bproj_ref[...]
    x1 = x + sa

    # ---------------- LayerNorm 2 + FeedForward + residual ----------------
    h2 = _layer_norm(x1, g2_ref[...], b2_ref[...])
    f1 = jnp.dot(h2.astype(jnp.bfloat16), wff1_ref[...],
                 preferred_element_type=jnp.float32) + bff1_ref[...]
    f1 = jnp.maximum(f1, 0.0)
    f2 = jnp.dot(f1.astype(jnp.bfloat16), wff2_ref[...],
                 preferred_element_type=jnp.float32) + bff2_ref[...]

    o_ref[...] = (x1 + f2).reshape(block_b, T, C).astype(o_ref.dtype)


def _choose_block_b(B, T):
    # Fill the MXU M-dim: fold batch rows so N = block_b*T reaches ~256.
    # No forced multi-block grid: v5e/v6e are single-TC (extra grid steps only
    # shrink M and add per-step overhead), and on v7x a 2-way split duplicates
    # the ~3.5 MiB weight fetch for very little compute at these sizes.
    bb = min(B, max(1, 256 // max(T, 1)))
    while B % bb != 0:
        bb -= 1
    return bb


def pack_block_params(wk, wq, wv, wp, bp, g1, b1, g2, b2, w1, bf1, w2, bf2):
    """One-time parameter preparation (hoisted out of the per-call path).

    wk/wq/wv: (H, C, hs) already transposed so k = x @ wk[h]
    (i.e. torch nn.Linear weight.T per head).  Fuses K/Q/V into one (C, 3C)
    bf16 matrix [K | Q | V], folds the attention scale C**-0.5 into the Q
    columns, casts matmul weights to bf16 and biases/LN params to (1, C) f32.
    """
    H, C, hs = wk.shape
    scale = jnp.float32(C) ** -0.5       # reference scales by n_embd**-0.5
    to_cols = lambda w: jnp.transpose(w, (1, 0, 2)).reshape(C, H * hs)
    wqkv = jnp.concatenate(
        [to_cols(wk), to_cols(wq) * scale, to_cols(wv)], axis=1)
    row = lambda v: v.reshape(1, -1).astype(jnp.float32)
    return (wqkv.astype(jnp.bfloat16), wp.astype(jnp.bfloat16), row(bp),
            row(g1), row(b1), row(g2), row(b2),
            w1.astype(jnp.bfloat16), row(bf1),
            w2.astype(jnp.bfloat16), row(bf2))


def block_forward(x, params, *, block_b=None):
    B, T, C = x.shape
    (wqkv, wp, bp, g1, b1, g2, b2, w1, bf1, w2, bf2) = params
    hidden = w1.shape[1]
    H = num_heads
    hs = C // H
    assert C == n_embd and H * hs == C
    assert T % 8 == 0 and C % 128 == 0 and hidden % 128 == 0
    assert H % 2 == 0 and (2 * hs) % 128 == 0   # lane-aligned head-pair stores

    if block_b is None:
        block_b = _choose_block_b(B, T)
    assert B % block_b == 0
    grid = (B // block_b,)

    kernel = functools.partial(_block_kernel, block_b=block_b, T=T, C=C, H=H, hs=hs)

    # Grid-invariant operands: single-buffered (default double-buffering would
    # reserve ~2x ~3.5 MiB of VMEM for blocks whose index_map never changes).
    def inv(shape):
        return pl.BlockSpec(shape, lambda i: (0,) * len(shape),
                            pipeline_mode=pl.Buffered(buffer_count=1))

    return pl.pallas_call(
        kernel,
        out_shape=jax.ShapeDtypeStruct((B, T, C), x.dtype),
        grid_spec=pltpu.PrefetchScalarGridSpec(
            num_scalar_prefetch=0,
            grid=grid,
            in_specs=[
                pl.BlockSpec((block_b, T, C), lambda i: (i, 0, 0)),   # x (per-batch block)
                inv((C, 3 * C)),      # fused Wqkv (bf16, scale folded into Q)
                inv((C, C)),          # Wproj (bf16)
                inv((1, C)),          # bproj
                inv((1, C)),          # ln1 gamma
                inv((1, C)),          # ln1 beta
                inv((1, C)),          # ln2 gamma
                inv((1, C)),          # ln2 beta
                inv((C, hidden)),     # Wff1 (bf16)
                inv((1, hidden)),     # bff1
                inv((hidden, C)),     # Wff2 (bf16)
                inv((1, C)),          # bff2
            ],
            out_specs=pl.BlockSpec((block_b, T, C), lambda i: (i, 0, 0)),
            scratch_shapes=[
                pltpu.VMEM((block_b, T, 3 * C), jnp.bfloat16),   # staged QKV
                pltpu.VMEM((block_b, T, C), jnp.float32),        # head outputs
            ],
        ),
        # Total VMEM (~6 MiB incl. single-buffered weights) is well under every
        # generation's default scoped limit, so no vmem_limit_bytes override.
        compiler_params=pltpu.CompilerParams(
            dimension_semantics=("parallel",)),
    )(x, wqkv, wp, bp, g1, b1, g2, b2, w1, bf1, w2, bf2)


def reference_block(x, wk, wq, wv, wp, bp, g1, b1, g2, b2, w1, bf1, w2, bf2):
    # Pure-JAX f32 mirror of the PyTorch Block forward (eval mode).
    B, T, C = x.shape

    def ln(z, g, b):
        mu = z.mean(-1, keepdims=True)
        var = ((z - mu) ** 2).mean(-1, keepdims=True)
        return (z - mu) / jnp.sqrt(var + LN_EPS) * g + b

    h1 = ln(x, g1, b1)
    scale = jnp.float32(C) ** -0.5
    tril = jnp.tril(jnp.ones((T, T), dtype=bool))
    outs = []
    for h in range(wk.shape[0]):
        k = h1 @ wk[h]
        q = h1 @ wq[h]
        v = h1 @ wv[h]
        wei = (k @ jnp.swapaxes(q, -2, -1)) * scale
        wei = jnp.where(tril, wei, -jnp.inf)
        wei = jax.nn.softmax(wei, axis=-1)
        outs.append(wei @ v)
    sa = jnp.concatenate(outs, axis=-1) @ wp + bp
    x1 = x + sa
    h2 = ln(x1, g2, b2)
    ff = jnp.maximum(h2 @ w1 + bf1, 0.0) @ w2 + bf2
    return x1 + ff


if __name__ == "__main__":
    key = jax.random.PRNGKey(0)
    ks = jax.random.split(key, 16)

    B, T = 4, 8   # small seq (<= block_size=256); n_embd fixed at 384 by the module
    x = jax.random.normal(ks[0], (B, T, n_embd), dtype=jnp.float32)

    init = 0.02
    wk = init * jax.random.normal(ks[1], (num_heads, n_embd, head_size), jnp.float32)
    wq = init * jax.random.normal(ks[2], (num_heads, n_embd, head_size), jnp.float32)
    wv = init * jax.random.normal(ks[3], (num_heads, n_embd, head_size), jnp.float32)
    wp = init * jax.random.normal(ks[4], (n_embd, n_embd), jnp.float32)
    bp = init * jax.random.normal(ks[5], (n_embd,), jnp.float32)
    g1 = 1.0 + 0.1 * jax.random.normal(ks[6], (n_embd,), jnp.float32)
    b1 = 0.1 * jax.random.normal(ks[7], (n_embd,), jnp.float32)
    g2 = 1.0 + 0.1 * jax.random.normal(ks[8], (n_embd,), jnp.float32)
    b2 = 0.1 * jax.random.normal(ks[9], (n_embd,), jnp.float32)
    w1 = init * jax.random.normal(ks[10], (n_embd, ffn_hidden), jnp.float32)
    bf1 = init * jax.random.normal(ks[11], (ffn_hidden,), jnp.float32)
    w2 = init * jax.random.normal(ks[12], (ffn_hidden, n_embd), jnp.float32)
    bf2 = init * jax.random.normal(ks[13], (n_embd,), jnp.float32)

    # One-time parameter packing (hoisted out of the per-call path).
    params = jax.block_until_ready(
        pack_block_params(wk, wq, wv, wp, bp, g1, b1, g2, b2, w1, bf1, w2, bf2))

    out = block_forward(x, params)
    out = jax.block_until_ready(out)

    ref = reference_block(x, wk, wq, wv, wp, bp, g1, b1, g2, b2, w1, bf1, w2, bf2)
    assert out.shape == (B, T, n_embd)
    # bf16 MXU inputs + approx reciprocal -> bf16-level tolerance vs f32 reference
    assert jnp.allclose(out, ref, atol=2e-2, rtol=2e-2), \
        float(jnp.max(jnp.abs(out - ref)))

    print("KERNEL_OK")
</pallas_src>

<mosaic_0001>
module attributes {stable_mosaic.version = 11 : i64} {
  func.func @_block_kernel(%arg0: i32, %arg1: memref<4x8x384xf32, #tpu.memory_space<vmem>>, %arg2: memref<384x1152xbf16, #tpu.memory_space<vmem>>, %arg3: memref<384x384xbf16, #tpu.memory_space<vmem>>, %arg4: memref<1x384xf32, #tpu.memory_space<vmem>>, %arg5: memref<1x384xf32, #tpu.memory_space<vmem>>, %arg6: memref<1x384xf32, #tpu.memory_space<vmem>>, %arg7: memref<1x384xf32, #tpu.memory_space<vmem>>, %arg8: memref<1x384xf32, #tpu.memory_space<vmem>>, %arg9: memref<384x1536xbf16, #tpu.memory_space<vmem>>, %arg10: memref<1x1536xf32, #tpu.memory_space<vmem>>, %arg11: memref<1536x384xbf16, #tpu.memory_space<vmem>>, %arg12: memref<1x384xf32, #tpu.memory_space<vmem>>, %arg13: memref<4x8x384xf32, #tpu.memory_space<vmem>>, %arg14: memref<4x8x1152xbf16, #tpu.memory_space<vmem>>, %arg15: memref<4x8x384xf32, #tpu.memory_space<vmem>>) attributes {dimension_semantics = [#tpu.dimension_semantics<parallel>], iteration_bounds = array<i64: 1>, scalar_prefetch = 0 : i64, scratch_operands = 2 : i64, tpu.core_type = #tpu.core_type<tc>, window_params = [{transform_indices = @transform_0, window_bounds = array<i64: 4, 8, 384>}, {pipeline_mode = #tpu.pipeline_mode<synchronous>, transform_indices = @transform_1, window_bounds = array<i64: 384, 1152>}, {pipeline_mode = #tpu.pipeline_mode<synchronous>, transform_indices = @transform_2, window_bounds = array<i64: 384, 384>}, {pipeline_mode = #tpu.pipeline_mode<synchronous>, transform_indices = @transform_3, window_bounds = array<i64: 1, 384>}, {pipeline_mode = #tpu.pipeline_mode<synchronous>, transform_indices = @transform_4, window_bounds = array<i64: 1, 384>}, {pipeline_mode = #tpu.pipeline_mode<synchronous>, transform_indices = @transform_5, window_bounds = array<i64: 1, 384>}, {pipeline_mode = #tpu.pipeline_mode<synchronous>, transform_indices = @transform_6, window_bounds = array<i64: 1, 384>}, {pipeline_mode = #tpu.pipeline_mode<synchronous>, transform_indices = @transform_7, window_bounds = array<i64: 1, 384>}, {pipeline_mode = #tpu.pipeline_mode<synchronous>, transform_indices = @transform_8, window_bounds = array<i64: 384, 1536>}, {pipeline_mode = #tpu.pipeline_mode<synchronous>, transform_indices = @transform_9, window_bounds = array<i64: 1, 1536>}, {pipeline_mode = #tpu.pipeline_mode<synchronous>, transform_indices = @transform_10, window_bounds = array<i64: 1536, 384>}, {pipeline_mode = #tpu.pipeline_mode<synchronous>, transform_indices = @transform_11, window_bounds = array<i64: 1, 384>}, {transform_indices = @transform_12, window_bounds = array<i64: 4, 8, 384>}]} {
    %c0 = arith.constant 0 : index
    %c0_0 = arith.constant 0 : index
    %c0_1 = arith.constant 0 : index
    %0 = vector.load %arg1[%c0, %c0_0, %c0_1] : memref<4x8x384xf32, #tpu.memory_space<vmem>>, vector<4x8x384xf32>
    %1 = vector.shape_cast %0 : vector<4x8x384xf32> to vector<32x384xf32>
    %c0_2 = arith.constant 0 : index
    %c0_3 = arith.constant 0 : index
    %2 = vector.load %arg5[%c0_2, %c0_3] : memref<1x384xf32, #tpu.memory_space<vmem>>, vector<1x384xf32>
    %c0_4 = arith.constant 0 : index
    %c0_5 = arith.constant 0 : index
    %3 = vector.load %arg6[%c0_4, %c0_5] : memref<1x384xf32, #tpu.memory_space<vmem>>, vector<1x384xf32>
    %cst = arith.constant dense<0.000000e+00> : vector<32xf32>
    %4 = vector.multi_reduction <add>, %1, %cst [1] : vector<32x384xf32> to vector<32xf32>
    %5 = vector.shape_cast %4 : vector<32xf32> to vector<32x1xf32>
    %cst_6 = arith.constant 3.840000e+02 : f32
    %6 = vector.broadcast %cst_6 : f32 to vector<32x1xf32>
    %7 = arith.divf %5, %6 : vector<32x1xf32>
    %8 = vector.broadcast %7 : vector<32x1xf32> to vector<32x384xf32>
    %9 = arith.subf %1, %8 : vector<32x384xf32>
    %10 = arith.mulf %9, %9 : vector<32x384xf32>
    %cst_7 = arith.constant dense<0.000000e+00> : vector<32xf32>
    %11 = vector.multi_reduction <add>, %10, %cst_7 [1] : vector<32x384xf32> to vector<32xf32>
    %12 = vector.shape_cast %11 : vector<32xf32> to vector<32x1xf32>
    %cst_8 = arith.constant 3.840000e+02 : f32
    %13 = vector.broadcast %cst_8 : f32 to vector<32x1xf32>
    %14 = arith.divf %12, %13 : vector<32x1xf32>
    %cst_9 = arith.constant 9.99999974E-6 : f32
    %15 = vector.broadcast %cst_9 : f32 to vector<32x1xf32>
    %16 = arith.addf %14, %15 : vector<32x1xf32>
    %17 = math.rsqrt %16 : vector<32x1xf32>
    %18 = vector.broadcast %17 : vector<32x1xf32> to vector<32x384xf32>
    %19 = arith.mulf %9, %18 : vector<32x384xf32>
    %20 = vector.broadcast %2 : vector<1x384xf32> to vector<32x384xf32>
    %21 = arith.mulf %19, %20 : vector<32x384xf32>
    %22 = vector.broadcast %3 : vector<1x384xf32> to vector<32x384xf32>
    %23 = arith.addf %21, %22 : vector<32x384xf32>
    %24 = arith.truncf %23 : vector<32x384xf32> to vector<32x384xbf16>
    %c0_10 = arith.constant 0 : index
    %c0_11 = arith.constant 0 : index
    %25 = vector.load %arg2[%c0_10, %c0_11] : memref<384x1152xbf16, #tpu.memory_space<vmem>>, vector<384x1152xbf16>
    %cst_12 = arith.constant dense<0.000000e+00> : vector<32x1152xf32>
    %26 = tpu.matmul %24, %25, %cst_12 {dimension_numbers = #tpu.dot_dimension_numbers<[1], [0], [0], [1], [0, 0, 1, 1], [], []>} : vector<32x384xbf16>, vector<384x1152xbf16>, vector<32x1152xf32> -> vector<32x1152xf32>
    %27 = vector.shape_cast %26 : vector<32x1152xf32> to vector<4x8x1152xf32>
    %28 = arith.truncf %27 : vector<4x8x1152xf32> to vector<4x8x1152xbf16>
    %c0_13 = arith.constant 0 : index
    %c0_14 = arith.constant 0 : index
    %c0_15 = arith.constant 0 : index
    %29 = vector.load %arg14[%c0_13, %c0_14, %c0_15] : memref<4x8x1152xbf16, #tpu.memory_space<vmem>>, vector<4x8x1152xbf16>
    tpu.vector_store %arg14[%c0_13, %c0_14, %c0_15], %28 {strides = array<i32>} : memref<4x8x1152xbf16, #tpu.memory_space<vmem>>, vector<4x8x1152xbf16>,
    %30 = tpu.iota {dimensions = array<i32: 0>} : vector<8x8xi32>
    %31 = tpu.iota {dimensions = array<i32: 1>} : vector<8x8xi32>
    %32 = arith.cmpi sle, %31, %30 : vector<8x8xi32>
    %c0_16 = arith.constant 0 : index
    %c0_17 = arith.constant 0 : index
    %c0_18 = arith.constant 0 : index
    %33 = vector.load %arg14[%c0_16, %c0_17, %c0_18] : memref<4x8x1152xbf16, #tpu.memory_space<vmem>>, vector<4x8x64xbf16>
    %c0_19 = arith.constant 0 : index
    %c0_20 = arith.constant 0 : index
    %c384 = arith.constant 384 : index
    %34 = vector.load %arg14[%c0_19, %c0_20, %c384] : memref<4x8x1152xbf16, #tpu.memory_space<vmem>>, vector<4x8x64xbf16>
    %c0_21 = arith.constant 0 : index
    %c0_22 = arith.constant 0 : index
    %c768 = arith.constant 768 : index
    %35 = vector.load %arg14[%c0_21, %c0_22, %c768] : memref<4x8x1152xbf16, #tpu.memory_space<vmem>>, vector<4x8x64xbf16>
    "tpu.trace_start"() <{level = 10 : i32, message = "bid,bjd->bij"}> : () -> ()
    %cst_23 = arith.constant dense<0.000000e+00> : vector<4x8x8xf32>
    %36 = tpu.matmul %33, %34, %cst_23 {dimension_numbers = #tpu.dot_dimension_numbers<[2], [2], [1], [1], [0, 0, 0, 1, 1, 1], [0], [0]>} : vector<4x8x64xbf16>, vector<4x8x64xbf16>, vector<4x8x8xf32> -> vector<4x8x8xf32>
    %cst_24 = arith.constant -1.000000e+30 : f32
    "tpu.trace_stop"() : () -> ()
    %37 = vector.shape_cast %32 : vector<8x8xi1> to vector<1x8x8xi1>
    %38 = vector.broadcast %37 : vector<1x8x8xi1> to vector<4x8x8xi1>
    %39 = vector.broadcast %cst_24 : f32 to vector<4x8x8xf32>
    %40 = arith.select %38, %36, %39 : vector<4x8x8xi1>, vector<4x8x8xf32>
    %cst_25 = arith.constant dense<0xFF800000> : vector<4x8xf32>
    %41 = vector.multi_reduction <maximumf>, %40, %cst_25 [2] : vector<4x8x8xf32> to vector<4x8xf32>
    %42 = vector.shape_cast %41 : vector<4x8xf32> to vector<4x8x1xf32>
    %43 = vector.broadcast %42 : vector<4x8x1xf32> to vector<4x8x8xf32>
    %44 = arith.subf %40, %43 : vector<4x8x8xf32>
    %45 = math.exp %44 : vector<4x8x8xf32>
    %cst_26 = arith.constant dense<0.000000e+00> : vector<4x8xf32>
    %46 = vector.multi_reduction <add>, %45, %cst_26 [2] : vector<4x8x8xf32> to vector<4x8xf32>
    %47 = vector.shape_cast %46 : vector<4x8xf32> to vector<4x8x1xf32>
    %48 = tpu.reciprocal %47 {approx = true} : vector<4x8x1xf32> -> vector<4x8x1xf32>
    %49 = vector.broadcast %48 : vector<4x8x1xf32> to vector<4x8x8xf32>
    %50 = arith.mulf %45, %49 : vector<4x8x8xf32>
    %51 = arith.truncf %50 : vector<4x8x8xf32> to vector<4x8x8xbf16>
    "tpu.trace_start"() <{level = 10 : i32, message = "bij,bjd->bid"}> : () -> ()
    %cst_27 = arith.constant dense<0.000000e+00> : vector<4x8x64xf32>
    %52 = tpu.matmul %51, %35, %cst_27 {dimension_numbers = #tpu.dot_dimension_numbers<[2], [1], [1], [2], [0, 0, 0, 1, 1, 2], [0], [0]>} : vector<4x8x8xbf16>, vector<4x8x64xbf16>, vector<4x8x64xf32> -> vector<4x8x64xf32>
    "tpu.trace_stop"() : () -> ()
    %c0_28 = arith.constant 0 : index
    %c0_29 = arith.constant 0 : index
    %c64 = arith.constant 64 : index
    %53 = vector.load %arg14[%c0_28, %c0_29, %c64] : memref<4x8x1152xbf16, #tpu.memory_space<vmem>>, vector<4x8x64xbf16>
    %c0_30 = arith.constant 0 : index
    %c0_31 = arith.constant 0 : index
    %c448 = arith.constant 448 : index
    %54 = vector.load %arg14[%c0_30, %c0_31, %c448] : memref<4x8x1152xbf16, #tpu.memory_space<vmem>>, vector<4x8x64xbf16>
    %c0_32 = arith.constant 0 : index
    %c0_33 = arith.constant 0 : index
    %c832 = arith.constant 832 : index
    %55 = vector.load %arg14[%c0_32, %c0_33, %c832] : memref<4x8x1152xbf16, #tpu.memory_space<vmem>>, vector<4x8x64xbf16>
    "tpu.trace_start"() <{level = 10 : i32, message = "bid,bjd->bij"}> : () -> ()
    %cst_34 = arith.constant dense<0.000000e+00> : vector<4x8x8xf32>
    %56 = tpu.matmul %53, %54, %cst_34 {dimension_numbers = #tpu.dot_dimension_numbers<[2], [2], [1], [1], [0, 0, 0, 1, 1, 1], [0], [0]>} : vector<4x8x64xbf16>, vector<4x8x64xbf16>, vector<4x8x8xf32> -> vector<4x8x8xf32>
    %cst_35 = arith.constant -1.000000e+30 : f32
    "tpu.trace_stop"() : () -> ()
    %57 = vector.shape_cast %32 : vector<8x8xi1> to vector<1x8x8xi1>
    %58 = vector.broadcast %57 : vector<1x8x8xi1> to vector<4x8x8xi1>
    %59 = vector.broadcast %cst_35 : f32 to vector<4x8x8xf32>
    %60 = arith.select %58, %56, %59 : vector<4x8x8xi1>, vector<4x8x8xf32>
    %cst_36 = arith.constant dense<0xFF800000> : vector<4x8xf32>
    %61 = vector.multi_reduction <maximumf>, %60, %cst_36 [2] : vector<4x8x8xf32> to vector<4x8xf32>
    %62 = vector.shape_cast %61 : vector<4x8xf32> to vector<4x8x1xf32>
    %63 = vector.broadcast %62 : vector<4x8x1xf32> to vector<4x8x8xf32>
    %64 = arith.subf %60, %63 : vector<4x8x8xf32>
    %65 = math.exp %64 : vector<4x8x8xf32>
    %cst_37 = arith.constant dense<0.000000e+00> : vector<4x8xf32>
    %66 = vector.multi_reduction <add>, %65, %cst_37 [2] : vector<4x8x8xf32> to vector<4x8xf32>
    %67 = vector.shape_cast %66 : vector<4x8xf32> to vector<4x8x1xf32>
    %68 = tpu.reciprocal %67 {approx = true} : vector<4x8x1xf32> -> vector<4x8x1xf32>
    %69 = vector.broadcast %68 : vector<4x8x1xf32> to vector<4x8x8xf32>
    %70 = arith.mulf %65, %69 : vector<4x8x8xf32>
    %71 = arith.truncf %70 : vector<4x8x8xf32> to vector<4x8x8xbf16>
    "tpu.trace_start"() <{level = 10 : i32, message = "bij,bjd->bid"}> : () -> ()
    %cst_38 = arith.constant dense<0.000000e+00> : vector<4x8x64xf32>
    %72 = tpu.matmul %71, %55, %cst_38 {dimension_numbers = #tpu.dot_dimension_numbers<[2], [1], [1], [2], [0, 0, 0, 1, 1, 2], [0], [0]>} : vector<4x8x8xbf16>, vector<4x8x64xbf16>, vector<4x8x64xf32> -> vector<4x8x64xf32>
    "tpu.trace_stop"() : () -> ()
    %73 = tpu.concatenate %52, %72 in 2 : vector<4x8x64xf32>, vector<4x8x64xf32> -> vector<4x8x128xf32>
    %c0_39 = arith.constant 0 : index
    %c0_40 = arith.constant 0 : index
    %c0_41 = arith.constant 0 : index
    %74 = vector.load %arg15[%c0_39, %c0_40, %c0_41] : memref<4x8x384xf32, #tpu.memory_space<vmem>>, vector<4x8x128xf32>
    tpu.vector_store %arg15[%c0_39, %c0_40, %c0_41], %73 {strides = array<i32>} : memref<4x8x384xf32, #tpu.memory_space<vmem>>, vector<4x8x128xf32>,
    %c0_42 = arith.constant 0 : index
    %c0_43 = arith.constant 0 : index
    %c128 = arith.constant 128 : index
    %75 = vector.load %arg14[%c0_42, %c0_43, %c128] : memref<4x8x1152xbf16, #tpu.memory_space<vmem>>, vector<4x8x64xbf16>
    %c0_44 = arith.constant 0 : index
    %c0_45 = arith.constant 0 : index
    %c512 = arith.constant 512 : index
    %76 = vector.load %arg14[%c0_44, %c0_45, %c512] : memref<4x8x1152xbf16, #tpu.memory_space<vmem>>, vector<4x8x64xbf16>
    %c0_46 = arith.constant 0 : index
    %c0_47 = arith.constant 0 : index
    %c896 = arith.constant 896 : index
    %77 = vector.load %arg14[%c0_46, %c0_47, %c896] : memref<4x8x1152xbf16, #tpu.memory_space<vmem>>, vector<4x8x64xbf16>
    "tpu.trace_start"() <{level = 10 : i32, message = "bid,bjd->bij"}> : () -> ()
    %cst_48 = arith.constant dense<0.000000e+00> : vector<4x8x8xf32>
    %78 = tpu.matmul %75, %76, %cst_48 {dimension_numbers = #tpu.dot_dimension_numbers<[2], [2], [1], [1], [0, 0, 0, 1, 1, 1], [0], [0]>} : vector<4x8x64xbf16>, vector<4x8x64xbf16>, vector<4x8x8xf32> -> vector<4x8x8xf32>
    %cst_49 = arith.constant -1.000000e+30 : f32
    "tpu.trace_stop"() : () -> ()
    %79 = vector.shape_cast %32 : vector<8x8xi1> to vector<1x8x8xi1>
    %80 = vector.broadcast %79 : vector<1x8x8xi1> to vector<4x8x8xi1>
    %81 = vector.broadcast %cst_49 : f32 to vector<4x8x8xf32>
    %82 = arith.select %80, %78, %81 : vector<4x8x8xi1>, vector<4x8x8xf32>
    %cst_50 = arith.constant dense<0xFF800000> : vector<4x8xf32>
    %83 = vector.multi_reduction <maximumf>, %82, %cst_50 [2] : vector<4x8x8xf32> to vector<4x8xf32>
    %84 = vector.shape_cast %83 : vector<4x8xf32> to vector<4x8x1xf32>
    %85 = vector.broadcast %84 : vector<4x8x1xf32> to vector<4x8x8xf32>
    %86 = arith.subf %82, %85 : vector<4x8x8xf32>
    %87 = math.exp %86 : vector<4x8x8xf32>
    %cst_51 = arith.constant dense<0.000000e+00> : vector<4x8xf32>
    %88 = vector.multi_reduction <add>, %87, %cst_51 [2] : vector<4x8x8xf32> to vector<4x8xf32>
    %89 = vector.shape_cast %88 : vector<4x8xf32> to vector<4x8x1xf32>
    %90 = tpu.reciprocal %89 {approx = true} : vector<4x8x1xf32> -> vector<4x8x1xf32>
    %91 = vector.broadcast %90 : vector<4x8x1xf32> to vector<4x8x8xf32>
    %92 = arith.mulf %87, %91 : vector<4x8x8xf32>
    %93 = arith.truncf %92 : vector<4x8x8xf32> to vector<4x8x8xbf16>
    "tpu.trace_start"() <{level = 10 : i32, message = "bij,bjd->bid"}> : () -> ()
    %cst_52 = arith.constant dense<0.000000e+00> : vector<4x8x64xf32>
    %94 = tpu.matmul %93, %77, %cst_52 {dimension_numbers = #tpu.dot_dimension_numbers<[2], [1], [1], [2], [0, 0, 0, 1, 1, 2], [0], [0]>} : vector<4x8x8xbf16>, vector<4x8x64xbf16>, vector<4x8x64xf32> -> vector<4x8x64xf32>
    "tpu.trace_stop"() : () -> ()
    %c0_53 = arith.constant 0 : index
    %c0_54 = arith.constant 0 : index
    %c192 = arith.constant 192 : index
    %95 = vector.load %arg14[%c0_53, %c0_54, %c192] : memref<4x8x1152xbf16, #tpu.memory_space<vmem>>, vector<4x8x64xbf16>
    %c0_55 = arith.constant 0 : index
    %c0_56 = arith.constant 0 : index
    %c576 = arith.constant 576 : index
    %96 = vector.load %arg14[%c0_55, %c0_56, %c576] : memref<4x8x1152xbf16, #tpu.memory_space<vmem>>, vector<4x8x64xbf16>
    %c0_57 = arith.constant 0 : index
    %c0_58 = arith.constant 0 : index
    %c960 = arith.constant 960 : index
    %97 = vector.load %arg14[%c0_57, %c0_58, %c960] : memref<4x8x1152xbf16, #tpu.memory_space<vmem>>, vector<4x8x64xbf16>
    "tpu.trace_start"() <{level = 10 : i32, message = "bid,bjd->bij"}> : () -> ()
    %cst_59 = arith.constant dense<0.000000e+00> : vector<4x8x8xf32>
    %98 = tpu.matmul %95, %96, %cst_59 {dimension_numbers = #tpu.dot_dimension_numbers<[2], [2], [1], [1], [0, 0, 0, 1, 1, 1], [0], [0]>} : vector<4x8x64xbf16>, vector<4x8x64xbf16>, vector<4x8x8xf32> -> vector<4x8x8xf32>
    %cst_60 = arith.constant -1.000000e+30 : f32
    "tpu.trace_stop"() : () -> ()
    %99 = vector.shape_cast %32 : vector<8x8xi1> to vector<1x8x8xi1>
    %100 = vector.broadcast %99 : vector<1x8x8xi1> to vector<4x8x8xi1>
    %101 = vector.broadcast %cst_60 : f32 to vector<4x8x8xf32>
    %102 = arith.select %100, %98, %101 : vector<4x8x8xi1>, vector<4x8x8xf32>
    %cst_61 = arith.constant dense<0xFF800000> : vector<4x8xf32>
    %103 = vector.multi_reduction <maximumf>, %102, %cst_61 [2] : vector<4x8x8xf32> to vector<4x8xf32>
    %104 = vector.shape_cast %103 : vector<4x8xf32> to vector<4x8x1xf32>
    %105 = vector.broadcast %104 : vector<4x8x1xf32> to vector<4x8x8xf32>
    %106 = arith.subf %102, %105 : vector<4x8x8xf32>
    %107 = math.exp %106 : vector<4x8x8xf32>
    %cst_62 = arith.constant dense<0.000000e+00> : vector<4x8xf32>
    %108 = vector.multi_reduction <add>, %107, %cst_62 [2] : vector<4x8x8xf32> to vector<4x8xf32>
    %109 = vector.shape_cast %108 : vector<4x8xf32> to vector<4x8x1xf32>
    %110 = tpu.reciprocal %109 {approx = true} : vector<4x8x1xf32> -> vector<4x8x1xf32>
    %111 = vector.broadcast %110 : vector<4x8x1xf32> to vector<4x8x8xf32>
    %112 = arith.mulf %107, %111 : vector<4x8x8xf32>
    %113 = arith.truncf %112 : vector<4x8x8xf32> to vector<4x8x8xbf16>
    "tpu.trace_start"() <{level = 10 : i32, message = "bij,bjd->bid"}> : () -> ()
    %cst_63 = arith.constant dense<0.000000e+00> : vector<4x8x64xf32>
    %114 = tpu.matmul %113, %97, %cst_63 {dimension_numbers = #tpu.dot_dimension_numbers<[2], [1], [1], [2], [0, 0, 0, 1, 1, 2], [0], [0]>} : vector<4x8x8xbf16>, vector<4x8x64xbf16>, vector<4x8x64xf32> -> vector<4x8x64xf32>
    "tpu.trace_stop"() : () -> ()
    %115 = tpu.concatenate %94, %114 in 2 : vector<4x8x64xf32>, vector<4x8x64xf32> -> vector<4x8x128xf32>
    %c0_64 = arith.constant 0 : index
    %c0_65 = arith.constant 0 : index
    %c128_66 = arith.constant 128 : index
    %116 = vector.load %arg15[%c0_64, %c0_65, %c128_66] : memref<4x8x384xf32, #tpu.memory_space<vmem>>, vector<4x8x128xf32>
    tpu.vector_store %arg15[%c0_64, %c0_65, %c128_66], %115 {strides = array<i32>} : memref<4x8x384xf32, #tpu.memory_space<vmem>>, vector<4x8x128xf32>,
    %c0_67 = arith.constant 0 : index
    %c0_68 = arith.constant 0 : index
    %c256 = arith.constant 256 : index
    %117 = vector.load %arg14[%c0_67, %c0_68, %c256] : memref<4x8x1152xbf16, #tpu.memory_space<vmem>>, vector<4x8x64xbf16>
    %c0_69 = arith.constant 0 : index
    %c0_70 = arith.constant 0 : index
    %c640 = arith.constant 640 : index
    %118 = vector.load %arg14[%c0_69, %c0_70, %c640] : memref<4x8x1152xbf16, #tpu.memory_space<vmem>>, vector<4x8x64xbf16>
    %c0_71 = arith.constant 0 : index
    %c0_72 = arith.constant 0 : index
    %c1024 = arith.constant 1024 : index
    %119 = vector.load %arg14[%c0_71, %c0_72, %c1024] : memref<4x8x1152xbf16, #tpu.memory_space<vmem>>, vector<4x8x64xbf16>
    "tpu.trace_start"() <{level = 10 : i32, message = "bid,bjd->bij"}> : () -> ()
    %cst_73 = arith.constant dense<0.000000e+00> : vector<4x8x8xf32>
    %120 = tpu.matmul %117, %118, %cst_73 {dimension_numbers = #tpu.dot_dimension_numbers<[2], [2], [1], [1], [0, 0, 0, 1, 1, 1], [0], [0]>} : vector<4x8x64xbf16>, vector<4x8x64xbf16>, vector<4x8x8xf32> -> vector<4x8x8xf32>
    %cst_74 = arith.constant -1.000000e+30 : f32
    "tpu.trace_stop"() : () -> ()
    %121 = vector.shape_cast %32 : vector<8x8xi1> to vector<1x8x8xi1>
    %122 = vector.broadcast %121 : vector<1x8x8xi1> to vector<4x8x8xi1>
    %123 = vector.broadcast %cst_74 : f32 to vector<4x8x8xf32>
    %124 = arith.select %122, %120, %123 : vector<4x8x8xi1>, vector<4x8x8xf32>
    %cst_75 = arith.constant dense<0xFF800000> : vector<4x8xf32>
    %125 = vector.multi_reduction <maximumf>, %124, %cst_75 [2] : vector<4x8x8xf32> to vector<4x8xf32>
    %126 = vector.shape_cast %125 : vector<4x8xf32> to vector<4x8x1xf32>
    %127 = vector.broadcast %126 : vector<4x8x1xf32> to vector<4x8x8xf32>
    %128 = arith.subf %124, %127 : vector<4x8x8xf32>
    %129 = math.exp %128 : vector<4x8x8xf32>
    %cst_76 = arith.constant dense<0.000000e+00> : vector<4x8xf32>
    %130 = vector.multi_reduction <add>, %129, %cst_76 [2] : vector<4x8x8xf32> to vector<4x8xf32>
    %131 = vector.shape_cast %130 : vector<4x8xf32> to vector<4x8x1xf32>
    %132 = tpu.reciprocal %131 {approx = true} : vector<4x8x1xf32> -> vector<4x8x1xf32>
    %133 = vector.broadcast %132 : vector<4x8x1xf32> to vector<4x8x8xf32>
    %134 = arith.mulf %129, %133 : vector<4x8x8xf32>
    %135 = arith.truncf %134 : vector<4x8x8xf32> to vector<4x8x8xbf16>
    "tpu.trace_start"() <{level = 10 : i32, message = "bij,bjd->bid"}> : () -> ()
    %cst_77 = arith.constant dense<0.000000e+00> : vector<4x8x64xf32>
    %136 = tpu.matmul %135, %119, %cst_77 {dimension_numbers = #tpu.dot_dimension_numbers<[2], [1], [1], [2], [0, 0, 0, 1, 1, 2], [0], [0]>} : vector<4x8x8xbf16>, vector<4x8x64xbf16>, vector<4x8x64xf32> -> vector<4x8x64xf32>
    "tpu.trace_stop"() : () -> ()
    %c0_78 = arith.constant 0 : index
    %c0_79 = arith.constant 0 : index
    %c320 = arith.constant 320 : index
    %137 = vector.load %arg14[%c0_78, %c0_79, %c320] : memref<4x8x1152xbf16, #tpu.memory_space<vmem>>, vector<4x8x64xbf16>
    %c0_80 = arith.constant 0 : index
    %c0_81 = arith.constant 0 : index
    %c704 = arith.constant 704 : index
    %138 = vector.load %arg14[%c0_80, %c0_81, %c704] : memref<4x8x1152xbf16, #tpu.memory_space<vmem>>, vector<4x8x64xbf16>
    %c0_82 = arith.constant 0 : index
    %c0_83 = arith.constant 0 : index
    %c1088 = arith.constant 1088 : index
    %139 = vector.load %arg14[%c0_82, %c0_83, %c1088] : memref<4x8x1152xbf16, #tpu.memory_space<vmem>>, vector<4x8x64xbf16>
    "tpu.trace_start"() <{level = 10 : i32, message = "bid,bjd->bij"}> : () -> ()
    %cst_84 = arith.constant dense<0.000000e+00> : vector<4x8x8xf32>
    %140 = tpu.matmul %137, %138, %cst_84 {dimension_numbers = #tpu.dot_dimension_numbers<[2], [2], [1], [1], [0, 0, 0, 1, 1, 1], [0], [0]>} : vector<4x8x64xbf16>, vector<4x8x64xbf16>, vector<4x8x8xf32> -> vector<4x8x8xf32>
    %cst_85 = arith.constant -1.000000e+30 : f32
    "tpu.trace_stop"() : () -> ()
    %141 = vector.shape_cast %32 : vector<8x8xi1> to vector<1x8x8xi1>
    %142 = vector.broadcast %141 : vector<1x8x8xi1> to vector<4x8x8xi1>
    %143 = vector.broadcast %cst_85 : f32 to vector<4x8x8xf32>
    %144 = arith.select %142, %140, %143 : vector<4x8x8xi1>, vector<4x8x8xf32>
    %cst_86 = arith.constant dense<0xFF800000> : vector<4x8xf32>
    %145 = vector.multi_reduction <maximumf>, %144, %cst_86 [2] : vector<4x8x8xf32> to vector<4x8xf32>
    %146 = vector.shape_cast %145 : vector<4x8xf32> to vector<4x8x1xf32>
    %147 = vector.broadcast %146 : vector<4x8x1xf32> to vector<4x8x8xf32>
    %148 = arith.subf %144, %147 : vector<4x8x8xf32>
    %149 = math.exp %148 : vector<4x8x8xf32>
    %cst_87 = arith.constant dense<0.000000e+00> : vector<4x8xf32>
    %150 = vector.multi_reduction <add>, %149, %cst_87 [2] : vector<4x8x8xf32> to vector<4x8xf32>
    %151 = vector.shape_cast %150 : vector<4x8xf32> to vector<4x8x1xf32>
    %152 = tpu.reciprocal %151 {approx = true} : vector<4x8x1xf32> -> vector<4x8x1xf32>
    %153 = vector.broadcast %152 : vector<4x8x1xf32> to vector<4x8x8xf32>
    %154 = arith.mulf %149, %153 : vector<4x8x8xf32>
    %155 = arith.truncf %154 : vector<4x8x8xf32> to vector<4x8x8xbf16>
    "tpu.trace_start"() <{level = 10 : i32, message = "bij,bjd->bid"}> : () -> ()
    %cst_88 = arith.constant dense<0.000000e+00> : vector<4x8x64xf32>
    %156 = tpu.matmul %155, %139, %cst_88 {dimension_numbers = #tpu.dot_dimension_numbers<[2], [1], [1], [2], [0, 0, 0, 1, 1, 2], [0], [0]>} : vector<4x8x8xbf16>, vector<4x8x64xbf16>, vector<4x8x64xf32> -> vector<4x8x64xf32>
    "tpu.trace_stop"() : () -> ()
    %157 = tpu.concatenate %136, %156 in 2 : vector<4x8x64xf32>, vector<4x8x64xf32> -> vector<4x8x128xf32>
    %c0_89 = arith.constant 0 : index
    %c0_90 = arith.constant 0 : index
    %c256_91 = arith.constant 256 : index
    %158 = vector.load %arg15[%c0_89, %c0_90, %c256_91] : memref<4x8x384xf32, #tpu.memory_space<vmem>>, vector<4x8x128xf32>
    tpu.vector_store %arg15[%c0_89, %c0_90, %c256_91], %157 {strides = array<i32>} : memref<4x8x384xf32, #tpu.memory_space<vmem>>, vector<4x8x128xf32>,
    %c0_92 = arith.constant 0 : index
    %c0_93 = arith.constant 0 : index
    %c0_94 = arith.constant 0 : index
    %159 = vector.load %arg15[%c0_92, %c0_93, %c0_94] : memref<4x8x384xf32, #tpu.memory_space<vmem>>, vector<4x8x384xf32>
    %160 = vector.shape_cast %159 : vector<4x8x384xf32> to vector<32x384xf32>
    %161 = arith.truncf %160 : vector<32x384xf32> to vector<32x384xbf16>
    %c0_95 = arith.constant 0 : index
    %c0_96 = arith.constant 0 : index
    %162 = vector.load %arg3[%c0_95, %c0_96] : memref<384x384xbf16, #tpu.memory_space<vmem>>, vector<384x384xbf16>
    %cst_97 = arith.constant dense<0.000000e+00> : vector<32x384xf32>
    %163 = tpu.matmul %161, %162, %cst_97 {dimension_numbers = #tpu.dot_dimension_numbers<[1], [0], [0], [1], [0, 0, 1, 1], [], []>} : vector<32x384xbf16>, vector<384x384xbf16>, vector<32x384xf32> -> vector<32x384xf32>
    %c0_98 = arith.constant 0 : index
    %c0_99 = arith.constant 0 : index
    %164 = vector.load %arg4[%c0_98, %c0_99] : memref<1x384xf32, #tpu.memory_space<vmem>>, vector<1x384xf32>
    %165 = vector.broadcast %164 : vector<1x384xf32> to vector<32x384xf32>
    %166 = arith.addf %163, %165 : vector<32x384xf32>
    %167 = arith.addf %1, %166 : vector<32x384xf32>
    %c0_100 = arith.constant 0 : index
    %c0_101 = arith.constant 0 : index
    %168 = vector.load %arg7[%c0_100, %c0_101] : memref<1x384xf32, #tpu.memory_space<vmem>>, vector<1x384xf32>
    %c0_102 = arith.constant 0 : index
    %c0_103 = arith.constant 0 : index
    %169 = vector.load %arg8[%c0_102, %c0_103] : memref<1x384xf32, #tpu.memory_space<vmem>>, vector<1x384xf32>
    %cst_104 = arith.constant dense<0.000000e+00> : vector<32xf32>
    %170 = vector.multi_reduction <add>, %167, %cst_104 [1] : vector<32x384xf32> to vector<32xf32>
    %171 = vector.shape_cast %170 : vector<32xf32> to vector<32x1xf32>
    %cst_105 = arith.constant 3.840000e+02 : f32
    %172 = vector.broadcast %cst_105 : f32 to vector<32x1xf32>
    %173 = arith.divf %171, %172 : vector<32x1xf32>
    %174 = vector.broadcast %173 : vector<32x1xf32> to vector<32x384xf32>
    %175 = arith.subf %167, %174 : vector<32x384xf32>
    %176 = arith.mulf %175, %175 : vector<32x384xf32>
    %cst_106 = arith.constant dense<0.000000e+00> : vector<32xf32>
    %177 = vector.multi_reduction <add>, %176, %cst_106 [1] : vector<32x384xf32> to vector<32xf32>
    %178 = vector.shape_cast %177 : vector<32xf32> to vector<32x1xf32>
    %cst_107 = arith.constant 3.840000e+02 : f32
    %179 = vector.broadcast %cst_107 : f32 to vector<32x1xf32>
    %180 = arith.divf %178, %179 : vector<32x1xf32>
    %cst_108 = arith.constant 9.99999974E-6 : f32
    %181 = vector.broadcast %cst_108 : f32 to vector<32x1xf32>
    %182 = arith.addf %180, %181 : vector<32x1xf32>
    %183 = math.rsqrt %182 : vector<32x1xf32>
    %184 = vector.broadcast %183 : vector<32x1xf32> to vector<32x384xf32>
    %185 = arith.mulf %175, %184 : vector<32x384xf32>
    %186 = vector.broadcast %168 : vector<1x384xf32> to vector<32x384xf32>
    %187 = arith.mulf %185, %186 : vector<32x384xf32>
    %188 = vector.broadcast %169 : vector<1x384xf32> to vector<32x384xf32>
    %189 = arith.addf %187, %188 : vector<32x384xf32>
    %190 = arith.truncf %189 : vector<32x384xf32> to vector<32x384xbf16>
    %c0_109 = arith.constant 0 : index
    %c0_110 = arith.constant 0 : index
    %191 = vector.load %arg9[%c0_109, %c0_110] : memref<384x1536xbf16, #tpu.memory_space<vmem>>, vector<384x1536xbf16>
    %cst_111 = arith.constant dense<0.000000e+00> : vector<32x1536xf32>
    %192 = tpu.matmul %190, %191, %cst_111 {dimension_numbers = #tpu.dot_dimension_numbers<[1], [0], [0], [1], [0, 0, 1, 1], [], []>} : vector<32x384xbf16>, vector<384x1536xbf16>, vector<32x1536xf32> -> vector<32x1536xf32>
    %c0_112 = arith.constant 0 : index
    %c0_113 = arith.constant 0 : index
    %193 = vector.load %arg10[%c0_112, %c0_113] : memref<1x1536xf32, #tpu.memory_space<vmem>>, vector<1x1536xf32>
    %194 = vector.broadcast %193 : vector<1x1536xf32> to vector<32x1536xf32>
    %195 = arith.addf %192, %194 : vector<32x1536xf32>
    %cst_114 = arith.constant 0.000000e+00 : f32
    %196 = vector.broadcast %cst_114 : f32 to vector<32x1536xf32>
    %197 = arith.maximumf %195, %196 : vector<32x1536xf32>
    %198 = arith.truncf %197 : vector<32x1536xf32> to vector<32x1536xbf16>
    %c0_115 = arith.constant 0 : index
    %c0_116 = arith.constant 0 : index
    %199 = vector.load %arg11[%c0_115, %c0_116] : memref<1536x384xbf16, #tpu.memory_space<vmem>>, vector<1536x384xbf16>
    %cst_117 = arith.constant dense<0.000000e+00> : vector<32x384xf32>
    %200 = tpu.matmul %198, %199, %cst_117 {dimension_numbers = #tpu.dot_dimension_numbers<[1], [0], [0], [1], [0, 0, 1, 1], [], []>} : vector<32x1536xbf16>, vector<1536x384xbf16>, vector<32x384xf32> -> vector<32x384xf32>
    %c0_118 = arith.constant 0 : index
    %c0_119 = arith.constant 0 : index
    %201 = vector.load %arg12[%c0_118, %c0_119] : memref<1x384xf32, #tpu.memory_space<vmem>>, vector<1x384xf32>
    %202 = vector.broadcast %201 : vector<1x384xf32> to vector<32x384xf32>
    %203 = arith.addf %200, %202 : vector<32x384xf32>
    %204 = arith.addf %167, %203 : vector<32x384xf32>
    %205 = vector.shape_cast %204 : vector<32x384xf32> to vector<4x8x384xf32>
    %c0_120 = arith.constant 0 : index
    %c0_121 = arith.constant 0 : index
    %c0_122 = arith.constant 0 : index
    %206 = vector.load %arg13[%c0_120, %c0_121, %c0_122] : memref<4x8x384xf32, #tpu.memory_space<vmem>>, vector<4x8x384xf32>
    tpu.vector_store %arg13[%c0_120, %c0_121, %c0_122], %205 {strides = array<i32>} : memref<4x8x384xf32, #tpu.memory_space<vmem>>, vector<4x8x384xf32>,
    return
  }
  func.func @transform_0(%arg0: i32) -> (i32, i32, i32) {
    %c0_i32 = arith.constant 0 : i32
    %c0_i32_0 = arith.constant 0 : i32
    %c0_i32_1 = arith.constant 0 : i32
    return %arg0, %c0_i32, %c0_i32_0 : i32, i32, i32
  }
  func.func @transform_1(%arg0: i32) -> (i32, i32) {
    %c0_i32 = arith.constant 0 : i32
    %c0_i32_0 = arith.constant 0 : i32
    %c0_i32_1 = arith.constant 0 : i32
    return %c0_i32, %c0_i32_0 : i32, i32
  }
  func.func @transform_2(%arg0: i32) -> (i32, i32) {
    %c0_i32 = arith.constant 0 : i32
    %c0_i32_0 = arith.constant 0 : i32
    %c0_i32_1 = arith.constant 0 : i32
    return %c0_i32, %c0_i32_0 : i32, i32
  }
  func.func @transform_3(%arg0: i32) -> (i32, i32) {
    %c0_i32 = arith.constant 0 : i32
    %c0_i32_0 = arith.constant 0 : i32
    %c0_i32_1 = arith.constant 0 : i32
    return %c0_i32, %c0_i32_0 : i32, i32
  }
  func.func @transform_4(%arg0: i32) -> (i32, i32) {
    %c0_i32 = arith.constant 0 : i32
    %c0_i32_0 = arith.constant 0 : i32
    %c0_i32_1 = arith.constant 0 : i32
    return %c0_i32, %c0_i32_0 : i32, i32
  }
  func.func @transform_5(%arg0: i32) -> (i32, i32) {
    %c0_i32 = arith.constant 0 : i32
    %c0_i32_0 = arith.constant 0 : i32
    %c0_i32_1 = arith.constant 0 : i32
    return %c0_i32, %c0_i32_0 : i32, i32
  }
  func.func @transform_6(%arg0: i32) -> (i32, i32) {
    %c0_i32 = arith.constant 0 : i32
    %c0_i32_0 = arith.constant 0 : i32
    %c0_i32_1 = arith.constant 0 : i32
    return %c0_i32, %c0_i32_0 : i32, i32
  }
  func.func @transform_7(%arg0: i32) -> (i32, i32) {
    %c0_i32 = arith.constant 0 : i32
    %c0_i32_0 = arith.constant 0 : i32
    %c0_i32_1 = arith.constant 0 : i32
    return %c0_i32, %c0_i32_0 : i32, i32
  }
  func.func @transform_8(%arg0: i32) -> (i32, i32) {
    %c0_i32 = arith.constant 0 : i32
    %c0_i32_0 = arith.constant 0 : i32
    %c0_i32_1 = arith.constant 0 : i32
    return %c0_i32, %c0_i32_0 : i32, i32
  }
  func.func @transform_9(%arg0: i32) -> (i32, i32) {
    %c0_i32 = arith.constant 0 : i32
    %c0_i32_0 = arith.constant 0 : i32
    %c0_i32_1 = arith.constant 0 : i32
    return %c0_i32, %c0_i32_0 : i32, i32
  }
  func.func @transform_10(%arg0: i32) -> (i32, i32) {
    %c0_i32 = arith.constant 0 : i32
    %c0_i32_0 = arith.constant 0 : i32
    %c0_i32_1 = arith.constant 0 : i32
    return %c0_i32, %c0_i32_0 : i32, i32
  }
  func.func @transform_11(%arg0: i32) -> (i32, i32) {
    %c0_i32 = arith.constant 0 : i32
    %c0_i32_0 = arith.constant 0 : i32
    %c0_i32_1 = arith.constant 0 : i32
    return %c0_i32, %c0_i32_0 : i32, i32
  }
  func.func @transform_12(%arg0: i32) -> (i32, i32, i32) {
    %c0_i32 = arith.constant 0 : i32
    %c0_i32_0 = arith.constant 0 : i32
    %c0_i32_1 = arith.constant 0 : i32
    return %arg0, %c0_i32, %c0_i32_0 : i32, i32, i32
  }
}

</mosaic_0001>

<llo_original>
// kernel: tpu_custom_call.1
$region0: #{tpu_custom_call.1}
  #allocation0 [shape = 'u32[]', space=smem, size = 0x4, offset = 0x4, fixed_abs, tag = 'smem constant byte address 0x4 - core index']
  #allocation1 [shape = 'u32[144,128]{1,0:T(1,128)}', space=vmem, size = 0x12000, scoped, tag = 'internal scratch']
  #allocation2 [shape = 'bf16[4,8,1152]{2,1,0:T(8,128)(2,1)}', space=vmem, size = 0x12000, scoped, tag = 'scratch operand']
  #allocation3 [shape = 'f32[4,8,384]{2,1,0:T(8,128)}', space=vmem, size = 0xc000, scoped, tag = 'scratch operand']
  %s0 = inlined_call_operand.hbm [shape: f32[4,8,384], index: 0, kind: input, shape index: {}]
  %s1 = inlined_call_operand.hbm [shape: bf16[384,1152], index: 1, kind: input, shape index: {}]
  %s2 = inlined_call_operand.hbm [shape: bf16[384,384], index: 2, kind: input, shape index: {}]
  %s3 = inlined_call_operand.hbm [shape: f32[1,384], index: 3, kind: input, shape index: {}]
  %s4 = inlined_call_operand.hbm [shape: f32[1,384], index: 4, kind: input, shape index: {}]
  %s5 = inlined_call_operand.hbm [shape: f32[1,384], index: 5, kind: input, shape index: {}]
  %s6 = inlined_call_operand.hbm [shape: f32[1,384], index: 6, kind: input, shape index: {}]
  %s7 = inlined_call_operand.hbm [shape: f32[1,384], index: 7, kind: input, shape index: {}]
  %s8 = inlined_call_operand.hbm [shape: bf16[384,1536], index: 8, kind: input, shape index: {}]
  %s9 = inlined_call_operand.hbm [shape: f32[1,1536], index: 9, kind: input, shape index: {}]
  %s10 = inlined_call_operand.hbm [shape: bf16[1536,384], index: 10, kind: input, shape index: {}]
  %s11 = inlined_call_operand.hbm [shape: f32[1,384], index: 11, kind: input, shape index: {}]
  %s12 = inlined_call_operand.hbm [shape: f32[4,8,384], index: 12, kind: output, shape index: {}]
  %s13 = sld [smem:[#allocation0]]
  $region106: #{tpu_custom_call.1} parent=0
    _
  %s15 = ssub.s32 1, %s13
  %s16 = scalar_select 0, %s15, %s13
  $region1: #{tpu_custom_call.1} parent=0
    #allocation4 [shape = 'u8[49152]{0}', space=vmem, size = 0xc000, scoped, tag = 'input window, operand 0, single buffered']
    #allocation5 [shape = 's32[1]{0}', space=sflag, size = 0x4, scoped, tag = 'scoped memory for tpu_custom_call.1']
    #allocation6 [shape = 's32[1]{0}', space=sflag, size = 0x4, scoped, tag = 'scoped memory for tpu_custom_call.1']
    #allocation7 [shape = 'u8[884736]{0}', space=vmem, size = 0xd8000, scoped, tag = 'input window, operand 1, single buffered']
    #allocation8 [shape = 's32[1]{0}', space=sflag, size = 0x4, scoped, tag = 'scoped memory for tpu_custom_call.1']
    #allocation9 [shape = 'u8[294912]{0}', space=vmem, size = 0x48000, scoped, tag = 'input window, operand 2, single buffered']
    #allocation10 [shape = 'u8[1536]{0}', space=vmem, size = 0x800, scoped, tag = 'input window, operand 3, single buffered']
    #allocation11 [shape = 's32[1]{0}', space=sflag, size = 0x4, scoped, tag = 'scoped memory for tpu_custom_call.1']
    #allocation12 [shape = 'u8[1536]{0}', space=vmem, size = 0x800, scoped, tag = 'input window, operand 4, single buffered']
    #allocation13 [shape = 'u8[1536]{0}', space=vmem, size = 0x800, scoped, tag = 'input window, operand 5, single buffered']
    #allocation14 [shape = 's32[1]{0}', space=sflag, size = 0x4, scoped, tag = 'scoped memory for tpu_custom_call.1']
    #allocation15 [shape = 'u8[1536]{0}', space=vmem, size = 0x800, scoped, tag = 'input window, operand 6, single buffered']
    #allocation16 [shape = 'u8[1536]{0}', space=vmem, size = 0x800, scoped, tag = 'input window, operand 7, single buffered']
    #allocation17 [shape = 's32[1]{0}', space=sflag, size = 0x4, scoped, tag = 'scoped memory for tpu_custom_call.1']
    #allocation18 [shape = 'u8[1179648]{0}', space=vmem, size = 0x120000, scoped, tag = 'input window, operand 8, single buffered']
    #allocation19 [shape = 'u8[6144]{0}', space=vmem, size = 0x1800, scoped, tag = 'input window, operand 9, single buffered']
    #allocation20 [shape = 's32[1]{0}', space=sflag, size = 0x4, scoped, tag = 'scoped memory for tpu_custom_call.1']
    #allocation21 [shape = 'u8[1179648]{0}', space=vmem, size = 0x120000, scoped, tag = 'input window, operand 10, single buffered']
    #allocation22 [shape = 'u8[1536]{0}', space=vmem, size = 0x800, scoped, tag = 'input window, operand 11, single buffered']
    #allocation23 [shape = 's32[1]{0}', space=sflag, size = 0x4, scoped, tag = 'scoped memory for tpu_custom_call.1']
    #allocation24 [shape = 'u8[49152]{0}', space=vmem, size = 0xc000, scoped, tag = 'output window, operand 0, single buffered']
    %17 = vsyncpa [#allocation5], 0
    %18 = vsyncpa [#allocation8], 0
    %19 = vsyncpa [#allocation11], 0
    %20 = vsyncpa [#allocation14], 0
    %21 = vsyncpa [#allocation17], 0
    %22 = vsyncpa [#allocation20], 0
    %23 = vsyncpa [#allocation23], 0
    %24 = vsyncpa [#allocation6], 0
    // Predicated region
    $region2: #{tpu_custom_call.1} parent=1 // pred_check
      _
    $region3: #{tpu_custom_call.1} parent=1 // pred_check_branch
      %26 = sbr.rel (0) target = $region5
    $region4: #{tpu_custom_call.1} parent=1 // pred_region
      %s28 = ssub.s32 1536, 1536
      %29 = vsyncadd [#allocation5], %s28
      %s30 = sshll.u32 [#allocation4], 4
      %s31 = int_to_ptr.vmem [resolvable:$true] %s30
      %36 = dma.hbm_to_vmem [thread:$0]  %s0, 1536, %s31, [#allocation5], 384, 384, 24
    $region5: #{tpu_custom_call.1} parent=1 // pred_fallthru
      _
    // Predicated region
    $region6: #{tpu_custom_call.1} parent=1 // pred_check
      _
    $region7: #{tpu_custom_call.1} parent=1 // pred_check_branch
      %38 = sbr.rel (0) target = $region9
    $region8: #{tpu_custom_call.1} parent=1 // pred_region
      %s40 = ssub.s32 27648, 27648
      %41 = vsyncadd [#allocation8], %s40
      %s42 = sshll.u32 [#allocation7], 4
      %s43 = int_to_ptr.vmem [resolvable:$true] %s42
      %48 = dma.hbm_to_vmem [thread:$0]  %s1, 27648, %s43, [#allocation8], 576, 576, 36
    $region9: #{tpu_custom_call.1} parent=1 // pred_fallthru
      _
    // Predicated region
    $region10: #{tpu_custom_call.1} parent=1 // pred_check
      _
    $region11: #{tpu_custom_call.1} parent=1 // pred_check_branch
      %50 = sbr.rel (0) target = $region13
    $region12: #{tpu_custom_call.1} parent=1 // pred_region
      %s52 = ssub.s32 9216, 9216
      %53 = vsyncadd [#allocation8], %s52
      %s54 = sshll.u32 [#allocation9], 4
      %s55 = int_to_ptr.vmem [resolvable:$true] %s54
      %60 = dma.hbm_to_vmem [thread:$0]  %s2, 9216, %s55, [#allocation8], 192, 192, 12
    $region13: #{tpu_custom_call.1} parent=1 // pred_fallthru
      _
    // Predicated region
    $region14: #{tpu_custom_call.1} parent=1 // pred_check
      _
    $region15: #{tpu_custom_call.1} parent=1 // pred_check_branch
      %62 = sbr.rel (0) target = $region17
    $region16: #{tpu_custom_call.1} parent=1 // pred_region
      %s64 = ssub.s32 48, 48
      %65 = vsyncadd [#allocation11], %s64
      %s67 = sshll.u32 [#allocation10], 4
      %s68 = int_to_ptr.vmem [resolvable:$true] %s67
      %70 = dma.hbm_to_vmem [thread:$0]  %s3, 48, %s68, [#allocation11]
    $region17: #{tpu_custom_call.1} parent=1 // pred_fallthru
      _
    // Predicated region
    $region18: #{tpu_custom_call.1} parent=1 // pred_check
      _
    $region19: #{tpu_custom_call.1} parent=1 // pred_check_branch
      %72 = sbr.rel (0) target = $region21
    $region20: #{tpu_custom_call.1} parent=1 // pred_region
      %s74 = ssub.s32 48, 48
      %75 = vsyncadd [#allocation11], %s74
      %s77 = sshll.u32 [#allocation12], 4
      %s78 = int_to_ptr.vmem [resolvable:$true] %s77
      %80 = dma.hbm_to_vmem [thread:$0]  %s4, 48, %s78, [#allocation11]
    $region21: #{tpu_custom_call.1} parent=1 // pred_fallthru
      _
    // Predicated region
    $region22: #{tpu_custom_call.1} parent=1 // pred_check
      _
    $region23: #{tpu_custom_call.1} parent=1 // pred_check_branch
      %82 = sbr.rel (0) target = $region25
    $region24: #{tpu_custom_call.1} parent=1 // pred_region
      %s84 = ssub.s32 48, 48
      %85 = vsyncadd [#allocation14], %s84
      %s87 = sshll.u32 [#allocation13], 4
      %s88 = int_to_ptr.vmem [resolvable:$true] %s87
      %90 = dma.hbm_to_vmem [thread:$0]  %s5, 48, %s88, [#allocation14]
    $region25: #{tpu_custom_call.1} parent=1 // pred_fallthru
      _
    // Predicated region
    $region26: #{tpu_custom_call.1} parent=1 // pred_check
      _
    $region27: #{tpu_custom_call.1} parent=1 // pred_check_branch
      %92 = sbr.rel (0) target = $region29
    $region28: #{tpu_custom_call.1} parent=1 // pred_region
      %s94 = ssub.s32 48, 48
      %95 = vsyncadd [#allocation14], %s94
      %s97 = sshll.u32 [#allocation15], 4
      %s98 = int_to_ptr.vmem [resolvable:$true] %s97
      %100 = dma.hbm_to_vmem [thread:$0]  %s6, 48, %s98, [#allocation14]
    $region29: #{tpu_custom_call.1} parent=1 // pred_fallthru
      _
    // Predicated region
    $region30: #{tpu_custom_call.1} parent=1 // pred_check
      _
    $region31: #{tpu_custom_call.1} parent=1 // pred_check_branch
      %102 = sbr.rel (0) target = $region33
    $region32: #{tpu_custom_call.1} parent=1 // pred_region
      %s104 = ssub.s32 48, 48
      %105 = vsyncadd [#allocation17], %s104
      %s107 = sshll.u32 [#allocation16], 4
      %s108 = int_to_ptr.vmem [resolvable:$true] %s107
      %110 = dma.hbm_to_vmem [thread:$0]  %s7, 48, %s108, [#allocation17]
    $region33: #{tpu_custom_call.1} parent=1 // pred_fallthru
      _
    // Predicated region
    $region34: #{tpu_custom_call.1} parent=1 // pred_check
      _
    $region35: #{tpu_custom_call.1} parent=1 // pred_check_branch
      %112 = sbr.rel (0) target = $region37
    $region36: #{tpu_custom_call.1} parent=1 // pred_region
      %s114 = ssub.s32 36864, 36864
      %115 = vsyncadd [#allocation17], %s114
      %s116 = sshll.u32 [#allocation18], 4
      %s117 = int_to_ptr.vmem [resolvable:$true] %s116
      %122 = dma.hbm_to_vmem [thread:$0]  %s8, 36864, %s117, [#allocation17], 768, 768, 48
    $region37: #{tpu_custom_call.1} parent=1 // pred_fallthru
      _
    // Predicated region
    $region38: #{tpu_custom_call.1} parent=1 // pred_check
      _
    $region39: #{tpu_custom_call.1} parent=1 // pred_check_branch
      %124 = sbr.rel (0) target = $region41
    $region40: #{tpu_custom_call.1} parent=1 // pred_region
      %s126 = ssub.s32 192, 192
      %127 = vsyncadd [#allocation20], %s126
      %s129 = sshll.u32 [#allocation19], 4
      %s130 = int_to_ptr.vmem [resolvable:$true] %s129
      %132 = dma.hbm_to_vmem [thread:$0]  %s9, 192, %s130, [#allocation20]
    $region41: #{tpu_custom_call.1} parent=1 // pred_fallthru
      _
    // Predicated region
    $region42: #{tpu_custom_call.1} parent=1 // pred_check
      _
    $region43: #{tpu_custom_call.1} parent=1 // pred_check_branch
      %134 = sbr.rel (0) target = $region45
    $region44: #{tpu_custom_call.1} parent=1 // pred_region
      %s136 = ssub.s32 36864, 36864
      %137 = vsyncadd [#allocation20], %s136
      %s138 = sshll.u32 [#allocation21], 4
      %s139 = int_to_ptr.vmem [resolvable:$true] %s138
      %144 = dma.hbm_to_vmem [thread:$0]  %s10, 36864, %s139, [#allocation20], 192, 192, 12
    $region45: #{tpu_custom_call.1} parent=1 // pred_fallthru
      _
    // Predicated region
    $region46: #{tpu_custom_call.1} parent=1 // pred_check
      _
    $region47: #{tpu_custom_call.1} parent=1 // pred_check_branch
      %146 = sbr.rel (0) target = $region49
    $region48: #{tpu_custom_call.1} parent=1 // pred_region
      %s148 = ssub.s32 48, 48
      %149 = vsyncadd [#allocation23], %s148
      %s151 = sshll.u32 [#allocation22], 4
      %s152 = int_to_ptr.vmem [resolvable:$true] %s151
      %154 = dma.hbm_to_vmem [thread:$0]  %s11, 48, %s152, [#allocation23]
    $region49: #{tpu_custom_call.1} parent=1 // pred_fallthru
      _
    // Predicated region
    $region50: #{tpu_custom_call.1} parent=1 // pred_check
      _
    $region51: #{tpu_custom_call.1} parent=1 // pred_check_branch
      %156 = sbr.rel (0) target = $region53
    $region52: #{tpu_custom_call.1} parent=1 // pred_region
      %157 = dma.done [#allocation5], 1536
    $region53: #{tpu_custom_call.1} parent=1 // pred_fallthru
      _
    // Predicated region
    $region54: #{tpu_custom_call.1} parent=1 // pred_check
      _
    $region55: #{tpu_custom_call.1} parent=1 // pred_check_branch
      %159 = sbr.rel (0) target = $region57
    $region56: #{tpu_custom_call.1} parent=1 // pred_region
      %160 = dma.done [#allocation8], 27648
    $region57: #{tpu_custom_call.1} parent=1 // pred_fallthru
      _
    // Predicated region
    $region58: #{tpu_custom_call.1} parent=1 // pred_check
      _
    $region59: #{tpu_custom_call.1} parent=1 // pred_check_branch
      %162 = sbr.rel (0) target = $region61
    $region60: #{tpu_custom_call.1} parent=1 // pred_region
      %163 = dma.done [#allocation8], 9216
    $region61: #{tpu_custom_call.1} parent=1 // pred_fallthru
      _
    // Predicated region
    $region62: #{tpu_custom_call.1} parent=1 // pred_check
      _
    $region63: #{tpu_custom_call.1} parent=1 // pred_check_branch
      %165 = sbr.rel (0) target = $region65
    $region64: #{tpu_custom_call.1} parent=1 // pred_region
      %166 = dma.done [#allocation11], 48
    $region65: #{tpu_custom_call.1} parent=1 // pred_fallthru
      _
    // Predicated region
    $region66: #{tpu_custom_call.1} parent=1 // pred_check
      _
    $region67: #{tpu_custom_call.1} parent=1 // pred_check_branch
      %168 = sbr.rel (0) target = $region69
    $region68: #{tpu_custom_call.1} parent=1 // pred_region
      %169 = dma.done [#allocation11], 48
    $region69: #{tpu_custom_call.1} parent=1 // pred_fallthru
      _
    // Predicated region
    $region70: #{tpu_custom_call.1} parent=1 // pred_check
      _
    $region71: #{tpu_custom_call.1} parent=1 // pred_check_branch
      %171 = sbr.rel (0) target = $region73
    $region72: #{tpu_custom_call.1} parent=1 // pred_region
      %172 = dma.done [#allocation14], 48
    $region73: #{tpu_custom_call.1} parent=1 // pred_fallthru
      _
    // Predicated region
    $region74: #{tpu_custom_call.1} parent=1 // pred_check
      _
    $region75: #{tpu_custom_call.1} parent=1 // pred_check_branch
      %174 = sbr.rel (0) target = $region77
    $region76: #{tpu_custom_call.1} parent=1 // pred_region
      %175 = dma.done [#allocation14], 48
    $region77: #{tpu_custom_call.1} parent=1 // pred_fallthru
      _
    // Predicated region
    $region78: #{tpu_custom_call.1} parent=1 // pred_check
      _
    $region79: #{tpu_custom_call.1} parent=1 // pred_check_branch
      %177 = sbr.rel (0) target = $region81
    $region80: #{tpu_custom_call.1} parent=1 // pred_region
      %178 = dma.done [#allocation17], 48
    $region81: #{tpu_custom_call.1} parent=1 // pred_fallthru
      _
    // Predicated region
    $region82: #{tpu_custom_call.1} parent=1 // pred_check
      _
    $region83: #{tpu_custom_call.1} parent=1 // pred_check_branch
      %180 = sbr.rel (0) target = $region85
    $region84: #{tpu_custom_call.1} parent=1 // pred_region
      %181 = dma.done [#allocation17], 36864
    $region85: #{tpu_custom_call.1} parent=1 // pred_fallthru
      _
    // Predicated region
    $region86: #{tpu_custom_call.1} parent=1 // pred_check
      _
    $region87: #{tpu_custom_call.1} parent=1 // pred_check_branch
      %183 = sbr.rel (0) target = $region89
    $region88: #{tpu_custom_call.1} parent=1 // pred_region
      %184 = dma.done [#allocation20], 192
    $region89: #{tpu_custom_call.1} parent=1 // pred_fallthru
      _
    // Predicated region
    $region90: #{tpu_custom_call.1} parent=1 // pred_check
      _
    $region91: #{tpu_custom_call.1} parent=1 // pred_check_branch
      %186 = sbr.rel (0) target = $region93
    $region92: #{tpu_custom_call.1} parent=1 // pred_region
      %187 = dma.done [#allocation20], 36864
    $region93: #{tpu_custom_call.1} parent=1 // pred_fallthru
      _
    // Predicated region
    $region94: #{tpu_custom_call.1} parent=1 // pred_check
      _
    $region95: #{tpu_custom_call.1} parent=1 // pred_check_branch
      %189 = sbr.rel (0) target = $region97
    $region96: #{tpu_custom_call.1} parent=1 // pred_region
      %190 = dma.done [#allocation23], 48
    $region97: #{tpu_custom_call.1} parent=1 // pred_fallthru
      _
    %v192 = vld [vmem:[#allocation4] sm:$0xff]
    %v193 = vld [vmem:[#allocation4 + $0x8] sm:$0xff]
    %v194 = vld [vmem:[#allocation4 + $0x10] sm:$0xff]
    %v195 = vld [vmem:[#allocation4 + $0x18] sm:$0xff]
    %v196 = vld [vmem:[#allocation4 + $0x20] sm:$0xff]
    %v197 = vld [vmem:[#allocation4 + $0x28] sm:$0xff]
    %v198 = vld [vmem:[#allocation4 + $0x30] sm:$0xff]
    %v199 = vld [vmem:[#allocation4 + $0x38] sm:$0xff]
    %v200 = vld [vmem:[#allocation4 + $0x40] sm:$0xff]
    %v201 = vld [vmem:[#allocation4 + $0x48] sm:$0xff]
    %v202 = vld [vmem:[#allocation4 + $0x50] sm:$0xff]
    %v203 = vld [vmem:[#allocation4 + $0x58] sm:$0xff]
    %v204 = vld [vmem:[#allocation12] sm:$0x7]
    %v205 = vld [vmem:[#allocation13] sm:$0x7]
    %v206 = vadd.f32 %v192, %v193
    %v207 = vadd.f32 %v206, %v194
    %208 = vadd.xlane.f32.xlu0 %v207
    %v209 = vpop.xlane.xlu0 %208
    %v210 = vadd.f32 %v195, %v196
    %v211 = vadd.f32 %v210, %v197
    %212 = vadd.xlane.f32.xlu0 %v211
    %v213 = vpop.xlane.xlu0 %212
    %v214 = vadd.f32 %v198, %v199
    %v215 = vadd.f32 %v214, %v200
    %216 = vadd.xlane.f32.xlu0 %v215
    %v217 = vpop.xlane.xlu0 %216
    %v218 = vadd.f32 %v201, %v202
    %v219 = vadd.f32 %v218, %v203
    %220 = vadd.xlane.f32.xlu0 %v219
    %v221 = vpop.xlane.xlu0 %220
    %v222 = vrcp.pop 384.0
    %v223 = vmul.f32 %v209, %v222
    %v224 = vmul.f32 %v213, %v222
    %v225 = vmul.f32 %v217, %v222
    %v226 = vmul.f32 %v221, %v222
    %v227 = vsub.f32 %v192, %v223
    %v228 = vsub.f32 %v193, %v223
    %v229 = vsub.f32 %v194, %v223
    %v230 = vsub.f32 %v195, %v224
    %v231 = vsub.f32 %v196, %v224
    %v232 = vsub.f32 %v197, %v224
    %v233 = vsub.f32 %v198, %v225
    %v234 = vsub.f32 %v199, %v225
    %v235 = vsub.f32 %v200, %v225
    %v236 = vsub.f32 %v201, %v226
    %v237 = vsub.f32 %v202, %v226
    %v238 = vsub.f32 %v203, %v226
    %v239 = vmul.f32 %v227, %v227
    %v240 = vmul.f32 %v228, %v228
    %v241 = vmul.f32 %v229, %v229
    %v242 = vmul.f32 %v230, %v230
    %v243 = vmul.f32 %v231, %v231
    %v244 = vmul.f32 %v232, %v232
    %v245 = vmul.f32 %v233, %v233
    %v246 = vmul.f32 %v234, %v234
    %v247 = vmul.f32 %v235, %v235
    %v248 = vmul.f32 %v236, %v236
    %v249 = vmul.f32 %v237, %v237
    %v250 = vmul.f32 %v238, %v238
    %v251 = vadd.f32 %v239, %v240
    %v252 = vadd.f32 %v251, %v241
    %253 = vadd.xlane.f32.xlu0 %v252
    %v254 = vpop.xlane.xlu0 %253
    %v255 = vadd.f32 %v242, %v243
    %v256 = vadd.f32 %v255, %v244
    %257 = vadd.xlane.f32.xlu0 %v256
    %v258 = vpop.xlane.xlu0 %257
    %v259 = vadd.f32 %v245, %v246
    %v260 = vadd.f32 %v259, %v247
    %261 = vadd.xlane.f32.xlu0 %v260
    %v262 = vpop.xlane.xlu0 %261
    %v263 = vadd.f32 %v248, %v249
    %v264 = vadd.f32 %v263, %v250
    %265 = vadd.xlane.f32.xlu0 %v264
    %v266 = vpop.xlane.xlu0 %265
    %v267 = vmul.f32 %v254, %v222
    %v268 = vmul.f32 %v258, %v222
    %v269 = vmul.f32 %v262, %v222
    %v270 = vmul.f32 %v266, %v222
    %v271 = vadd.f32 %v267, 1e-05
    %v272 = vadd.f32 %v268, 1e-05
    %v273 = vadd.f32 %v269, 1e-05
    %v274 = vadd.f32 %v270, 1e-05
    %v275 = vrsqrt.pop %v271
    %v276 = vrsqrt.pop %v272
    %v277 = vrsqrt.pop %v273
    %v278 = vrsqrt.pop %v274
    %v279 = vmul.f32 %v227, %v275
    %v280 = vmul.f32 %v228, %v275
    %v281 = vmul.f32 %v229, %v275
    %v282 = vmul.f32 %v230, %v276
    %v283 = vmul.f32 %v231, %v276
    %v284 = vmul.f32 %v232, %v276
    %v285 = vmul.f32 %v233, %v277
    %v286 = vmul.f32 %v234, %v277
    %v287 = vmul.f32 %v235, %v277
    %v288 = vmul.f32 %v236, %v278
    %v289 = vmul.f32 %v237, %v278
    %v290 = vmul.f32 %v238, %v278
    %v292 = vlaneseq
    %v293 = vshrl.u32 %v292, 7
    %v294 = vsub.s32 0, %v293
    %v295 = vrot.slane %v204, %v294
    %v296 = vlaneseq
    %v297 = vshrl.u32 %v296, 7
    %v298 = vsub.s32 1, %v297
    %v299 = vrot.slane %v204, %v298
    %v300 = vlaneseq
    %v301 = vshrl.u32 %v300, 7
    %v302 = vsub.s32 2, %v301
    %v303 = vrot.slane %v204, %v302
    %v307 = vmul.f32 %v279, %v295
    %v308 = vmul.f32 %v280, %v299
    %v309 = vmul.f32 %v281, %v303
    %v310 = vmul.f32 %v282, %v295
    %v311 = vmul.f32 %v283, %v299
    %v312 = vmul.f32 %v284, %v303
    %v313 = vmul.f32 %v285, %v295
    %v314 = vmul.f32 %v286, %v299
    %v315 = vmul.f32 %v287, %v303
    %v316 = vmul.f32 %v288, %v295
    %v317 = vmul.f32 %v289, %v299
    %v318 = vmul.f32 %v290, %v303
    %v320 = vlaneseq
    %v321 = vshrl.u32 %v320, 7
    %v322 = vsub.s32 0, %v321
    %v323 = vrot.slane %v205, %v322
    %v324 = vlaneseq
    %v325 = vshrl.u32 %v324, 7
    %v326 = vsub.s32 1, %v325
    %v327 = vrot.slane %v205, %v326
    %v328 = vlaneseq
    %v329 = vshrl.u32 %v328, 7
    %v330 = vsub.s32 2, %v329
    %v331 = vrot.slane %v205, %v330
    %v335 = vadd.f32 %v307, %v323
    %v336 = vadd.f32 %v308, %v327
    %v337 = vadd.f32 %v309, %v331
    %v338 = vadd.f32 %v310, %v323
    %v339 = vadd.f32 %v311, %v327
    %v340 = vadd.f32 %v312, %v331
    %v341 = vadd.f32 %v313, %v323
    %v342 = vadd.f32 %v314, %v327
    %v343 = vadd.f32 %v315, %v331
    %v344 = vadd.f32 %v316, %v323
    %v345 = vadd.f32 %v317, %v327
    %v346 = vadd.f32 %v318, %v331
    %v347 = vpack.c.bf16 %v338, %v335
    %v348 = vpack.c.bf16 %v339, %v336
    %v349 = vpack.c.bf16 %v340, %v337
    %v350 = vpack.c.bf16 %v344, %v341
    %v351 = vpack.c.bf16 %v345, %v342
    %v352 = vpack.c.bf16 %v346, %v343
    %v353 = vld [vmem:[#allocation7] sm:$0xff]
    %v354 = vld [vmem:[#allocation7 + $0x8] sm:$0xff]
    %v355 = vld [vmem:[#allocation7 + $0x10] sm:$0xff]
    %v356 = vld [vmem:[#allocation7 + $0x18] sm:$0xff]
    %v357 = vld [vmem:[#allocation7 + $0x20] sm:$0xf]
    %v358 = vld [vmem:[#allocation7 + $0x24] sm:$0xff]
    %v359 = vld [vmem:[#allocation7 + $0x2c] sm:$0xff]
    %v360 = vld [vmem:[#allocation7 + $0x34] sm:$0xff]
    %v361 = vld [vmem:[#allocation7 + $0x3c] sm:$0xff]
    %v362 = vld [vmem:[#allocation7 + $0x44] sm:$0xf]
    %v363 = vld [vmem:[#allocation7 + $0x48] sm:$0xff]
    %v364 = vld [vmem:[#allocation7 + $0x50] sm:$0xff]
    %v365 = vld [vmem:[#allocation7 + $0x58] sm:$0xff]
    %v366 = vld [vmem:[#allocation7 + $0x60] sm:$0xff]
    %v367 = vld [vmem:[#allocation7 + $0x68] sm:$0xf]
    %v368 = vld [vmem:[#allocation7 + $0x6c] sm:$0xff]
    %v369 = vld [vmem:[#allocation7 + $0x74] sm:$0xff]
    %v370 = vld [vmem:[#allocation7 + $0x7c] sm:$0xff]
    %v371 = vld [vmem:[#allocation7 + $0x84] sm:$0xff]
    %v372 = vld [vmem:[#allocation7 + $0x8c] sm:$0xf]
    %v373 = vld [vmem:[#allocation7 + $0x90] sm:$0xff]
    %v374 = vld [vmem:[#allocation7 + $0x98] sm:$0xff]
    %v375 = vld [vmem:[#allocation7 + $0xa0] sm:$0xff]
    %v376 = vld [vmem:[#allocation7 + $0xa8] sm:$0xff]
    %v377 = vld [vmem:[#allocation7 + $0xb0] sm:$0xf]
    %v378 = vld [vmem:[#allocation7 + $0xb4] sm:$0xff]
    %v379 = vld [vmem:[#allocation7 + $0xbc] sm:$0xff]
    %v380 = vld [vmem:[#allocation7 + $0xc4] sm:$0xff]
    %v381 = vld [vmem:[#allocation7 + $0xcc] sm:$0xff]
    %v382 = vld [vmem:[#allocation7 + $0xd4] sm:$0xf]
    %v383 = vld [vmem:[#allocation7 + $0xd8] sm:$0xff]
    %v384 = vld [vmem:[#allocation7 + $0xe0] sm:$0xff]
    %v385 = vld [vmem:[#allocation7 + $0xe8] sm:$0xff]
    %v386 = vld [vmem:[#allocation7 + $0xf0] sm:$0xff]
    %v387 = vld [vmem:[#allocation7 + $0xf8] sm:$0xf]
    %v388 = vld [vmem:[#allocation7 + $0xfc] sm:$0xff]
    %v389 = vld [vmem:[#allocation7 + $0x104] sm:$0xff]
    %v390 = vld [vmem:[#allocation7 + $0x10c] sm:$0xff]
    %v391 = vld [vmem:[#allocation7 + $0x114] sm:$0xff]
    %v392 = vld [vmem:[#allocation7 + $0x11c] sm:$0xf]
    %v393 = vld [vmem:[#allocation7 + $0x120] sm:$0xff]
    %v394 = vld [vmem:[#allocation7 + $0x128] sm:$0xff]
    %v395 = vld [vmem:[#allocation7 + $0x130] sm:$0xff]
    %v396 = vld [vmem:[#allocation7 + $0x138] sm:$0xff]
    %v397 = vld [vmem:[#allocation7 + $0x140] sm:$0xf]
    %v398 = vld [vmem:[#allocation7 + $0x144] sm:$0xff]
    %v399 = vld [vmem:[#allocation7 + $0x14c] sm:$0xff]
    %v400 = vld [vmem:[#allocation7 + $0x154] sm:$0xff]
    %v401 = vld [vmem:[#allocation7 + $0x15c] sm:$0xff]
    %v402 = vld [vmem:[#allocation7 + $0x164] sm:$0xf]
    %v403 = vld [vmem:[#allocation7 + $0x168] sm:$0xff]
    %v404 = vld [vmem:[#allocation7 + $0x170] sm:$0xff]
    %v405 = vld [vmem:[#allocation7 + $0x178] sm:$0xff]
    %v406 = vld [vmem:[#allocation7 + $0x180] sm:$0xff]
    %v407 = vld [vmem:[#allocation7 + $0x188] sm:$0xf]
    %v408 = vld [vmem:[#allocation7 + $0x18c] sm:$0xff]
    %v409 = vld [vmem:[#allocation7 + $0x194] sm:$0xff]
    %v410 = vld [vmem:[#allocation7 + $0x19c] sm:$0xff]
    %v411 = vld [vmem:[#allocation7 + $0x1a4] sm:$0xff]
    %v412 = vld [vmem:[#allocation7 + $0x1ac] sm:$0xf]
    %v413 = vld [vmem:[#allocation7 + $0x1b0] sm:$0xff]
    %v414 = vld [vmem:[#allocation7 + $0x1b8] sm:$0xff]
    %v415 = vld [vmem:[#allocation7 + $0x1c0] sm:$0xff]
    %v416 = vld [vmem:[#allocation7 + $0x1c8] sm:$0xff]
    %v417 = vld [vmem:[#allocation7 + $0x1d0] sm:$0xf]
    %v418 = vld [vmem:[#allocation7 + $0x1d4] sm:$0xff]
    %v419 = vld [vmem:[#allocation7 + $0x1dc] sm:$0xff]
    %v420 = vld [vmem:[#allocation7 + $0x1e4] sm:$0xff]
    %v421 = vld [vmem:[#allocation7 + $0x1ec] sm:$0xff]
    %v422 = vld [vmem:[#allocation7 + $0x1f4] sm:$0xf]
    %v423 = vld [vmem:[#allocation7 + $0x1f8] sm:$0xff]
    %v424 = vld [vmem:[#allocation7 + $0x200] sm:$0xff]
    %v425 = vld [vmem:[#allocation7 + $0x208] sm:$0xff]
    %v426 = vld [vmem:[#allocation7 + $0x210] sm:$0xff]
    %v427 = vld [vmem:[#allocation7 + $0x218] sm:$0xf]
    %v428 = vld [vmem:[#allocation7 + $0x21c] sm:$0xff]
    %v429 = vld [vmem:[#allocation7 + $0x224] sm:$0xff]
    %v430 = vld [vmem:[#allocation7 + $0x22c] sm:$0xff]
    %v431 = vld [vmem:[#allocation7 + $0x234] sm:$0xff]
    %v432 = vld [vmem:[#allocation7 + $0x23c] sm:$0xf]
    %v433 = vld [vmem:[#allocation7 + $0x240] sm:$0xff]
    %v434 = vld [vmem:[#allocation7 + $0x248] sm:$0xff]
    %v435 = vld [vmem:[#allocation7 + $0x250] sm:$0xff]
    %v436 = vld [vmem:[#allocation7 + $0x258] sm:$0xff]
    %v437 = vld [vmem:[#allocation7 + $0x260] sm:$0xf]
    %v438 = vld [vmem:[#allocation7 + $0x264] sm:$0xff]
    %v439 = vld [vmem:[#allocation7 + $0x26c] sm:$0xff]
    %v440 = vld [vmem:[#allocation7 + $0x274] sm:$0xff]
    %v441 = vld [vmem:[#allocation7 + $0x27c] sm:$0xff]
    %v442 = vld [vmem:[#allocation7 + $0x284] sm:$0xf]
    %v443 = vld [vmem:[#allocation7 + $0x288] sm:$0xff]
    %v444 = vld [vmem:[#allocation7 + $0x290] sm:$0xff]
    %v445 = vld [vmem:[#allocation7 + $0x298] sm:$0xff]
    %v446 = vld [vmem:[#allocation7 + $0x2a0] sm:$0xff]
    %v447 = vld [vmem:[#allocation7 + $0x2a8] sm:$0xf]
    %v448 = vld [vmem:[#allocation7 + $0x2ac] sm:$0xff]
    %v449 = vld [vmem:[#allocation7 + $0x2b4] sm:$0xff]
    %v450 = vld [vmem:[#allocation7 + $0x2bc] sm:$0xff]
    %v451 = vld [vmem:[#allocation7 + $0x2c4] sm:$0xff]
    %v452 = vld [vmem:[#allocation7 + $0x2cc] sm:$0xf]
    %v453 = vld [vmem:[#allocation7 + $0x2d0] sm:$0xff]
    %v454 = vld [vmem:[#allocation7 + $0x2d8] sm:$0xff]
    %v455 = vld [vmem:[#allocation7 + $0x2e0] sm:$0xff]
    %v456 = vld [vmem:[#allocation7 + $0x2e8] sm:$0xff]
    %v457 = vld [vmem:[#allocation7 + $0x2f0] sm:$0xf]
    %v458 = vld [vmem:[#allocation7 + $0x2f4] sm:$0xff]
    %v459 = vld [vmem:[#allocation7 + $0x2fc] sm:$0xff]
    %v460 = vld [vmem:[#allocation7 + $0x304] sm:$0xff]
    %v461 = vld [vmem:[#allocation7 + $0x30c] sm:$0xff]
    %v462 = vld [vmem:[#allocation7 + $0x314] sm:$0xf]
    %v463 = vld [vmem:[#allocation7 + $0x318] sm:$0xff]
    %v464 = vld [vmem:[#allocation7 + $0x320] sm:$0xff]
    %v465 = vld [vmem:[#allocation7 + $0x328] sm:$0xff]
    %v466 = vld [vmem:[#allocation7 + $0x330] sm:$0xff]
    %v467 = vld [vmem:[#allocation7 + $0x338] sm:$0xf]
    %v468 = vld [vmem:[#allocation7 + $0x33c] sm:$0xff]
    %v469 = vld [vmem:[#allocation7 + $0x344] sm:$0xff]
    %v470 = vld [vmem:[#allocation7 + $0x34c] sm:$0xff]
    %v471 = vld [vmem:[#allocation7 + $0x354] sm:$0xff]
    %v472 = vld [vmem:[#allocation7 + $0x35c] sm:$0xf]
    %v473 = vld [vmem:[#allocation7 + $0x360] sm:$0xff]
    %v474 = vld [vmem:[#allocation7 + $0x368] sm:$0xff]
    %v475 = vld [vmem:[#allocation7 + $0x370] sm:$0xff]
    %v476 = vld [vmem:[#allocation7 + $0x378] sm:$0xff]
    %v477 = vld [vmem:[#allocation7 + $0x380] sm:$0xf]
    %v478 = vld [vmem:[#allocation7 + $0x384] sm:$0xff]
    %v479 = vld [vmem:[#allocation7 + $0x38c] sm:$0xff]
    %v480 = vld [vmem:[#allocation7 + $0x394] sm:$0xff]
    %v481 = vld [vmem:[#allocation7 + $0x39c] sm:$0xff]
    %v482 = vld [vmem:[#allocation7 + $0x3a4] sm:$0xf]
    %v483 = vld [vmem:[#allocation7 + $0x3a8] sm:$0xff]
    %v484 = vld [vmem:[#allocation7 + $0x3b0] sm:$0xff]
    %v485 = vld [vmem:[#allocation7 + $0x3b8] sm:$0xff]
    %v486 = vld [vmem:[#allocation7 + $0x3c0] sm:$0xff]
    %v487 = vld [vmem:[#allocation7 + $0x3c8] sm:$0xf]
    %v488 = vld [vmem:[#allocation7 + $0x3cc] sm:$0xff]
    %v489 = vld [vmem:[#allocation7 + $0x3d4] sm:$0xff]
    %v490 = vld [vmem:[#allocation7 + $0x3dc] sm:$0xff]
    %v491 = vld [vmem:[#allocation7 + $0x3e4] sm:$0xff]
    %v492 = vld [vmem:[#allocation7 + $0x3ec] sm:$0xf]
    %v493 = vld [vmem:[#allocation7 + $0x3f0] sm:$0xff]
    %v494 = vld [vmem:[#allocation7 + $0x3f8] sm:$0xff]
    %v495 = vld [vmem:[#allocation7 + $0x400] sm:$0xff]
    %v496 = vld [vmem:[#allocation7 + $0x408] sm:$0xff]
    %v497 = vld [vmem:[#allocation7 + $0x410] sm:$0xf]
    %v498 = vld [vmem:[#allocation7 + $0x414] sm:$0xff]
    %v499 = vld [vmem:[#allocation7 + $0x41c] sm:$0xff]
    %v500 = vld [vmem:[#allocation7 + $0x424] sm:$0xff]
    %v501 = vld [vmem:[#allocation7 + $0x42c] sm:$0xff]
    %v502 = vld [vmem:[#allocation7 + $0x434] sm:$0xf]
    %v503 = vld [vmem:[#allocation7 + $0x438] sm:$0xff]
    %v504 = vld [vmem:[#allocation7 + $0x440] sm:$0xff]
    %v505 = vld [vmem:[#allocation7 + $0x448] sm:$0xff]
    %v506 = vld [vmem:[#allocation7 + $0x450] sm:$0xff]
    %v507 = vld [vmem:[#allocation7 + $0x458] sm:$0xf]
    %v508 = vld [vmem:[#allocation7 + $0x45c] sm:$0xff]
    %v509 = vld [vmem:[#allocation7 + $0x464] sm:$0xff]
    %v510 = vld [vmem:[#allocation7 + $0x46c] sm:$0xff]
    %v511 = vld [vmem:[#allocation7 + $0x474] sm:$0xff]
    %v512 = vld [vmem:[#allocation7 + $0x47c] sm:$0xf]
    %v513 = vld [vmem:[#allocation7 + $0x480] sm:$0xff]
    %v514 = vld [vmem:[#allocation7 + $0x488] sm:$0xff]
    %v515 = vld [vmem:[#allocation7 + $0x490] sm:$0xff]
    %v516 = vld [vmem:[#allocation7 + $0x498] sm:$0xff]
    %v517 = vld [vmem:[#allocation7 + $0x4a0] sm:$0xf]
    %v518 = vld [vmem:[#allocation7 + $0x4a4] sm:$0xff]
    %v519 = vld [vmem:[#allocation7 + $0x4ac] sm:$0xff]
    %v520 = vld [vmem:[#allocation7 + $0x4b4] sm:$0xff]
    %v521 = vld [vmem:[#allocation7 + $0x4bc] sm:$0xff]
    %v522 = vld [vmem:[#allocation7 + $0x4c4] sm:$0xf]
    %v523 = vld [vmem:[#allocation7 + $0x4c8] sm:$0xff]
    %v524 = vld [vmem:[#allocation7 + $0x4d0] sm:$0xff]
    %v525 = vld [vmem:[#allocation7 + $0x4d8] sm:$0xff]
    %v526 = vld [vmem:[#allocation7 + $0x4e0] sm:$0xff]
    %v527 = vld [vmem:[#allocation7 + $0x4e8] sm:$0xf]
    %v528 = vld [vmem:[#allocation7 + $0x4ec] sm:$0xff]
    %v529 = vld [vmem:[#allocation7 + $0x4f4] sm:$0xff]
    %v530 = vld [vmem:[#allocation7 + $0x4fc] sm:$0xff]
    %v531 = vld [vmem:[#allocation7 + $0x504] sm:$0xff]
    %v532 = vld [vmem:[#allocation7 + $0x50c] sm:$0xf]
    %v533 = vld [vmem:[#allocation7 + $0x510] sm:$0xff]
    %v534 = vld [vmem:[#allocation7 + $0x518] sm:$0xff]
    %v535 = vld [vmem:[#allocation7 + $0x520] sm:$0xff]
    %v536 = vld [vmem:[#allocation7 + $0x528] sm:$0xff]
    %v537 = vld [vmem:[#allocation7 + $0x530] sm:$0xf]
    %v538 = vld [vmem:[#allocation7 + $0x534] sm:$0xff]
    %v539 = vld [vmem:[#allocation7 + $0x53c] sm:$0xff]
    %v540 = vld [vmem:[#allocation7 + $0x544] sm:$0xff]
    %v541 = vld [vmem:[#allocation7 + $0x54c] sm:$0xff]
    %v542 = vld [vmem:[#allocation7 + $0x554] sm:$0xf]
    %v543 = vld [vmem:[#allocation7 + $0x558] sm:$0xff]
    %v544 = vld [vmem:[#allocation7 + $0x560] sm:$0xff]
    %v545 = vld [vmem:[#allocation7 + $0x568] sm:$0xff]
    %v546 = vld [vmem:[#allocation7 + $0x570] sm:$0xff]
    %v547 = vld [vmem:[#allocation7 + $0x578] sm:$0xf]
    %v548 = vld [vmem:[#allocation7 + $0x57c] sm:$0xff]
    %v549 = vld [vmem:[#allocation7 + $0x584] sm:$0xff]
    %v550 = vld [vmem:[#allocation7 + $0x58c] sm:$0xff]
    %v551 = vld [vmem:[#allocation7 + $0x594] sm:$0xff]
    %v552 = vld [vmem:[#allocation7 + $0x59c] sm:$0xf]
    %v553 = vld [vmem:[#allocation7 + $0x5a0] sm:$0xff]
    %v554 = vld [vmem:[#allocation7 + $0x5a8] sm:$0xff]
    %v555 = vld [vmem:[#allocation7 + $0x5b0] sm:$0xff]
    %v556 = vld [vmem:[#allocation7 + $0x5b8] sm:$0xff]
    %v557 = vld [vmem:[#allocation7 + $0x5c0] sm:$0xf]
    %v558 = vld [vmem:[#allocation7 + $0x5c4] sm:$0xff]
    %v559 = vld [vmem:[#allocation7 + $0x5cc] sm:$0xff]
    %v560 = vld [vmem:[#allocation7 + $0x5d4] sm:$0xff]
    %v561 = vld [vmem:[#allocation7 + $0x5dc] sm:$0xff]
    %v562 = vld [vmem:[#allocation7 + $0x5e4] sm:$0xf]
    %v563 = vld [vmem:[#allocation7 + $0x5e8] sm:$0xff]
    %v564 = vld [vmem:[#allocation7 + $0x5f0] sm:$0xff]
    %v565 = vld [vmem:[#allocation7 + $0x5f8] sm:$0xff]
    %v566 = vld [vmem:[#allocation7 + $0x600] sm:$0xff]
    %v567 = vld [vmem:[#allocation7 + $0x608] sm:$0xf]
    %v568 = vld [vmem:[#allocation7 + $0x60c] sm:$0xff]
    %v569 = vld [vmem:[#allocation7 + $0x614] sm:$0xff]
    %v570 = vld [vmem:[#allocation7 + $0x61c] sm:$0xff]
    %v571 = vld [vmem:[#allocation7 + $0x624] sm:$0xff]
    %v572 = vld [vmem:[#allocation7 + $0x62c] sm:$0xf]
    %v573 = vld [vmem:[#allocation7 + $0x630] sm:$0xff]
    %v574 = vld [vmem:[#allocation7 + $0x638] sm:$0xff]
    %v575 = vld [vmem:[#allocation7 + $0x640] sm:$0xff]
    %v576 = vld [vmem:[#allocation7 + $0x648] sm:$0xff]
    %v577 = vld [vmem:[#allocation7 + $0x650] sm:$0xf]
    %v578 = vld [vmem:[#allocation7 + $0x654] sm:$0xff]
    %v579 = vld [vmem:[#allocation7 + $0x65c] sm:$0xff]
    %v580 = vld [vmem:[#allocation7 + $0x664] sm:$0xff]
    %v581 = vld [vmem:[#allocation7 + $0x66c] sm:$0xff]
    %v582 = vld [vmem:[#allocation7 + $0x674] sm:$0xf]
    %v583 = vld [vmem:[#allocation7 + $0x678] sm:$0xff]
    %v584 = vld [vmem:[#allocation7 + $0x680] sm:$0xff]
    %v585 = vld [vmem:[#allocation7 + $0x688] sm:$0xff]
    %v586 = vld [vmem:[#allocation7 + $0x690] sm:$0xff]
    %v587 = vld [vmem:[#allocation7 + $0x698] sm:$0xf]
    %v588 = vld [vmem:[#allocation7 + $0x69c] sm:$0xff]
    %v589 = vld [vmem:[#allocation7 + $0x6a4] sm:$0xff]
    %v590 = vld [vmem:[#allocation7 + $0x6ac] sm:$0xff]
    %v591 = vld [vmem:[#allocation7 + $0x6b4] sm:$0xff]
    %v592 = vld [vmem:[#allocation7 + $0x6bc] sm:$0xf]
    %v833 = vunpack.c.l.b16 %v353
    %v834 = vunpack.c.h.b16 %v353
    %v835 = vunpack.c.l.b16 %v354
    %v836 = vunpack.c.h.b16 %v354
    %v837 = vunpack.c.l.b16 %v355
    %v838 = vunpack.c.h.b16 %v355
    %v839 = vunpack.c.l.b16 %v356
    %v840 = vunpack.c.h.b16 %v356
    %v841 = vunpack.c.l.b16 %v357
    %v842 = vunpack.c.l.b16 %v358
    %v843 = vunpack.c.h.b16 %v358
    %v844 = vunpack.c.l.b16 %v359
    %v845 = vunpack.c.h.b16 %v359
    %v846 = vunpack.c.l.b16 %v360
    %v847 = vunpack.c.h.b16 %v360
    %v848 = vunpack.c.l.b16 %v361
    %v849 = vunpack.c.h.b16 %v361
    %v850 = vunpack.c.l.b16 %v362
    %v851 = vunpack.c.l.b16 %v363
    %v852 = vunpack.c.h.b16 %v363
    %v853 = vunpack.c.l.b16 %v364
    %v854 = vunpack.c.h.b16 %v364
    %v855 = vunpack.c.l.b16 %v365
    %v856 = vunpack.c.h.b16 %v365
    %v857 = vunpack.c.l.b16 %v366
    %v858 = vunpack.c.h.b16 %v366
    %v859 = vunpack.c.l.b16 %v367
    %v860 = vunpack.c.l.b16 %v368
    %v861 = vunpack.c.h.b16 %v368
    %v862 = vunpack.c.l.b16 %v369
    %v863 = vunpack.c.h.b16 %v369
    %v864 = vunpack.c.l.b16 %v370
    %v865 = vunpack.c.h.b16 %v370
    %v866 = vunpack.c.l.b16 %v371
    %v867 = vunpack.c.h.b16 %v371
    %v868 = vunpack.c.l.b16 %v372
    %v869 = vunpack.c.l.b16 %v373
    %v870 = vunpack.c.h.b16 %v373
    %v871 = vunpack.c.l.b16 %v374
    %v872 = vunpack.c.h.b16 %v374
    %v873 = vunpack.c.l.b16 %v375
    %v874 = vunpack.c.h.b16 %v375
    %v875 = vunpack.c.l.b16 %v376
    %v876 = vunpack.c.h.b16 %v376
    %v877 = vunpack.c.l.b16 %v377
    %v878 = vunpack.c.l.b16 %v378
    %v879 = vunpack.c.h.b16 %v378
    %v880 = vunpack.c.l.b16 %v379
    %v881 = vunpack.c.h.b16 %v379
    %v882 = vunpack.c.l.b16 %v380
    %v883 = vunpack.c.h.b16 %v380
    %v884 = vunpack.c.l.b16 %v381
    %v885 = vunpack.c.h.b16 %v381
    %v886 = vunpack.c.l.b16 %v382
    %v887 = vunpack.c.l.b16 %v383
    %v888 = vunpack.c.h.b16 %v383
    %v889 = vunpack.c.l.b16 %v384
    %v890 = vunpack.c.h.b16 %v384
    %v891 = vunpack.c.l.b16 %v385
    %v892 = vunpack.c.h.b16 %v385
    %v893 = vunpack.c.l.b16 %v386
    %v894 = vunpack.c.h.b16 %v386
    %v895 = vunpack.c.l.b16 %v387
    %v896 = vunpack.c.l.b16 %v388
    %v897 = vunpack.c.h.b16 %v388
    %v898 = vunpack.c.l.b16 %v389
    %v899 = vunpack.c.h.b16 %v389
    %v900 = vunpack.c.l.b16 %v390
    %v901 = vunpack.c.h.b16 %v390
    %v902 = vunpack.c.l.b16 %v391
    %v903 = vunpack.c.h.b16 %v391
    %v904 = vunpack.c.l.b16 %v392
    %v905 = vunpack.c.l.b16 %v393
    %v906 = vunpack.c.h.b16 %v393
    %v907 = vunpack.c.l.b16 %v394
    %v908 = vunpack.c.h.b16 %v394
    %v909 = vunpack.c.l.b16 %v395
    %v910 = vunpack.c.h.b16 %v395
    %v911 = vunpack.c.l.b16 %v396
    %v912 = vunpack.c.h.b16 %v396
    %v913 = vunpack.c.l.b16 %v397
    %v914 = vunpack.c.l.b16 %v398
    %v915 = vunpack.c.h.b16 %v398
    %v916 = vunpack.c.l.b16 %v399
    %v917 = vunpack.c.h.b16 %v399
    %v918 = vunpack.c.l.b16 %v400
    %v919 = vunpack.c.h.b16 %v400
    %v920 = vunpack.c.l.b16 %v401
    %v921 = vunpack.c.h.b16 %v401
    %v922 = vunpack.c.l.b16 %v402
    %v923 = vunpack.c.l.b16 %v403
    %v924 = vunpack.c.h.b16 %v403
    %v925 = vunpack.c.l.b16 %v404
    %v926 = vunpack.c.h.b16 %v404
    %v927 = vunpack.c.l.b16 %v405
    %v928 = vunpack.c.h.b16 %v405
    %v929 = vunpack.c.l.b16 %v406
    %v930 = vunpack.c.h.b16 %v406
    %v931 = vunpack.c.l.b16 %v407
    %v932 = vunpack.c.l.b16 %v408
    %v933 = vunpack.c.h.b16 %v408
    %v934 = vunpack.c.l.b16 %v409
    %v935 = vunpack.c.h.b16 %v409
    %v936 = vunpack.c.l.b16 %v410
    %v937 = vunpack.c.h.b16 %v410
    %v938 = vunpack.c.l.b16 %v411
    %v939 = vunpack.c.h.b16 %v411
    %v940 = vunpack.c.l.b16 %v412
    %v941 = vunpack.c.l.b16 %v413
    %v942 = vunpack.c.h.b16 %v413
    %v943 = vunpack.c.l.b16 %v414
    %v944 = vunpack.c.h.b16 %v414
    %v945 = vunpack.c.l.b16 %v415
    %v946 = vunpack.c.h.b16 %v415
    %v947 = vunpack.c.l.b16 %v416
    %v948 = vunpack.c.h.b16 %v416
    %v949 = vunpack.c.l.b16 %v417
    %v950 = vunpack.c.l.b16 %v418
    %v951 = vunpack.c.h.b16 %v418
    %v952 = vunpack.c.l.b16 %v419
    %v953 = vunpack.c.h.b16 %v419
    %v954 = vunpack.c.l.b16 %v420
    %v955 = vunpack.c.h.b16 %v420
    %v956 = vunpack.c.l.b16 %v421
    %v957 = vunpack.c.h.b16 %v421
    %v958 = vunpack.c.l.b16 %v422
    %v959 = vunpack.c.l.b16 %v423
    %v960 = vunpack.c.h.b16 %v423
    %v961 = vunpack.c.l.b16 %v424
    %v962 = vunpack.c.h.b16 %v424
    %v963 = vunpack.c.l.b16 %v425
    %v964 = vunpack.c.h.b16 %v425
    %v965 = vunpack.c.l.b16 %v426
    %v966 = vunpack.c.h.b16 %v426
    %v967 = vunpack.c.l.b16 %v427
    %v968 = vunpack.c.l.b16 %v428
    %v969 = vunpack.c.h.b16 %v428
    %v970 = vunpack.c.l.b16 %v429
    %v971 = vunpack.c.h.b16 %v429
    %v972 = vunpack.c.l.b16 %v430
    %v973 = vunpack.c.h.b16 %v430
    %v974 = vunpack.c.l.b16 %v431
    %v975 = vunpack.c.h.b16 %v431
    %v976 = vunpack.c.l.b16 %v432
    %v977 = vunpack.c.l.b16 %v433
    %v978 = vunpack.c.h.b16 %v433
    %v979 = vunpack.c.l.b16 %v434
    %v980 = vunpack.c.h.b16 %v434
    %v981 = vunpack.c.l.b16 %v435
    %v982 = vunpack.c.h.b16 %v435
    %v983 = vunpack.c.l.b16 %v436
    %v984 = vunpack.c.h.b16 %v436
    %v985 = vunpack.c.l.b16 %v437
    %v986 = vunpack.c.l.b16 %v438
    %v987 = vunpack.c.h.b16 %v438
    %v988 = vunpack.c.l.b16 %v439
    %v989 = vunpack.c.h.b16 %v439
    %v990 = vunpack.c.l.b16 %v440
    %v991 = vunpack.c.h.b16 %v440
    %v992 = vunpack.c.l.b16 %v441
    %v993 = vunpack.c.h.b16 %v441
    %v994 = vunpack.c.l.b16 %v442
    %v995 = vunpack.c.l.b16 %v443
    %v996 = vunpack.c.h.b16 %v443
    %v997 = vunpack.c.l.b16 %v444
    %v998 = vunpack.c.h.b16 %v444
    %v999 = vunpack.c.l.b16 %v445
    %v1000 = vunpack.c.h.b16 %v445
    %v1001 = vunpack.c.l.b16 %v446
    %v1002 = vunpack.c.h.b16 %v446
    %v1003 = vunpack.c.l.b16 %v447
    %v1004 = vunpack.c.l.b16 %v448
    %v1005 = vunpack.c.h.b16 %v448
    %v1006 = vunpack.c.l.b16 %v449
    %v1007 = vunpack.c.h.b16 %v449
    %v1008 = vunpack.c.l.b16 %v450
    %v1009 = vunpack.c.h.b16 %v450
    %v1010 = vunpack.c.l.b16 %v451
    %v1011 = vunpack.c.h.b16 %v451
    %v1012 = vunpack.c.l.b16 %v452
    %v1013 = vunpack.c.l.b16 %v453
    %v1014 = vunpack.c.h.b16 %v453
    %v1015 = vunpack.c.l.b16 %v454
    %v1016 = vunpack.c.h.b16 %v454
    %v1017 = vunpack.c.l.b16 %v455
    %v1018 = vunpack.c.h.b16 %v455
    %v1019 = vunpack.c.l.b16 %v456
    %v1020 = vunpack.c.h.b16 %v456
    %v1021 = vunpack.c.l.b16 %v457
    %v1022 = vunpack.c.l.b16 %v458
    %v1023 = vunpack.c.h.b16 %v458
    %v1024 = vunpack.c.l.b16 %v459
    %v1025 = vunpack.c.h.b16 %v459
    %v1026 = vunpack.c.l.b16 %v460
    %v1027 = vunpack.c.h.b16 %v460
    %v1028 = vunpack.c.l.b16 %v461
    %v1029 = vunpack.c.h.b16 %v461
    %v1030 = vunpack.c.l.b16 %v462
    %v1031 = vunpack.c.l.b16 %v463
    %v1032 = vunpack.c.h.b16 %v463
    %v1033 = vunpack.c.l.b16 %v464
    %v1034 = vunpack.c.h.b16 %v464
    %v1035 = vunpack.c.l.b16 %v465
    %v1036 = vunpack.c.h.b16 %v465
    %v1037 = vunpack.c.l.b16 %v466
    %v1038 = vunpack.c.h.b16 %v466
    %v1039 = vunpack.c.l.b16 %v467
    %v1040 = vunpack.c.l.b16 %v468
    %v1041 = vunpack.c.h.b16 %v468
    %v1042 = vunpack.c.l.b16 %v469
    %v1043 = vunpack.c.h.b16 %v469
    %v1044 = vunpack.c.l.b16 %v470
    %v1045 = vunpack.c.h.b16 %v470
    %v1046 = vunpack.c.l.b16 %v471
    %v1047 = vunpack.c.h.b16 %v471
    %v1048 = vunpack.c.l.b16 %v472
    %v1049 = vunpack.c.l.b16 %v473
    %v1050 = vunpack.c.h.b16 %v473
    %v1051 = vunpack.c.l.b16 %v474
    %v1052 = vunpack.c.h.b16 %v474
    %v1053 = vunpack.c.l.b16 %v475
    %v1054 = vunpack.c.h.b16 %v475
    %v1055 = vunpack.c.l.b16 %v476
    %v1056 = vunpack.c.h.b16 %v476
    %v1057 = vunpack.c.l.b16 %v477
    %v1058 = vunpack.c.l.b16 %v478
    %v1059 = vunpack.c.h.b16 %v478
    %v1060 = vunpack.c.l.b16 %v479
    %v1061 = vunpack.c.h.b16 %v479
    %v1062 = vunpack.c.l.b16 %v480
    %v1063 = vunpack.c.h.b16 %v480
    %v1064 = vunpack.c.l.b16 %v481
    %v1065 = vunpack.c.h.b16 %v481
    %v1066 = vunpack.c.l.b16 %v482
    %v1067 = vunpack.c.l.b16 %v483
    %v1068 = vunpack.c.h.b16 %v483
    %v1069 = vunpack.c.l.b16 %v484
    %v1070 = vunpack.c.h.b16 %v484
    %v1071 = vunpack.c.l.b16 %v485
    %v1072 = vunpack.c.h.b16 %v485
    %v1073 = vunpack.c.l.b16 %v486
    %v1074 = vunpack.c.h.b16 %v486
    %v1075 = vunpack.c.l.b16 %v487
    %v1076 = vunpack.c.l.b16 %v488
    %v1077 = vunpack.c.h.b16 %v488
    %v1078 = vunpack.c.l.b16 %v489
    %v1079 = vunpack.c.h.b16 %v489
    %v1080 = vunpack.c.l.b16 %v490
    %v1081 = vunpack.c.h.b16 %v490
    %v1082 = vunpack.c.l.b16 %v491
    %v1083 = vunpack.c.h.b16 %v491
    %v1084 = vunpack.c.l.b16 %v492
    %v1085 = vunpack.c.l.b16 %v493
    %v1086 = vunpack.c.h.b16 %v493
    %v1087 = vunpack.c.l.b16 %v494
    %v1088 = vunpack.c.h.b16 %v494
    %v1089 = vunpack.c.l.b16 %v495
    %v1090 = vunpack.c.h.b16 %v495
    %v1091 = vunpack.c.l.b16 %v496
    %v1092 = vunpack.c.h.b16 %v496
    %v1093 = vunpack.c.l.b16 %v497
    %v1094 = vunpack.c.l.b16 %v498
    %v1095 = vunpack.c.h.b16 %v498
    %v1096 = vunpack.c.l.b16 %v499
    %v1097 = vunpack.c.h.b16 %v499
    %v1098 = vunpack.c.l.b16 %v500
    %v1099 = vunpack.c.h.b16 %v500
    %v1100 = vunpack.c.l.b16 %v501
    %v1101 = vunpack.c.h.b16 %v501
    %v1102 = vunpack.c.l.b16 %v502
    %v1103 = vunpack.c.l.b16 %v503
    %v1104 = vunpack.c.h.b16 %v503
    %v1105 = vunpack.c.l.b16 %v504
    %v1106 = vunpack.c.h.b16 %v504
    %v1107 = vunpack.c.l.b16 %v505
    %v1108 = vunpack.c.h.b16 %v505
    %v1109 = vunpack.c.l.b16 %v506
    %v1110 = vunpack.c.h.b16 %v506
    %v1111 = vunpack.c.l.b16 %v507
    %v1112 = vunpack.c.l.b16 %v508
    %v1113 = vunpack.c.h.b16 %v508
    %v1114 = vunpack.c.l.b16 %v509
    %v1115 = vunpack.c.h.b16 %v509
    %v1116 = vunpack.c.l.b16 %v510
    %v1117 = vunpack.c.h.b16 %v510
    %v1118 = vunpack.c.l.b16 %v511
    %v1119 = vunpack.c.h.b16 %v511
    %v1120 = vunpack.c.l.b16 %v512
    %v1121 = vunpack.c.l.b16 %v513
    %v1122 = vunpack.c.h.b16 %v513
    %v1123 = vunpack.c.l.b16 %v514
    %v1124 = vunpack.c.h.b16 %v514
    %v1125 = vunpack.c.l.b16 %v515
    %v1126 = vunpack.c.h.b16 %v515
    %v1127 = vunpack.c.l.b16 %v516
    %v1128 = vunpack.c.h.b16 %v516
    %v1129 = vunpack.c.l.b16 %v517
    %v1130 = vunpack.c.l.b16 %v518
    %v1131 = vunpack.c.h.b16 %v518
    %v1132 = vunpack.c.l.b16 %v519
    %v1133 = vunpack.c.h.b16 %v519
    %v1134 = vunpack.c.l.b16 %v520
    %v1135 = vunpack.c.h.b16 %v520
    %v1136 = vunpack.c.l.b16 %v521
    %v1137 = vunpack.c.h.b16 %v521
    %v1138 = vunpack.c.l.b16 %v522
    %v1139 = vunpack.c.l.b16 %v523
    %v1140 = vunpack.c.h.b16 %v523
    %v1141 = vunpack.c.l.b16 %v524
    %v1142 = vunpack.c.h.b16 %v524
    %v1143 = vunpack.c.l.b16 %v525
    %v1144 = vunpack.c.h.b16 %v525
    %v1145 = vunpack.c.l.b16 %v526
    %v1146 = vunpack.c.h.b16 %v526
    %v1147 = vunpack.c.l.b16 %v527
    %v1148 = vunpack.c.l.b16 %v528
    %v1149 = vunpack.c.h.b16 %v528
    %v1150 = vunpack.c.l.b16 %v529
    %v1151 = vunpack.c.h.b16 %v529
    %v1152 = vunpack.c.l.b16 %v530
    %v1153 = vunpack.c.h.b16 %v530
    %v1154 = vunpack.c.l.b16 %v531
    %v1155 = vunpack.c.h.b16 %v531
    %v1156 = vunpack.c.l.b16 %v532
    %v1157 = vunpack.c.l.b16 %v533
    %v1158 = vunpack.c.h.b16 %v533
    %v1159 = vunpack.c.l.b16 %v534
    %v1160 = vunpack.c.h.b16 %v534
    %v1161 = vunpack.c.l.b16 %v535
    %v1162 = vunpack.c.h.b16 %v535
    %v1163 = vunpack.c.l.b16 %v536
    %v1164 = vunpack.c.h.b16 %v536
    %v1165 = vunpack.c.l.b16 %v537
    %v1166 = vunpack.c.l.b16 %v538
    %v1167 = vunpack.c.h.b16 %v538
    %v1168 = vunpack.c.l.b16 %v539
    %v1169 = vunpack.c.h.b16 %v539
    %v1170 = vunpack.c.l.b16 %v540
    %v1171 = vunpack.c.h.b16 %v540
    %v1172 = vunpack.c.l.b16 %v541
    %v1173 = vunpack.c.h.b16 %v541
    %v1174 = vunpack.c.l.b16 %v542
    %v1175 = vunpack.c.l.b16 %v543
    %v1176 = vunpack.c.h.b16 %v543
    %v1177 = vunpack.c.l.b16 %v544
    %v1178 = vunpack.c.h.b16 %v544
    %v1179 = vunpack.c.l.b16 %v545
    %v1180 = vunpack.c.h.b16 %v545
    %v1181 = vunpack.c.l.b16 %v546
    %v1182 = vunpack.c.h.b16 %v546
    %v1183 = vunpack.c.l.b16 %v547
    %v1184 = vunpack.c.l.b16 %v548
    %v1185 = vunpack.c.h.b16 %v548
    %v1186 = vunpack.c.l.b16 %v549
    %v1187 = vunpack.c.h.b16 %v549
    %v1188 = vunpack.c.l.b16 %v550
    %v1189 = vunpack.c.h.b16 %v550
    %v1190 = vunpack.c.l.b16 %v551
    %v1191 = vunpack.c.h.b16 %v551
    %v1192 = vunpack.c.l.b16 %v552
    %v1193 = vunpack.c.l.b16 %v553
    %v1194 = vunpack.c.h.b16 %v553
    %v1195 = vunpack.c.l.b16 %v554
    %v1196 = vunpack.c.h.b16 %v554
    %v1197 = vunpack.c.l.b16 %v555
    %v1198 = vunpack.c.h.b16 %v555
    %v1199 = vunpack.c.l.b16 %v556
    %v1200 = vunpack.c.h.b16 %v556
    %v1201 = vunpack.c.l.b16 %v557
    %v1202 = vunpack.c.l.b16 %v558
    %v1203 = vunpack.c.h.b16 %v558
    %v1204 = vunpack.c.l.b16 %v559
    %v1205 = vunpack.c.h.b16 %v559
    %v1206 = vunpack.c.l.b16 %v560
    %v1207 = vunpack.c.h.b16 %v560
    %v1208 = vunpack.c.l.b16 %v561
    %v1209 = vunpack.c.h.b16 %v561
    %v1210 = vunpack.c.l.b16 %v562
    %v1211 = vunpack.c.l.b16 %v563
    %v1212 = vunpack.c.h.b16 %v563
    %v1213 = vunpack.c.l.b16 %v564
    %v1214 = vunpack.c.h.b16 %v564
    %v1215 = vunpack.c.l.b16 %v565
    %v1216 = vunpack.c.h.b16 %v565
    %v1217 = vunpack.c.l.b16 %v566
    %v1218 = vunpack.c.h.b16 %v566
    %v1219 = vunpack.c.l.b16 %v567
    %v1220 = vunpack.c.l.b16 %v568
    %v1221 = vunpack.c.h.b16 %v568
    %v1222 = vunpack.c.l.b16 %v569
    %v1223 = vunpack.c.h.b16 %v569
    %v1224 = vunpack.c.l.b16 %v570
    %v1225 = vunpack.c.h.b16 %v570
    %v1226 = vunpack.c.l.b16 %v571
    %v1227 = vunpack.c.h.b16 %v571
    %v1228 = vunpack.c.l.b16 %v572
    %v1229 = vunpack.c.l.b16 %v573
    %v1230 = vunpack.c.h.b16 %v573
    %v1231 = vunpack.c.l.b16 %v574
    %v1232 = vunpack.c.h.b16 %v574
    %v1233 = vunpack.c.l.b16 %v575
    %v1234 = vunpack.c.h.b16 %v575
    %v1235 = vunpack.c.l.b16 %v576
    %v1236 = vunpack.c.h.b16 %v576
    %v1237 = vunpack.c.l.b16 %v577
    %v1238 = vunpack.c.l.b16 %v578
    %v1239 = vunpack.c.h.b16 %v578
    %v1240 = vunpack.c.l.b16 %v579
    %v1241 = vunpack.c.h.b16 %v579
    %v1242 = vunpack.c.l.b16 %v580
    %v1243 = vunpack.c.h.b16 %v580
    %v1244 = vunpack.c.l.b16 %v581
    %v1245 = vunpack.c.h.b16 %v581
    %v1246 = vunpack.c.l.b16 %v582
    %v1247 = vunpack.c.l.b16 %v583
    %v1248 = vunpack.c.h.b16 %v583
    %v1249 = vunpack.c.l.b16 %v584
    %v1250 = vunpack.c.h.b16 %v584
    %v1251 = vunpack.c.l.b16 %v585
    %v1252 = vunpack.c.h.b16 %v585
    %v1253 = vunpack.c.l.b16 %v586
    %v1254 = vunpack.c.h.b16 %v586
    %v1255 = vunpack.c.l.b16 %v587
    %v1256 = vunpack.c.l.b16 %v588
    %v1257 = vunpack.c.h.b16 %v588
    %v1258 = vunpack.c.l.b16 %v589
    %v1259 = vunpack.c.h.b16 %v589
    %v1260 = vunpack.c.l.b16 %v590
    %v1261 = vunpack.c.h.b16 %v590
    %v1262 = vunpack.c.l.b16 %v591
    %v1263 = vunpack.c.h.b16 %v591
    %v1264 = vunpack.c.l.b16 %v592
    %v1265 = vpack.c.b16 %v842, %v833
    %v1266 = vpack.c.b16 %v843, %v834
    %v1267 = vpack.c.b16 %v844, %v835
    %v1268 = vpack.c.b16 %v845, %v836
    %v1269 = vpack.c.b16 %v846, %v837
    %v1270 = vpack.c.b16 %v847, %v838
    %v1271 = vpack.c.b16 %v848, %v839
    %v1272 = vpack.c.b16 %v849, %v840
    %v1273 = vpack.c.b16 %v850, %v841
    %v1274 = vpack.c.b16 %v860, %v851
    %v1275 = vpack.c.b16 %v861, %v852
    %v1276 = vpack.c.b16 %v862, %v853
    %v1277 = vpack.c.b16 %v863, %v854
    %v1278 = vpack.c.b16 %v864, %v855
    %v1279 = vpack.c.b16 %v865, %v856
    %v1280 = vpack.c.b16 %v866, %v857
    %v1281 = vpack.c.b16 %v867, %v858
    %v1282 = vpack.c.b16 %v868, %v859
    %v1283 = vpack.c.b16 %v878, %v869
    %v1284 = vpack.c.b16 %v879, %v870
    %v1285 = vpack.c.b16 %v880, %v871
    %v1286 = vpack.c.b16 %v881, %v872
    %v1287 = vpack.c.b16 %v882, %v873
    %v1288 = vpack.c.b16 %v883, %v874
    %v1289 = vpack.c.b16 %v884, %v875
    %v1290 = vpack.c.b16 %v885, %v876
    %v1291 = vpack.c.b16 %v886, %v877
    %v1292 = vpack.c.b16 %v896, %v887
    %v1293 = vpack.c.b16 %v897, %v888
    %v1294 = vpack.c.b16 %v898, %v889
    %v1295 = vpack.c.b16 %v899, %v890
    %v1296 = vpack.c.b16 %v900, %v891
    %v1297 = vpack.c.b16 %v901, %v892
    %v1298 = vpack.c.b16 %v902, %v893
    %v1299 = vpack.c.b16 %v903, %v894
    %v1300 = vpack.c.b16 %v904, %v895
    %v1301 = vpack.c.b16 %v914, %v905
    %v1302 = vpack.c.b16 %v915, %v906
    %v1303 = vpack.c.b16 %v916, %v907
    %v1304 = vpack.c.b16 %v917, %v908
    %v1305 = vpack.c.b16 %v918, %v909
    %v1306 = vpack.c.b16 %v919, %v910
    %v1307 = vpack.c.b16 %v920, %v911
    %v1308 = vpack.c.b16 %v921, %v912
    %v1309 = vpack.c.b16 %v922, %v913
    %v1310 = vpack.c.b16 %v932, %v923
    %v1311 = vpack.c.b16 %v933, %v924
    %v1312 = vpack.c.b16 %v934, %v925
    %v1313 = vpack.c.b16 %v935, %v926
    %v1314 = vpack.c.b16 %v936, %v927
    %v1315 = vpack.c.b16 %v937, %v928
    %v1316 = vpack.c.b16 %v938, %v929
    %v1317 = vpack.c.b16 %v939, %v930
    %v1318 = vpack.c.b16 %v940, %v931
    %v1319 = vpack.c.b16 %v950, %v941
    %v1320 = vpack.c.b16 %v951, %v942
    %v1321 = vpack.c.b16 %v952, %v943
    %v1322 = vpack.c.b16 %v953, %v944
    %v1323 = vpack.c.b16 %v954, %v945
    %v1324 = vpack.c.b16 %v955, %v946
    %v1325 = vpack.c.b16 %v956, %v947
    %v1326 = vpack.c.b16 %v957, %v948
    %v1327 = vpack.c.b16 %v958, %v949
    %v1328 = vpack.c.b16 %v968, %v959
    %v1329 = vpack.c.b16 %v969, %v960
    %v1330 = vpack.c.b16 %v970, %v961
    %v1331 = vpack.c.b16 %v971, %v962
    %v1332 = vpack.c.b16 %v972, %v963
    %v1333 = vpack.c.b16 %v973, %v964
    %v1334 = vpack.c.b16 %v974, %v965
    %v1335 = vpack.c.b16 %v975, %v966
    %v1336 = vpack.c.b16 %v976, %v967
    %v1337 = vpack.c.b16 %v986, %v977
    %v1338 = vpack.c.b16 %v987, %v978
    %v1339 = vpack.c.b16 %v988, %v979
    %v1340 = vpack.c.b16 %v989, %v980
    %v1341 = vpack.c.b16 %v990, %v981
    %v1342 = vpack.c.b16 %v991, %v982
    %v1343 = vpack.c.b16 %v992, %v983
    %v1344 = vpack.c.b16 %v993, %v984
    %v1345 = vpack.c.b16 %v994, %v985
    %v1346 = vpack.c.b16 %v1004, %v995
    %v1347 = vpack.c.b16 %v1005, %v996
    %v1348 = vpack.c.b16 %v1006, %v997
    %v1349 = vpack.c.b16 %v1007, %v998
    %v1350 = vpack.c.b16 %v1008, %v999
    %v1351 = vpack.c.b16 %v1009, %v1000
    %v1352 = vpack.c.b16 %v1010, %v1001
    %v1353 = vpack.c.b16 %v1011, %v1002
    %v1354 = vpack.c.b16 %v1012, %v1003
    %v1355 = vpack.c.b16 %v1022, %v1013
    %v1356 = vpack.c.b16 %v1023, %v1014
    %v1357 = vpack.c.b16 %v1024, %v1015
    %v1358 = vpack.c.b16 %v1025, %v1016
    %v1359 = vpack.c.b16 %v1026, %v1017
    %v1360 = vpack.c.b16 %v1027, %v1018
    %v1361 = vpack.c.b16 %v1028, %v1019
    %v1362 = vpack.c.b16 %v1029, %v1020
    %v1363 = vpack.c.b16 %v1030, %v1021
    %v1364 = vpack.c.b16 %v1040, %v1031
    %v1365 = vpack.c.b16 %v1041, %v1032
    %v1366 = vpack.c.b16 %v1042, %v1033
    %v1367 = vpack.c.b16 %v1043, %v1034
    %v1368 = vpack.c.b16 %v1044, %v1035
    %v1369 = vpack.c.b16 %v1045, %v1036
    %v1370 = vpack.c.b16 %v1046, %v1037
    %v1371 = vpack.c.b16 %v1047, %v1038
    %v1372 = vpack.c.b16 %v1048, %v1039
    %v1373 = vpack.c.b16 %v1058, %v1049
    %v1374 = vpack.c.b16 %v1059, %v1050
    %v1375 = vpack.c.b16 %v1060, %v1051
    %v1376 = vpack.c.b16 %v1061, %v1052
    %v1377 = vpack.c.b16 %v1062, %v1053
    %v1378 = vpack.c.b16 %v1063, %v1054
    %v1379 = vpack.c.b16 %v1064, %v1055
    %v1380 = vpack.c.b16 %v1065, %v1056
    %v1381 = vpack.c.b16 %v1066, %v1057
    %v1382 = vpack.c.b16 %v1076, %v1067
    %v1383 = vpack.c.b16 %v1077, %v1068
    %v1384 = vpack.c.b16 %v1078, %v1069
    %v1385 = vpack.c.b16 %v1079, %v1070
    %v1386 = vpack.c.b16 %v1080, %v1071
    %v1387 = vpack.c.b16 %v1081, %v1072
    %v1388 = vpack.c.b16 %v1082, %v1073
    %v1389 = vpack.c.b16 %v1083, %v1074
    %v1390 = vpack.c.b16 %v1084, %v1075
    %v1391 = vpack.c.b16 %v1094, %v1085
    %v1392 = vpack.c.b16 %v1095, %v1086
    %v1393 = vpack.c.b16 %v1096, %v1087
    %v1394 = vpack.c.b16 %v1097, %v1088
    %v1395 = vpack.c.b16 %v1098, %v1089
    %v1396 = vpack.c.b16 %v1099, %v1090
    %v1397 = vpack.c.b16 %v1100, %v1091
    %v1398 = vpack.c.b16 %v1101, %v1092
    %v1399 = vpack.c.b16 %v1102, %v1093
    %v1400 = vpack.c.b16 %v1112, %v1103
    %v1401 = vpack.c.b16 %v1113, %v1104
    %v1402 = vpack.c.b16 %v1114, %v1105
    %v1403 = vpack.c.b16 %v1115, %v1106
    %v1404 = vpack.c.b16 %v1116, %v1107
    %v1405 = vpack.c.b16 %v1117, %v1108
    %v1406 = vpack.c.b16 %v1118, %v1109
    %v1407 = vpack.c.b16 %v1119, %v1110
    %v1408 = vpack.c.b16 %v1120, %v1111
    %v1409 = vpack.c.b16 %v1130, %v1121
    %v1410 = vpack.c.b16 %v1131, %v1122
    %v1411 = vpack.c.b16 %v1132, %v1123
    %v1412 = vpack.c.b16 %v1133, %v1124
    %v1413 = vpack.c.b16 %v1134, %v1125
    %v1414 = vpack.c.b16 %v1135, %v1126
    %v1415 = vpack.c.b16 %v1136, %v1127
    %v1416 = vpack.c.b16 %v1137, %v1128
    %v1417 = vpack.c.b16 %v1138, %v1129
    %v1418 = vpack.c.b16 %v1148, %v1139
    %v1419 = vpack.c.b16 %v1149, %v1140
    %v1420 = vpack.c.b16 %v1150, %v1141
    %v1421 = vpack.c.b16 %v1151, %v1142
    %v1422 = vpack.c.b16 %v1152, %v1143
    %v1423 = vpack.c.b16 %v1153, %v1144
    %v1424 = vpack.c.b16 %v1154, %v1145
    %v1425 = vpack.c.b16 %v1155, %v1146
    %v1426 = vpack.c.b16 %v1156, %v1147
    %v1427 = vpack.c.b16 %v1166, %v1157
    %v1428 = vpack.c.b16 %v1167, %v1158
    %v1429 = vpack.c.b16 %v1168, %v1159
    %v1430 = vpack.c.b16 %v1169, %v1160
    %v1431 = vpack.c.b16 %v1170, %v1161
    %v1432 = vpack.c.b16 %v1171, %v1162
    %v1433 = vpack.c.b16 %v1172, %v1163
    %v1434 = vpack.c.b16 %v1173, %v1164
    %v1435 = vpack.c.b16 %v1174, %v1165
    %v1436 = vpack.c.b16 %v1184, %v1175
    %v1437 = vpack.c.b16 %v1185, %v1176
    %v1438 = vpack.c.b16 %v1186, %v1177
    %v1439 = vpack.c.b16 %v1187, %v1178
    %v1440 = vpack.c.b16 %v1188, %v1179
    %v1441 = vpack.c.b16 %v1189, %v1180
    %v1442 = vpack.c.b16 %v1190, %v1181
    %v1443 = vpack.c.b16 %v1191, %v1182
    %v1444 = vpack.c.b16 %v1192, %v1183
    %v1445 = vpack.c.b16 %v1202, %v1193
    %v1446 = vpack.c.b16 %v1203, %v1194
    %v1447 = vpack.c.b16 %v1204, %v1195
    %v1448 = vpack.c.b16 %v1205, %v1196
    %v1449 = vpack.c.b16 %v1206, %v1197
    %v1450 = vpack.c.b16 %v1207, %v1198
    %v1451 = vpack.c.b16 %v1208, %v1199
    %v1452 = vpack.c.b16 %v1209, %v1200
    %v1453 = vpack.c.b16 %v1210, %v1201
    %v1454 = vpack.c.b16 %v1220, %v1211
    %v1455 = vpack.c.b16 %v1221, %v1212
    %v1456 = vpack.c.b16 %v1222, %v1213
    %v1457 = vpack.c.b16 %v1223, %v1214
    %v1458 = vpack.c.b16 %v1224, %v1215
    %v1459 = vpack.c.b16 %v1225, %v1216
    %v1460 = vpack.c.b16 %v1226, %v1217
    %v1461 = vpack.c.b16 %v1227, %v1218
    %v1462 = vpack.c.b16 %v1228, %v1219
    %v1463 = vpack.c.b16 %v1238, %v1229
    %v1464 = vpack.c.b16 %v1239, %v1230
    %v1465 = vpack.c.b16 %v1240, %v1231
    %v1466 = vpack.c.b16 %v1241, %v1232
    %v1467 = vpack.c.b16 %v1242, %v1233
    %v1468 = vpack.c.b16 %v1243, %v1234
    %v1469 = vpack.c.b16 %v1244, %v1235
    %v1470 = vpack.c.b16 %v1245, %v1236
    %v1471 = vpack.c.b16 %v1246, %v1237
    %v1472 = vpack.c.b16 %v1256, %v1247
    %v1473 = vpack.c.b16 %v1257, %v1248
    %v1474 = vpack.c.b16 %v1258, %v1249
    %v1475 = vpack.c.b16 %v1259, %v1250
    %v1476 = vpack.c.b16 %v1260, %v1251
    %v1477 = vpack.c.b16 %v1261, %v1252
    %v1478 = vpack.c.b16 %v1262, %v1253
    %v1479 = vpack.c.b16 %v1263, %v1254
    %v1480 = vpack.c.b16 %v1264, %v1255
    %1697 = vmatprep.subr.bf16.mxu0 %v1266
    %1698 = vmatpush1.bf16.msra.mxu0 %v1265
    %1699 = vmatprep.subr.bf16.mxu0 %v1275
    %1700 = vmatpush1.bf16.msra.mxu0 %v1274
    %1701 = vmatprep.subr.bf16.mxu0 %v1284
    %1702 = vmatpush1.bf16.msra.mxu0 %v1283
    %1703 = vmatprep.subr.bf16.mxu0 %v1293
    %1704 = vmatpush1.bf16.msra.mxu0 %v1292
    %1705 = vmatprep.subr.bf16.mxu0 %v1302
    %1706 = vmatpush1.bf16.msra.mxu0 %v1301
    %1707 = vmatprep.subr.bf16.mxu0 %v1311
    %1708 = vmatpush1.bf16.msra.mxu0 %v1310
    %1709 = vmatprep.subr.bf16.mxu0 %v1320
    %1710 = vmatpush1.bf16.msra.mxu0 %v1319
    %1711 = vmatprep.subr.bf16.mxu0 %v1329
    %1712 = vmatpush1.bf16.msra.mxu0 %v1328
    %1713 = vmatprep.subr.bf16.mxu0 %v1338
    %1714 = vmatpush1.bf16.msra.mxu0 %v1337
    %1715 = vmatprep.subr.bf16.mxu0 %v1347
    %1716 = vmatpush1.bf16.msra.mxu0 %v1346
    %1717 = vmatprep.subr.bf16.mxu0 %v1356
    %1718 = vmatpush1.bf16.msra.mxu0 %v1355
    %1719 = vmatprep.subr.bf16.mxu0 %v1365
    %1720 = vmatpush1.bf16.msra.mxu0 %v1364
    %1721 = vmatprep.subr.bf16.mxu0 %v1374
    %1722 = vmatpush1.bf16.msra.mxu0 %v1373
    %1723 = vmatprep.subr.bf16.mxu0 %v1383
    %1724 = vmatpush1.bf16.msra.mxu0 %v1382
    %1725 = vmatprep.subr.bf16.mxu0 %v1392
    %1726 = vmatpush1.bf16.msra.mxu0 %v1391
    %1727 = vmatprep.subr.bf16.mxu0 %v1401
    %1728 = vmatpush1.bf16.msra.mxu0 %v1400
    %1729 = vmatprep.mubr.bf16.mxu0 %v348
    %1730 = vmatmul.mubr.bf16.gmra.mrb[0].mxu0 %v347
    %v1731 = vpop.f32.mrb[0].mxu0
    %v1732 = vadd.f32 0.0, %v1731
    %v1733 = vpop.f32.mrb[0].mxu0
    %v1734 = vadd.f32 0.0, %v1733
    %v1735 = vpop.f32.mrb[0].mxu0
    %v1736 = vadd.f32 0.0, %v1735
    %v1737 = vpop.f32.mrb[0].mxu0
    %v1738 = vadd.f32 0.0, %v1737
    %1739 = vmatprep.mubr.bf16.mxu0 %v351
    %1740 = vmatmul.mubr.bf16.gmra.mrb[0].mxu0 %v350
    %v1741 = vpop.f32.mrb[0].mxu0
    %v1742 = vadd.f32 0.0, %v1741
    %v1743 = vpop.f32.mrb[0].mxu0
    %v1744 = vadd.f32 0.0, %v1743
    %v1745 = vpop.f32.mrb[0].mxu0
    %v1746 = vadd.f32 0.0, %v1745
    %v1747 = vpop.f32.mrb[0].mxu0
    %v1748 = vadd.f32 0.0, %v1747
    %1749 = vdwg.mxu0
    %1750 = vmatprep.subr.bf16.mxu0 %v1410
    %1751 = vmatpush1.bf16.msra.mxu0 %v1409
    %1752 = vmatprep.subr.bf16.mxu0 %v1419
    %1753 = vmatpush1.bf16.msra.mxu0 %v1418
    %1754 = vmatprep.subr.bf16.mxu0 %v1428
    %1755 = vmatpush1.bf16.msra.mxu0 %v1427
    %1756 = vmatprep.subr.bf16.mxu0 %v1437
    %1757 = vmatpush1.bf16.msra.mxu0 %v1436
    %1758 = vmatprep.subr.bf16.mxu0 %v1446
    %1759 = vmatpush1.bf16.msra.mxu0 %v1445
    %1760 = vmatprep.subr.bf16.mxu0 %v1455
    %1761 = vmatpush1.bf16.msra.mxu0 %v1454
    %1762 = vmatprep.subr.bf16.mxu0 %v1464
    %1763 = vmatpush1.bf16.msra.mxu0 %v1463
    %1764 = vmatprep.subr.bf16.mxu0 %v1473
    %1765 = vmatpush1.bf16.msra.mxu0 %v1472
    %1766 = vmatprep.subr.bf16.mxu0 0
    %1767 = vmatpush1.bf16.msra.mxu0 0
    %1768 = vmatprep.subr.bf16.mxu0 0
    %1769 = vmatpush1.bf16.msra.mxu0 0
    %1770 = vmatprep.subr.bf16.mxu0 0
    %1771 = vmatpush1.bf16.msra.mxu0 0
    %1772 = vmatprep.subr.bf16.mxu0 0
    %1773 = vmatpush1.bf16.msra.mxu0 0
    %1774 = vmatprep.subr.bf16.mxu0 0
    %1775 = vmatpush1.bf16.msra.mxu0 0
    %1776 = vmatprep.subr.bf16.mxu0 0
    %1777 = vmatpush1.bf16.msra.mxu0 0
    %1778 = vmatprep.subr.bf16.mxu0 0
    %1779 = vmatpush1.bf16.msra.mxu0 0
    %1780 = vmatprep.subr.bf16.mxu0 0
    %1781 = vmatpush1.bf16.msra.mxu0 0
    %1782 = vmatprep.mubr.bf16.mxu0 0
    %1783 = vmatmul.mubr.bf16.gmra.mrb[0].mxu0 %v349
    %v1784 = vpop.f32.mrb[0].mxu0
    %v1785 = vadd.f32 %v1732, %v1784
    %v1786 = vpop.f32.mrb[0].mxu0
    %v1787 = vadd.f32 %v1734, %v1786
    %v1788 = vpop.f32.mrb[0].mxu0
    %v1789 = vadd.f32 %v1736, %v1788
    %v1790 = vpop.f32.mrb[0].mxu0
    %v1791 = vadd.f32 %v1738, %v1790
    %1792 = vmatprep.mubr.bf16.mxu0 0
    %1793 = vmatmul.mubr.bf16.gmra.mrb[0].mxu0 %v352
    %v1794 = vpop.f32.mrb[0].mxu0
    %v1795 = vadd.f32 %v1742, %v1794
    %v1796 = vpop.f32.mrb[0].mxu0
    %v1797 = vadd.f32 %v1744, %v1796
    %v1798 = vpop.f32.mrb[0].mxu0
    %v1799 = vadd.f32 %v1746, %v1798
    %v1800 = vpop.f32.mrb[0].mxu0
    %v1801 = vadd.f32 %v1748, %v1800
    %1802 = vdwg.mxu0
    %1803 = vmatprep.subr.bf16.mxu0 %v1268
    %1804 = vmatpush1.bf16.msra.mxu0 %v1267
    %1805 = vmatprep.subr.bf16.mxu0 %v1277
    %1806 = vmatpush1.bf16.msra.mxu0 %v1276
    %1807 = vmatprep.subr.bf16.mxu0 %v1286
    %1808 = vmatpush1.bf16.msra.mxu0 %v1285
    %1809 = vmatprep.subr.bf16.mxu0 %v1295
    %1810 = vmatpush1.bf16.msra.mxu0 %v1294
    %1811 = vmatprep.subr.bf16.mxu0 %v1304
    %1812 = vmatpush1.bf16.msra.mxu0 %v1303
    %1813 = vmatprep.subr.bf16.mxu0 %v1313
    %1814 = vmatpush1.bf16.msra.mxu0 %v1312
    %1815 = vmatprep.subr.bf16.mxu0 %v1322
    %1816 = vmatpush1.bf16.msra.mxu0 %v1321
    %1817 = vmatprep.subr.bf16.mxu0 %v1331
    %1818 = vmatpush1.bf16.msra.mxu0 %v1330
    %1819 = vmatprep.subr.bf16.mxu0 %v1340
    %1820 = vmatpush1.bf16.msra.mxu0 %v1339
    %1821 = vmatprep.subr.bf16.mxu0 %v1349
    %1822 = vmatpush1.bf16.msra.mxu0 %v1348
    %1823 = vmatprep.subr.bf16.mxu0 %v1358
    %1824 = vmatpush1.bf16.msra.mxu0 %v1357
    %1825 = vmatprep.subr.bf16.mxu0 %v1367
    %1826 = vmatpush1.bf16.msra.mxu0 %v1366
    %1827 = vmatprep.subr.bf16.mxu0 %v1376
    %1828 = vmatpush1.bf16.msra.mxu0 %v1375
    %1829 = vmatprep.subr.bf16.mxu0 %v1385
    %1830 = vmatpush1.bf16.msra.mxu0 %v1384
    %1831 = vmatprep.subr.bf16.mxu0 %v1394
    %1832 = vmatpush1.bf16.msra.mxu0 %v1393
    %1833 = vmatprep.subr.bf16.mxu0 %v1403
    %1834 = vmatpush1.bf16.msra.mxu0 %v1402
    %1835 = vmatprep.mubr.bf16.mxu0 %v348
    %1836 = vmatmul.mubr.bf16.gmra.mrb[0].mxu0 %v347
    %v1837 = vpop.f32.mrb[0].mxu0
    %v1838 = vadd.f32 0.0, %v1837
    %v1839 = vpop.f32.mrb[0].mxu0
    %v1840 = vadd.f32 0.0, %v1839
    %v1841 = vpop.f32.mrb[0].mxu0
    %v1842 = vadd.f32 0.0, %v1841
    %v1843 = vpop.f32.mrb[0].mxu0
    %v1844 = vadd.f32 0.0, %v1843
    %1845 = vmatprep.mubr.bf16.mxu0 %v351
    %1846 = vmatmul.mubr.bf16.gmra.mrb[0].mxu0 %v350
    %v1847 = vpop.f32.mrb[0].mxu0
    %v1848 = vadd.f32 0.0, %v1847
    %v1849 = vpop.f32.mrb[0].mxu0
    %v1850 = vadd.f32 0.0, %v1849
    %v1851 = vpop.f32.mrb[0].mxu0
    %v1852 = vadd.f32 0.0, %v1851
    %v1853 = vpop.f32.mrb[0].mxu0
    %v1854 = vadd.f32 0.0, %v1853
    %1855 = vdwg.mxu0
    %1856 = vmatprep.subr.bf16.mxu0 %v1412
    %1857 = vmatpush1.bf16.msra.mxu0 %v1411
    %1858 = vmatprep.subr.bf16.mxu0 %v1421
    %1859 = vmatpush1.bf16.msra.mxu0 %v1420
    %1860 = vmatprep.subr.bf16.mxu0 %v1430
    %1861 = vmatpush1.bf16.msra.mxu0 %v1429
    %1862 = vmatprep.subr.bf16.mxu0 %v1439
    %1863 = vmatpush1.bf16.msra.mxu0 %v1438
    %1864 = vmatprep.subr.bf16.mxu0 %v1448
    %1865 = vmatpush1.bf16.msra.mxu0 %v1447
    %1866 = vmatprep.subr.bf16.mxu0 %v1457
    %1867 = vmatpush1.bf16.msra.mxu0 %v1456
    %1868 = vmatprep.subr.bf16.mxu0 %v1466
    %1869 = vmatpush1.bf16.msra.mxu0 %v1465
    %1870 = vmatprep.subr.bf16.mxu0 %v1475
    %1871 = vmatpush1.bf16.msra.mxu0 %v1474
    %1872 = vmatprep.subr.bf16.mxu0 0
    %1873 = vmatpush1.bf16.msra.mxu0 0
    %1874 = vmatprep.subr.bf16.mxu0 0
    %1875 = vmatpush1.bf16.msra.mxu0 0
    %1876 = vmatprep.subr.bf16.mxu0 0
    %1877 = vmatpush1.bf16.msra.mxu0 0
    %1878 = vmatprep.subr.bf16.mxu0 0
    %1879 = vmatpush1.bf16.msra.mxu0 0
    %1880 = vmatprep.subr.bf16.mxu0 0
    %1881 = vmatpush1.bf16.msra.mxu0 0
    %1882 = vmatprep.subr.bf16.mxu0 0
    %1883 = vmatpush1.bf16.msra.mxu0 0
    %1884 = vmatprep.subr.bf16.mxu0 0
    %1885 = vmatpush1.bf16.msra.mxu0 0
    %1886 = vmatprep.subr.bf16.mxu0 0
    %1887 = vmatpush1.bf16.msra.mxu0 0
    %1888 = vmatprep.mubr.bf16.mxu0 0
    %1889 = vmatmul.mubr.bf16.gmra.mrb[0].mxu0 %v349
    %v1890 = vpop.f32.mrb[0].mxu0
    %v1891 = vadd.f32 %v1838, %v1890
    %v1892 = vpop.f32.mrb[0].mxu0
    %v1893 = vadd.f32 %v1840, %v1892
    %v1894 = vpop.f32.mrb[0].mxu0
    %v1895 = vadd.f32 %v1842, %v1894
    %v1896 = vpop.f32.mrb[0].mxu0
    %v1897 = vadd.f32 %v1844, %v1896
    %1898 = vmatprep.mubr.bf16.mxu0 0
    %1899 = vmatmul.mubr.bf16.gmra.mrb[0].mxu0 %v352
    %v1900 = vpop.f32.mrb[0].mxu0
    %v1901 = vadd.f32 %v1848, %v1900
    %v1902 = vpop.f32.mrb[0].mxu0
    %v1903 = vadd.f32 %v1850, %v1902
    %v1904 = vpop.f32.mrb[0].mxu0
    %v1905 = vadd.f32 %v1852, %v1904
    %v1906 = vpop.f32.mrb[0].mxu0
    %v1907 = vadd.f32 %v1854, %v1906
    %1908 = vdwg.mxu0
    %1909 = vmatprep.subr.bf16.mxu0 %v1270
    %1910 = vmatpush1.bf16.msra.mxu0 %v1269
    %1911 = vmatprep.subr.bf16.mxu0 %v1279
    %1912 = vmatpush1.bf16.msra.mxu0 %v1278
    %1913 = vmatprep.subr.bf16.mxu0 %v1288
    %1914 = vmatpush1.bf16.msra.mxu0 %v1287
    %1915 = vmatprep.subr.bf16.mxu0 %v1297
    %1916 = vmatpush1.bf16.msra.mxu0 %v1296
    %1917 = vmatprep.subr.bf16.mxu0 %v1306
    %1918 = vmatpush1.bf16.msra.mxu0 %v1305
    %1919 = vmatprep.subr.bf16.mxu0 %v1315
    %1920 = vmatpush1.bf16.msra.mxu0 %v1314
    %1921 = vmatprep.subr.bf16.mxu0 %v1324
    %1922 = vmatpush1.bf16.msra.mxu0 %v1323
    %1923 = vmatprep.subr.bf16.mxu0 %v1333
    %1924 = vmatpush1.bf16.msra.mxu0 %v1332
    %1925 = vmatprep.subr.bf16.mxu0 %v1342
    %1926 = vmatpush1.bf16.msra.mxu0 %v1341
    %1927 = vmatprep.subr.bf16.mxu0 %v1351
    %1928 = vmatpush1.bf16.msra.mxu0 %v1350
    %1929 = vmatprep.subr.bf16.mxu0 %v1360
    %1930 = vmatpush1.bf16.msra.mxu0 %v1359
    %1931 = vmatprep.subr.bf16.mxu0 %v1369
    %1932 = vmatpush1.bf16.msra.mxu0 %v1368
    %1933 = vmatprep.subr.bf16.mxu0 %v1378
    %1934 = vmatpush1.bf16.msra.mxu0 %v1377
    %1935 = vmatprep.subr.bf16.mxu0 %v1387
    %1936 = vmatpush1.bf16.msra.mxu0 %v1386
    %1937 = vmatprep.subr.bf16.mxu0 %v1396
    %1938 = vmatpush1.bf16.msra.mxu0 %v1395
    %1939 = vmatprep.subr.bf16.mxu0 %v1405
    %1940 = vmatpush1.bf16.msra.mxu0 %v1404
    %1941 = vmatprep.mubr.bf16.mxu0 %v348
    %1942 = vmatmul.mubr.bf16.gmra.mrb[0].mxu0 %v347
    %v1943 = vpop.f32.mrb[0].mxu0
    %v1944 = vadd.f32 0.0, %v1943
    %v1945 = vpop.f32.mrb[0].mxu0
    %v1946 = vadd.f32 0.0, %v1945
    %v1947 = vpop.f32.mrb[0].mxu0
    %v1948 = vadd.f32 0.0, %v1947
    %v1949 = vpop.f32.mrb[0].mxu0
    %v1950 = vadd.f32 0.0, %v1949
    %1951 = vmatprep.mubr.bf16.mxu0 %v351
    %1952 = vmatmul.mubr.bf16.gmra.mrb[0].mxu0 %v350
    %v1953 = vpop.f32.mrb[0].mxu0
    %v1954 = vadd.f32 0.0, %v1953
    %v1955 = vpop.f32.mrb[0].mxu0
    %v1956 = vadd.f32 0.0, %v1955
    %v1957 = vpop.f32.mrb[0].mxu0
    %v1958 = vadd.f32 0.0, %v1957
    %v1959 = vpop.f32.mrb[0].mxu0
    %v1960 = vadd.f32 0.0, %v1959
    %1961 = vdwg.mxu0
    %1962 = vmatprep.subr.bf16.mxu0 %v1414
    %1963 = vmatpush1.bf16.msra.mxu0 %v1413
    %1964 = vmatprep.subr.bf16.mxu0 %v1423
    %1965 = vmatpush1.bf16.msra.mxu0 %v1422
    %1966 = vmatprep.subr.bf16.mxu0 %v1432
    %1967 = vmatpush1.bf16.msra.mxu0 %v1431
    %1968 = vmatprep.subr.bf16.mxu0 %v1441
    %1969 = vmatpush1.bf16.msra.mxu0 %v1440
    %1970 = vmatprep.subr.bf16.mxu0 %v1450
    %1971 = vmatpush1.bf16.msra.mxu0 %v1449
    %1972 = vmatprep.subr.bf16.mxu0 %v1459
    %1973 = vmatpush1.bf16.msra.mxu0 %v1458
    %1974 = vmatprep.subr.bf16.mxu0 %v1468
    %1975 = vmatpush1.bf16.msra.mxu0 %v1467
    %1976 = vmatprep.subr.bf16.mxu0 %v1477
    %1977 = vmatpush1.bf16.msra.mxu0 %v1476
    %1978 = vmatprep.subr.bf16.mxu0 0
    %1979 = vmatpush1.bf16.msra.mxu0 0
    %1980 = vmatprep.subr.bf16.mxu0 0
    %1981 = vmatpush1.bf16.msra.mxu0 0
    %1982 = vmatprep.subr.bf16.mxu0 0
    %1983 = vmatpush1.bf16.msra.mxu0 0
    %1984 = vmatprep.subr.bf16.mxu0 0
    %1985 = vmatpush1.bf16.msra.mxu0 0
    %1986 = vmatprep.subr.bf16.mxu0 0
    %1987 = vmatpush1.bf16.msra.mxu0 0
    %1988 = vmatprep.subr.bf16.mxu0 0
    %1989 = vmatpush1.bf16.msra.mxu0 0
    %1990 = vmatprep.subr.bf16.mxu0 0
    %1991 = vmatpush1.bf16.msra.mxu0 0
    %1992 = vmatprep.subr.bf16.mxu0 0
    %1993 = vmatpush1.bf16.msra.mxu0 0
    %1994 = vmatprep.mubr.bf16.mxu0 0
    %1995 = vmatmul.mubr.bf16.gmra.mrb[0].mxu0 %v349
    %v1996 = vpop.f32.mrb[0].mxu0
    %v1997 = vadd.f32 %v1944, %v1996
    %v1998 = vpop.f32.mrb[0].mxu0
    %v1999 = vadd.f32 %v1946, %v1998
    %v2000 = vpop.f32.mrb[0].mxu0
    %v2001 = vadd.f32 %v1948, %v2000
    %v2002 = vpop.f32.mrb[0].mxu0
    %v2003 = vadd.f32 %v1950, %v2002
    %2004 = vmatprep.mubr.bf16.mxu0 0
    %2005 = vmatmul.mubr.bf16.gmra.mrb[0].mxu0 %v352
    %v2006 = vpop.f32.mrb[0].mxu0
    %v2007 = vadd.f32 %v1954, %v2006
    %v2008 = vpop.f32.mrb[0].mxu0
    %v2009 = vadd.f32 %v1956, %v2008
    %v2010 = vpop.f32.mrb[0].mxu0
    %v2011 = vadd.f32 %v1958, %v2010
    %v2012 = vpop.f32.mrb[0].mxu0
    %v2013 = vadd.f32 %v1960, %v2012
    %2014 = vdwg.mxu0
    %2015 = vmatprep.subr.bf16.mxu0 %v1272
    %2016 = vmatpush1.bf16.msra.mxu0 %v1271
    %2017 = vmatprep.subr.bf16.mxu0 %v1281
    %2018 = vmatpush1.bf16.msra.mxu0 %v1280
    %2019 = vmatprep.subr.bf16.mxu0 %v1290
    %2020 = vmatpush1.bf16.msra.mxu0 %v1289
    %2021 = vmatprep.subr.bf16.mxu0 %v1299
    %2022 = vmatpush1.bf16.msra.mxu0 %v1298
    %2023 = vmatprep.subr.bf16.mxu0 %v1308
    %2024 = vmatpush1.bf16.msra.mxu0 %v1307
    %2025 = vmatprep.subr.bf16.mxu0 %v1317
    %2026 = vmatpush1.bf16.msra.mxu0 %v1316
    %2027 = vmatprep.subr.bf16.mxu0 %v1326
    %2028 = vmatpush1.bf16.msra.mxu0 %v1325
    %2029 = vmatprep.subr.bf16.mxu0 %v1335
    %2030 = vmatpush1.bf16.msra.mxu0 %v1334
    %2031 = vmatprep.subr.bf16.mxu0 %v1344
    %2032 = vmatpush1.bf16.msra.mxu0 %v1343
    %2033 = vmatprep.subr.bf16.mxu0 %v1353
    %2034 = vmatpush1.bf16.msra.mxu0 %v1352
    %2035 = vmatprep.subr.bf16.mxu0 %v1362
    %2036 = vmatpush1.bf16.msra.mxu0 %v1361
    %2037 = vmatprep.subr.bf16.mxu0 %v1371
    %2038 = vmatpush1.bf16.msra.mxu0 %v1370
    %2039 = vmatprep.subr.bf16.mxu0 %v1380
    %2040 = vmatpush1.bf16.msra.mxu0 %v1379
    %2041 = vmatprep.subr.bf16.mxu0 %v1389
    %2042 = vmatpush1.bf16.msra.mxu0 %v1388
    %2043 = vmatprep.subr.bf16.mxu0 %v1398
    %2044 = vmatpush1.bf16.msra.mxu0 %v1397
    %2045 = vmatprep.subr.bf16.mxu0 %v1407
    %2046 = vmatpush1.bf16.msra.mxu0 %v1406
    %2047 = vmatprep.mubr.bf16.mxu0 %v348
    %2048 = vmatmul.mubr.bf16.gmra.mrb[0].mxu0 %v347
    %v2049 = vpop.f32.mrb[0].mxu0
    %v2050 = vadd.f32 0.0, %v2049
    %v2051 = vpop.f32.mrb[0].mxu0
    %v2052 = vadd.f32 0.0, %v2051
    %v2053 = vpop.f32.mrb[0].mxu0
    %v2054 = vadd.f32 0.0, %v2053
    %v2055 = vpop.f32.mrb[0].mxu0
    %v2056 = vadd.f32 0.0, %v2055
    %2057 = vmatprep.mubr.bf16.mxu0 %v351
    %2058 = vmatmul.mubr.bf16.gmra.mrb[0].mxu0 %v350
    %v2059 = vpop.f32.mrb[0].mxu0
    %v2060 = vadd.f32 0.0, %v2059
    %v2061 = vpop.f32.mrb[0].mxu0
    %v2062 = vadd.f32 0.0, %v2061
    %v2063 = vpop.f32.mrb[0].mxu0
    %v2064 = vadd.f32 0.0, %v2063
    %v2065 = vpop.f32.mrb[0].mxu0
    %v2066 = vadd.f32 0.0, %v2065
    %2067 = vdwg.mxu0
    %2068 = vmatprep.subr.bf16.mxu0 %v1416
    %2069 = vmatpush1.bf16.msra.mxu0 %v1415
    %2070 = vmatprep.subr.bf16.mxu0 %v1425
    %2071 = vmatpush1.bf16.msra.mxu0 %v1424
    %2072 = vmatprep.subr.bf16.mxu0 %v1434
    %2073 = vmatpush1.bf16.msra.mxu0 %v1433
    %2074 = vmatprep.subr.bf16.mxu0 %v1443
    %2075 = vmatpush1.bf16.msra.mxu0 %v1442
    %2076 = vmatprep.subr.bf16.mxu0 %v1452
    %2077 = vmatpush1.bf16.msra.mxu0 %v1451
    %2078 = vmatprep.subr.bf16.mxu0 %v1461
    %2079 = vmatpush1.bf16.msra.mxu0 %v1460
    %2080 = vmatprep.subr.bf16.mxu0 %v1470
    %2081 = vmatpush1.bf16.msra.mxu0 %v1469
    %2082 = vmatprep.subr.bf16.mxu0 %v1479
    %2083 = vmatpush1.bf16.msra.mxu0 %v1478
    %2084 = vmatprep.subr.bf16.mxu0 0
    %2085 = vmatpush1.bf16.msra.mxu0 0
    %2086 = vmatprep.subr.bf16.mxu0 0
    %2087 = vmatpush1.bf16.msra.mxu0 0
    %2088 = vmatprep.subr.bf16.mxu0 0
    %2089 = vmatpush1.bf16.msra.mxu0 0
    %2090 = vmatprep.subr.bf16.mxu0 0
    %2091 = vmatpush1.bf16.msra.mxu0 0
    %2092 = vmatprep.subr.bf16.mxu0 0
    %2093 = vmatpush1.bf16.msra.mxu0 0
    %2094 = vmatprep.subr.bf16.mxu0 0
    %2095 = vmatpush1.bf16.msra.mxu0 0
    %2096 = vmatprep.subr.bf16.mxu0 0
    %2097 = vmatpush1.bf16.msra.mxu0 0
    %2098 = vmatprep.subr.bf16.mxu0 0
    %2099 = vmatpush1.bf16.msra.mxu0 0
    %2100 = vmatprep.mubr.bf16.mxu0 0
    %2101 = vmatmul.mubr.bf16.gmra.mrb[0].mxu0 %v349
    %v2102 = vpop.f32.mrb[0].mxu0
    %v2103 = vadd.f32 %v2050, %v2102
    %v2104 = vpop.f32.mrb[0].mxu0
    %v2105 = vadd.f32 %v2052, %v2104
    %v2106 = vpop.f32.mrb[0].mxu0
    %v2107 = vadd.f32 %v2054, %v2106
    %v2108 = vpop.f32.mrb[0].mxu0
    %v2109 = vadd.f32 %v2056, %v2108
    %2110 = vmatprep.mubr.bf16.mxu0 0
    %2111 = vmatmul.mubr.bf16.gmra.mrb[0].mxu0 %v352
    %v2112 = vpop.f32.mrb[0].mxu0
    %v2113 = vadd.f32 %v2060, %v2112
    %v2114 = vpop.f32.mrb[0].mxu0
    %v2115 = vadd.f32 %v2062, %v2114
    %v2116 = vpop.f32.mrb[0].mxu0
    %v2117 = vadd.f32 %v2064, %v2116
    %v2118 = vpop.f32.mrb[0].mxu0
    %v2119 = vadd.f32 %v2066, %v2118
    %2120 = vdwg.mxu0
    %2121 = vmatprep.subr.bf16.mxu0 0
    %2122 = vmatpush1.bf16.msra.mxu0 %v1273
    %2123 = vmatprep.subr.bf16.mxu0 0
    %2124 = vmatpush1.bf16.msra.mxu0 %v1282
    %2125 = vmatprep.subr.bf16.mxu0 0
    %2126 = vmatpush1.bf16.msra.mxu0 %v1291
    %2127 = vmatprep.subr.bf16.mxu0 0
    %2128 = vmatpush1.bf16.msra.mxu0 %v1300
    %2129 = vmatprep.subr.bf16.mxu0 0
    %2130 = vmatpush1.bf16.msra.mxu0 %v1309
    %2131 = vmatprep.subr.bf16.mxu0 0
    %2132 = vmatpush1.bf16.msra.mxu0 %v1318
    %2133 = vmatprep.subr.bf16.mxu0 0
    %2134 = vmatpush1.bf16.msra.mxu0 %v1327
    %2135 = vmatprep.subr.bf16.mxu0 0
    %2136 = vmatpush1.bf16.msra.mxu0 %v1336
    %2137 = vmatprep.subr.bf16.mxu0 0
    %2138 = vmatpush1.bf16.msra.mxu0 %v1345
    %2139 = vmatprep.subr.bf16.mxu0 0
    %2140 = vmatpush1.bf16.msra.mxu0 %v1354
    %2141 = vmatprep.subr.bf16.mxu0 0
    %2142 = vmatpush1.bf16.msra.mxu0 %v1363
    %2143 = vmatprep.subr.bf16.mxu0 0
    %2144 = vmatpush1.bf16.msra.mxu0 %v1372
    %2145 = vmatprep.subr.bf16.mxu0 0
    %2146 = vmatpush1.bf16.msra.mxu0 %v1381
    %2147 = vmatprep.subr.bf16.mxu0 0
    %2148 = vmatpush1.bf16.msra.mxu0 %v1390
    %2149 = vmatprep.subr.bf16.mxu0 0
    %2150 = vmatpush1.bf16.msra.mxu0 %v1399
    %2151 = vmatprep.subr.bf16.mxu0 0
    %2152 = vmatpush1.bf16.msra.mxu0 %v1408
    %2153 = vmatprep.mubr.bf16.mxu0 %v348
    %2154 = vmatmul.mubr.bf16.gmra.mrb[0].mxu0 %v347
    %v2155 = vpop.f32.mrb[0].mxu0
    %v2156 = vadd.f32 0.0, %v2155
    %v2157 = vpop.f32.mrb[0].mxu0
    %v2158 = vpop.f32.mrb[0].mxu0
    %v2159 = vadd.f32 0.0, %v2158
    %v2160 = vpop.f32.mrb[0].mxu0
    %2161 = vmatprep.mubr.bf16.mxu0 %v351
    %2162 = vmatmul.mubr.bf16.gmra.mrb[0].mxu0 %v350
    %v2163 = vpop.f32.mrb[0].mxu0
    %v2164 = vadd.f32 0.0, %v2163
    %v2165 = vpop.f32.mrb[0].mxu0
    %v2166 = vpop.f32.mrb[0].mxu0
    %v2167 = vadd.f32 0.0, %v2166
    %v2168 = vpop.f32.mrb[0].mxu0
    %2169 = vdwg.mxu0
    %2170 = vmatprep.subr.bf16.mxu0 0
    %2171 = vmatpush1.bf16.msra.mxu0 %v1417
    %2172 = vmatprep.subr.bf16.mxu0 0
    %2173 = vmatpush1.bf16.msra.mxu0 %v1426
    %2174 = vmatprep.subr.bf16.mxu0 0
    %2175 = vmatpush1.bf16.msra.mxu0 %v1435
    %2176 = vmatprep.subr.bf16.mxu0 0
    %2177 = vmatpush1.bf16.msra.mxu0 %v1444
    %2178 = vmatprep.subr.bf16.mxu0 0
    %2179 = vmatpush1.bf16.msra.mxu0 %v1453
    %2180 = vmatprep.subr.bf16.mxu0 0
    %2181 = vmatpush1.bf16.msra.mxu0 %v1462
    %2182 = vmatprep.subr.bf16.mxu0 0
    %2183 = vmatpush1.bf16.msra.mxu0 %v1471
    %2184 = vmatprep.subr.bf16.mxu0 0
    %2185 = vmatpush1.bf16.msra.mxu0 %v1480
    %2186 = vmatprep.subr.bf16.mxu0 0
    %2187 = vmatpush1.bf16.msra.mxu0 0
    %2188 = vmatprep.subr.bf16.mxu0 0
    %2189 = vmatpush1.bf16.msra.mxu0 0
    %2190 = vmatprep.subr.bf16.mxu0 0
    %2191 = vmatpush1.bf16.msra.mxu0 0
    %2192 = vmatprep.subr.bf16.mxu0 0
    %2193 = vmatpush1.bf16.msra.mxu0 0
    %2194 = vmatprep.subr.bf16.mxu0 0
    %2195 = vmatpush1.bf16.msra.mxu0 0
    %2196 = vmatprep.subr.bf16.mxu0 0
    %2197 = vmatpush1.bf16.msra.mxu0 0
    %2198 = vmatprep.subr.bf16.mxu0 0
    %2199 = vmatpush1.bf16.msra.mxu0 0
    %2200 = vmatprep.subr.bf16.mxu0 0
    %2201 = vmatpush1.bf16.msra.mxu0 0
    %2202 = vmatprep.mubr.bf16.mxu0 0
    %2203 = vmatmul.mubr.bf16.gmra.mrb[0].mxu0 %v349
    %v2204 = vpop.f32.mrb[0].mxu0
    %v2205 = vadd.f32 %v2156, %v2204
    %v2206 = vpop.f32.mrb[0].mxu0
    %v2207 = vpop.f32.mrb[0].mxu0
    %v2208 = vadd.f32 %v2159, %v2207
    %v2209 = vpop.f32.mrb[0].mxu0
    %2210 = vmatprep.mubr.bf16.mxu0 0
    %2211 = vmatmul.mubr.bf16.gmra.mrb[0].mxu0 %v352
    %v2212 = vpop.f32.mrb[0].mxu0
    %v2213 = vadd.f32 %v2164, %v2212
    %v2214 = vpop.f32.mrb[0].mxu0
    %v2215 = vpop.f32.mrb[0].mxu0
    %v2216 = vadd.f32 %v2167, %v2215
    %v2217 = vpop.f32.mrb[0].mxu0
    %2218 = vdwg.mxu0
    %v2219 = vpack.c.bf16 %v1785, %v1785
    %v2220 = vpack.c.bf16 %v1787, %v1787
    %v2221 = vpack.c.bf16 %v1891, %v1891
    %v2222 = vpack.c.bf16 %v1893, %v1893
    %v2223 = vpack.c.bf16 %v1997, %v1997
    %v2224 = vpack.c.bf16 %v1999, %v1999
    %v2225 = vpack.c.bf16 %v2103, %v2103
    %v2226 = vpack.c.bf16 %v2105, %v2105
    %v2227 = vpack.c.bf16 %v2205, %v2205
    %v2228 = vpack.c.bf16 %v1789, %v1789
    %v2229 = vpack.c.bf16 %v1791, %v1791
    %v2230 = vpack.c.bf16 %v1895, %v1895
    %v2231 = vpack.c.bf16 %v1897, %v1897
    %v2232 = vpack.c.bf16 %v2001, %v2001
    %v2233 = vpack.c.bf16 %v2003, %v2003
    %v2234 = vpack.c.bf16 %v2107, %v2107
    %v2235 = vpack.c.bf16 %v2109, %v2109
    %v2236 = vpack.c.bf16 %v2208, %v2208
    %v2237 = vpack.c.bf16 %v1795, %v1795
    %v2238 = vpack.c.bf16 %v1797, %v1797
    %v2239 = vpack.c.bf16 %v1901, %v1901
    %v2240 = vpack.c.bf16 %v1903, %v1903
    %v2241 = vpack.c.bf16 %v2007, %v2007
    %v2242 = vpack.c.bf16 %v2009, %v2009
    %v2243 = vpack.c.bf16 %v2113, %v2113
    %v2244 = vpack.c.bf16 %v2115, %v2115
    %v2245 = vpack.c.bf16 %v2213, %v2213
    %v2246 = vpack.c.bf16 %v1799, %v1799
    %v2247 = vpack.c.bf16 %v1801, %v1801
    %v2248 = vpack.c.bf16 %v1905, %v1905
    %v2249 = vpack.c.bf16 %v1907, %v1907
    %v2250 = vpack.c.bf16 %v2011, %v2011
    %v2251 = vpack.c.bf16 %v2013, %v2013
    %v2252 = vpack.c.bf16 %v2117, %v2117
    %v2253 = vpack.c.bf16 %v2119, %v2119
    %v2254 = vpack.c.bf16 %v2216, %v2216
    %v2291 = vunpack.c.l.b16 %v2219
    %v2292 = vunpack.c.l.b16 %v2220
    %v2293 = vunpack.c.l.b16 %v2221
    %v2294 = vunpack.c.l.b16 %v2222
    %v2295 = vunpack.c.l.b16 %v2223
    %v2296 = vunpack.c.l.b16 %v2224
    %v2297 = vunpack.c.l.b16 %v2225
    %v2298 = vunpack.c.l.b16 %v2226
    %v2299 = vunpack.c.l.b16 %v2227
    %v2300 = vunpack.c.l.b16 %v2228
    %v2301 = vunpack.c.l.b16 %v2229
    %v2302 = vunpack.c.l.b16 %v2230
    %v2303 = vunpack.c.l.b16 %v2231
    %v2304 = vunpack.c.l.b16 %v2232
    %v2305 = vunpack.c.l.b16 %v2233
    %v2306 = vunpack.c.l.b16 %v2234
    %v2307 = vunpack.c.l.b16 %v2235
    %v2308 = vunpack.c.l.b16 %v2236
    %v2309 = vunpack.c.l.b16 %v2237
    %v2310 = vunpack.c.l.b16 %v2238
    %v2311 = vunpack.c.l.b16 %v2239
    %v2312 = vunpack.c.l.b16 %v2240
    %v2313 = vunpack.c.l.b16 %v2241
    %v2314 = vunpack.c.l.b16 %v2242
    %v2315 = vunpack.c.l.b16 %v2243
    %v2316 = vunpack.c.l.b16 %v2244
    %v2317 = vunpack.c.l.b16 %v2245
    %v2318 = vunpack.c.l.b16 %v2246
    %v2319 = vunpack.c.l.b16 %v2247
    %v2320 = vunpack.c.l.b16 %v2248
    %v2321 = vunpack.c.l.b16 %v2249
    %v2322 = vunpack.c.l.b16 %v2250
    %v2323 = vunpack.c.l.b16 %v2251
    %v2324 = vunpack.c.l.b16 %v2252
    %v2325 = vunpack.c.l.b16 %v2253
    %v2326 = vunpack.c.l.b16 %v2254
    %v2327 = vpack.c.b16 %v2292, %v2291
    %v2328 = vpack.c.b16 %v2294, %v2293
    %v2329 = vpack.c.b16 %v2296, %v2295
    %v2330 = vpack.c.b16 %v2298, %v2297
    %v2331 = vpack.c.b16 %v2299, %v2299
    %v2332 = vpack.c.b16 %v2301, %v2300
    %v2333 = vpack.c.b16 %v2303, %v2302
    %v2334 = vpack.c.b16 %v2305, %v2304
    %v2335 = vpack.c.b16 %v2307, %v2306
    %v2336 = vpack.c.b16 %v2308, %v2308
    %v2337 = vpack.c.b16 %v2310, %v2309
    %v2338 = vpack.c.b16 %v2312, %v2311
    %v2339 = vpack.c.b16 %v2314, %v2313
    %v2340 = vpack.c.b16 %v2316, %v2315
    %v2341 = vpack.c.b16 %v2317, %v2317
    %v2342 = vpack.c.b16 %v2319, %v2318
    %v2343 = vpack.c.b16 %v2321, %v2320
    %v2344 = vpack.c.b16 %v2323, %v2322
    %v2345 = vpack.c.b16 %v2325, %v2324
    %v2346 = vpack.c.b16 %v2326, %v2326
    %2367 = vst [vmem:[#allocation2] sm:$0xff] %v2327
    %2368 = vst [vmem:[#allocation2 + $0x8] sm:$0xff] %v2328
    %2369 = vst [vmem:[#allocation2 + $0x10] sm:$0xff] %v2329
    %2370 = vst [vmem:[#allocation2 + $0x18] sm:$0xff] %v2330
    %2371 = vst [vmem:[#allocation2 + $0x20] sm:$0xf] %v2331
    %2372 = vst [vmem:[#allocation2 + $0x24] sm:$0xff] %v2332
    %2373 = vst [vmem:[#allocation2 + $0x2c] sm:$0xff] %v2333
    %2374 = vst [vmem:[#allocation2 + $0x34] sm:$0xff] %v2334
    %2375 = vst [vmem:[#allocation2 + $0x3c] sm:$0xff] %v2335
    %2376 = vst [vmem:[#allocation2 + $0x44] sm:$0xf] %v2336
    %2377 = vst [vmem:[#allocation2 + $0x48] sm:$0xff] %v2337
    %2378 = vst [vmem:[#allocation2 + $0x50] sm:$0xff] %v2338
    %2379 = vst [vmem:[#allocation2 + $0x58] sm:$0xff] %v2339
    %2380 = vst [vmem:[#allocation2 + $0x60] sm:$0xff] %v2340
    %2381 = vst [vmem:[#allocation2 + $0x68] sm:$0xf] %v2341
    %2382 = vst [vmem:[#allocation2 + $0x6c] sm:$0xff] %v2342
    %2383 = vst [vmem:[#allocation2 + $0x74] sm:$0xff] %v2343
    %2384 = vst [vmem:[#allocation2 + $0x7c] sm:$0xff] %v2344
    %2385 = vst [vmem:[#allocation2 + $0x84] sm:$0xff] %v2345
    %2386 = vst [vmem:[#allocation2 + $0x8c] sm:$0xf] %v2346
    %v2387 = vlaneseq
    %v2388 = vshrl.u32 %v2387, 7
    %v2389 = vlaneseq
    %v2390 = vand.u32 %v2389, 127
    %vm2391 = vcmp.le.s32.totalorder %v2390, %v2388
    %v2392 = vld [vmem:[#allocation2] sm:$0xf]
    %v2393 = vld [vmem:[#allocation2 + $0x24] sm:$0xf]
    %v2394 = vld [vmem:[#allocation2 + $0x48] sm:$0xf]
    %v2395 = vld [vmem:[#allocation2 + $0x6c] sm:$0xf]
    %v2396 = vld [vmem:[#allocation2 + $0xc] sm:$0xf]
    %v2397 = vld [vmem:[#allocation2 + $0x30] sm:$0xf]
    %v2398 = vld [vmem:[#allocation2 + $0x54] sm:$0xf]
    %v2399 = vld [vmem:[#allocation2 + $0x78] sm:$0xf]
    %v2400 = vld [vmem:[#allocation2 + $0x18] sm:$0xf]
    %v2401 = vld [vmem:[#allocation2 + $0x3c] sm:$0xf]
    %v2402 = vld [vmem:[#allocation2 + $0x60] sm:$0xf]
    %v2403 = vld [vmem:[#allocation2 + $0x84] sm:$0xf]
    %vm2404 = vcmask 523264
    %v2406 = vsel %vm2404, %v2392, 0
    %v2409 = vsel %vm2404, %v2396, 0
    %2411 = vmatprep.subr.bf16.mxu0 0
    %2412 = vmatpush1.bf16.xpose.msra.mxu0 %v2409
    %2413 = vmatprep.subr.bf16.mxu0 0
    %2414 = vmatpush1.bf16.xpose.msra.mxu0 0
    %2415 = vmatprep.subr.bf16.mxu0 0
    %2416 = vmatpush1.bf16.xpose.msra.mxu0 0
    %2417 = vmatprep.subr.bf16.mxu0 0
    %2418 = vmatpush1.bf16.xpose.msra.mxu0 0
    %2419 = vmatprep.subr.bf16.mxu0 0
    %2420 = vmatpush1.bf16.xpose.msra.mxu0 0
    %2421 = vmatprep.subr.bf16.mxu0 0
    %2422 = vmatpush1.bf16.xpose.msra.mxu0 0
    %2423 = vmatprep.subr.bf16.mxu0 0
    %2424 = vmatpush1.bf16.xpose.msra.mxu0 0
    %2425 = vmatprep.subr.bf16.mxu0 0
    %2426 = vmatpush1.bf16.xpose.msra.mxu0 0
    %2427 = vmatprep.subr.bf16.mxu0 0
    %2428 = vmatpush1.bf16.xpose.msra.mxu0 0
    %2429 = vmatprep.subr.bf16.mxu0 0
    %2430 = vmatpush1.bf16.xpose.msra.mxu0 0
    %2431 = vmatprep.subr.bf16.mxu0 0
    %2432 = vmatpush1.bf16.xpose.msra.mxu0 0
    %2433 = vmatprep.subr.bf16.mxu0 0
    %2434 = vmatpush1.bf16.xpose.msra.mxu0 0
    %2435 = vmatprep.subr.bf16.mxu0 0
    %2436 = vmatpush1.bf16.xpose.msra.mxu0 0
    %2437 = vmatprep.subr.bf16.mxu0 0
    %2438 = vmatpush1.bf16.xpose.msra.mxu0 0
    %2439 = vmatprep.subr.bf16.mxu0 0
    %2440 = vmatpush1.bf16.xpose.msra.mxu0 0
    %2441 = vmatprep.subr.bf16.mxu0 0
    %2442 = vmatpush1.bf16.xpose.msra.mxu0 0
    %2443 = vmatprep.mubr.bf16.mxu0 0
    %2444 = vmatmul.mubr.bf16.gmra.mrb[0].mxu0 %v2406
    %v2445 = vpop.f32.mrb[0].mxu0
    %v2446 = vadd.f32 0.0, %v2445
    %v2447 = vpop.f32.mrb[0].mxu0
    %v2448 = vpop.f32.mrb[0].mxu0
    %v2449 = vpop.f32.mrb[0].mxu0
    %2450 = vdwg.mxu0
    %v2452 = vsel %vm2404, %v2393, 0
    %v2455 = vsel %vm2404, %v2397, 0
    %2457 = vmatprep.subr.bf16.mxu0 0
    %2458 = vmatpush1.bf16.xpose.msra.mxu0 %v2455
    %2459 = vmatprep.subr.bf16.mxu0 0
    %2460 = vmatpush1.bf16.xpose.msra.mxu0 0
    %2461 = vmatprep.subr.bf16.mxu0 0
    %2462 = vmatpush1.bf16.xpose.msra.mxu0 0
    %2463 = vmatprep.subr.bf16.mxu0 0
    %2464 = vmatpush1.bf16.xpose.msra.mxu0 0
    %2465 = vmatprep.subr.bf16.mxu0 0
    %2466 = vmatpush1.bf16.xpose.msra.mxu0 0
    %2467 = vmatprep.subr.bf16.mxu0 0
    %2468 = vmatpush1.bf16.xpose.msra.mxu0 0
    %2469 = vmatprep.subr.bf16.mxu0 0
    %2470 = vmatpush1.bf16.xpose.msra.mxu0 0
    %2471 = vmatprep.subr.bf16.mxu0 0
    %2472 = vmatpush1.bf16.xpose.msra.mxu0 0
    %2473 = vmatprep.subr.bf16.mxu0 0
    %2474 = vmatpush1.bf16.xpose.msra.mxu0 0
    %2475 = vmatprep.subr.bf16.mxu0 0
    %2476 = vmatpush1.bf16.xpose.msra.mxu0 0
    %2477 = vmatprep.subr.bf16.mxu0 0
    %2478 = vmatpush1.bf16.xpose.msra.mxu0 0
    %2479 = vmatprep.subr.bf16.mxu0 0
    %2480 = vmatpush1.bf16.xpose.msra.mxu0 0
    %2481 = vmatprep.subr.bf16.mxu0 0
    %2482 = vmatpush1.bf16.xpose.msra.mxu0 0
    %2483 = vmatprep.subr.bf16.mxu0 0
    %2484 = vmatpush1.bf16.xpose.msra.mxu0 0
    %2485 = vmatprep.subr.bf16.mxu0 0
    %2486 = vmatpush1.bf16.xpose.msra.mxu0 0
    %2487 = vmatprep.subr.bf16.mxu0 0
    %2488 = vmatpush1.bf16.xpose.msra.mxu0 0
    %2489 = vmatprep.mubr.bf16.mxu0 0
    %2490 = vmatmul.mubr.bf16.gmra.mrb[0].mxu0 %v2452
    %v2491 = vpop.f32.mrb[0].mxu0
    %v2492 = vadd.f32 0.0, %v2491
    %v2493 = vpop.f32.mrb[0].mxu0
    %v2494 = vpop.f32.mrb[0].mxu0
    %v2495 = vpop.f32.mrb[0].mxu0
    %2496 = vdwg.mxu0
    %v2498 = vsel %vm2404, %v2394, 0
    %v2501 = vsel %vm2404, %v2398, 0
    %2503 = vmatprep.subr.bf16.mxu0 0
    %2504 = vmatpush1.bf16.xpose.msra.mxu0 %v2501
    %2505 = vmatprep.subr.bf16.mxu0 0
    %2506 = vmatpush1.bf16.xpose.msra.mxu0 0
    %2507 = vmatprep.subr.bf16.mxu0 0
    %2508 = vmatpush1.bf16.xpose.msra.mxu0 0
    %2509 = vmatprep.subr.bf16.mxu0 0
    %2510 = vmatpush1.bf16.xpose.msra.mxu0 0
    %2511 = vmatprep.subr.bf16.mxu0 0
    %2512 = vmatpush1.bf16.xpose.msra.mxu0 0
    %2513 = vmatprep.subr.bf16.mxu0 0
    %2514 = vmatpush1.bf16.xpose.msra.mxu0 0
    %2515 = vmatprep.subr.bf16.mxu0 0
    %2516 = vmatpush1.bf16.xpose.msra.mxu0 0
    %2517 = vmatprep.subr.bf16.mxu0 0
    %2518 = vmatpush1.bf16.xpose.msra.mxu0 0
    %2519 = vmatprep.subr.bf16.mxu0 0
    %2520 = vmatpush1.bf16.xpose.msra.mxu0 0
    %2521 = vmatprep.subr.bf16.mxu0 0
    %2522 = vmatpush1.bf16.xpose.msra.mxu0 0
    %2523 = vmatprep.subr.bf16.mxu0 0
    %2524 = vmatpush1.bf16.xpose.msra.mxu0 0
    %2525 = vmatprep.subr.bf16.mxu0 0
    %2526 = vmatpush1.bf16.xpose.msra.mxu0 0
    %2527 = vmatprep.subr.bf16.mxu0 0
    %2528 = vmatpush1.bf16.xpose.msra.mxu0 0
    %2529 = vmatprep.subr.bf16.mxu0 0
    %2530 = vmatpush1.bf16.xpose.msra.mxu0 0
    %2531 = vmatprep.subr.bf16.mxu0 0
    %2532 = vmatpush1.bf16.xpose.msra.mxu0 0
    %2533 = vmatprep.subr.bf16.mxu0 0
    %2534 = vmatpush1.bf16.xpose.msra.mxu0 0
    %2535 = vmatprep.mubr.bf16.mxu0 0
    %2536 = vmatmul.mubr.bf16.gmra.mrb[0].mxu0 %v2498
    %v2537 = vpop.f32.mrb[0].mxu0
    %v2538 = vadd.f32 0.0, %v2537
    %v2539 = vpop.f32.mrb[0].mxu0
    %v2540 = vpop.f32.mrb[0].mxu0
    %v2541 = vpop.f32.mrb[0].mxu0
    %2542 = vdwg.mxu0
    %v2544 = vsel %vm2404, %v2395, 0
    %v2547 = vsel %vm2404, %v2399, 0
    %2549 = vmatprep.subr.bf16.mxu0 0
    %2550 = vmatpush1.bf16.xpose.msra.mxu0 %v2547
    %2551 = vmatprep.subr.bf16.mxu0 0
    %2552 = vmatpush1.bf16.xpose.msra.mxu0 0
    %2553 = vmatprep.subr.bf16.mxu0 0
    %2554 = vmatpush1.bf16.xpose.msra.mxu0 0
    %2555 = vmatprep.subr.bf16.mxu0 0
    %2556 = vmatpush1.bf16.xpose.msra.mxu0 0
    %2557 = vmatprep.subr.bf16.mxu0 0
    %2558 = vmatpush1.bf16.xpose.msra.mxu0 0
    %2559 = vmatprep.subr.bf16.mxu0 0
    %2560 = vmatpush1.bf16.xpose.msra.mxu0 0
    %2561 = vmatprep.subr.bf16.mxu0 0
    %2562 = vmatpush1.bf16.xpose.msra.mxu0 0
    %2563 = vmatprep.subr.bf16.mxu0 0
    %2564 = vmatpush1.bf16.xpose.msra.mxu0 0
    %2565 = vmatprep.subr.bf16.mxu0 0
    %2566 = vmatpush1.bf16.xpose.msra.mxu0 0
    %2567 = vmatprep.subr.bf16.mxu0 0
    %2568 = vmatpush1.bf16.xpose.msra.mxu0 0
    %2569 = vmatprep.subr.bf16.mxu0 0
    %2570 = vmatpush1.bf16.xpose.msra.mxu0 0
    %2571 = vmatprep.subr.bf16.mxu0 0
    %2572 = vmatpush1.bf16.xpose.msra.mxu0 0
    %2573 = vmatprep.subr.bf16.mxu0 0
    %2574 = vmatpush1.bf16.xpose.msra.mxu0 0
    %2575 = vmatprep.subr.bf16.mxu0 0
    %2576 = vmatpush1.bf16.xpose.msra.mxu0 0
    %2577 = vmatprep.subr.bf16.mxu0 0
    %2578 = vmatpush1.bf16.xpose.msra.mxu0 0
    %2579 = vmatprep.subr.bf16.mxu0 0
    %2580 = vmatpush1.bf16.xpose.msra.mxu0 0
    %2581 = vmatprep.mubr.bf16.mxu0 0
    %2582 = vmatmul.mubr.bf16.gmra.mrb[0].mxu0 %v2544
    %v2583 = vpop.f32.mrb[0].mxu0
    %v2584 = vadd.f32 0.0, %v2583
    %v2585 = vpop.f32.mrb[0].mxu0
    %v2586 = vpop.f32.mrb[0].mxu0
    %v2587 = vpop.f32.mrb[0].mxu0
    %2588 = vdwg.mxu0
    %v2589 = vsel %vm2391, 1, 0
    %vm2590 = vcmp.eq.s32.totalorder %v2589, 1
    %v2591 = vsel %vm2590, %v2446, -1e+30
    %v2592 = vsel %vm2590, %v2492, -1e+30
    %v2593 = vsel %vm2590, %v2538, -1e+30
    %v2594 = vsel %vm2590, %v2584, -1e+30
    %vm2595 = vcmask 64512
    %v2596 = vsel %vm2595, %v2591, -inf
    %2597 = vmax.xlane.f32.xlu0 %v2596
    %v2598 = vpop.xlane.xlu0 %2597
    %v2599 = vsel %vm2595, %v2592, -inf
    %2600 = vmax.xlane.f32.xlu0 %v2599
    %v2601 = vpop.xlane.xlu0 %2600
    %v2602 = vsel %vm2595, %v2593, -inf
    %2603 = vmax.xlane.f32.xlu0 %v2602
    %v2604 = vpop.xlane.xlu0 %2603
    %v2605 = vsel %vm2595, %v2594, -inf
    %2606 = vmax.xlane.f32.xlu0 %v2605
    %v2607 = vpop.xlane.xlu0 %2606
    %v2608 = vsub.f32 %v2591, %v2598
    %v2609 = vsub.f32 %v2592, %v2601
    %v2610 = vsub.f32 %v2593, %v2604
    %v2611 = vsub.f32 %v2594, %v2607
    %v2612 = vmul.f32 %v2608, 1.442695
    %v2613 = vpow.pop %v2612
    %v2614 = vmul.f32 %v2609, 1.442695
    %v2615 = vpow.pop %v2614
    %v2616 = vmul.f32 %v2610, 1.442695
    %v2617 = vpow.pop %v2616
    %v2618 = vmul.f32 %v2611, 1.442695
    %v2619 = vpow.pop %v2618
    %v2620 = vsel %vm2595, %v2613, 0.0
    %2621 = vadd.xlane.f32.xlu0 %v2620
    %v2622 = vpop.xlane.xlu0 %2621
    %v2623 = vsel %vm2595, %v2615, 0.0
    %2624 = vadd.xlane.f32.xlu0 %v2623
    %v2625 = vpop.xlane.xlu0 %2624
    %v2626 = vsel %vm2595, %v2617, 0.0
    %2627 = vadd.xlane.f32.xlu0 %v2626
    %v2628 = vpop.xlane.xlu0 %2627
    %v2629 = vsel %vm2595, %v2619, 0.0
    %2630 = vadd.xlane.f32.xlu0 %v2629
    %v2631 = vpop.xlane.xlu0 %2630
    %v2632 = vrcp.pop %v2622
    %v2633 = vrcp.pop %v2625
    %v2634 = vrcp.pop %v2628
    %v2635 = vrcp.pop %v2631
    %v2636 = vmul.f32 %v2613, %v2632
    %v2637 = vmul.f32 %v2615, %v2633
    %v2638 = vmul.f32 %v2617, %v2634
    %v2639 = vmul.f32 %v2619, %v2635
    %v2640 = vpack.c.bf16 %v2636, %v2636
    %v2641 = vpack.c.bf16 %v2637, %v2637
    %v2642 = vpack.c.bf16 %v2638, %v2638
    %v2643 = vpack.c.bf16 %v2639, %v2639
    %v2645 = vsel %vm2595, %v2640, 0
    %vm2647 = vcmask 1043456
    %v2649 = vsel %vm2647, %v2400, 0
    %2651 = vmatprep.subr.bf16.mxu0 0
    %2652 = vmatpush1.bf16.msra.mxu0 %v2649
    %2653 = vmatprep.subr.bf16.mxu0 0
    %2654 = vmatpush1.bf16.msra.mxu0 0
    %2655 = vmatprep.subr.bf16.mxu0 0
    %2656 = vmatpush1.bf16.msra.mxu0 0
    %2657 = vmatprep.subr.bf16.mxu0 0
    %2658 = vmatpush1.bf16.msra.mxu0 0
    %2659 = vmatprep.subr.bf16.mxu0 0
    %2660 = vmatpush1.bf16.msra.mxu0 0
    %2661 = vmatprep.subr.bf16.mxu0 0
    %2662 = vmatpush1.bf16.msra.mxu0 0
    %2663 = vmatprep.subr.bf16.mxu0 0
    %2664 = vmatpush1.bf16.msra.mxu0 0
    %2665 = vmatprep.subr.bf16.mxu0 0
    %2666 = vmatpush1.bf16.msra.mxu0 0
    %2667 = vmatprep.subr.bf16.mxu0 0
    %2668 = vmatpush1.bf16.msra.mxu0 0
    %2669 = vmatprep.subr.bf16.mxu0 0
    %2670 = vmatpush1.bf16.msra.mxu0 0
    %2671 = vmatprep.subr.bf16.mxu0 0
    %2672 = vmatpush1.bf16.msra.mxu0 0
    %2673 = vmatprep.subr.bf16.mxu0 0
    %2674 = vmatpush1.bf16.msra.mxu0 0
    %2675 = vmatprep.subr.bf16.mxu0 0
    %2676 = vmatpush1.bf16.msra.mxu0 0
    %2677 = vmatprep.subr.bf16.mxu0 0
    %2678 = vmatpush1.bf16.msra.mxu0 0
    %2679 = vmatprep.subr.bf16.mxu0 0
    %2680 = vmatpush1.bf16.msra.mxu0 0
    %2681 = vmatprep.subr.bf16.mxu0 0
    %2682 = vmatpush1.bf16.msra.mxu0 0
    %2683 = vmatprep.mubr.bf16.mxu0 0
    %2684 = vmatmul.mubr.bf16.gmra.mrb[0].mxu0 %v2645
    %v2685 = vpop.f32.mrb[0].mxu0
    %v2686 = vadd.f32 0.0, %v2685
    %v2687 = vpop.f32.mrb[0].mxu0
    %v2688 = vpop.f32.mrb[0].mxu0
    %v2689 = vpop.f32.mrb[0].mxu0
    %2690 = vdwg.mxu0
    %v2692 = vsel %vm2595, %v2641, 0
    %v2695 = vsel %vm2647, %v2401, 0
    %2697 = vmatprep.subr.bf16.mxu0 0
    %2698 = vmatpush1.bf16.msra.mxu0 %v2695
    %2699 = vmatprep.subr.bf16.mxu0 0
    %2700 = vmatpush1.bf16.msra.mxu0 0
    %2701 = vmatprep.subr.bf16.mxu0 0
    %2702 = vmatpush1.bf16.msra.mxu0 0
    %2703 = vmatprep.subr.bf16.mxu0 0
    %2704 = vmatpush1.bf16.msra.mxu0 0
    %2705 = vmatprep.subr.bf16.mxu0 0
    %2706 = vmatpush1.bf16.msra.mxu0 0
    %2707 = vmatprep.subr.bf16.mxu0 0
    %2708 = vmatpush1.bf16.msra.mxu0 0
    %2709 = vmatprep.subr.bf16.mxu0 0
    %2710 = vmatpush1.bf16.msra.mxu0 0
    %2711 = vmatprep.subr.bf16.mxu0 0
    %2712 = vmatpush1.bf16.msra.mxu0 0
    %2713 = vmatprep.subr.bf16.mxu0 0
    %2714 = vmatpush1.bf16.msra.mxu0 0
    %2715 = vmatprep.subr.bf16.mxu0 0
    %2716 = vmatpush1.bf16.msra.mxu0 0
    %2717 = vmatprep.subr.bf16.mxu0 0
    %2718 = vmatpush1.bf16.msra.mxu0 0
    %2719 = vmatprep.subr.bf16.mxu0 0
    %2720 = vmatpush1.bf16.msra.mxu0 0
    %2721 = vmatprep.subr.bf16.mxu0 0
    %2722 = vmatpush1.bf16.msra.mxu0 0
    %2723 = vmatprep.subr.bf16.mxu0 0
    %2724 = vmatpush1.bf16.msra.mxu0 0
    %2725 = vmatprep.subr.bf16.mxu0 0
    %2726 = vmatpush1.bf16.msra.mxu0 0
    %2727 = vmatprep.subr.bf16.mxu0 0
    %2728 = vmatpush1.bf16.msra.mxu0 0
    %2729 = vmatprep.mubr.bf16.mxu0 0
    %2730 = vmatmul.mubr.bf16.gmra.mrb[0].mxu0 %v2692
    %v2731 = vpop.f32.mrb[0].mxu0
    %v2732 = vadd.f32 0.0, %v2731
    %v2733 = vpop.f32.mrb[0].mxu0
    %v2734 = vpop.f32.mrb[0].mxu0
    %v2735 = vpop.f32.mrb[0].mxu0
    %2736 = vdwg.mxu0
    %v2738 = vsel %vm2595, %v2642, 0
    %v2741 = vsel %vm2647, %v2402, 0
    %2743 = vmatprep.subr.bf16.mxu0 0
    %2744 = vmatpush1.bf16.msra.mxu0 %v2741
    %2745 = vmatprep.subr.bf16.mxu0 0
    %2746 = vmatpush1.bf16.msra.mxu0 0
    %2747 = vmatprep.subr.bf16.mxu0 0
    %2748 = vmatpush1.bf16.msra.mxu0 0
    %2749 = vmatprep.subr.bf16.mxu0 0
    %2750 = vmatpush1.bf16.msra.mxu0 0
    %2751 = vmatprep.subr.bf16.mxu0 0
    %2752 = vmatpush1.bf16.msra.mxu0 0
    %2753 = vmatprep.subr.bf16.mxu0 0
    %2754 = vmatpush1.bf16.msra.mxu0 0
    %2755 = vmatprep.subr.bf16.mxu0 0
    %2756 = vmatpush1.bf16.msra.mxu0 0
    %2757 = vmatprep.subr.bf16.mxu0 0
    %2758 = vmatpush1.bf16.msra.mxu0 0
    %2759 = vmatprep.subr.bf16.mxu0 0
    %2760 = vmatpush1.bf16.msra.mxu0 0
    %2761 = vmatprep.subr.bf16.mxu0 0
    %2762 = vmatpush1.bf16.msra.mxu0 0
    %2763 = vmatprep.subr.bf16.mxu0 0
    %2764 = vmatpush1.bf16.msra.mxu0 0
    %2765 = vmatprep.subr.bf16.mxu0 0
    %2766 = vmatpush1.bf16.msra.mxu0 0
    %2767 = vmatprep.subr.bf16.mxu0 0
    %2768 = vmatpush1.bf16.msra.mxu0 0
    %2769 = vmatprep.subr.bf16.mxu0 0
    %2770 = vmatpush1.bf16.msra.mxu0 0
    %2771 = vmatprep.subr.bf16.mxu0 0
    %2772 = vmatpush1.bf16.msra.mxu0 0
    %2773 = vmatprep.subr.bf16.mxu0 0
    %2774 = vmatpush1.bf16.msra.mxu0 0
    %2775 = vmatprep.mubr.bf16.mxu0 0
    %2776 = vmatmul.mubr.bf16.gmra.mrb[0].mxu0 %v2738
    %v2777 = vpop.f32.mrb[0].mxu0
    %v2778 = vadd.f32 0.0, %v2777
    %v2779 = vpop.f32.mrb[0].mxu0
    %v2780 = vpop.f32.mrb[0].mxu0
    %v2781 = vpop.f32.mrb[0].mxu0
    %2782 = vdwg.mxu0
    %v2784 = vsel %vm2595, %v2643, 0
    %v2787 = vsel %vm2647, %v2403, 0
    %2789 = vmatprep.subr.bf16.mxu0 0
    %2790 = vmatpush1.bf16.msra.mxu0 %v2787
    %2791 = vmatprep.subr.bf16.mxu0 0
    %2792 = vmatpush1.bf16.msra.mxu0 0
    %2793 = vmatprep.subr.bf16.mxu0 0
    %2794 = vmatpush1.bf16.msra.mxu0 0
    %2795 = vmatprep.subr.bf16.mxu0 0
    %2796 = vmatpush1.bf16.msra.mxu0 0
    %2797 = vmatprep.subr.bf16.mxu0 0
    %2798 = vmatpush1.bf16.msra.mxu0 0
    %2799 = vmatprep.subr.bf16.mxu0 0
    %2800 = vmatpush1.bf16.msra.mxu0 0
    %2801 = vmatprep.subr.bf16.mxu0 0
    %2802 = vmatpush1.bf16.msra.mxu0 0
    %2803 = vmatprep.subr.bf16.mxu0 0
    %2804 = vmatpush1.bf16.msra.mxu0 0
    %2805 = vmatprep.subr.bf16.mxu0 0
    %2806 = vmatpush1.bf16.msra.mxu0 0
    %2807 = vmatprep.subr.bf16.mxu0 0
    %2808 = vmatpush1.bf16.msra.mxu0 0
    %2809 = vmatprep.subr.bf16.mxu0 0
    %2810 = vmatpush1.bf16.msra.mxu0 0
    %2811 = vmatprep.subr.bf16.mxu0 0
    %2812 = vmatpush1.bf16.msra.mxu0 0
    %2813 = vmatprep.subr.bf16.mxu0 0
    %2814 = vmatpush1.bf16.msra.mxu0 0
    %2815 = vmatprep.subr.bf16.mxu0 0
    %2816 = vmatpush1.bf16.msra.mxu0 0
    %2817 = vmatprep.subr.bf16.mxu0 0
    %2818 = vmatpush1.bf16.msra.mxu0 0
    %2819 = vmatprep.subr.bf16.mxu0 0
    %2820 = vmatpush1.bf16.msra.mxu0 0
    %2821 = vmatprep.mubr.bf16.mxu0 0
    %2822 = vmatmul.mubr.bf16.gmra.mrb[0].mxu0 %v2784
    %v2823 = vpop.f32.mrb[0].mxu0
    %v2824 = vadd.f32 0.0, %v2823
    %v2825 = vpop.f32.mrb[0].mxu0
    %v2826 = vpop.f32.mrb[0].mxu0
    %v2827 = vpop.f32.mrb[0].mxu0
    %2828 = vdwg.mxu0
    %v2829 = vld [vmem:[#allocation2] sm:$0xf]
    %v2830 = vld [vmem:[#allocation2 + $0x24] sm:$0xf]
    %v2831 = vld [vmem:[#allocation2 + $0x48] sm:$0xf]
    %v2832 = vld [vmem:[#allocation2 + $0x6c] sm:$0xf]
    %v2833 = vld [vmem:[#allocation2 + $0xc] sm:$0xf]
    %v2834 = vld [vmem:[#allocation2 + $0x30] sm:$0xf]
    %v2835 = vld [vmem:[#allocation2 + $0x54] sm:$0xf]
    %v2836 = vld [vmem:[#allocation2 + $0x78] sm:$0xf]
    %v2837 = vld [vmem:[#allocation2 + $0x18] sm:$0xf]
    %v2838 = vld [vmem:[#allocation2 + $0x3c] sm:$0xf]
    %v2839 = vld [vmem:[#allocation2 + $0x60] sm:$0xf]
    %v2840 = vld [vmem:[#allocation2 + $0x84] sm:$0xf]
    %v2842 = vunpack.c.l.b16 %v2829
    %v2843 = vpack.c.b16 %v2842, %v2842
    %2844 = vrot.lane.b32.xlu0 %v2843, 64
    %v2845 = vpop.permute.xlu0 %2844
    %v2847 = vunpack.c.l.b16 %v2833
    %v2848 = vpack.c.b16 %v2847, %v2847
    %2849 = vrot.lane.b32.xlu0 %v2848, 64
    %v2850 = vpop.permute.xlu0 %2849
    %v2852 = vsel %vm2404, %v2845, 0
    %v2855 = vsel %vm2404, %v2850, 0
    %2857 = vmatprep.subr.bf16.mxu0 0
    %2858 = vmatpush1.bf16.xpose.msra.mxu0 %v2855
    %2859 = vmatprep.subr.bf16.mxu0 0
    %2860 = vmatpush1.bf16.xpose.msra.mxu0 0
    %2861 = vmatprep.subr.bf16.mxu0 0
    %2862 = vmatpush1.bf16.xpose.msra.mxu0 0
    %2863 = vmatprep.subr.bf16.mxu0 0
    %2864 = vmatpush1.bf16.xpose.msra.mxu0 0
    %2865 = vmatprep.subr.bf16.mxu0 0
    %2866 = vmatpush1.bf16.xpose.msra.mxu0 0
    %2867 = vmatprep.subr.bf16.mxu0 0
    %2868 = vmatpush1.bf16.xpose.msra.mxu0 0
    %2869 = vmatprep.subr.bf16.mxu0 0
    %2870 = vmatpush1.bf16.xpose.msra.mxu0 0
    %2871 = vmatprep.subr.bf16.mxu0 0
    %2872 = vmatpush1.bf16.xpose.msra.mxu0 0
    %2873 = vmatprep.subr.bf16.mxu0 0
    %2874 = vmatpush1.bf16.xpose.msra.mxu0 0
    %2875 = vmatprep.subr.bf16.mxu0 0
    %2876 = vmatpush1.bf16.xpose.msra.mxu0 0
    %2877 = vmatprep.subr.bf16.mxu0 0
    %2878 = vmatpush1.bf16.xpose.msra.mxu0 0
    %2879 = vmatprep.subr.bf16.mxu0 0
    %2880 = vmatpush1.bf16.xpose.msra.mxu0 0
    %2881 = vmatprep.subr.bf16.mxu0 0
    %2882 = vmatpush1.bf16.xpose.msra.mxu0 0
    %2883 = vmatprep.subr.bf16.mxu0 0
    %2884 = vmatpush1.bf16.xpose.msra.mxu0 0
    %2885 = vmatprep.subr.bf16.mxu0 0
    %2886 = vmatpush1.bf16.xpose.msra.mxu0 0
    %2887 = vmatprep.subr.bf16.mxu0 0
    %2888 = vmatpush1.bf16.xpose.msra.mxu0 0
    %2889 = vmatprep.mubr.bf16.mxu0 0
    %2890 = vmatmul.mubr.bf16.gmra.mrb[0].mxu0 %v2852
    %v2891 = vpop.f32.mrb[0].mxu0
    %v2892 = vadd.f32 0.0, %v2891
    %v2893 = vpop.f32.mrb[0].mxu0
    %v2894 = vpop.f32.mrb[0].mxu0
    %v2895 = vpop.f32.mrb[0].mxu0
    %2896 = vdwg.mxu0
    %v2898 = vunpack.c.l.b16 %v2830
    %v2899 = vpack.c.b16 %v2898, %v2898
    %2900 = vrot.lane.b32.xlu0 %v2899, 64
    %v2901 = vpop.permute.xlu0 %2900
    %v2903 = vunpack.c.l.b16 %v2834
    %v2904 = vpack.c.b16 %v2903, %v2903
    %2905 = vrot.lane.b32.xlu0 %v2904, 64
    %v2906 = vpop.permute.xlu0 %2905
    %v2908 = vsel %vm2404, %v2901, 0
    %v2911 = vsel %vm2404, %v2906, 0
    %2913 = vmatprep.subr.bf16.mxu0 0
    %2914 = vmatpush1.bf16.xpose.msra.mxu0 %v2911
    %2915 = vmatprep.subr.bf16.mxu0 0
    %2916 = vmatpush1.bf16.xpose.msra.mxu0 0
    %2917 = vmatprep.subr.bf16.mxu0 0
    %2918 = vmatpush1.bf16.xpose.msra.mxu0 0
    %2919 = vmatprep.subr.bf16.mxu0 0
    %2920 = vmatpush1.bf16.xpose.msra.mxu0 0
    %2921 = vmatprep.subr.bf16.mxu0 0
    %2922 = vmatpush1.bf16.xpose.msra.mxu0 0
    %2923 = vmatprep.subr.bf16.mxu0 0
    %2924 = vmatpush1.bf16.xpose.msra.mxu0 0
    %2925 = vmatprep.subr.bf16.mxu0 0
    %2926 = vmatpush1.bf16.xpose.msra.mxu0 0
    %2927 = vmatprep.subr.bf16.mxu0 0
    %2928 = vmatpush1.bf16.xpose.msra.mxu0 0
    %2929 = vmatprep.subr.bf16.mxu0 0
    %2930 = vmatpush1.bf16.xpose.msra.mxu0 0
    %2931 = vmatprep.subr.bf16.mxu0 0
    %2932 = vmatpush1.bf16.xpose.msra.mxu0 0
    %2933 = vmatprep.subr.bf16.mxu0 0
    %2934 = vmatpush1.bf16.xpose.msra.mxu0 0
    %2935 = vmatprep.subr.bf16.mxu0 0
    %2936 = vmatpush1.bf16.xpose.msra.mxu0 0
    %2937 = vmatprep.subr.bf16.mxu0 0
    %2938 = vmatpush1.bf16.xpose.msra.mxu0 0
    %2939 = vmatprep.subr.bf16.mxu0 0
    %2940 = vmatpush1.bf16.xpose.msra.mxu0 0
    %2941 = vmatprep.subr.bf16.mxu0 0
    %2942 = vmatpush1.bf16.xpose.msra.mxu0 0
    %2943 = vmatprep.subr.bf16.mxu0 0
    %2944 = vmatpush1.bf16.xpose.msra.mxu0 0
    %2945 = vmatprep.mubr.bf16.mxu0 0
    %2946 = vmatmul.mubr.bf16.gmra.mrb[0].mxu0 %v2908
    %v2947 = vpop.f32.mrb[0].mxu0
    %v2948 = vadd.f32 0.0, %v2947
    %v2949 = vpop.f32.mrb[0].mxu0
    %v2950 = vpop.f32.mrb[0].mxu0
    %v2951 = vpop.f32.mrb[0].mxu0
    %2952 = vdwg.mxu0
    %v2954 = vunpack.c.l.b16 %v2831
    %v2955 = vpack.c.b16 %v2954, %v2954
    %2956 = vrot.lane.b32.xlu0 %v2955, 64
    %v2957 = vpop.permute.xlu0 %2956
    %v2959 = vunpack.c.l.b16 %v2835
    %v2960 = vpack.c.b16 %v2959, %v2959
    %2961 = vrot.lane.b32.xlu0 %v2960, 64
    %v2962 = vpop.permute.xlu0 %2961
    %v2964 = vsel %vm2404, %v2957, 0
    %v2967 = vsel %vm2404, %v2962, 0
    %2969 = vmatprep.subr.bf16.mxu0 0
    %2970 = vmatpush1.bf16.xpose.msra.mxu0 %v2967
    %2971 = vmatprep.subr.bf16.mxu0 0
    %2972 = vmatpush1.bf16.xpose.msra.mxu0 0
    %2973 = vmatprep.subr.bf16.mxu0 0
    %2974 = vmatpush1.bf16.xpose.msra.mxu0 0
    %2975 = vmatprep.subr.bf16.mxu0 0
    %2976 = vmatpush1.bf16.xpose.msra.mxu0 0
    %2977 = vmatprep.subr.bf16.mxu0 0
    %2978 = vmatpush1.bf16.xpose.msra.mxu0 0
    %2979 = vmatprep.subr.bf16.mxu0 0
    %2980 = vmatpush1.bf16.xpose.msra.mxu0 0
    %2981 = vmatprep.subr.bf16.mxu0 0
    %2982 = vmatpush1.bf16.xpose.msra.mxu0 0
    %2983 = vmatprep.subr.bf16.mxu0 0
    %2984 = vmatpush1.bf16.xpose.msra.mxu0 0
    %2985 = vmatprep.subr.bf16.mxu0 0
    %2986 = vmatpush1.bf16.xpose.msra.mxu0 0
    %2987 = vmatprep.subr.bf16.mxu0 0
    %2988 = vmatpush1.bf16.xpose.msra.mxu0 0
    %2989 = vmatprep.subr.bf16.mxu0 0
    %2990 = vmatpush1.bf16.xpose.msra.mxu0 0
    %2991 = vmatprep.subr.bf16.mxu0 0
    %2992 = vmatpush1.bf16.xpose.msra.mxu0 0
    %2993 = vmatprep.subr.bf16.mxu0 0
    %2994 = vmatpush1.bf16.xpose.msra.mxu0 0
    %2995 = vmatprep.subr.bf16.mxu0 0
    %2996 = vmatpush1.bf16.xpose.msra.mxu0 0
    %2997 = vmatprep.subr.bf16.mxu0 0
    %2998 = vmatpush1.bf16.xpose.msra.mxu0 0
    %2999 = vmatprep.subr.bf16.mxu0 0
    %3000 = vmatpush1.bf16.xpose.msra.mxu0 0
    %3001 = vmatprep.mubr.bf16.mxu0 0
    %3002 = vmatmul.mubr.bf16.gmra.mrb[0].mxu0 %v2964
    %v3003 = vpop.f32.mrb[0].mxu0
    %v3004 = vadd.f32 0.0, %v3003
    %v3005 = vpop.f32.mrb[0].mxu0
    %v3006 = vpop.f32.mrb[0].mxu0
    %v3007 = vpop.f32.mrb[0].mxu0
    %3008 = vdwg.mxu0
    %v3010 = vunpack.c.l.b16 %v2832
    %v3011 = vpack.c.b16 %v3010, %v3010
    %3012 = vrot.lane.b32.xlu0 %v3011, 64
    %v3013 = vpop.permute.xlu0 %3012
    %v3015 = vunpack.c.l.b16 %v2836
    %v3016 = vpack.c.b16 %v3015, %v3015
    %3017 = vrot.lane.b32.xlu0 %v3016, 64
    %v3018 = vpop.permute.xlu0 %3017
    %v3020 = vsel %vm2404, %v3013, 0
    %v3023 = vsel %vm2404, %v3018, 0
    %3025 = vmatprep.subr.bf16.mxu0 0
    %3026 = vmatpush1.bf16.xpose.msra.mxu0 %v3023
    %3027 = vmatprep.subr.bf16.mxu0 0
    %3028 = vmatpush1.bf16.xpose.msra.mxu0 0
    %3029 = vmatprep.subr.bf16.mxu0 0
    %3030 = vmatpush1.bf16.xpose.msra.mxu0 0
    %3031 = vmatprep.subr.bf16.mxu0 0
    %3032 = vmatpush1.bf16.xpose.msra.mxu0 0
    %3033 = vmatprep.subr.bf16.mxu0 0
    %3034 = vmatpush1.bf16.xpose.msra.mxu0 0
    %3035 = vmatprep.subr.bf16.mxu0 0
    %3036 = vmatpush1.bf16.xpose.msra.mxu0 0
    %3037 = vmatprep.subr.bf16.mxu0 0
    %3038 = vmatpush1.bf16.xpose.msra.mxu0 0
    %3039 = vmatprep.subr.bf16.mxu0 0
    %3040 = vmatpush1.bf16.xpose.msra.mxu0 0
    %3041 = vmatprep.subr.bf16.mxu0 0
    %3042 = vmatpush1.bf16.xpose.msra.mxu0 0
    %3043 = vmatprep.subr.bf16.mxu0 0
    %3044 = vmatpush1.bf16.xpose.msra.mxu0 0
    %3045 = vmatprep.subr.bf16.mxu0 0
    %3046 = vmatpush1.bf16.xpose.msra.mxu0 0
    %3047 = vmatprep.subr.bf16.mxu0 0
    %3048 = vmatpush1.bf16.xpose.msra.mxu0 0
    %3049 = vmatprep.subr.bf16.mxu0 0
    %3050 = vmatpush1.bf16.xpose.msra.mxu0 0
    %3051 = vmatprep.subr.bf16.mxu0 0
    %3052 = vmatpush1.bf16.xpose.msra.mxu0 0
    %3053 = vmatprep.subr.bf16.mxu0 0
    %3054 = vmatpush1.bf16.xpose.msra.mxu0 0
    %3055 = vmatprep.subr.bf16.mxu0 0
    %3056 = vmatpush1.bf16.xpose.msra.mxu0 0
    %3057 = vmatprep.mubr.bf16.mxu0 0
    %3058 = vmatmul.mubr.bf16.gmra.mrb[0].mxu0 %v3020
    %v3059 = vpop.f32.mrb[0].mxu0
    %v3060 = vadd.f32 0.0, %v3059
    %v3061 = vpop.f32.mrb[0].mxu0
    %v3062 = vpop.f32.mrb[0].mxu0
    %v3063 = vpop.f32.mrb[0].mxu0
    %3064 = vdwg.mxu0
    %v3065 = vsel %vm2590, %v2892, -1e+30
    %v3066 = vsel %vm2590, %v2948, -1e+30
    %v3067 = vsel %vm2590, %v3004, -1e+30
    %v3068 = vsel %vm2590, %v3060, -1e+30
    %v3069 = vsel %vm2595, %v3065, -inf
    %3070 = vmax.xlane.f32.xlu0 %v3069
    %v3071 = vpop.xlane.xlu0 %3070
    %v3072 = vsel %vm2595, %v3066, -inf
    %3073 = vmax.xlane.f32.xlu0 %v3072
    %v3074 = vpop.xlane.xlu0 %3073
    %v3075 = vsel %vm2595, %v3067, -inf
    %3076 = vmax.xlane.f32.xlu0 %v3075
    %v3077 = vpop.xlane.xlu0 %3076
    %v3078 = vsel %vm2595, %v3068, -inf
    %3079 = vmax.xlane.f32.xlu0 %v3078
    %v3080 = vpop.xlane.xlu0 %3079
    %v3081 = vsub.f32 %v3065, %v3071
    %v3082 = vsub.f32 %v3066, %v3074
    %v3083 = vsub.f32 %v3067, %v3077
    %v3084 = vsub.f32 %v3068, %v3080
    %v3085 = vmul.f32 %v3081, 1.442695
    %v3086 = vpow.pop %v3085
    %v3087 = vmul.f32 %v3082, 1.442695
    %v3088 = vpow.pop %v3087
    %v3089 = vmul.f32 %v3083, 1.442695
    %v3090 = vpow.pop %v3089
    %v3091 = vmul.f32 %v3084, 1.442695
    %v3092 = vpow.pop %v3091
    %v3093 = vsel %vm2595, %v3086, 0.0
    %3094 = vadd.xlane.f32.xlu0 %v3093
    %v3095 = vpop.xlane.xlu0 %3094
    %v3096 = vsel %vm2595, %v3088, 0.0
    %3097 = vadd.xlane.f32.xlu0 %v3096
    %v3098 = vpop.xlane.xlu0 %3097
    %v3099 = vsel %vm2595, %v3090, 0.0
    %3100 = vadd.xlane.f32.xlu0 %v3099
    %v3101 = vpop.xlane.xlu0 %3100
    %v3102 = vsel %vm2595, %v3092, 0.0
    %3103 = vadd.xlane.f32.xlu0 %v3102
    %v3104 = vpop.xlane.xlu0 %3103
    %v3105 = vrcp.pop %v3095
    %v3106 = vrcp.pop %v3098
    %v3107 = vrcp.pop %v3101
    %v3108 = vrcp.pop %v3104
    %v3109 = vmul.f32 %v3086, %v3105
    %v3110 = vmul.f32 %v3088, %v3106
    %v3111 = vmul.f32 %v3090, %v3107
    %v3112 = vmul.f32 %v3092, %v3108
    %v3113 = vpack.c.bf16 %v3109, %v3109
    %v3114 = vpack.c.bf16 %v3110, %v3110
    %v3115 = vpack.c.bf16 %v3111, %v3111
    %v3116 = vpack.c.bf16 %v3112, %v3112
    %v3118 = vunpack.c.l.b16 %v2837
    %v3119 = vpack.c.b16 %v3118, %v3118
    %3120 = vrot.lane.b32.xlu0 %v3119, 64
    %v3121 = vpop.permute.xlu0 %3120
    %v3123 = vsel %vm2595, %v3113, 0
    %v3126 = vsel %vm2647, %v3121, 0
    %3128 = vmatprep.subr.bf16.mxu0 0
    %3129 = vmatpush1.bf16.msra.mxu0 %v3126
    %3130 = vmatprep.subr.bf16.mxu0 0
    %3131 = vmatpush1.bf16.msra.mxu0 0
    %3132 = vmatprep.subr.bf16.mxu0 0
    %3133 = vmatpush1.bf16.msra.mxu0 0
    %3134 = vmatprep.subr.bf16.mxu0 0
    %3135 = vmatpush1.bf16.msra.mxu0 0
    %3136 = vmatprep.subr.bf16.mxu0 0
    %3137 = vmatpush1.bf16.msra.mxu0 0
    %3138 = vmatprep.subr.bf16.mxu0 0
    %3139 = vmatpush1.bf16.msra.mxu0 0
    %3140 = vmatprep.subr.bf16.mxu0 0
    %3141 = vmatpush1.bf16.msra.mxu0 0
    %3142 = vmatprep.subr.bf16.mxu0 0
    %3143 = vmatpush1.bf16.msra.mxu0 0
    %3144 = vmatprep.subr.bf16.mxu0 0
    %3145 = vmatpush1.bf16.msra.mxu0 0
    %3146 = vmatprep.subr.bf16.mxu0 0
    %3147 = vmatpush1.bf16.msra.mxu0 0
    %3148 = vmatprep.subr.bf16.mxu0 0
    %3149 = vmatpush1.bf16.msra.mxu0 0
    %3150 = vmatprep.subr.bf16.mxu0 0
    %3151 = vmatpush1.bf16.msra.mxu0 0
    %3152 = vmatprep.subr.bf16.mxu0 0
    %3153 = vmatpush1.bf16.msra.mxu0 0
    %3154 = vmatprep.subr.bf16.mxu0 0
    %3155 = vmatpush1.bf16.msra.mxu0 0
    %3156 = vmatprep.subr.bf16.mxu0 0
    %3157 = vmatpush1.bf16.msra.mxu0 0
    %3158 = vmatprep.subr.bf16.mxu0 0
    %3159 = vmatpush1.bf16.msra.mxu0 0
    %3160 = vmatprep.mubr.bf16.mxu0 0
    %3161 = vmatmul.mubr.bf16.gmra.mrb[0].mxu0 %v3123
    %v3162 = vpop.f32.mrb[0].mxu0
    %v3163 = vadd.f32 0.0, %v3162
    %v3164 = vpop.f32.mrb[0].mxu0
    %v3165 = vpop.f32.mrb[0].mxu0
    %v3166 = vpop.f32.mrb[0].mxu0
    %3167 = vdwg.mxu0
    %v3169 = vunpack.c.l.b16 %v2838
    %v3170 = vpack.c.b16 %v3169, %v3169
    %3171 = vrot.lane.b32.xlu0 %v3170, 64
    %v3172 = vpop.permute.xlu0 %3171
    %v3174 = vsel %vm2595, %v3114, 0
    %v3177 = vsel %vm2647, %v3172, 0
    %3179 = vmatprep.subr.bf16.mxu0 0
    %3180 = vmatpush1.bf16.msra.mxu0 %v3177
    %3181 = vmatprep.subr.bf16.mxu0 0
    %3182 = vmatpush1.bf16.msra.mxu0 0
    %3183 = vmatprep.subr.bf16.mxu0 0
    %3184 = vmatpush1.bf16.msra.mxu0 0
    %3185 = vmatprep.subr.bf16.mxu0 0
    %3186 = vmatpush1.bf16.msra.mxu0 0
    %3187 = vmatprep.subr.bf16.mxu0 0
    %3188 = vmatpush1.bf16.msra.mxu0 0
    %3189 = vmatprep.subr.bf16.mxu0 0
    %3190 = vmatpush1.bf16.msra.mxu0 0
    %3191 = vmatprep.subr.bf16.mxu0 0
    %3192 = vmatpush1.bf16.msra.mxu0 0
    %3193 = vmatprep.subr.bf16.mxu0 0
    %3194 = vmatpush1.bf16.msra.mxu0 0
    %3195 = vmatprep.subr.bf16.mxu0 0
    %3196 = vmatpush1.bf16.msra.mxu0 0
    %3197 = vmatprep.subr.bf16.mxu0 0
    %3198 = vmatpush1.bf16.msra.mxu0 0
    %3199 = vmatprep.subr.bf16.mxu0 0
    %3200 = vmatpush1.bf16.msra.mxu0 0
    %3201 = vmatprep.subr.bf16.mxu0 0
    %3202 = vmatpush1.bf16.msra.mxu0 0
    %3203 = vmatprep.subr.bf16.mxu0 0
    %3204 = vmatpush1.bf16.msra.mxu0 0
    %3205 = vmatprep.subr.bf16.mxu0 0
    %3206 = vmatpush1.bf16.msra.mxu0 0
    %3207 = vmatprep.subr.bf16.mxu0 0
    %3208 = vmatpush1.bf16.msra.mxu0 0
    %3209 = vmatprep.subr.bf16.mxu0 0
    %3210 = vmatpush1.bf16.msra.mxu0 0
    %3211 = vmatprep.mubr.bf16.mxu0 0
    %3212 = vmatmul.mubr.bf16.gmra.mrb[0].mxu0 %v3174
    %v3213 = vpop.f32.mrb[0].mxu0
    %v3214 = vadd.f32 0.0, %v3213
    %v3215 = vpop.f32.mrb[0].mxu0
    %v3216 = vpop.f32.mrb[0].mxu0
    %v3217 = vpop.f32.mrb[0].mxu0
    %3218 = vdwg.mxu0
    %v3220 = vunpack.c.l.b16 %v2839
    %v3221 = vpack.c.b16 %v3220, %v3220
    %3222 = vrot.lane.b32.xlu0 %v3221, 64
    %v3223 = vpop.permute.xlu0 %3222
    %v3225 = vsel %vm2595, %v3115, 0
    %v3228 = vsel %vm2647, %v3223, 0
    %3230 = vmatprep.subr.bf16.mxu0 0
    %3231 = vmatpush1.bf16.msra.mxu0 %v3228
    %3232 = vmatprep.subr.bf16.mxu0 0
    %3233 = vmatpush1.bf16.msra.mxu0 0
    %3234 = vmatprep.subr.bf16.mxu0 0
    %3235 = vmatpush1.bf16.msra.mxu0 0
    %3236 = vmatprep.subr.bf16.mxu0 0
    %3237 = vmatpush1.bf16.msra.mxu0 0
    %3238 = vmatprep.subr.bf16.mxu0 0
    %3239 = vmatpush1.bf16.msra.mxu0 0
    %3240 = vmatprep.subr.bf16.mxu0 0
    %3241 = vmatpush1.bf16.msra.mxu0 0
    %3242 = vmatprep.subr.bf16.mxu0 0
    %3243 = vmatpush1.bf16.msra.mxu0 0
    %3244 = vmatprep.subr.bf16.mxu0 0
    %3245 = vmatpush1.bf16.msra.mxu0 0
    %3246 = vmatprep.subr.bf16.mxu0 0
    %3247 = vmatpush1.bf16.msra.mxu0 0
    %3248 = vmatprep.subr.bf16.mxu0 0
    %3249 = vmatpush1.bf16.msra.mxu0 0
    %3250 = vmatprep.subr.bf16.mxu0 0
    %3251 = vmatpush1.bf16.msra.mxu0 0
    %3252 = vmatprep.subr.bf16.mxu0 0
    %3253 = vmatpush1.bf16.msra.mxu0 0
    %3254 = vmatprep.subr.bf16.mxu0 0
    %3255 = vmatpush1.bf16.msra.mxu0 0
    %3256 = vmatprep.subr.bf16.mxu0 0
    %3257 = vmatpush1.bf16.msra.mxu0 0
    %3258 = vmatprep.subr.bf16.mxu0 0
    %3259 = vmatpush1.bf16.msra.mxu0 0
    %3260 = vmatprep.subr.bf16.mxu0 0
    %3261 = vmatpush1.bf16.msra.mxu0 0
    %3262 = vmatprep.mubr.bf16.mxu0 0
    %3263 = vmatmul.mubr.bf16.gmra.mrb[0].mxu0 %v3225
    %v3264 = vpop.f32.mrb[0].mxu0
    %v3265 = vadd.f32 0.0, %v3264
    %v3266 = vpop.f32.mrb[0].mxu0
    %v3267 = vpop.f32.mrb[0].mxu0
    %v3268 = vpop.f32.mrb[0].mxu0
    %3269 = vdwg.mxu0
    %v3271 = vunpack.c.l.b16 %v2840
    %v3272 = vpack.c.b16 %v3271, %v3271
    %3273 = vrot.lane.b32.xlu0 %v3272, 64
    %v3274 = vpop.permute.xlu0 %3273
    %v3276 = vsel %vm2595, %v3116, 0
    %v3279 = vsel %vm2647, %v3274, 0
    %3281 = vmatprep.subr.bf16.mxu0 0
    %3282 = vmatpush1.bf16.msra.mxu0 %v3279
    %3283 = vmatprep.subr.bf16.mxu0 0
    %3284 = vmatpush1.bf16.msra.mxu0 0
    %3285 = vmatprep.subr.bf16.mxu0 0
    %3286 = vmatpush1.bf16.msra.mxu0 0
    %3287 = vmatprep.subr.bf16.mxu0 0
    %3288 = vmatpush1.bf16.msra.mxu0 0
    %3289 = vmatprep.subr.bf16.mxu0 0
    %3290 = vmatpush1.bf16.msra.mxu0 0
    %3291 = vmatprep.subr.bf16.mxu0 0
    %3292 = vmatpush1.bf16.msra.mxu0 0
    %3293 = vmatprep.subr.bf16.mxu0 0
    %3294 = vmatpush1.bf16.msra.mxu0 0
    %3295 = vmatprep.subr.bf16.mxu0 0
    %3296 = vmatpush1.bf16.msra.mxu0 0
    %3297 = vmatprep.subr.bf16.mxu0 0
    %3298 = vmatpush1.bf16.msra.mxu0 0
    %3299 = vmatprep.subr.bf16.mxu0 0
    %3300 = vmatpush1.bf16.msra.mxu0 0
    %3301 = vmatprep.subr.bf16.mxu0 0
    %3302 = vmatpush1.bf16.msra.mxu0 0
    %3303 = vmatprep.subr.bf16.mxu0 0
    %3304 = vmatpush1.bf16.msra.mxu0 0
    %3305 = vmatprep.subr.bf16.mxu0 0
    %3306 = vmatpush1.bf16.msra.mxu0 0
    %3307 = vmatprep.subr.bf16.mxu0 0
    %3308 = vmatpush1.bf16.msra.mxu0 0
    %3309 = vmatprep.subr.bf16.mxu0 0
    %3310 = vmatpush1.bf16.msra.mxu0 0
    %3311 = vmatprep.subr.bf16.mxu0 0
    %3312 = vmatpush1.bf16.msra.mxu0 0
    %3313 = vmatprep.mubr.bf16.mxu0 0
    %3314 = vmatmul.mubr.bf16.gmra.mrb[0].mxu0 %v3276
    %v3315 = vpop.f32.mrb[0].mxu0
    %v3316 = vadd.f32 0.0, %v3315
    %v3317 = vpop.f32.mrb[0].mxu0
    %v3318 = vpop.f32.mrb[0].mxu0
    %v3319 = vpop.f32.mrb[0].mxu0
    %3320 = vdwg.mxu0
    %3325 = vrot.lane.b32.xlu0 %v3163, 64
    %v3326 = vpop.permute.xlu0 %3325
    %3327 = vrot.lane.b32.xlu0 %v3214, 64
    %v3328 = vpop.permute.xlu0 %3327
    %3329 = vrot.lane.b32.xlu0 %v3265, 64
    %v3330 = vpop.permute.xlu0 %3329
    %3331 = vrot.lane.b32.xlu0 %v3316, 64
    %v3332 = vpop.permute.xlu0 %3331
    %v3337 = vsel %vm2404, %v2686, %v3326
    %v3338 = vsel %vm2404, %v2732, %v3328
    %v3339 = vsel %vm2404, %v2778, %v3330
    %v3340 = vsel %vm2404, %v2824, %v3332
    %3341 = vst [vmem:[#allocation3] sm:$0xff] %v3337
    %3342 = vst [vmem:[#allocation3 + $0x18] sm:$0xff] %v3338
    %3343 = vst [vmem:[#allocation3 + $0x30] sm:$0xff] %v3339
    %3344 = vst [vmem:[#allocation3 + $0x48] sm:$0xff] %v3340
    %v3345 = vld [vmem:[#allocation2 + $0x4] sm:$0xf]
    %v3346 = vld [vmem:[#allocation2 + $0x28] sm:$0xf]
    %v3347 = vld [vmem:[#allocation2 + $0x4c] sm:$0xf]
    %v3348 = vld [vmem:[#allocation2 + $0x70] sm:$0xf]
    %v3349 = vld [vmem:[#allocation2 + $0x10] sm:$0xf]
    %v3350 = vld [vmem:[#allocation2 + $0x34] sm:$0xf]
    %v3351 = vld [vmem:[#allocation2 + $0x58] sm:$0xf]
    %v3352 = vld [vmem:[#allocation2 + $0x7c] sm:$0xf]
    %v3353 = vld [vmem:[#allocation2 + $0x1c] sm:$0xf]
    %v3354 = vld [vmem:[#allocation2 + $0x40] sm:$0xf]
    %v3355 = vld [vmem:[#allocation2 + $0x64] sm:$0xf]
    %v3356 = vld [vmem:[#allocation2 + $0x88] sm:$0xf]
    %v3358 = vsel %vm2404, %v3345, 0
    %v3361 = vsel %vm2404, %v3349, 0
    %3363 = vmatprep.subr.bf16.mxu0 0
    %3364 = vmatpush1.bf16.xpose.msra.mxu0 %v3361
    %3365 = vmatprep.subr.bf16.mxu0 0
    %3366 = vmatpush1.bf16.xpose.msra.mxu0 0
    %3367 = vmatprep.subr.bf16.mxu0 0
    %3368 = vmatpush1.bf16.xpose.msra.mxu0 0
    %3369 = vmatprep.subr.bf16.mxu0 0
    %3370 = vmatpush1.bf16.xpose.msra.mxu0 0
    %3371 = vmatprep.subr.bf16.mxu0 0
    %3372 = vmatpush1.bf16.xpose.msra.mxu0 0
    %3373 = vmatprep.subr.bf16.mxu0 0
    %3374 = vmatpush1.bf16.xpose.msra.mxu0 0
    %3375 = vmatprep.subr.bf16.mxu0 0
    %3376 = vmatpush1.bf16.xpose.msra.mxu0 0
    %3377 = vmatprep.subr.bf16.mxu0 0
    %3378 = vmatpush1.bf16.xpose.msra.mxu0 0
    %3379 = vmatprep.subr.bf16.mxu0 0
    %3380 = vmatpush1.bf16.xpose.msra.mxu0 0
    %3381 = vmatprep.subr.bf16.mxu0 0
    %3382 = vmatpush1.bf16.xpose.msra.mxu0 0
    %3383 = vmatprep.subr.bf16.mxu0 0
    %3384 = vmatpush1.bf16.xpose.msra.mxu0 0
    %3385 = vmatprep.subr.bf16.mxu0 0
    %3386 = vmatpush1.bf16.xpose.msra.mxu0 0
    %3387 = vmatprep.subr.bf16.mxu0 0
    %3388 = vmatpush1.bf16.xpose.msra.mxu0 0
    %3389 = vmatprep.subr.bf16.mxu0 0
    %3390 = vmatpush1.bf16.xpose.msra.mxu0 0
    %3391 = vmatprep.subr.bf16.mxu0 0
    %3392 = vmatpush1.bf16.xpose.msra.mxu0 0
    %3393 = vmatprep.subr.bf16.mxu0 0
    %3394 = vmatpush1.bf16.xpose.msra.mxu0 0
    %3395 = vmatprep.mubr.bf16.mxu0 0
    %3396 = vmatmul.mubr.bf16.gmra.mrb[0].mxu0 %v3358
    %v3397 = vpop.f32.mrb[0].mxu0
    %v3398 = vadd.f32 0.0, %v3397
    %v3399 = vpop.f32.mrb[0].mxu0
    %v3400 = vpop.f32.mrb[0].mxu0
    %v3401 = vpop.f32.mrb[0].mxu0
    %3402 = vdwg.mxu0
    %v3404 = vsel %vm2404, %v3346, 0
    %v3407 = vsel %vm2404, %v3350, 0
    %3409 = vmatprep.subr.bf16.mxu0 0
    %3410 = vmatpush1.bf16.xpose.msra.mxu0 %v3407
    %3411 = vmatprep.subr.bf16.mxu0 0
    %3412 = vmatpush1.bf16.xpose.msra.mxu0 0
    %3413 = vmatprep.subr.bf16.mxu0 0
    %3414 = vmatpush1.bf16.xpose.msra.mxu0 0
    %3415 = vmatprep.subr.bf16.mxu0 0
    %3416 = vmatpush1.bf16.xpose.msra.mxu0 0
    %3417 = vmatprep.subr.bf16.mxu0 0
    %3418 = vmatpush1.bf16.xpose.msra.mxu0 0
    %3419 = vmatprep.subr.bf16.mxu0 0
    %3420 = vmatpush1.bf16.xpose.msra.mxu0 0
    %3421 = vmatprep.subr.bf16.mxu0 0
    %3422 = vmatpush1.bf16.xpose.msra.mxu0 0
    %3423 = vmatprep.subr.bf16.mxu0 0
    %3424 = vmatpush1.bf16.xpose.msra.mxu0 0
    %3425 = vmatprep.subr.bf16.mxu0 0
    %3426 = vmatpush1.bf16.xpose.msra.mxu0 0
    %3427 = vmatprep.subr.bf16.mxu0 0
    %3428 = vmatpush1.bf16.xpose.msra.mxu0 0
    %3429 = vmatprep.subr.bf16.mxu0 0
    %3430 = vmatpush1.bf16.xpose.msra.mxu0 0
    %3431 = vmatprep.subr.bf16.mxu0 0
    %3432 = vmatpush1.bf16.xpose.msra.mxu0 0
    %3433 = vmatprep.subr.bf16.mxu0 0
    %3434 = vmatpush1.bf16.xpose.msra.mxu0 0
    %3435 = vmatprep.subr.bf16.mxu0 0
    %3436 = vmatpush1.bf16.xpose.msra.mxu0 0
    %3437 = vmatprep.subr.bf16.mxu0 0
    %3438 = vmatpush1.bf16.xpose.msra.mxu0 0
    %3439 = vmatprep.subr.bf16.mxu0 0
    %3440 = vmatpush1.bf16.xpose.msra.mxu0 0
    %3441 = vmatprep.mubr.bf16.mxu0 0
    %3442 = vmatmul.mubr.bf16.gmra.mrb[0].mxu0 %v3404
    %v3443 = vpop.f32.mrb[0].mxu0
    %v3444 = vadd.f32 0.0, %v3443
    %v3445 = vpop.f32.mrb[0].mxu0
    %v3446 = vpop.f32.mrb[0].mxu0
    %v3447 = vpop.f32.mrb[0].mxu0
    %3448 = vdwg.mxu0
    %v3450 = vsel %vm2404, %v3347, 0
    %v3453 = vsel %vm2404, %v3351, 0
    %3455 = vmatprep.subr.bf16.mxu0 0
    %3456 = vmatpush1.bf16.xpose.msra.mxu0 %v3453
    %3457 = vmatprep.subr.bf16.mxu0 0
    %3458 = vmatpush1.bf16.xpose.msra.mxu0 0
    %3459 = vmatprep.subr.bf16.mxu0 0
    %3460 = vmatpush1.bf16.xpose.msra.mxu0 0
    %3461 = vmatprep.subr.bf16.mxu0 0
    %3462 = vmatpush1.bf16.xpose.msra.mxu0 0
    %3463 = vmatprep.subr.bf16.mxu0 0
    %3464 = vmatpush1.bf16.xpose.msra.mxu0 0
    %3465 = vmatprep.subr.bf16.mxu0 0
    %3466 = vmatpush1.bf16.xpose.msra.mxu0 0
    %3467 = vmatprep.subr.bf16.mxu0 0
    %3468 = vmatpush1.bf16.xpose.msra.mxu0 0
    %3469 = vmatprep.subr.bf16.mxu0 0
    %3470 = vmatpush1.bf16.xpose.msra.mxu0 0
    %3471 = vmatprep.subr.bf16.mxu0 0
    %3472 = vmatpush1.bf16.xpose.msra.mxu0 0
    %3473 = vmatprep.subr.bf16.mxu0 0
    %3474 = vmatpush1.bf16.xpose.msra.mxu0 0
    %3475 = vmatprep.subr.bf16.mxu0 0
    %3476 = vmatpush1.bf16.xpose.msra.mxu0 0
    %3477 = vmatprep.subr.bf16.mxu0 0
    %3478 = vmatpush1.bf16.xpose.msra.mxu0 0
    %3479 = vmatprep.subr.bf16.mxu0 0
    %3480 = vmatpush1.bf16.xpose.msra.mxu0 0
    %3481 = vmatprep.subr.bf16.mxu0 0
    %3482 = vmatpush1.bf16.xpose.msra.mxu0 0
    %3483 = vmatprep.subr.bf16.mxu0 0
    %3484 = vmatpush1.bf16.xpose.msra.mxu0 0
    %3485 = vmatprep.subr.bf16.mxu0 0
    %3486 = vmatpush1.bf16.xpose.msra.mxu0 0
    %3487 = vmatprep.mubr.bf16.mxu0 0
    %3488 = vmatmul.mubr.bf16.gmra.mrb[0].mxu0 %v3450
    %v3489 = vpop.f32.mrb[0].mxu0
    %v3490 = vadd.f32 0.0, %v3489
    %v3491 = vpop.f32.mrb[0].mxu0
    %v3492 = vpop.f32.mrb[0].mxu0
    %v3493 = vpop.f32.mrb[0].mxu0
    %3494 = vdwg.mxu0
    %v3496 = vsel %vm2404, %v3348, 0
    %v3499 = vsel %vm2404, %v3352, 0
    %3501 = vmatprep.subr.bf16.mxu0 0
    %3502 = vmatpush1.bf16.xpose.msra.mxu0 %v3499
    %3503 = vmatprep.subr.bf16.mxu0 0
    %3504 = vmatpush1.bf16.xpose.msra.mxu0 0
    %3505 = vmatprep.subr.bf16.mxu0 0
    %3506 = vmatpush1.bf16.xpose.msra.mxu0 0
    %3507 = vmatprep.subr.bf16.mxu0 0
    %3508 = vmatpush1.bf16.xpose.msra.mxu0 0
    %3509 = vmatprep.subr.bf16.mxu0 0
    %3510 = vmatpush1.bf16.xpose.msra.mxu0 0
    %3511 = vmatprep.subr.bf16.mxu0 0
    %3512 = vmatpush1.bf16.xpose.msra.mxu0 0
    %3513 = vmatprep.subr.bf16.mxu0 0
    %3514 = vmatpush1.bf16.xpose.msra.mxu0 0
    %3515 = vmatprep.subr.bf16.mxu0 0
    %3516 = vmatpush1.bf16.xpose.msra.mxu0 0
    %3517 = vmatprep.subr.bf16.mxu0 0
    %3518 = vmatpush1.bf16.xpose.msra.mxu0 0
    %3519 = vmatprep.subr.bf16.mxu0 0
    %3520 = vmatpush1.bf16.xpose.msra.mxu0 0
    %3521 = vmatprep.subr.bf16.mxu0 0
    %3522 = vmatpush1.bf16.xpose.msra.mxu0 0
    %3523 = vmatprep.subr.bf16.mxu0 0
    %3524 = vmatpush1.bf16.xpose.msra.mxu0 0
    %3525 = vmatprep.subr.bf16.mxu0 0
    %3526 = vmatpush1.bf16.xpose.msra.mxu0 0
    %3527 = vmatprep.subr.bf16.mxu0 0
    %3528 = vmatpush1.bf16.xpose.msra.mxu0 0
    %3529 = vmatprep.subr.bf16.mxu0 0
    %3530 = vmatpush1.bf16.xpose.msra.mxu0 0
    %3531 = vmatprep.subr.bf16.mxu0 0
    %3532 = vmatpush1.bf16.xpose.msra.mxu0 0
    %3533 = vmatprep.mubr.bf16.mxu0 0
    %3534 = vmatmul.mubr.bf16.gmra.mrb[0].mxu0 %v3496
    %v3535 = vpop.f32.mrb[0].mxu0
    %v3536 = vadd.f32 0.0, %v3535
    %v3537 = vpop.f32.mrb[0].mxu0
    %v3538 = vpop.f32.mrb[0].mxu0
    %v3539 = vpop.f32.mrb[0].mxu0
    %3540 = vdwg.mxu0
    %v3541 = vsel %vm2590, %v3398, -1e+30
    %v3542 = vsel %vm2590, %v3444, -1e+30
    %v3543 = vsel %vm2590, %v3490, -1e+30
    %v3544 = vsel %vm2590, %v3536, -1e+30
    %v3545 = vsel %vm2595, %v3541, -inf
    %3546 = vmax.xlane.f32.xlu0 %v3545
    %v3547 = vpop.xlane.xlu0 %3546
    %v3548 = vsel %vm2595, %v3542, -inf
    %3549 = vmax.xlane.f32.xlu0 %v3548
    %v3550 = vpop.xlane.xlu0 %3549
    %v3551 = vsel %vm2595, %v3543, -inf
    %3552 = vmax.xlane.f32.xlu0 %v3551
    %v3553 = vpop.xlane.xlu0 %3552
    %v3554 = vsel %vm2595, %v3544, -inf
    %3555 = vmax.xlane.f32.xlu0 %v3554
    %v3556 = vpop.xlane.xlu0 %3555
    %v3557 = vsub.f32 %v3541, %v3547
    %v3558 = vsub.f32 %v3542, %v3550
    %v3559 = vsub.f32 %v3543, %v3553
    %v3560 = vsub.f32 %v3544, %v3556
    %v3561 = vmul.f32 %v3557, 1.442695
    %v3562 = vpow.pop %v3561
    %v3563 = vmul.f32 %v3558, 1.442695
    %v3564 = vpow.pop %v3563
    %v3565 = vmul.f32 %v3559, 1.442695
    %v3566 = vpow.pop %v3565
    %v3567 = vmul.f32 %v3560, 1.442695
    %v3568 = vpow.pop %v3567
    %v3569 = vsel %vm2595, %v3562, 0.0
    %3570 = vadd.xlane.f32.xlu0 %v3569
    %v3571 = vpop.xlane.xlu0 %3570
    %v3572 = vsel %vm2595, %v3564, 0.0
    %3573 = vadd.xlane.f32.xlu0 %v3572
    %v3574 = vpop.xlane.xlu0 %3573
    %v3575 = vsel %vm2595, %v3566, 0.0
    %3576 = vadd.xlane.f32.xlu0 %v3575
    %v3577 = vpop.xlane.xlu0 %3576
    %v3578 = vsel %vm2595, %v3568, 0.0
    %3579 = vadd.xlane.f32.xlu0 %v3578
    %v3580 = vpop.xlane.xlu0 %3579
    %v3581 = vrcp.pop %v3571
    %v3582 = vrcp.pop %v3574
    %v3583 = vrcp.pop %v3577
    %v3584 = vrcp.pop %v3580
    %v3585 = vmul.f32 %v3562, %v3581
    %v3586 = vmul.f32 %v3564, %v3582
    %v3587 = vmul.f32 %v3566, %v3583
    %v3588 = vmul.f32 %v3568, %v3584
    %v3589 = vpack.c.bf16 %v3585, %v3585
    %v3590 = vpack.c.bf16 %v3586, %v3586
    %v3591 = vpack.c.bf16 %v3587, %v3587
    %v3592 = vpack.c.bf16 %v3588, %v3588
    %v3594 = vsel %vm2595, %v3589, 0
    %v3597 = vsel %vm2647, %v3353, 0
    %3599 = vmatprep.subr.bf16.mxu0 0
    %3600 = vmatpush1.bf16.msra.mxu0 %v3597
    %3601 = vmatprep.subr.bf16.mxu0 0
    %3602 = vmatpush1.bf16.msra.mxu0 0
    %3603 = vmatprep.subr.bf16.mxu0 0
    %3604 = vmatpush1.bf16.msra.mxu0 0
    %3605 = vmatprep.subr.bf16.mxu0 0
    %3606 = vmatpush1.bf16.msra.mxu0 0
    %3607 = vmatprep.subr.bf16.mxu0 0
    %3608 = vmatpush1.bf16.msra.mxu0 0
    %3609 = vmatprep.subr.bf16.mxu0 0
    %3610 = vmatpush1.bf16.msra.mxu0 0
    %3611 = vmatprep.subr.bf16.mxu0 0
    %3612 = vmatpush1.bf16.msra.mxu0 0
    %3613 = vmatprep.subr.bf16.mxu0 0
    %3614 = vmatpush1.bf16.msra.mxu0 0
    %3615 = vmatprep.subr.bf16.mxu0 0
    %3616 = vmatpush1.bf16.msra.mxu0 0
    %3617 = vmatprep.subr.bf16.mxu0 0
    %3618 = vmatpush1.bf16.msra.mxu0 0
    %3619 = vmatprep.subr.bf16.mxu0 0
    %3620 = vmatpush1.bf16.msra.mxu0 0
    %3621 = vmatprep.subr.bf16.mxu0 0
    %3622 = vmatpush1.bf16.msra.mxu0 0
    %3623 = vmatprep.subr.bf16.mxu0 0
    %3624 = vmatpush1.bf16.msra.mxu0 0
    %3625 = vmatprep.subr.bf16.mxu0 0
    %3626 = vmatpush1.bf16.msra.mxu0 0
    %3627 = vmatprep.subr.bf16.mxu0 0
    %3628 = vmatpush1.bf16.msra.mxu0 0
    %3629 = vmatprep.subr.bf16.mxu0 0
    %3630 = vmatpush1.bf16.msra.mxu0 0
    %3631 = vmatprep.mubr.bf16.mxu0 0
    %3632 = vmatmul.mubr.bf16.gmra.mrb[0].mxu0 %v3594
    %v3633 = vpop.f32.mrb[0].mxu0
    %v3634 = vadd.f32 0.0, %v3633
    %v3635 = vpop.f32.mrb[0].mxu0
    %v3636 = vpop.f32.mrb[0].mxu0
    %v3637 = vpop.f32.mrb[0].mxu0
    %3638 = vdwg.mxu0
    %v3640 = vsel %vm2595, %v3590, 0
    %v3643 = vsel %vm2647, %v3354, 0
    %3645 = vmatprep.subr.bf16.mxu0 0
    %3646 = vmatpush1.bf16.msra.mxu0 %v3643
    %3647 = vmatprep.subr.bf16.mxu0 0
    %3648 = vmatpush1.bf16.msra.mxu0 0
    %3649 = vmatprep.subr.bf16.mxu0 0
    %3650 = vmatpush1.bf16.msra.mxu0 0
    %3651 = vmatprep.subr.bf16.mxu0 0
    %3652 = vmatpush1.bf16.msra.mxu0 0
    %3653 = vmatprep.subr.bf16.mxu0 0
    %3654 = vmatpush1.bf16.msra.mxu0 0
    %3655 = vmatprep.subr.bf16.mxu0 0
    %3656 = vmatpush1.bf16.msra.mxu0 0
    %3657 = vmatprep.subr.bf16.mxu0 0
    %3658 = vmatpush1.bf16.msra.mxu0 0
    %3659 = vmatprep.subr.bf16.mxu0 0
    %3660 = vmatpush1.bf16.msra.mxu0 0
    %3661 = vmatprep.subr.bf16.mxu0 0
    %3662 = vmatpush1.bf16.msra.mxu0 0
    %3663 = vmatprep.subr.bf16.mxu0 0
    %3664 = vmatpush1.bf16.msra.mxu0 0
    %3665 = vmatprep.subr.bf16.mxu0 0
    %3666 = vmatpush1.bf16.msra.mxu0 0
    %3667 = vmatprep.subr.bf16.mxu0 0
    %3668 = vmatpush1.bf16.msra.mxu0 0
    %3669 = vmatprep.subr.bf16.mxu0 0
    %3670 = vmatpush1.bf16.msra.mxu0 0
    %3671 = vmatprep.subr.bf16.mxu0 0
    %3672 = vmatpush1.bf16.msra.mxu0 0
    %3673 = vmatprep.subr.bf16.mxu0 0
    %3674 = vmatpush1.bf16.msra.mxu0 0
    %3675 = vmatprep.subr.bf16.mxu0 0
    %3676 = vmatpush1.bf16.msra.mxu0 0
    %3677 = vmatprep.mubr.bf16.mxu0 0
    %3678 = vmatmul.mubr.bf16.gmra.mrb[0].mxu0 %v3640
    %v3679 = vpop.f32.mrb[0].mxu0
    %v3680 = vadd.f32 0.0, %v3679
    %v3681 = vpop.f32.mrb[0].mxu0
    %v3682 = vpop.f32.mrb[0].mxu0
    %v3683 = vpop.f32.mrb[0].mxu0
    %3684 = vdwg.mxu0
    %v3686 = vsel %vm2595, %v3591, 0
    %v3689 = vsel %vm2647, %v3355, 0
    %3691 = vmatprep.subr.bf16.mxu0 0
    %3692 = vmatpush1.bf16.msra.mxu0 %v3689
    %3693 = vmatprep.subr.bf16.mxu0 0
    %3694 = vmatpush1.bf16.msra.mxu0 0
    %3695 = vmatprep.subr.bf16.mxu0 0
    %3696 = vmatpush1.bf16.msra.mxu0 0
    %3697 = vmatprep.subr.bf16.mxu0 0
    %3698 = vmatpush1.bf16.msra.mxu0 0
    %3699 = vmatprep.subr.bf16.mxu0 0
    %3700 = vmatpush1.bf16.msra.mxu0 0
    %3701 = vmatprep.subr.bf16.mxu0 0
    %3702 = vmatpush1.bf16.msra.mxu0 0
    %3703 = vmatprep.subr.bf16.mxu0 0
    %3704 = vmatpush1.bf16.msra.mxu0 0
    %3705 = vmatprep.subr.bf16.mxu0 0
    %3706 = vmatpush1.bf16.msra.mxu0 0
    %3707 = vmatprep.subr.bf16.mxu0 0
    %3708 = vmatpush1.bf16.msra.mxu0 0
    %3709 = vmatprep.subr.bf16.mxu0 0
    %3710 = vmatpush1.bf16.msra.mxu0 0
    %3711 = vmatprep.subr.bf16.mxu0 0
    %3712 = vmatpush1.bf16.msra.mxu0 0
    %3713 = vmatprep.subr.bf16.mxu0 0
    %3714 = vmatpush1.bf16.msra.mxu0 0
    %3715 = vmatprep.subr.bf16.mxu0 0
    %3716 = vmatpush1.bf16.msra.mxu0 0
    %3717 = vmatprep.subr.bf16.mxu0 0
    %3718 = vmatpush1.bf16.msra.mxu0 0
    %3719 = vmatprep.subr.bf16.mxu0 0
    %3720 = vmatpush1.bf16.msra.mxu0 0
    %3721 = vmatprep.subr.bf16.mxu0 0
    %3722 = vmatpush1.bf16.msra.mxu0 0
    %3723 = vmatprep.mubr.bf16.mxu0 0
    %3724 = vmatmul.mubr.bf16.gmra.mrb[0].mxu0 %v3686
    %v3725 = vpop.f32.mrb[0].mxu0
    %v3726 = vadd.f32 0.0, %v3725
    %v3727 = vpop.f32.mrb[0].mxu0
    %v3728 = vpop.f32.mrb[0].mxu0
    %v3729 = vpop.f32.mrb[0].mxu0
    %3730 = vdwg.mxu0
    %v3732 = vsel %vm2595, %v3592, 0
    %v3735 = vsel %vm2647, %v3356, 0
    %3737 = vmatprep.subr.bf16.mxu0 0
    %3738 = vmatpush1.bf16.msra.mxu0 %v3735
    %3739 = vmatprep.subr.bf16.mxu0 0
    %3740 = vmatpush1.bf16.msra.mxu0 0
    %3741 = vmatprep.subr.bf16.mxu0 0
    %3742 = vmatpush1.bf16.msra.mxu0 0
    %3743 = vmatprep.subr.bf16.mxu0 0
    %3744 = vmatpush1.bf16.msra.mxu0 0
    %3745 = vmatprep.subr.bf16.mxu0 0
    %3746 = vmatpush1.bf16.msra.mxu0 0
    %3747 = vmatprep.subr.bf16.mxu0 0
    %3748 = vmatpush1.bf16.msra.mxu0 0
    %3749 = vmatprep.subr.bf16.mxu0 0
    %3750 = vmatpush1.bf16.msra.mxu0 0
    %3751 = vmatprep.subr.bf16.mxu0 0
    %3752 = vmatpush1.bf16.msra.mxu0 0
    %3753 = vmatprep.subr.bf16.mxu0 0
    %3754 = vmatpush1.bf16.msra.mxu0 0
    %3755 = vmatprep.subr.bf16.mxu0 0
    %3756 = vmatpush1.bf16.msra.mxu0 0
    %3757 = vmatprep.subr.bf16.mxu0 0
    %3758 = vmatpush1.bf16.msra.mxu0 0
    %3759 = vmatprep.subr.bf16.mxu0 0
    %3760 = vmatpush1.bf16.msra.mxu0 0
    %3761 = vmatprep.subr.bf16.mxu0 0
    %3762 = vmatpush1.bf16.msra.mxu0 0
    %3763 = vmatprep.subr.bf16.mxu0 0
    %3764 = vmatpush1.bf16.msra.mxu0 0
    %3765 = vmatprep.subr.bf16.mxu0 0
    %3766 = vmatpush1.bf16.msra.mxu0 0
    %3767 = vmatprep.subr.bf16.mxu0 0
    %3768 = vmatpush1.bf16.msra.mxu0 0
    %3769 = vmatprep.mubr.bf16.mxu0 0
    %3770 = vmatmul.mubr.bf16.gmra.mrb[0].mxu0 %v3732
    %v3771 = vpop.f32.mrb[0].mxu0
    %v3772 = vadd.f32 0.0, %v3771
    %v3773 = vpop.f32.mrb[0].mxu0
    %v3774 = vpop.f32.mrb[0].mxu0
    %v3775 = vpop.f32.mrb[0].mxu0
    %3776 = vdwg.mxu0
    %v3777 = vld [vmem:[#allocation2 + $0x4] sm:$0xf]
    %v3778 = vld [vmem:[#allocation2 + $0x28] sm:$0xf]
    %v3779 = vld [vmem:[#allocation2 + $0x4c] sm:$0xf]
    %v3780 = vld [vmem:[#allocation2 + $0x70] sm:$0xf]
    %v3781 = vld [vmem:[#allocation2 + $0x10] sm:$0xf]
    %v3782 = vld [vmem:[#allocation2 + $0x34] sm:$0xf]
    %v3783 = vld [vmem:[#allocation2 + $0x58] sm:$0xf]
    %v3784 = vld [vmem:[#allocation2 + $0x7c] sm:$0xf]
    %v3785 = vld [vmem:[#allocation2 + $0x1c] sm:$0xf]
    %v3786 = vld [vmem:[#allocation2 + $0x40] sm:$0xf]
    %v3787 = vld [vmem:[#allocation2 + $0x64] sm:$0xf]
    %v3788 = vld [vmem:[#allocation2 + $0x88] sm:$0xf]
    %v3790 = vunpack.c.l.b16 %v3777
    %v3791 = vpack.c.b16 %v3790, %v3790
    %3792 = vrot.lane.b32.xlu0 %v3791, 64
    %v3793 = vpop.permute.xlu0 %3792
    %v3795 = vunpack.c.l.b16 %v3781
    %v3796 = vpack.c.b16 %v3795, %v3795
    %3797 = vrot.lane.b32.xlu0 %v3796, 64
    %v3798 = vpop.permute.xlu0 %3797
    %v3800 = vsel %vm2404, %v3793, 0
    %v3803 = vsel %vm2404, %v3798, 0
    %3805 = vmatprep.subr.bf16.mxu0 0
    %3806 = vmatpush1.bf16.xpose.msra.mxu0 %v3803
    %3807 = vmatprep.subr.bf16.mxu0 0
    %3808 = vmatpush1.bf16.xpose.msra.mxu0 0
    %3809 = vmatprep.subr.bf16.mxu0 0
    %3810 = vmatpush1.bf16.xpose.msra.mxu0 0
    %3811 = vmatprep.subr.bf16.mxu0 0
    %3812 = vmatpush1.bf16.xpose.msra.mxu0 0
    %3813 = vmatprep.subr.bf16.mxu0 0
    %3814 = vmatpush1.bf16.xpose.msra.mxu0 0
    %3815 = vmatprep.subr.bf16.mxu0 0
    %3816 = vmatpush1.bf16.xpose.msra.mxu0 0
    %3817 = vmatprep.subr.bf16.mxu0 0
    %3818 = vmatpush1.bf16.xpose.msra.mxu0 0
    %3819 = vmatprep.subr.bf16.mxu0 0
    %3820 = vmatpush1.bf16.xpose.msra.mxu0 0
    %3821 = vmatprep.subr.bf16.mxu0 0
    %3822 = vmatpush1.bf16.xpose.msra.mxu0 0
    %3823 = vmatprep.subr.bf16.mxu0 0
    %3824 = vmatpush1.bf16.xpose.msra.mxu0 0
    %3825 = vmatprep.subr.bf16.mxu0 0
    %3826 = vmatpush1.bf16.xpose.msra.mxu0 0
    %3827 = vmatprep.subr.bf16.mxu0 0
    %3828 = vmatpush1.bf16.xpose.msra.mxu0 0
    %3829 = vmatprep.subr.bf16.mxu0 0
    %3830 = vmatpush1.bf16.xpose.msra.mxu0 0
    %3831 = vmatprep.subr.bf16.mxu0 0
    %3832 = vmatpush1.bf16.xpose.msra.mxu0 0
    %3833 = vmatprep.subr.bf16.mxu0 0
    %3834 = vmatpush1.bf16.xpose.msra.mxu0 0
    %3835 = vmatprep.subr.bf16.mxu0 0
    %3836 = vmatpush1.bf16.xpose.msra.mxu0 0
    %3837 = vmatprep.mubr.bf16.mxu0 0
    %3838 = vmatmul.mubr.bf16.gmra.mrb[0].mxu0 %v3800
    %v3839 = vpop.f32.mrb[0].mxu0
    %v3840 = vadd.f32 0.0, %v3839
    %v3841 = vpop.f32.mrb[0].mxu0
    %v3842 = vpop.f32.mrb[0].mxu0
    %v3843 = vpop.f32.mrb[0].mxu0
    %3844 = vdwg.mxu0
    %v3846 = vunpack.c.l.b16 %v3778
    %v3847 = vpack.c.b16 %v3846, %v3846
    %3848 = vrot.lane.b32.xlu0 %v3847, 64
    %v3849 = vpop.permute.xlu0 %3848
    %v3851 = vunpack.c.l.b16 %v3782
    %v3852 = vpack.c.b16 %v3851, %v3851
    %3853 = vrot.lane.b32.xlu0 %v3852, 64
    %v3854 = vpop.permute.xlu0 %3853
    %v3856 = vsel %vm2404, %v3849, 0
    %v3859 = vsel %vm2404, %v3854, 0
    %3861 = vmatprep.subr.bf16.mxu0 0
    %3862 = vmatpush1.bf16.xpose.msra.mxu0 %v3859
    %3863 = vmatprep.subr.bf16.mxu0 0
    %3864 = vmatpush1.bf16.xpose.msra.mxu0 0
    %3865 = vmatprep.subr.bf16.mxu0 0
    %3866 = vmatpush1.bf16.xpose.msra.mxu0 0
    %3867 = vmatprep.subr.bf16.mxu0 0
    %3868 = vmatpush1.bf16.xpose.msra.mxu0 0
    %3869 = vmatprep.subr.bf16.mxu0 0
    %3870 = vmatpush1.bf16.xpose.msra.mxu0 0
    %3871 = vmatprep.subr.bf16.mxu0 0
    %3872 = vmatpush1.bf16.xpose.msra.mxu0 0
    %3873 = vmatprep.subr.bf16.mxu0 0
    %3874 = vmatpush1.bf16.xpose.msra.mxu0 0
    %3875 = vmatprep.subr.bf16.mxu0 0
    %3876 = vmatpush1.bf16.xpose.msra.mxu0 0
    %3877 = vmatprep.subr.bf16.mxu0 0
    %3878 = vmatpush1.bf16.xpose.msra.mxu0 0
    %3879 = vmatprep.subr.bf16.mxu0 0
    %3880 = vmatpush1.bf16.xpose.msra.mxu0 0
    %3881 = vmatprep.subr.bf16.mxu0 0
    %3882 = vmatpush1.bf16.xpose.msra.mxu0 0
    %3883 = vmatprep.subr.bf16.mxu0 0
    %3884 = vmatpush1.bf16.xpose.msra.mxu0 0
    %3885 = vmatprep.subr.bf16.mxu0 0
    %3886 = vmatpush1.bf16.xpose.msra.mxu0 0
    %3887 = vmatprep.subr.bf16.mxu0 0
    %3888 = vmatpush1.bf16.xpose.msra.mxu0 0
    %3889 = vmatprep.subr.bf16.mxu0 0
    %3890 = vmatpush1.bf16.xpose.msra.mxu0 0
    %3891 = vmatprep.subr.bf16.mxu0 0
    %3892 = vmatpush1.bf16.xpose.msra.mxu0 0
    %3893 = vmatprep.mubr.bf16.mxu0 0
    %3894 = vmatmul.mubr.bf16.gmra.mrb[0].mxu0 %v3856
    %v3895 = vpop.f32.mrb[0].mxu0
    %v3896 = vadd.f32 0.0, %v3895
    %v3897 = vpop.f32.mrb[0].mxu0
    %v3898 = vpop.f32.mrb[0].mxu0
    %v3899 = vpop.f32.mrb[0].mxu0
    %3900 = vdwg.mxu0
    %v3902 = vunpack.c.l.b16 %v3779
    %v3903 = vpack.c.b16 %v3902, %v3902
    %3904 = vrot.lane.b32.xlu0 %v3903, 64
    %v3905 = vpop.permute.xlu0 %3904
    %v3907 = vunpack.c.l.b16 %v3783
    %v3908 = vpack.c.b16 %v3907, %v3907
    %3909 = vrot.lane.b32.xlu0 %v3908, 64
    %v3910 = vpop.permute.xlu0 %3909
    %v3912 = vsel %vm2404, %v3905, 0
    %v3915 = vsel %vm2404, %v3910, 0
    %3917 = vmatprep.subr.bf16.mxu0 0
    %3918 = vmatpush1.bf16.xpose.msra.mxu0 %v3915
    %3919 = vmatprep.subr.bf16.mxu0 0
    %3920 = vmatpush1.bf16.xpose.msra.mxu0 0
    %3921 = vmatprep.subr.bf16.mxu0 0
    %3922 = vmatpush1.bf16.xpose.msra.mxu0 0
    %3923 = vmatprep.subr.bf16.mxu0 0
    %3924 = vmatpush1.bf16.xpose.msra.mxu0 0
    %3925 = vmatprep.subr.bf16.mxu0 0
    %3926 = vmatpush1.bf16.xpose.msra.mxu0 0
    %3927 = vmatprep.subr.bf16.mxu0 0
    %3928 = vmatpush1.bf16.xpose.msra.mxu0 0
    %3929 = vmatprep.subr.bf16.mxu0 0
    %3930 = vmatpush1.bf16.xpose.msra.mxu0 0
    %3931 = vmatprep.subr.bf16.mxu0 0
    %3932 = vmatpush1.bf16.xpose.msra.mxu0 0
    %3933 = vmatprep.subr.bf16.mxu0 0
    %3934 = vmatpush1.bf16.xpose.msra.mxu0 0
    %3935 = vmatprep.subr.bf16.mxu0 0
    %3936 = vmatpush1.bf16.xpose.msra.mxu0 0
    %3937 = vmatprep.subr.bf16.mxu0 0
    %3938 = vmatpush1.bf16.xpose.msra.mxu0 0
    %3939 = vmatprep.subr.bf16.mxu0 0
    %3940 = vmatpush1.bf16.xpose.msra.mxu0 0
    %3941 = vmatprep.subr.bf16.mxu0 0
    %3942 = vmatpush1.bf16.xpose.msra.mxu0 0
    %3943 = vmatprep.subr.bf16.mxu0 0
    %3944 = vmatpush1.bf16.xpose.msra.mxu0 0
    %3945 = vmatprep.subr.bf16.mxu0 0
    %3946 = vmatpush1.bf16.xpose.msra.mxu0 0
    %3947 = vmatprep.subr.bf16.mxu0 0
    %3948 = vmatpush1.bf16.xpose.msra.mxu0 0
    %3949 = vmatprep.mubr.bf16.mxu0 0
    %3950 = vmatmul.mubr.bf16.gmra.mrb[0].mxu0 %v3912
    %v3951 = vpop.f32.mrb[0].mxu0
    %v3952 = vadd.f32 0.0, %v3951
    %v3953 = vpop.f32.mrb[0].mxu0
    %v3954 = vpop.f32.mrb[0].mxu0
    %v3955 = vpop.f32.mrb[0].mxu0
    %3956 = vdwg.mxu0
    %v3958 = vunpack.c.l.b16 %v3780
    %v3959 = vpack.c.b16 %v3958, %v3958
    %3960 = vrot.lane.b32.xlu0 %v3959, 64
    %v3961 = vpop.permute.xlu0 %3960
    %v3963 = vunpack.c.l.b16 %v3784
    %v3964 = vpack.c.b16 %v3963, %v3963
    %3965 = vrot.lane.b32.xlu0 %v3964, 64
    %v3966 = vpop.permute.xlu0 %3965
    %v3968 = vsel %vm2404, %v3961, 0
    %v3971 = vsel %vm2404, %v3966, 0
    %3973 = vmatprep.subr.bf16.mxu0 0
    %3974 = vmatpush1.bf16.xpose.msra.mxu0 %v3971
    %3975 = vmatprep.subr.bf16.mxu0 0
    %3976 = vmatpush1.bf16.xpose.msra.mxu0 0
    %3977 = vmatprep.subr.bf16.mxu0 0
    %3978 = vmatpush1.bf16.xpose.msra.mxu0 0
    %3979 = vmatprep.subr.bf16.mxu0 0
    %3980 = vmatpush1.bf16.xpose.msra.mxu0 0
    %3981 = vmatprep.subr.bf16.mxu0 0
    %3982 = vmatpush1.bf16.xpose.msra.mxu0 0
    %3983 = vmatprep.subr.bf16.mxu0 0
    %3984 = vmatpush1.bf16.xpose.msra.mxu0 0
    %3985 = vmatprep.subr.bf16.mxu0 0
    %3986 = vmatpush1.bf16.xpose.msra.mxu0 0
    %3987 = vmatprep.subr.bf16.mxu0 0
    %3988 = vmatpush1.bf16.xpose.msra.mxu0 0
    %3989 = vmatprep.subr.bf16.mxu0 0
    %3990 = vmatpush1.bf16.xpose.msra.mxu0 0
    %3991 = vmatprep.subr.bf16.mxu0 0
    %3992 = vmatpush1.bf16.xpose.msra.mxu0 0
    %3993 = vmatprep.subr.bf16.mxu0 0
    %3994 = vmatpush1.bf16.xpose.msra.mxu0 0
    %3995 = vmatprep.subr.bf16.mxu0 0
    %3996 = vmatpush1.bf16.xpose.msra.mxu0 0
    %3997 = vmatprep.subr.bf16.mxu0 0
    %3998 = vmatpush1.bf16.xpose.msra.mxu0 0
    %3999 = vmatprep.subr.bf16.mxu0 0
    %4000 = vmatpush1.bf16.xpose.msra.mxu0 0
    %4001 = vmatprep.subr.bf16.mxu0 0
    %4002 = vmatpush1.bf16.xpose.msra.mxu0 0
    %4003 = vmatprep.subr.bf16.mxu0 0
    %4004 = vmatpush1.bf16.xpose.msra.mxu0 0
    %4005 = vmatprep.mubr.bf16.mxu0 0
    %4006 = vmatmul.mubr.bf16.gmra.mrb[0].mxu0 %v3968
    %v4007 = vpop.f32.mrb[0].mxu0
    %v4008 = vadd.f32 0.0, %v4007
    %v4009 = vpop.f32.mrb[0].mxu0
    %v4010 = vpop.f32.mrb[0].mxu0
    %v4011 = vpop.f32.mrb[0].mxu0
    %4012 = vdwg.mxu0
    %v4013 = vsel %vm2590, %v3840, -1e+30
    %v4014 = vsel %vm2590, %v3896, -1e+30
    %v4015 = vsel %vm2590, %v3952, -1e+30
    %v4016 = vsel %vm2590, %v4008, -1e+30
    %v4017 = vsel %vm2595, %v4013, -inf
    %4018 = vmax.xlane.f32.xlu0 %v4017
    %v4019 = vpop.xlane.xlu0 %4018
    %v4020 = vsel %vm2595, %v4014, -inf
    %4021 = vmax.xlane.f32.xlu0 %v4020
    %v4022 = vpop.xlane.xlu0 %4021
    %v4023 = vsel %vm2595, %v4015, -inf
    %4024 = vmax.xlane.f32.xlu0 %v4023
    %v4025 = vpop.xlane.xlu0 %4024
    %v4026 = vsel %vm2595, %v4016, -inf
    %4027 = vmax.xlane.f32.xlu0 %v4026
    %v4028 = vpop.xlane.xlu0 %4027
    %v4029 = vsub.f32 %v4013, %v4019
    %v4030 = vsub.f32 %v4014, %v4022
    %v4031 = vsub.f32 %v4015, %v4025
    %v4032 = vsub.f32 %v4016, %v4028
    %v4033 = vmul.f32 %v4029, 1.442695
    %v4034 = vpow.pop %v4033
    %v4035 = vmul.f32 %v4030, 1.442695
    %v4036 = vpow.pop %v4035
    %v4037 = vmul.f32 %v4031, 1.442695
    %v4038 = vpow.pop %v4037
    %v4039 = vmul.f32 %v4032, 1.442695
    %v4040 = vpow.pop %v4039
    %v4041 = vsel %vm2595, %v4034, 0.0
    %4042 = vadd.xlane.f32.xlu0 %v4041
    %v4043 = vpop.xlane.xlu0 %4042
    %v4044 = vsel %vm2595, %v4036, 0.0
    %4045 = vadd.xlane.f32.xlu0 %v4044
    %v4046 = vpop.xlane.xlu0 %4045
    %v4047 = vsel %vm2595, %v4038, 0.0
    %4048 = vadd.xlane.f32.xlu0 %v4047
    %v4049 = vpop.xlane.xlu0 %4048
    %v4050 = vsel %vm2595, %v4040, 0.0
    %4051 = vadd.xlane.f32.xlu0 %v4050
    %v4052 = vpop.xlane.xlu0 %4051
    %v4053 = vrcp.pop %v4043
    %v4054 = vrcp.pop %v4046
    %v4055 = vrcp.pop %v4049
    %v4056 = vrcp.pop %v4052
    %v4057 = vmul.f32 %v4034, %v4053
    %v4058 = vmul.f32 %v4036, %v4054
    %v4059 = vmul.f32 %v4038, %v4055
    %v4060 = vmul.f32 %v4040, %v4056
    %v4061 = vpack.c.bf16 %v4057, %v4057
    %v4062 = vpack.c.bf16 %v4058, %v4058
    %v4063 = vpack.c.bf16 %v4059, %v4059
    %v4064 = vpack.c.bf16 %v4060, %v4060
    %v4066 = vunpack.c.l.b16 %v3785
    %v4067 = vpack.c.b16 %v4066, %v4066
    %4068 = vrot.lane.b32.xlu0 %v4067, 64
    %v4069 = vpop.permute.xlu0 %4068
    %v4071 = vsel %vm2595, %v4061, 0
    %v4074 = vsel %vm2647, %v4069, 0
    %4076 = vmatprep.subr.bf16.mxu0 0
    %4077 = vmatpush1.bf16.msra.mxu0 %v4074
    %4078 = vmatprep.subr.bf16.mxu0 0
    %4079 = vmatpush1.bf16.msra.mxu0 0
    %4080 = vmatprep.subr.bf16.mxu0 0
    %4081 = vmatpush1.bf16.msra.mxu0 0
    %4082 = vmatprep.subr.bf16.mxu0 0
    %4083 = vmatpush1.bf16.msra.mxu0 0
    %4084 = vmatprep.subr.bf16.mxu0 0
    %4085 = vmatpush1.bf16.msra.mxu0 0
    %4086 = vmatprep.subr.bf16.mxu0 0
    %4087 = vmatpush1.bf16.msra.mxu0 0
    %4088 = vmatprep.subr.bf16.mxu0 0
    %4089 = vmatpush1.bf16.msra.mxu0 0
    %4090 = vmatprep.subr.bf16.mxu0 0
    %4091 = vmatpush1.bf16.msra.mxu0 0
    %4092 = vmatprep.subr.bf16.mxu0 0
    %4093 = vmatpush1.bf16.msra.mxu0 0
    %4094 = vmatprep.subr.bf16.mxu0 0
    %4095 = vmatpush1.bf16.msra.mxu0 0
    %4096 = vmatprep.subr.bf16.mxu0 0
    %4097 = vmatpush1.bf16.msra.mxu0 0
    %4098 = vmatprep.subr.bf16.mxu0 0
    %4099 = vmatpush1.bf16.msra.mxu0 0
    %4100 = vmatprep.subr.bf16.mxu0 0
    %4101 = vmatpush1.bf16.msra.mxu0 0
    %4102 = vmatprep.subr.bf16.mxu0 0
    %4103 = vmatpush1.bf16.msra.mxu0 0
    %4104 = vmatprep.subr.bf16.mxu0 0
    %4105 = vmatpush1.bf16.msra.mxu0 0
    %4106 = vmatprep.subr.bf16.mxu0 0
    %4107 = vmatpush1.bf16.msra.mxu0 0
    %4108 = vmatprep.mubr.bf16.mxu0 0
    %4109 = vmatmul.mubr.bf16.gmra.mrb[0].mxu0 %v4071
    %v4110 = vpop.f32.mrb[0].mxu0
    %v4111 = vadd.f32 0.0, %v4110
    %v4112 = vpop.f32.mrb[0].mxu0
    %v4113 = vpop.f32.mrb[0].mxu0
    %v4114 = vpop.f32.mrb[0].mxu0
    %4115 = vdwg.mxu0
    %v4117 = vunpack.c.l.b16 %v3786
    %v4118 = vpack.c.b16 %v4117, %v4117
    %4119 = vrot.lane.b32.xlu0 %v4118, 64
    %v4120 = vpop.permute.xlu0 %4119
    %v4122 = vsel %vm2595, %v4062, 0
    %v4125 = vsel %vm2647, %v4120, 0
    %4127 = vmatprep.subr.bf16.mxu0 0
    %4128 = vmatpush1.bf16.msra.mxu0 %v4125
    %4129 = vmatprep.subr.bf16.mxu0 0
    %4130 = vmatpush1.bf16.msra.mxu0 0
    %4131 = vmatprep.subr.bf16.mxu0 0
    %4132 = vmatpush1.bf16.msra.mxu0 0
    %4133 = vmatprep.subr.bf16.mxu0 0
    %4134 = vmatpush1.bf16.msra.mxu0 0
    %4135 = vmatprep.subr.bf16.mxu0 0
    %4136 = vmatpush1.bf16.msra.mxu0 0
    %4137 = vmatprep.subr.bf16.mxu0 0
    %4138 = vmatpush1.bf16.msra.mxu0 0
    %4139 = vmatprep.subr.bf16.mxu0 0
    %4140 = vmatpush1.bf16.msra.mxu0 0
    %4141 = vmatprep.subr.bf16.mxu0 0
    %4142 = vmatpush1.bf16.msra.mxu0 0
    %4143 = vmatprep.subr.bf16.mxu0 0
    %4144 = vmatpush1.bf16.msra.mxu0 0
    %4145 = vmatprep.subr.bf16.mxu0 0
    %4146 = vmatpush1.bf16.msra.mxu0 0
    %4147 = vmatprep.subr.bf16.mxu0 0
    %4148 = vmatpush1.bf16.msra.mxu0 0
    %4149 = vmatprep.subr.bf16.mxu0 0
    %4150 = vmatpush1.bf16.msra.mxu0 0
    %4151 = vmatprep.subr.bf16.mxu0 0
    %4152 = vmatpush1.bf16.msra.mxu0 0
    %4153 = vmatprep.subr.bf16.mxu0 0
    %4154 = vmatpush1.bf16.msra.mxu0 0
    %4155 = vmatprep.subr.bf16.mxu0 0
    %4156 = vmatpush1.bf16.msra.mxu0 0
    %4157 = vmatprep.subr.bf16.mxu0 0
    %4158 = vmatpush1.bf16.msra.mxu0 0
    %4159 = vmatprep.mubr.bf16.mxu0 0
    %4160 = vmatmul.mubr.bf16.gmra.mrb[0].mxu0 %v4122
    %v4161 = vpop.f32.mrb[0].mxu0
    %v4162 = vadd.f32 0.0, %v4161
    %v4163 = vpop.f32.mrb[0].mxu0
    %v4164 = vpop.f32.mrb[0].mxu0
    %v4165 = vpop.f32.mrb[0].mxu0
    %4166 = vdwg.mxu0
    %v4168 = vunpack.c.l.b16 %v3787
    %v4169 = vpack.c.b16 %v4168, %v4168
    %4170 = vrot.lane.b32.xlu0 %v4169, 64
    %v4171 = vpop.permute.xlu0 %4170
    %v4173 = vsel %vm2595, %v4063, 0
    %v4176 = vsel %vm2647, %v4171, 0
    %4178 = vmatprep.subr.bf16.mxu0 0
    %4179 = vmatpush1.bf16.msra.mxu0 %v4176
    %4180 = vmatprep.subr.bf16.mxu0 0
    %4181 = vmatpush1.bf16.msra.mxu0 0
    %4182 = vmatprep.subr.bf16.mxu0 0
    %4183 = vmatpush1.bf16.msra.mxu0 0
    %4184 = vmatprep.subr.bf16.mxu0 0
    %4185 = vmatpush1.bf16.msra.mxu0 0
    %4186 = vmatprep.subr.bf16.mxu0 0
    %4187 = vmatpush1.bf16.msra.mxu0 0
    %4188 = vmatprep.subr.bf16.mxu0 0
    %4189 = vmatpush1.bf16.msra.mxu0 0
    %4190 = vmatprep.subr.bf16.mxu0 0
    %4191 = vmatpush1.bf16.msra.mxu0 0
    %4192 = vmatprep.subr.bf16.mxu0 0
    %4193 = vmatpush1.bf16.msra.mxu0 0
    %4194 = vmatprep.subr.bf16.mxu0 0
    %4195 = vmatpush1.bf16.msra.mxu0 0
    %4196 = vmatprep.subr.bf16.mxu0 0
    %4197 = vmatpush1.bf16.msra.mxu0 0
    %4198 = vmatprep.subr.bf16.mxu0 0
    %4199 = vmatpush1.bf16.msra.mxu0 0
    %4200 = vmatprep.subr.bf16.mxu0 0
    %4201 = vmatpush1.bf16.msra.mxu0 0
    %4202 = vmatprep.subr.bf16.mxu0 0
    %4203 = vmatpush1.bf16.msra.mxu0 0
    %4204 = vmatprep.subr.bf16.mxu0 0
    %4205 = vmatpush1.bf16.msra.mxu0 0
    %4206 = vmatprep.subr.bf16.mxu0 0
    %4207 = vmatpush1.bf16.msra.mxu0 0
    %4208 = vmatprep.subr.bf16.mxu0 0
    %4209 = vmatpush1.bf16.msra.mxu0 0
    %4210 = vmatprep.mubr.bf16.mxu0 0
    %4211 = vmatmul.mubr.bf16.gmra.mrb[0].mxu0 %v4173
    %v4212 = vpop.f32.mrb[0].mxu0
    %v4213 = vadd.f32 0.0, %v4212
    %v4214 = vpop.f32.mrb[0].mxu0
    %v4215 = vpop.f32.mrb[0].mxu0
    %v4216 = vpop.f32.mrb[0].mxu0
    %4217 = vdwg.mxu0
    %v4219 = vunpack.c.l.b16 %v3788
    %v4220 = vpack.c.b16 %v4219, %v4219
    %4221 = vrot.lane.b32.xlu0 %v4220, 64
    %v4222 = vpop.permute.xlu0 %4221
    %v4224 = vsel %vm2595, %v4064, 0
    %v4227 = vsel %vm2647, %v4222, 0
    %4229 = vmatprep.subr.bf16.mxu0 0
    %4230 = vmatpush1.bf16.msra.mxu0 %v4227
    %4231 = vmatprep.subr.bf16.mxu0 0
    %4232 = vmatpush1.bf16.msra.mxu0 0
    %4233 = vmatprep.subr.bf16.mxu0 0
    %4234 = vmatpush1.bf16.msra.mxu0 0
    %4235 = vmatprep.subr.bf16.mxu0 0
    %4236 = vmatpush1.bf16.msra.mxu0 0
    %4237 = vmatprep.subr.bf16.mxu0 0
    %4238 = vmatpush1.bf16.msra.mxu0 0
    %4239 = vmatprep.subr.bf16.mxu0 0
    %4240 = vmatpush1.bf16.msra.mxu0 0
    %4241 = vmatprep.subr.bf16.mxu0 0
    %4242 = vmatpush1.bf16.msra.mxu0 0
    %4243 = vmatprep.subr.bf16.mxu0 0
    %4244 = vmatpush1.bf16.msra.mxu0 0
    %4245 = vmatprep.subr.bf16.mxu0 0
    %4246 = vmatpush1.bf16.msra.mxu0 0
    %4247 = vmatprep.subr.bf16.mxu0 0
    %4248 = vmatpush1.bf16.msra.mxu0 0
    %4249 = vmatprep.subr.bf16.mxu0 0
    %4250 = vmatpush1.bf16.msra.mxu0 0
    %4251 = vmatprep.subr.bf16.mxu0 0
    %4252 = vmatpush1.bf16.msra.mxu0 0
    %4253 = vmatprep.subr.bf16.mxu0 0
    %4254 = vmatpush1.bf16.msra.mxu0 0
    %4255 = vmatprep.subr.bf16.mxu0 0
    %4256 = vmatpush1.bf16.msra.mxu0 0
    %4257 = vmatprep.subr.bf16.mxu0 0
    %4258 = vmatpush1.bf16.msra.mxu0 0
    %4259 = vmatprep.subr.bf16.mxu0 0
    %4260 = vmatpush1.bf16.msra.mxu0 0
    %4261 = vmatprep.mubr.bf16.mxu0 0
    %4262 = vmatmul.mubr.bf16.gmra.mrb[0].mxu0 %v4224
    %v4263 = vpop.f32.mrb[0].mxu0
    %v4264 = vadd.f32 0.0, %v4263
    %v4265 = vpop.f32.mrb[0].mxu0
    %v4266 = vpop.f32.mrb[0].mxu0
    %v4267 = vpop.f32.mrb[0].mxu0
    %4268 = vdwg.mxu0
    %4273 = vrot.lane.b32.xlu0 %v4111, 64
    %v4274 = vpop.permute.xlu0 %4273
    %4275 = vrot.lane.b32.xlu0 %v4162, 64
    %v4276 = vpop.permute.xlu0 %4275
    %4277 = vrot.lane.b32.xlu0 %v4213, 64
    %v4278 = vpop.permute.xlu0 %4277
    %4279 = vrot.lane.b32.xlu0 %v4264, 64
    %v4280 = vpop.permute.xlu0 %4279
    %v4285 = vsel %vm2404, %v3634, %v4274
    %v4286 = vsel %vm2404, %v3680, %v4276
    %v4287 = vsel %vm2404, %v3726, %v4278
    %v4288 = vsel %vm2404, %v3772, %v4280
    %4289 = vst [vmem:[#allocation3 + $0x8] sm:$0xff] %v4285
    %4290 = vst [vmem:[#allocation3 + $0x20] sm:$0xff] %v4286
    %4291 = vst [vmem:[#allocation3 + $0x38] sm:$0xff] %v4287
    %4292 = vst [vmem:[#allocation3 + $0x50] sm:$0xff] %v4288
    %v4293 = vld [vmem:[#allocation2 + $0x8] sm:$0xf]
    %v4294 = vld [vmem:[#allocation2 + $0x2c] sm:$0xf]
    %v4295 = vld [vmem:[#allocation2 + $0x50] sm:$0xf]
    %v4296 = vld [vmem:[#allocation2 + $0x74] sm:$0xf]
    %v4297 = vld [vmem:[#allocation2 + $0x14] sm:$0xf]
    %v4298 = vld [vmem:[#allocation2 + $0x38] sm:$0xf]
    %v4299 = vld [vmem:[#allocation2 + $0x5c] sm:$0xf]
    %v4300 = vld [vmem:[#allocation2 + $0x80] sm:$0xf]
    %v4301 = vld [vmem:[#allocation2 + $0x20] sm:$0xf]
    %v4302 = vld [vmem:[#allocation2 + $0x44] sm:$0xf]
    %v4303 = vld [vmem:[#allocation2 + $0x68] sm:$0xf]
    %v4304 = vld [vmem:[#allocation2 + $0x8c] sm:$0xf]
    %v4306 = vsel %vm2404, %v4293, 0
    %v4309 = vsel %vm2404, %v4297, 0
    %4311 = vmatprep.subr.bf16.mxu0 0
    %4312 = vmatpush1.bf16.xpose.msra.mxu0 %v4309
    %4313 = vmatprep.subr.bf16.mxu0 0
    %4314 = vmatpush1.bf16.xpose.msra.mxu0 0
    %4315 = vmatprep.subr.bf16.mxu0 0
    %4316 = vmatpush1.bf16.xpose.msra.mxu0 0
    %4317 = vmatprep.subr.bf16.mxu0 0
    %4318 = vmatpush1.bf16.xpose.msra.mxu0 0
    %4319 = vmatprep.subr.bf16.mxu0 0
    %4320 = vmatpush1.bf16.xpose.msra.mxu0 0
    %4321 = vmatprep.subr.bf16.mxu0 0
    %4322 = vmatpush1.bf16.xpose.msra.mxu0 0
    %4323 = vmatprep.subr.bf16.mxu0 0
    %4324 = vmatpush1.bf16.xpose.msra.mxu0 0
    %4325 = vmatprep.subr.bf16.mxu0 0
    %4326 = vmatpush1.bf16.xpose.msra.mxu0 0
    %4327 = vmatprep.subr.bf16.mxu0 0
    %4328 = vmatpush1.bf16.xpose.msra.mxu0 0
    %4329 = vmatprep.subr.bf16.mxu0 0
    %4330 = vmatpush1.bf16.xpose.msra.mxu0 0
    %4331 = vmatprep.subr.bf16.mxu0 0
    %4332 = vmatpush1.bf16.xpose.msra.mxu0 0
    %4333 = vmatprep.subr.bf16.mxu0 0
    %4334 = vmatpush1.bf16.xpose.msra.mxu0 0
    %4335 = vmatprep.subr.bf16.mxu0 0
    %4336 = vmatpush1.bf16.xpose.msra.mxu0 0
    %4337 = vmatprep.subr.bf16.mxu0 0
    %4338 = vmatpush1.bf16.xpose.msra.mxu0 0
    %4339 = vmatprep.subr.bf16.mxu0 0
    %4340 = vmatpush1.bf16.xpose.msra.mxu0 0
    %4341 = vmatprep.subr.bf16.mxu0 0
    %4342 = vmatpush1.bf16.xpose.msra.mxu0 0
    %4343 = vmatprep.mubr.bf16.mxu0 0
    %4344 = vmatmul.mubr.bf16.gmra.mrb[0].mxu0 %v4306
    %v4345 = vpop.f32.mrb[0].mxu0
    %v4346 = vadd.f32 0.0, %v4345
    %v4347 = vpop.f32.mrb[0].mxu0
    %v4348 = vpop.f32.mrb[0].mxu0
    %v4349 = vpop.f32.mrb[0].mxu0
    %4350 = vdwg.mxu0
    %v4352 = vsel %vm2404, %v4294, 0
    %v4355 = vsel %vm2404, %v4298, 0
    %4357 = vmatprep.subr.bf16.mxu0 0
    %4358 = vmatpush1.bf16.xpose.msra.mxu0 %v4355
    %4359 = vmatprep.subr.bf16.mxu0 0
    %4360 = vmatpush1.bf16.xpose.msra.mxu0 0
    %4361 = vmatprep.subr.bf16.mxu0 0
    %4362 = vmatpush1.bf16.xpose.msra.mxu0 0
    %4363 = vmatprep.subr.bf16.mxu0 0
    %4364 = vmatpush1.bf16.xpose.msra.mxu0 0
    %4365 = vmatprep.subr.bf16.mxu0 0
    %4366 = vmatpush1.bf16.xpose.msra.mxu0 0
    %4367 = vmatprep.subr.bf16.mxu0 0
    %4368 = vmatpush1.bf16.xpose.msra.mxu0 0
    %4369 = vmatprep.subr.bf16.mxu0 0
    %4370 = vmatpush1.bf16.xpose.msra.mxu0 0
    %4371 = vmatprep.subr.bf16.mxu0 0
    %4372 = vmatpush1.bf16.xpose.msra.mxu0 0
    %4373 = vmatprep.subr.bf16.mxu0 0
    %4374 = vmatpush1.bf16.xpose.msra.mxu0 0
    %4375 = vmatprep.subr.bf16.mxu0 0
    %4376 = vmatpush1.bf16.xpose.msra.mxu0 0
    %4377 = vmatprep.subr.bf16.mxu0 0
    %4378 = vmatpush1.bf16.xpose.msra.mxu0 0
    %4379 = vmatprep.subr.bf16.mxu0 0
    %4380 = vmatpush1.bf16.xpose.msra.mxu0 0
    %4381 = vmatprep.subr.bf16.mxu0 0
    %4382 = vmatpush1.bf16.xpose.msra.mxu0 0
    %4383 = vmatprep.subr.bf16.mxu0 0
    %4384 = vmatpush1.bf16.xpose.msra.mxu0 0
    %4385 = vmatprep.subr.bf16.mxu0 0
    %4386 = vmatpush1.bf16.xpose.msra.mxu0 0
    %4387 = vmatprep.subr.bf16.mxu0 0
    %4388 = vmatpush1.bf16.xpose.msra.mxu0 0
    %4389 = vmatprep.mubr.bf16.mxu0 0
    %4390 = vmatmul.mubr.bf16.gmra.mrb[0].mxu0 %v4352
    %v4391 = vpop.f32.mrb[0].mxu0
    %v4392 = vadd.f32 0.0, %v4391
    %v4393 = vpop.f32.mrb[0].mxu0
    %v4394 = vpop.f32.mrb[0].mxu0
    %v4395 = vpop.f32.mrb[0].mxu0
    %4396 = vdwg.mxu0
    %v4398 = vsel %vm2404, %v4295, 0
    %v4401 = vsel %vm2404, %v4299, 0
    %4403 = vmatprep.subr.bf16.mxu0 0
    %4404 = vmatpush1.bf16.xpose.msra.mxu0 %v4401
    %4405 = vmatprep.subr.bf16.mxu0 0
    %4406 = vmatpush1.bf16.xpose.msra.mxu0 0
    %4407 = vmatprep.subr.bf16.mxu0 0
    %4408 = vmatpush1.bf16.xpose.msra.mxu0 0
    %4409 = vmatprep.subr.bf16.mxu0 0
    %4410 = vmatpush1.bf16.xpose.msra.mxu0 0
    %4411 = vmatprep.subr.bf16.mxu0 0
    %4412 = vmatpush1.bf16.xpose.msra.mxu0 0
    %4413 = vmatprep.subr.bf16.mxu0 0
    %4414 = vmatpush1.bf16.xpose.msra.mxu0 0
    %4415 = vmatprep.subr.bf16.mxu0 0
    %4416 = vmatpush1.bf16.xpose.msra.mxu0 0
    %4417 = vmatprep.subr.bf16.mxu0 0
    %4418 = vmatpush1.bf16.xpose.msra.mxu0 0
    %4419 = vmatprep.subr.bf16.mxu0 0
    %4420 = vmatpush1.bf16.xpose.msra.mxu0 0
    %4421 = vmatprep.subr.bf16.mxu0 0
    %4422 = vmatpush1.bf16.xpose.msra.mxu0 0
    %4423 = vmatprep.subr.bf16.mxu0 0
    %4424 = vmatpush1.bf16.xpose.msra.mxu0 0
    %4425 = vmatprep.subr.bf16.mxu0 0
    %4426 = vmatpush1.bf16.xpose.msra.mxu0 0
    %4427 = vmatprep.subr.bf16.mxu0 0
    %4428 = vmatpush1.bf16.xpose.msra.mxu0 0
    %4429 = vmatprep.subr.bf16.mxu0 0
    %4430 = vmatpush1.bf16.xpose.msra.mxu0 0
    %4431 = vmatprep.subr.bf16.mxu0 0
    %4432 = vmatpush1.bf16.xpose.msra.mxu0 0
    %4433 = vmatprep.subr.bf16.mxu0 0
    %4434 = vmatpush1.bf16.xpose.msra.mxu0 0
    %4435 = vmatprep.mubr.bf16.mxu0 0
    %4436 = vmatmul.mubr.bf16.gmra.mrb[0].mxu0 %v4398
    %v4437 = vpop.f32.mrb[0].mxu0
    %v4438 = vadd.f32 0.0, %v4437
    %v4439 = vpop.f32.mrb[0].mxu0
    %v4440 = vpop.f32.mrb[0].mxu0
    %v4441 = vpop.f32.mrb[0].mxu0
    %4442 = vdwg.mxu0
    %v4444 = vsel %vm2404, %v4296, 0
    %v4447 = vsel %vm2404, %v4300, 0
    %4449 = vmatprep.subr.bf16.mxu0 0
    %4450 = vmatpush1.bf16.xpose.msra.mxu0 %v4447
    %4451 = vmatprep.subr.bf16.mxu0 0
    %4452 = vmatpush1.bf16.xpose.msra.mxu0 0
    %4453 = vmatprep.subr.bf16.mxu0 0
    %4454 = vmatpush1.bf16.xpose.msra.mxu0 0
    %4455 = vmatprep.subr.bf16.mxu0 0
    %4456 = vmatpush1.bf16.xpose.msra.mxu0 0
    %4457 = vmatprep.subr.bf16.mxu0 0
    %4458 = vmatpush1.bf16.xpose.msra.mxu0 0
    %4459 = vmatprep.subr.bf16.mxu0 0
    %4460 = vmatpush1.bf16.xpose.msra.mxu0 0
    %4461 = vmatprep.subr.bf16.mxu0 0
    %4462 = vmatpush1.bf16.xpose.msra.mxu0 0
    %4463 = vmatprep.subr.bf16.mxu0 0
    %4464 = vmatpush1.bf16.xpose.msra.mxu0 0
    %4465 = vmatprep.subr.bf16.mxu0 0
    %4466 = vmatpush1.bf16.xpose.msra.mxu0 0
    %4467 = vmatprep.subr.bf16.mxu0 0
    %4468 = vmatpush1.bf16.xpose.msra.mxu0 0
    %4469 = vmatprep.subr.bf16.mxu0 0
    %4470 = vmatpush1.bf16.xpose.msra.mxu0 0
    %4471 = vmatprep.subr.bf16.mxu0 0
    %4472 = vmatpush1.bf16.xpose.msra.mxu0 0
    %4473 = vmatprep.subr.bf16.mxu0 0
    %4474 = vmatpush1.bf16.xpose.msra.mxu0 0
    %4475 = vmatprep.subr.bf16.mxu0 0
    %4476 = vmatpush1.bf16.xpose.msra.mxu0 0
    %4477 = vmatprep.subr.bf16.mxu0 0
    %4478 = vmatpush1.bf16.xpose.msra.mxu0 0
    %4479 = vmatprep.subr.bf16.mxu0 0
    %4480 = vmatpush1.bf16.xpose.msra.mxu0 0
    %4481 = vmatprep.mubr.bf16.mxu0 0
    %4482 = vmatmul.mubr.bf16.gmra.mrb[0].mxu0 %v4444
    %v4483 = vpop.f32.mrb[0].mxu0
    %v4484 = vadd.f32 0.0, %v4483
    %v4485 = vpop.f32.mrb[0].mxu0
    %v4486 = vpop.f32.mrb[0].mxu0
    %v4487 = vpop.f32.mrb[0].mxu0
    %4488 = vdwg.mxu0
    %v4489 = vsel %vm2590, %v4346, -1e+30
    %v4490 = vsel %vm2590, %v4392, -1e+30
    %v4491 = vsel %vm2590, %v4438, -1e+30
    %v4492 = vsel %vm2590, %v4484, -1e+30
    %v4493 = vsel %vm2595, %v4489, -inf
    %4494 = vmax.xlane.f32.xlu0 %v4493
    %v4495 = vpop.xlane.xlu0 %4494
    %v4496 = vsel %vm2595, %v4490, -inf
    %4497 = vmax.xlane.f32.xlu0 %v4496
    %v4498 = vpop.xlane.xlu0 %4497
    %v4499 = vsel %vm2595, %v4491, -inf
    %4500 = vmax.xlane.f32.xlu0 %v4499
    %v4501 = vpop.xlane.xlu0 %4500
    %v4502 = vsel %vm2595, %v4492, -inf
    %4503 = vmax.xlane.f32.xlu0 %v4502
    %v4504 = vpop.xlane.xlu0 %4503
    %v4505 = vsub.f32 %v4489, %v4495
    %v4506 = vsub.f32 %v4490, %v4498
    %v4507 = vsub.f32 %v4491, %v4501
    %v4508 = vsub.f32 %v4492, %v4504
    %v4509 = vmul.f32 %v4505, 1.442695
    %v4510 = vpow.pop %v4509
    %v4511 = vmul.f32 %v4506, 1.442695
    %v4512 = vpow.pop %v4511
    %v4513 = vmul.f32 %v4507, 1.442695
    %v4514 = vpow.pop %v4513
    %v4515 = vmul.f32 %v4508, 1.442695
    %v4516 = vpow.pop %v4515
    %v4517 = vsel %vm2595, %v4510, 0.0
    %4518 = vadd.xlane.f32.xlu0 %v4517
    %v4519 = vpop.xlane.xlu0 %4518
    %v4520 = vsel %vm2595, %v4512, 0.0
    %4521 = vadd.xlane.f32.xlu0 %v4520
    %v4522 = vpop.xlane.xlu0 %4521
    %v4523 = vsel %vm2595, %v4514, 0.0
    %4524 = vadd.xlane.f32.xlu0 %v4523
    %v4525 = vpop.xlane.xlu0 %4524
    %v4526 = vsel %vm2595, %v4516, 0.0
    %4527 = vadd.xlane.f32.xlu0 %v4526
    %v4528 = vpop.xlane.xlu0 %4527
    %v4529 = vrcp.pop %v4519
    %v4530 = vrcp.pop %v4522
    %v4531 = vrcp.pop %v4525
    %v4532 = vrcp.pop %v4528
    %v4533 = vmul.f32 %v4510, %v4529
    %v4534 = vmul.f32 %v4512, %v4530
    %v4535 = vmul.f32 %v4514, %v4531
    %v4536 = vmul.f32 %v4516, %v4532
    %v4537 = vpack.c.bf16 %v4533, %v4533
    %v4538 = vpack.c.bf16 %v4534, %v4534
    %v4539 = vpack.c.bf16 %v4535, %v4535
    %v4540 = vpack.c.bf16 %v4536, %v4536
    %v4542 = vsel %vm2595, %v4537, 0
    %v4545 = vsel %vm2647, %v4301, 0
    %4547 = vmatprep.subr.bf16.mxu0 0
    %4548 = vmatpush1.bf16.msra.mxu0 %v4545
    %4549 = vmatprep.subr.bf16.mxu0 0
    %4550 = vmatpush1.bf16.msra.mxu0 0
    %4551 = vmatprep.subr.bf16.mxu0 0
    %4552 = vmatpush1.bf16.msra.mxu0 0
    %4553 = vmatprep.subr.bf16.mxu0 0
    %4554 = vmatpush1.bf16.msra.mxu0 0
    %4555 = vmatprep.subr.bf16.mxu0 0
    %4556 = vmatpush1.bf16.msra.mxu0 0
    %4557 = vmatprep.subr.bf16.mxu0 0
    %4558 = vmatpush1.bf16.msra.mxu0 0
    %4559 = vmatprep.subr.bf16.mxu0 0
    %4560 = vmatpush1.bf16.msra.mxu0 0
    %4561 = vmatprep.subr.bf16.mxu0 0
    %4562 = vmatpush1.bf16.msra.mxu0 0
    %4563 = vmatprep.subr.bf16.mxu0 0
    %4564 = vmatpush1.bf16.msra.mxu0 0
    %4565 = vmatprep.subr.bf16.mxu0 0
    %4566 = vmatpush1.bf16.msra.mxu0 0
    %4567 = vmatprep.subr.bf16.mxu0 0
    %4568 = vmatpush1.bf16.msra.mxu0 0
    %4569 = vmatprep.subr.bf16.mxu0 0
    %4570 = vmatpush1.bf16.msra.mxu0 0
    %4571 = vmatprep.subr.bf16.mxu0 0
    %4572 = vmatpush1.bf16.msra.mxu0 0
    %4573 = vmatprep.subr.bf16.mxu0 0
    %4574 = vmatpush1.bf16.msra.mxu0 0
    %4575 = vmatprep.subr.bf16.mxu0 0
    %4576 = vmatpush1.bf16.msra.mxu0 0
    %4577 = vmatprep.subr.bf16.mxu0 0
    %4578 = vmatpush1.bf16.msra.mxu0 0
    %4579 = vmatprep.mubr.bf16.mxu0 0
    %4580 = vmatmul.mubr.bf16.gmra.mrb[0].mxu0 %v4542
    %v4581 = vpop.f32.mrb[0].mxu0
    %v4582 = vadd.f32 0.0, %v4581
    %v4583 = vpop.f32.mrb[0].mxu0
    %v4584 = vpop.f32.mrb[0].mxu0
    %v4585 = vpop.f32.mrb[0].mxu0
    %4586 = vdwg.mxu0
    %v4588 = vsel %vm2595, %v4538, 0
    %v4591 = vsel %vm2647, %v4302, 0
    %4593 = vmatprep.subr.bf16.mxu0 0
    %4594 = vmatpush1.bf16.msra.mxu0 %v4591
    %4595 = vmatprep.subr.bf16.mxu0 0
    %4596 = vmatpush1.bf16.msra.mxu0 0
    %4597 = vmatprep.subr.bf16.mxu0 0
    %4598 = vmatpush1.bf16.msra.mxu0 0
    %4599 = vmatprep.subr.bf16.mxu0 0
    %4600 = vmatpush1.bf16.msra.mxu0 0
    %4601 = vmatprep.subr.bf16.mxu0 0
    %4602 = vmatpush1.bf16.msra.mxu0 0
    %4603 = vmatprep.subr.bf16.mxu0 0
    %4604 = vmatpush1.bf16.msra.mxu0 0
    %4605 = vmatprep.subr.bf16.mxu0 0
    %4606 = vmatpush1.bf16.msra.mxu0 0
    %4607 = vmatprep.subr.bf16.mxu0 0
    %4608 = vmatpush1.bf16.msra.mxu0 0
    %4609 = vmatprep.subr.bf16.mxu0 0
    %4610 = vmatpush1.bf16.msra.mxu0 0
    %4611 = vmatprep.subr.bf16.mxu0 0
    %4612 = vmatpush1.bf16.msra.mxu0 0
    %4613 = vmatprep.subr.bf16.mxu0 0
    %4614 = vmatpush1.bf16.msra.mxu0 0
    %4615 = vmatprep.subr.bf16.mxu0 0
    %4616 = vmatpush1.bf16.msra.mxu0 0
    %4617 = vmatprep.subr.bf16.mxu0 0
    %4618 = vmatpush1.bf16.msra.mxu0 0
    %4619 = vmatprep.subr.bf16.mxu0 0
    %4620 = vmatpush1.bf16.msra.mxu0 0
    %4621 = vmatprep.subr.bf16.mxu0 0
    %4622 = vmatpush1.bf16.msra.mxu0 0
    %4623 = vmatprep.subr.bf16.mxu0 0
    %4624 = vmatpush1.bf16.msra.mxu0 0
    %4625 = vmatprep.mubr.bf16.mxu0 0
    %4626 = vmatmul.mubr.bf16.gmra.mrb[0].mxu0 %v4588
    %v4627 = vpop.f32.mrb[0].mxu0
    %v4628 = vadd.f32 0.0, %v4627
    %v4629 = vpop.f32.mrb[0].mxu0
    %v4630 = vpop.f32.mrb[0].mxu0
    %v4631 = vpop.f32.mrb[0].mxu0
    %4632 = vdwg.mxu0
    %v4634 = vsel %vm2595, %v4539, 0
    %v4637 = vsel %vm2647, %v4303, 0
    %4639 = vmatprep.subr.bf16.mxu0 0
    %4640 = vmatpush1.bf16.msra.mxu0 %v4637
    %4641 = vmatprep.subr.bf16.mxu0 0
    %4642 = vmatpush1.bf16.msra.mxu0 0
    %4643 = vmatprep.subr.bf16.mxu0 0
    %4644 = vmatpush1.bf16.msra.mxu0 0
    %4645 = vmatprep.subr.bf16.mxu0 0
    %4646 = vmatpush1.bf16.msra.mxu0 0
    %4647 = vmatprep.subr.bf16.mxu0 0
    %4648 = vmatpush1.bf16.msra.mxu0 0
    %4649 = vmatprep.subr.bf16.mxu0 0
    %4650 = vmatpush1.bf16.msra.mxu0 0
    %4651 = vmatprep.subr.bf16.mxu0 0
    %4652 = vmatpush1.bf16.msra.mxu0 0
    %4653 = vmatprep.subr.bf16.mxu0 0
    %4654 = vmatpush1.bf16.msra.mxu0 0
    %4655 = vmatprep.subr.bf16.mxu0 0
    %4656 = vmatpush1.bf16.msra.mxu0 0
    %4657 = vmatprep.subr.bf16.mxu0 0
    %4658 = vmatpush1.bf16.msra.mxu0 0
    %4659 = vmatprep.subr.bf16.mxu0 0
    %4660 = vmatpush1.bf16.msra.mxu0 0
    %4661 = vmatprep.subr.bf16.mxu0 0
    %4662 = vmatpush1.bf16.msra.mxu0 0
    %4663 = vmatprep.subr.bf16.mxu0 0
    %4664 = vmatpush1.bf16.msra.mxu0 0
    %4665 = vmatprep.subr.bf16.mxu0 0
    %4666 = vmatpush1.bf16.msra.mxu0 0
    %4667 = vmatprep.subr.bf16.mxu0 0
    %4668 = vmatpush1.bf16.msra.mxu0 0
    %4669 = vmatprep.subr.bf16.mxu0 0
    %4670 = vmatpush1.bf16.msra.mxu0 0
    %4671 = vmatprep.mubr.bf16.mxu0 0
    %4672 = vmatmul.mubr.bf16.gmra.mrb[0].mxu0 %v4634
    %v4673 = vpop.f32.mrb[0].mxu0
    %v4674 = vadd.f32 0.0, %v4673
    %v4675 = vpop.f32.mrb[0].mxu0
    %v4676 = vpop.f32.mrb[0].mxu0
    %v4677 = vpop.f32.mrb[0].mxu0
    %4678 = vdwg.mxu0
    %v4680 = vsel %vm2595, %v4540, 0
    %v4683 = vsel %vm2647, %v4304, 0
    %4685 = vmatprep.subr.bf16.mxu0 0
    %4686 = vmatpush1.bf16.msra.mxu0 %v4683
    %4687 = vmatprep.subr.bf16.mxu0 0
    %4688 = vmatpush1.bf16.msra.mxu0 0
    %4689 = vmatprep.subr.bf16.mxu0 0
    %4690 = vmatpush1.bf16.msra.mxu0 0
    %4691 = vmatprep.subr.bf16.mxu0 0
    %4692 = vmatpush1.bf16.msra.mxu0 0
    %4693 = vmatprep.subr.bf16.mxu0 0
    %4694 = vmatpush1.bf16.msra.mxu0 0
    %4695 = vmatprep.subr.bf16.mxu0 0
    %4696 = vmatpush1.bf16.msra.mxu0 0
    %4697 = vmatprep.subr.bf16.mxu0 0
    %4698 = vmatpush1.bf16.msra.mxu0 0
    %4699 = vmatprep.subr.bf16.mxu0 0
    %4700 = vmatpush1.bf16.msra.mxu0 0
    %4701 = vmatprep.subr.bf16.mxu0 0
    %4702 = vmatpush1.bf16.msra.mxu0 0
    %4703 = vmatprep.subr.bf16.mxu0 0
    %4704 = vmatpush1.bf16.msra.mxu0 0
    %4705 = vmatprep.subr.bf16.mxu0 0
    %4706 = vmatpush1.bf16.msra.mxu0 0
    %4707 = vmatprep.subr.bf16.mxu0 0
    %4708 = vmatpush1.bf16.msra.mxu0 0
    %4709 = vmatprep.subr.bf16.mxu0 0
    %4710 = vmatpush1.bf16.msra.mxu0 0
    %4711 = vmatprep.subr.bf16.mxu0 0
    %4712 = vmatpush1.bf16.msra.mxu0 0
    %4713 = vmatprep.subr.bf16.mxu0 0
    %4714 = vmatpush1.bf16.msra.mxu0 0
    %4715 = vmatprep.subr.bf16.mxu0 0
    %4716 = vmatpush1.bf16.msra.mxu0 0
    %4717 = vmatprep.mubr.bf16.mxu0 0
    %4718 = vmatmul.mubr.bf16.gmra.mrb[0].mxu0 %v4680
    %v4719 = vpop.f32.mrb[0].mxu0
    %v4720 = vadd.f32 0.0, %v4719
    %v4721 = vpop.f32.mrb[0].mxu0
    %v4722 = vpop.f32.mrb[0].mxu0
    %v4723 = vpop.f32.mrb[0].mxu0
    %4724 = vdwg.mxu0
    %v4725 = vld [vmem:[#allocation2 + $0x8] sm:$0xf]
    %v4726 = vld [vmem:[#allocation2 + $0x2c] sm:$0xf]
    %v4727 = vld [vmem:[#allocation2 + $0x50] sm:$0xf]
    %v4728 = vld [vmem:[#allocation2 + $0x74] sm:$0xf]
    %v4729 = vld [vmem:[#allocation2 + $0x14] sm:$0xf]
    %v4730 = vld [vmem:[#allocation2 + $0x38] sm:$0xf]
    %v4731 = vld [vmem:[#allocation2 + $0x5c] sm:$0xf]
    %v4732 = vld [vmem:[#allocation2 + $0x80] sm:$0xf]
    %v4733 = vld [vmem:[#allocation2 + $0x20] sm:$0xf]
    %v4734 = vld [vmem:[#allocation2 + $0x44] sm:$0xf]
    %v4735 = vld [vmem:[#allocation2 + $0x68] sm:$0xf]
    %v4736 = vld [vmem:[#allocation2 + $0x8c] sm:$0xf]
    %v4738 = vunpack.c.l.b16 %v4725
    %v4739 = vpack.c.b16 %v4738, %v4738
    %4740 = vrot.lane.b32.xlu0 %v4739, 64
    %v4741 = vpop.permute.xlu0 %4740
    %v4743 = vunpack.c.l.b16 %v4729
    %v4744 = vpack.c.b16 %v4743, %v4743
    %4745 = vrot.lane.b32.xlu0 %v4744, 64
    %v4746 = vpop.permute.xlu0 %4745
    %v4748 = vsel %vm2404, %v4741, 0
    %v4751 = vsel %vm2404, %v4746, 0
    %4753 = vmatprep.subr.bf16.mxu0 0
    %4754 = vmatpush1.bf16.xpose.msra.mxu0 %v4751
    %4755 = vmatprep.subr.bf16.mxu0 0
    %4756 = vmatpush1.bf16.xpose.msra.mxu0 0
    %4757 = vmatprep.subr.bf16.mxu0 0
    %4758 = vmatpush1.bf16.xpose.msra.mxu0 0
    %4759 = vmatprep.subr.bf16.mxu0 0
    %4760 = vmatpush1.bf16.xpose.msra.mxu0 0
    %4761 = vmatprep.subr.bf16.mxu0 0
    %4762 = vmatpush1.bf16.xpose.msra.mxu0 0
    %4763 = vmatprep.subr.bf16.mxu0 0
    %4764 = vmatpush1.bf16.xpose.msra.mxu0 0
    %4765 = vmatprep.subr.bf16.mxu0 0
    %4766 = vmatpush1.bf16.xpose.msra.mxu0 0
    %4767 = vmatprep.subr.bf16.mxu0 0
    %4768 = vmatpush1.bf16.xpose.msra.mxu0 0
    %4769 = vmatprep.subr.bf16.mxu0 0
    %4770 = vmatpush1.bf16.xpose.msra.mxu0 0
    %4771 = vmatprep.subr.bf16.mxu0 0
    %4772 = vmatpush1.bf16.xpose.msra.mxu0 0
    %4773 = vmatprep.subr.bf16.mxu0 0
    %4774 = vmatpush1.bf16.xpose.msra.mxu0 0
    %4775 = vmatprep.subr.bf16.mxu0 0
    %4776 = vmatpush1.bf16.xpose.msra.mxu0 0
    %4777 = vmatprep.subr.bf16.mxu0 0
    %4778 = vmatpush1.bf16.xpose.msra.mxu0 0
    %4779 = vmatprep.subr.bf16.mxu0 0
    %4780 = vmatpush1.bf16.xpose.msra.mxu0 0
    %4781 = vmatprep.subr.bf16.mxu0 0
    %4782 = vmatpush1.bf16.xpose.msra.mxu0 0
    %4783 = vmatprep.subr.bf16.mxu0 0
    %4784 = vmatpush1.bf16.xpose.msra.mxu0 0
    %4785 = vmatprep.mubr.bf16.mxu0 0
    %4786 = vmatmul.mubr.bf16.gmra.mrb[0].mxu0 %v4748
    %v4787 = vpop.f32.mrb[0].mxu0
    %v4788 = vadd.f32 0.0, %v4787
    %v4789 = vpop.f32.mrb[0].mxu0
    %v4790 = vpop.f32.mrb[0].mxu0
    %v4791 = vpop.f32.mrb[0].mxu0
    %4792 = vdwg.mxu0
    %v4794 = vunpack.c.l.b16 %v4726
    %v4795 = vpack.c.b16 %v4794, %v4794
    %4796 = vrot.lane.b32.xlu0 %v4795, 64
    %v4797 = vpop.permute.xlu0 %4796
    %v4799 = vunpack.c.l.b16 %v4730
    %v4800 = vpack.c.b16 %v4799, %v4799
    %4801 = vrot.lane.b32.xlu0 %v4800, 64
    %v4802 = vpop.permute.xlu0 %4801
    %v4804 = vsel %vm2404, %v4797, 0
    %v4807 = vsel %vm2404, %v4802, 0
    %4809 = vmatprep.subr.bf16.mxu0 0
    %4810 = vmatpush1.bf16.xpose.msra.mxu0 %v4807
    %4811 = vmatprep.subr.bf16.mxu0 0
    %4812 = vmatpush1.bf16.xpose.msra.mxu0 0
    %4813 = vmatprep.subr.bf16.mxu0 0
    %4814 = vmatpush1.bf16.xpose.msra.mxu0 0
    %4815 = vmatprep.subr.bf16.mxu0 0
    %4816 = vmatpush1.bf16.xpose.msra.mxu0 0
    %4817 = vmatprep.subr.bf16.mxu0 0
    %4818 = vmatpush1.bf16.xpose.msra.mxu0 0
    %4819 = vmatprep.subr.bf16.mxu0 0
    %4820 = vmatpush1.bf16.xpose.msra.mxu0 0
    %4821 = vmatprep.subr.bf16.mxu0 0
    %4822 = vmatpush1.bf16.xpose.msra.mxu0 0
    %4823 = vmatprep.subr.bf16.mxu0 0
    %4824 = vmatpush1.bf16.xpose.msra.mxu0 0
    %4825 = vmatprep.subr.bf16.mxu0 0
    %4826 = vmatpush1.bf16.xpose.msra.mxu0 0
    %4827 = vmatprep.subr.bf16.mxu0 0
    %4828 = vmatpush1.bf16.xpose.msra.mxu0 0
    %4829 = vmatprep.subr.bf16.mxu0 0
    %4830 = vmatpush1.bf16.xpose.msra.mxu0 0
    %4831 = vmatprep.subr.bf16.mxu0 0
    %4832 = vmatpush1.bf16.xpose.msra.mxu0 0
    %4833 = vmatprep.subr.bf16.mxu0 0
    %4834 = vmatpush1.bf16.xpose.msra.mxu0 0
    %4835 = vmatprep.subr.bf16.mxu0 0
    %4836 = vmatpush1.bf16.xpose.msra.mxu0 0
    %4837 = vmatprep.subr.bf16.mxu0 0
    %4838 = vmatpush1.bf16.xpose.msra.mxu0 0
    %4839 = vmatprep.subr.bf16.mxu0 0
    %4840 = vmatpush1.bf16.xpose.msra.mxu0 0
    %4841 = vmatprep.mubr.bf16.mxu0 0
    %4842 = vmatmul.mubr.bf16.gmra.mrb[0].mxu0 %v4804
    %v4843 = vpop.f32.mrb[0].mxu0
    %v4844 = vadd.f32 0.0, %v4843
    %v4845 = vpop.f32.mrb[0].mxu0
    %v4846 = vpop.f32.mrb[0].mxu0
    %v4847 = vpop.f32.mrb[0].mxu0
    %4848 = vdwg.mxu0
    %v4850 = vunpack.c.l.b16 %v4727
    %v4851 = vpack.c.b16 %v4850, %v4850
    %4852 = vrot.lane.b32.xlu0 %v4851, 64
    %v4853 = vpop.permute.xlu0 %4852
    %v4855 = vunpack.c.l.b16 %v4731
    %v4856 = vpack.c.b16 %v4855, %v4855
    %4857 = vrot.lane.b32.xlu0 %v4856, 64
    %v4858 = vpop.permute.xlu0 %4857
    %v4860 = vsel %vm2404, %v4853, 0
    %v4863 = vsel %vm2404, %v4858, 0
    %4865 = vmatprep.subr.bf16.mxu0 0
    %4866 = vmatpush1.bf16.xpose.msra.mxu0 %v4863
    %4867 = vmatprep.subr.bf16.mxu0 0
    %4868 = vmatpush1.bf16.xpose.msra.mxu0 0
    %4869 = vmatprep.subr.bf16.mxu0 0
    %4870 = vmatpush1.bf16.xpose.msra.mxu0 0
    %4871 = vmatprep.subr.bf16.mxu0 0
    %4872 = vmatpush1.bf16.xpose.msra.mxu0 0
    %4873 = vmatprep.subr.bf16.mxu0 0
    %4874 = vmatpush1.bf16.xpose.msra.mxu0 0
    %4875 = vmatprep.subr.bf16.mxu0 0
    %4876 = vmatpush1.bf16.xpose.msra.mxu0 0
    %4877 = vmatprep.subr.bf16.mxu0 0
    %4878 = vmatpush1.bf16.xpose.msra.mxu0 0
    %4879 = vmatprep.subr.bf16.mxu0 0
    %4880 = vmatpush1.bf16.xpose.msra.mxu0 0
    %4881 = vmatprep.subr.bf16.mxu0 0
    %4882 = vmatpush1.bf16.xpose.msra.mxu0 0
    %4883 = vmatprep.subr.bf16.mxu0 0
    %4884 = vmatpush1.bf16.xpose.msra.mxu0 0
    %4885 = vmatprep.subr.bf16.mxu0 0
    %4886 = vmatpush1.bf16.xpose.msra.mxu0 0
    %4887 = vmatprep.subr.bf16.mxu0 0
    %4888 = vmatpush1.bf16.xpose.msra.mxu0 0
    %4889 = vmatprep.subr.bf16.mxu0 0
    %4890 = vmatpush1.bf16.xpose.msra.mxu0 0
    %4891 = vmatprep.subr.bf16.mxu0 0
    %4892 = vmatpush1.bf16.xpose.msra.mxu0 0
    %4893 = vmatprep.subr.bf16.mxu0 0
    %4894 = vmatpush1.bf16.xpose.msra.mxu0 0
    %4895 = vmatprep.subr.bf16.mxu0 0
    %4896 = vmatpush1.bf16.xpose.msra.mxu0 0
    %4897 = vmatprep.mubr.bf16.mxu0 0
    %4898 = vmatmul.mubr.bf16.gmra.mrb[0].mxu0 %v4860
    %v4899 = vpop.f32.mrb[0].mxu0
    %v4900 = vadd.f32 0.0, %v4899
    %v4901 = vpop.f32.mrb[0].mxu0
    %v4902 = vpop.f32.mrb[0].mxu0
    %v4903 = vpop.f32.mrb[0].mxu0
    %4904 = vdwg.mxu0
    %v4906 = vunpack.c.l.b16 %v4728
    %v4907 = vpack.c.b16 %v4906, %v4906
    %4908 = vrot.lane.b32.xlu0 %v4907, 64
    %v4909 = vpop.permute.xlu0 %4908
    %v4911 = vunpack.c.l.b16 %v4732
    %v4912 = vpack.c.b16 %v4911, %v4911
    %4913 = vrot.lane.b32.xlu0 %v4912, 64
    %v4914 = vpop.permute.xlu0 %4913
    %v4916 = vsel %vm2404, %v4909, 0
    %v4919 = vsel %vm2404, %v4914, 0
    %4921 = vmatprep.subr.bf16.mxu0 0
    %4922 = vmatpush1.bf16.xpose.msra.mxu0 %v4919
    %4923 = vmatprep.subr.bf16.mxu0 0
    %4924 = vmatpush1.bf16.xpose.msra.mxu0 0
    %4925 = vmatprep.subr.bf16.mxu0 0
    %4926 = vmatpush1.bf16.xpose.msra.mxu0 0
    %4927 = vmatprep.subr.bf16.mxu0 0
    %4928 = vmatpush1.bf16.xpose.msra.mxu0 0
    %4929 = vmatprep.subr.bf16.mxu0 0
    %4930 = vmatpush1.bf16.xpose.msra.mxu0 0
    %4931 = vmatprep.subr.bf16.mxu0 0
    %4932 = vmatpush1.bf16.xpose.msra.mxu0 0
    %4933 = vmatprep.subr.bf16.mxu0 0
    %4934 = vmatpush1.bf16.xpose.msra.mxu0 0
    %4935 = vmatprep.subr.bf16.mxu0 0
    %4936 = vmatpush1.bf16.xpose.msra.mxu0 0
    %4937 = vmatprep.subr.bf16.mxu0 0
    %4938 = vmatpush1.bf16.xpose.msra.mxu0 0
    %4939 = vmatprep.subr.bf16.mxu0 0
    %4940 = vmatpush1.bf16.xpose.msra.mxu0 0
    %4941 = vmatprep.subr.bf16.mxu0 0
    %4942 = vmatpush1.bf16.xpose.msra.mxu0 0
    %4943 = vmatprep.subr.bf16.mxu0 0
    %4944 = vmatpush1.bf16.xpose.msra.mxu0 0
    %4945 = vmatprep.subr.bf16.mxu0 0
    %4946 = vmatpush1.bf16.xpose.msra.mxu0 0
    %4947 = vmatprep.subr.bf16.mxu0 0
    %4948 = vmatpush1.bf16.xpose.msra.mxu0 0
    %4949 = vmatprep.subr.bf16.mxu0 0
    %4950 = vmatpush1.bf16.xpose.msra.mxu0 0
    %4951 = vmatprep.subr.bf16.mxu0 0
    %4952 = vmatpush1.bf16.xpose.msra.mxu0 0
    %4953 = vmatprep.mubr.bf16.mxu0 0
    %4954 = vmatmul.mubr.bf16.gmra.mrb[0].mxu0 %v4916
    %v4955 = vpop.f32.mrb[0].mxu0
    %v4956 = vadd.f32 0.0, %v4955
    %v4957 = vpop.f32.mrb[0].mxu0
    %v4958 = vpop.f32.mrb[0].mxu0
    %v4959 = vpop.f32.mrb[0].mxu0
    %4960 = vdwg.mxu0
    %v4961 = vsel %vm2590, %v4788, -1e+30
    %v4962 = vsel %vm2590, %v4844, -1e+30
    %v4963 = vsel %vm2590, %v4900, -1e+30
    %v4964 = vsel %vm2590, %v4956, -1e+30
    %v4965 = vsel %vm2595, %v4961, -inf
    %4966 = vmax.xlane.f32.xlu0 %v4965
    %v4967 = vpop.xlane.xlu0 %4966
    %v4968 = vsel %vm2595, %v4962, -inf
    %4969 = vmax.xlane.f32.xlu0 %v4968
    %v4970 = vpop.xlane.xlu0 %4969
    %v4971 = vsel %vm2595, %v4963, -inf
    %4972 = vmax.xlane.f32.xlu0 %v4971
    %v4973 = vpop.xlane.xlu0 %4972
    %v4974 = vsel %vm2595, %v4964, -inf
    %4975 = vmax.xlane.f32.xlu0 %v4974
    %v4976 = vpop.xlane.xlu0 %4975
    %v4977 = vsub.f32 %v4961, %v4967
    %v4978 = vsub.f32 %v4962, %v4970
    %v4979 = vsub.f32 %v4963, %v4973
    %v4980 = vsub.f32 %v4964, %v4976
    %v4981 = vmul.f32 %v4977, 1.442695
    %v4982 = vpow.pop %v4981
    %v4983 = vmul.f32 %v4978, 1.442695
    %v4984 = vpow.pop %v4983
    %v4985 = vmul.f32 %v4979, 1.442695
    %v4986 = vpow.pop %v4985
    %v4987 = vmul.f32 %v4980, 1.442695
    %v4988 = vpow.pop %v4987
    %v4989 = vsel %vm2595, %v4982, 0.0
    %4990 = vadd.xlane.f32.xlu0 %v4989
    %v4991 = vpop.xlane.xlu0 %4990
    %v4992 = vsel %vm2595, %v4984, 0.0
    %4993 = vadd.xlane.f32.xlu0 %v4992
    %v4994 = vpop.xlane.xlu0 %4993
    %v4995 = vsel %vm2595, %v4986, 0.0
    %4996 = vadd.xlane.f32.xlu0 %v4995
    %v4997 = vpop.xlane.xlu0 %4996
    %v4998 = vsel %vm2595, %v4988, 0.0
    %4999 = vadd.xlane.f32.xlu0 %v4998
    %v5000 = vpop.xlane.xlu0 %4999
    %v5001 = vrcp.pop %v4991
    %v5002 = vrcp.pop %v4994
    %v5003 = vrcp.pop %v4997
    %v5004 = vrcp.pop %v5000
    %v5005 = vmul.f32 %v4982, %v5001
    %v5006 = vmul.f32 %v4984, %v5002
    %v5007 = vmul.f32 %v4986, %v5003
    %v5008 = vmul.f32 %v4988, %v5004
    %v5009 = vpack.c.bf16 %v5005, %v5005
    %v5010 = vpack.c.bf16 %v5006, %v5006
    %v5011 = vpack.c.bf16 %v5007, %v5007
    %v5012 = vpack.c.bf16 %v5008, %v5008
    %v5014 = vunpack.c.l.b16 %v4733
    %v5015 = vpack.c.b16 %v5014, %v5014
    %5016 = vrot.lane.b32.xlu0 %v5015, 64
    %v5017 = vpop.permute.xlu0 %5016
    %v5019 = vsel %vm2595, %v5009, 0
    %v5022 = vsel %vm2647, %v5017, 0
    %5024 = vmatprep.subr.bf16.mxu0 0
    %5025 = vmatpush1.bf16.msra.mxu0 %v5022
    %5026 = vmatprep.subr.bf16.mxu0 0
    %5027 = vmatpush1.bf16.msra.mxu0 0
    %5028 = vmatprep.subr.bf16.mxu0 0
    %5029 = vmatpush1.bf16.msra.mxu0 0
    %5030 = vmatprep.subr.bf16.mxu0 0
    %5031 = vmatpush1.bf16.msra.mxu0 0
    %5032 = vmatprep.subr.bf16.mxu0 0
    %5033 = vmatpush1.bf16.msra.mxu0 0
    %5034 = vmatprep.subr.bf16.mxu0 0
    %5035 = vmatpush1.bf16.msra.mxu0 0
    %5036 = vmatprep.subr.bf16.mxu0 0
    %5037 = vmatpush1.bf16.msra.mxu0 0
    %5038 = vmatprep.subr.bf16.mxu0 0
    %5039 = vmatpush1.bf16.msra.mxu0 0
    %5040 = vmatprep.subr.bf16.mxu0 0
    %5041 = vmatpush1.bf16.msra.mxu0 0
    %5042 = vmatprep.subr.bf16.mxu0 0
    %5043 = vmatpush1.bf16.msra.mxu0 0
    %5044 = vmatprep.subr.bf16.mxu0 0
    %5045 = vmatpush1.bf16.msra.mxu0 0
    %5046 = vmatprep.subr.bf16.mxu0 0
    %5047 = vmatpush1.bf16.msra.mxu0 0
    %5048 = vmatprep.subr.bf16.mxu0 0
    %5049 = vmatpush1.bf16.msra.mxu0 0
    %5050 = vmatprep.subr.bf16.mxu0 0
    %5051 = vmatpush1.bf16.msra.mxu0 0
    %5052 = vmatprep.subr.bf16.mxu0 0
    %5053 = vmatpush1.bf16.msra.mxu0 0
    %5054 = vmatprep.subr.bf16.mxu0 0
    %5055 = vmatpush1.bf16.msra.mxu0 0
    %5056 = vmatprep.mubr.bf16.mxu0 0
    %5057 = vmatmul.mubr.bf16.gmra.mrb[0].mxu0 %v5019
    %v5058 = vpop.f32.mrb[0].mxu0
    %v5059 = vadd.f32 0.0, %v5058
    %v5060 = vpop.f32.mrb[0].mxu0
    %v5061 = vpop.f32.mrb[0].mxu0
    %v5062 = vpop.f32.mrb[0].mxu0
    %5063 = vdwg.mxu0
    %v5065 = vunpack.c.l.b16 %v4734
    %v5066 = vpack.c.b16 %v5065, %v5065
    %5067 = vrot.lane.b32.xlu0 %v5066, 64
    %v5068 = vpop.permute.xlu0 %5067
    %v5070 = vsel %vm2595, %v5010, 0
    %v5073 = vsel %vm2647, %v5068, 0
    %5075 = vmatprep.subr.bf16.mxu0 0
    %5076 = vmatpush1.bf16.msra.mxu0 %v5073
    %5077 = vmatprep.subr.bf16.mxu0 0
    %5078 = vmatpush1.bf16.msra.mxu0 0
    %5079 = vmatprep.subr.bf16.mxu0 0
    %5080 = vmatpush1.bf16.msra.mxu0 0
    %5081 = vmatprep.subr.bf16.mxu0 0
    %5082 = vmatpush1.bf16.msra.mxu0 0
    %5083 = vmatprep.subr.bf16.mxu0 0
    %5084 = vmatpush1.bf16.msra.mxu0 0
    %5085 = vmatprep.subr.bf16.mxu0 0
    %5086 = vmatpush1.bf16.msra.mxu0 0
    %5087 = vmatprep.subr.bf16.mxu0 0
    %5088 = vmatpush1.bf16.msra.mxu0 0
    %5089 = vmatprep.subr.bf16.mxu0 0
    %5090 = vmatpush1.bf16.msra.mxu0 0
    %5091 = vmatprep.subr.bf16.mxu0 0
    %5092 = vmatpush1.bf16.msra.mxu0 0
    %5093 = vmatprep.subr.bf16.mxu0 0
    %5094 = vmatpush1.bf16.msra.mxu0 0
    %5095 = vmatprep.subr.bf16.mxu0 0
    %5096 = vmatpush1.bf16.msra.mxu0 0
    %5097 = vmatprep.subr.bf16.mxu0 0
    %5098 = vmatpush1.bf16.msra.mxu0 0
    %5099 = vmatprep.subr.bf16.mxu0 0
    %5100 = vmatpush1.bf16.msra.mxu0 0
    %5101 = vmatprep.subr.bf16.mxu0 0
    %5102 = vmatpush1.bf16.msra.mxu0 0
    %5103 = vmatprep.subr.bf16.mxu0 0
    %5104 = vmatpush1.bf16.msra.mxu0 0
    %5105 = vmatprep.subr.bf16.mxu0 0
    %5106 = vmatpush1.bf16.msra.mxu0 0
    %5107 = vmatprep.mubr.bf16.mxu0 0
    %5108 = vmatmul.mubr.bf16.gmra.mrb[0].mxu0 %v5070
    %v5109 = vpop.f32.mrb[0].mxu0
    %v5110 = vadd.f32 0.0, %v5109
    %v5111 = vpop.f32.mrb[0].mxu0
    %v5112 = vpop.f32.mrb[0].mxu0
    %v5113 = vpop.f32.mrb[0].mxu0
    %5114 = vdwg.mxu0
    %v5116 = vunpack.c.l.b16 %v4735
    %v5117 = vpack.c.b16 %v5116, %v5116
    %5118 = vrot.lane.b32.xlu0 %v5117, 64
    %v5119 = vpop.permute.xlu0 %5118
    %v5121 = vsel %vm2595, %v5011, 0
    %v5124 = vsel %vm2647, %v5119, 0
    %5126 = vmatprep.subr.bf16.mxu0 0
    %5127 = vmatpush1.bf16.msra.mxu0 %v5124
    %5128 = vmatprep.subr.bf16.mxu0 0
    %5129 = vmatpush1.bf16.msra.mxu0 0
    %5130 = vmatprep.subr.bf16.mxu0 0
    %5131 = vmatpush1.bf16.msra.mxu0 0
    %5132 = vmatprep.subr.bf16.mxu0 0
    %5133 = vmatpush1.bf16.msra.mxu0 0
    %5134 = vmatprep.subr.bf16.mxu0 0
    %5135 = vmatpush1.bf16.msra.mxu0 0
    %5136 = vmatprep.subr.bf16.mxu0 0
    %5137 = vmatpush1.bf16.msra.mxu0 0
    %5138 = vmatprep.subr.bf16.mxu0 0
    %5139 = vmatpush1.bf16.msra.mxu0 0
    %5140 = vmatprep.subr.bf16.mxu0 0
    %5141 = vmatpush1.bf16.msra.mxu0 0
    %5142 = vmatprep.subr.bf16.mxu0 0
    %5143 = vmatpush1.bf16.msra.mxu0 0
    %5144 = vmatprep.subr.bf16.mxu0 0
    %5145 = vmatpush1.bf16.msra.mxu0 0
    %5146 = vmatprep.subr.bf16.mxu0 0
    %5147 = vmatpush1.bf16.msra.mxu0 0
    %5148 = vmatprep.subr.bf16.mxu0 0
    %5149 = vmatpush1.bf16.msra.mxu0 0
    %5150 = vmatprep.subr.bf16.mxu0 0
    %5151 = vmatpush1.bf16.msra.mxu0 0
    %5152 = vmatprep.subr.bf16.mxu0 0
    %5153 = vmatpush1.bf16.msra.mxu0 0
    %5154 = vmatprep.subr.bf16.mxu0 0
    %5155 = vmatpush1.bf16.msra.mxu0 0
    %5156 = vmatprep.subr.bf16.mxu0 0
    %5157 = vmatpush1.bf16.msra.mxu0 0
    %5158 = vmatprep.mubr.bf16.mxu0 0
    %5159 = vmatmul.mubr.bf16.gmra.mrb[0].mxu0 %v5121
    %v5160 = vpop.f32.mrb[0].mxu0
    %v5161 = vadd.f32 0.0, %v5160
    %v5162 = vpop.f32.mrb[0].mxu0
    %v5163 = vpop.f32.mrb[0].mxu0
    %v5164 = vpop.f32.mrb[0].mxu0
    %5165 = vdwg.mxu0
    %v5167 = vunpack.c.l.b16 %v4736
    %v5168 = vpack.c.b16 %v5167, %v5167
    %5169 = vrot.lane.b32.xlu0 %v5168, 64
    %v5170 = vpop.permute.xlu0 %5169
    %v5172 = vsel %vm2595, %v5012, 0
    %v5175 = vsel %vm2647, %v5170, 0
    %5177 = vmatprep.subr.bf16.mxu0 0
    %5178 = vmatpush1.bf16.msra.mxu0 %v5175
    %5179 = vmatprep.subr.bf16.mxu0 0
    %5180 = vmatpush1.bf16.msra.mxu0 0
    %5181 = vmatprep.subr.bf16.mxu0 0
    %5182 = vmatpush1.bf16.msra.mxu0 0
    %5183 = vmatprep.subr.bf16.mxu0 0
    %5184 = vmatpush1.bf16.msra.mxu0 0
    %5185 = vmatprep.subr.bf16.mxu0 0
    %5186 = vmatpush1.bf16.msra.mxu0 0
    %5187 = vmatprep.subr.bf16.mxu0 0
    %5188 = vmatpush1.bf16.msra.mxu0 0
    %5189 = vmatprep.subr.bf16.mxu0 0
    %5190 = vmatpush1.bf16.msra.mxu0 0
    %5191 = vmatprep.subr.bf16.mxu0 0
    %5192 = vmatpush1.bf16.msra.mxu0 0
    %5193 = vmatprep.subr.bf16.mxu0 0
    %5194 = vmatpush1.bf16.msra.mxu0 0
    %5195 = vmatprep.subr.bf16.mxu0 0
    %5196 = vmatpush1.bf16.msra.mxu0 0
    %5197 = vmatprep.subr.bf16.mxu0 0
    %5198 = vmatpush1.bf16.msra.mxu0 0
    %5199 = vmatprep.subr.bf16.mxu0 0
    %5200 = vmatpush1.bf16.msra.mxu0 0
    %5201 = vmatprep.subr.bf16.mxu0 0
    %5202 = vmatpush1.bf16.msra.mxu0 0
    %5203 = vmatprep.subr.bf16.mxu0 0
    %5204 = vmatpush1.bf16.msra.mxu0 0
    %5205 = vmatprep.subr.bf16.mxu0 0
    %5206 = vmatpush1.bf16.msra.mxu0 0
    %5207 = vmatprep.subr.bf16.mxu0 0
    %5208 = vmatpush1.bf16.msra.mxu0 0
    %5209 = vmatprep.mubr.bf16.mxu0 0
    %5210 = vmatmul.mubr.bf16.gmra.mrb[0].mxu0 %v5172
    %v5211 = vpop.f32.mrb[0].mxu0
    %v5212 = vadd.f32 0.0, %v5211
    %v5213 = vpop.f32.mrb[0].mxu0
    %v5214 = vpop.f32.mrb[0].mxu0
    %v5215 = vpop.f32.mrb[0].mxu0
    %5216 = vdwg.mxu0
    %5221 = vrot.lane.b32.xlu0 %v5059, 64
    %v5222 = vpop.permute.xlu0 %5221
    %5223 = vrot.lane.b32.xlu0 %v5110, 64
    %v5224 = vpop.permute.xlu0 %5223
    %5225 = vrot.lane.b32.xlu0 %v5161, 64
    %v5226 = vpop.permute.xlu0 %5225
    %5227 = vrot.lane.b32.xlu0 %v5212, 64
    %v5228 = vpop.permute.xlu0 %5227
    %v5233 = vsel %vm2404, %v4582, %v5222
    %v5234 = vsel %vm2404, %v4628, %v5224
    %v5235 = vsel %vm2404, %v4674, %v5226
    %v5236 = vsel %vm2404, %v4720, %v5228
    %5237 = vst [vmem:[#allocation3 + $0x10] sm:$0xff] %v5233
    %5238 = vst [vmem:[#allocation3 + $0x28] sm:$0xff] %v5234
    %5239 = vst [vmem:[#allocation3 + $0x40] sm:$0xff] %v5235
    %5240 = vst [vmem:[#allocation3 + $0x58] sm:$0xff] %v5236
    %v5241 = vld [vmem:[#allocation3] sm:$0xff]
    %v5242 = vld [vmem:[#allocation3 + $0x8] sm:$0xff]
    %v5243 = vld [vmem:[#allocation3 + $0x10] sm:$0xff]
    %v5244 = vld [vmem:[#allocation3 + $0x18] sm:$0xff]
    %v5245 = vld [vmem:[#allocation3 + $0x20] sm:$0xff]
    %v5246 = vld [vmem:[#allocation3 + $0x28] sm:$0xff]
    %v5247 = vld [vmem:[#allocation3 + $0x30] sm:$0xff]
    %v5248 = vld [vmem:[#allocation3 + $0x38] sm:$0xff]
    %v5249 = vld [vmem:[#allocation3 + $0x40] sm:$0xff]
    %v5250 = vld [vmem:[#allocation3 + $0x48] sm:$0xff]
    %v5251 = vld [vmem:[#allocation3 + $0x50] sm:$0xff]
    %v5252 = vld [vmem:[#allocation3 + $0x58] sm:$0xff]
    %v5253 = vpack.c.bf16 %v5244, %v5241
    %v5254 = vpack.c.bf16 %v5245, %v5242
    %v5255 = vpack.c.bf16 %v5246, %v5243
    %v5256 = vpack.c.bf16 %v5250, %v5247
    %v5257 = vpack.c.bf16 %v5251, %v5248
    %v5258 = vpack.c.bf16 %v5252, %v5249
    %v5259 = vld [vmem:[#allocation9] sm:$0xff]
    %v5260 = vld [vmem:[#allocation9 + $0x8] sm:$0xf]
    %v5261 = vld [vmem:[#allocation9 + $0xc] sm:$0xff]
    %v5262 = vld [vmem:[#allocation9 + $0x14] sm:$0xf]
    %v5263 = vld [vmem:[#allocation9 + $0x18] sm:$0xff]
    %v5264 = vld [vmem:[#allocation9 + $0x20] sm:$0xf]
    %v5265 = vld [vmem:[#allocation9 + $0x24] sm:$0xff]
    %v5266 = vld [vmem:[#allocation9 + $0x2c] sm:$0xf]
    %v5267 = vld [vmem:[#allocation9 + $0x30] sm:$0xff]
    %v5268 = vld [vmem:[#allocation9 + $0x38] sm:$0xf]
    %v5269 = vld [vmem:[#allocation9 + $0x3c] sm:$0xff]
    %v5270 = vld [vmem:[#allocation9 + $0x44] sm:$0xf]
    %v5271 = vld [vmem:[#allocation9 + $0x48] sm:$0xff]
    %v5272 = vld [vmem:[#allocation9 + $0x50] sm:$0xf]
    %v5273 = vld [vmem:[#allocation9 + $0x54] sm:$0xff]
    %v5274 = vld [vmem:[#allocation9 + $0x5c] sm:$0xf]
    %v5275 = vld [vmem:[#allocation9 + $0x60] sm:$0xff]
    %v5276 = vld [vmem:[#allocation9 + $0x68] sm:$0xf]
    %v5277 = vld [vmem:[#allocation9 + $0x6c] sm:$0xff]
    %v5278 = vld [vmem:[#allocation9 + $0x74] sm:$0xf]
    %v5279 = vld [vmem:[#allocation9 + $0x78] sm:$0xff]
    %v5280 = vld [vmem:[#allocation9 + $0x80] sm:$0xf]
    %v5281 = vld [vmem:[#allocation9 + $0x84] sm:$0xff]
    %v5282 = vld [vmem:[#allocation9 + $0x8c] sm:$0xf]
    %v5283 = vld [vmem:[#allocation9 + $0x90] sm:$0xff]
    %v5284 = vld [vmem:[#allocation9 + $0x98] sm:$0xf]
    %v5285 = vld [vmem:[#allocation9 + $0x9c] sm:$0xff]
    %v5286 = vld [vmem:[#allocation9 + $0xa4] sm:$0xf]
    %v5287 = vld [vmem:[#allocation9 + $0xa8] sm:$0xff]
    %v5288 = vld [vmem:[#allocation9 + $0xb0] sm:$0xf]
    %v5289 = vld [vmem:[#allocation9 + $0xb4] sm:$0xff]
    %v5290 = vld [vmem:[#allocation9 + $0xbc] sm:$0xf]
    %v5291 = vld [vmem:[#allocation9 + $0xc0] sm:$0xff]
    %v5292 = vld [vmem:[#allocation9 + $0xc8] sm:$0xf]
    %v5293 = vld [vmem:[#allocation9 + $0xcc] sm:$0xff]
    %v5294 = vld [vmem:[#allocation9 + $0xd4] sm:$0xf]
    %v5295 = vld [vmem:[#allocation9 + $0xd8] sm:$0xff]
    %v5296 = vld [vmem:[#allocation9 + $0xe0] sm:$0xf]
    %v5297 = vld [vmem:[#allocation9 + $0xe4] sm:$0xff]
    %v5298 = vld [vmem:[#allocation9 + $0xec] sm:$0xf]
    %v5299 = vld [vmem:[#allocation9 + $0xf0] sm:$0xff]
    %v5300 = vld [vmem:[#allocation9 + $0xf8] sm:$0xf]
    %v5301 = vld [vmem:[#allocation9 + $0xfc] sm:$0xff]
    %v5302 = vld [vmem:[#allocation9 + $0x104] sm:$0xf]
    %v5303 = vld [vmem:[#allocation9 + $0x108] sm:$0xff]
    %v5304 = vld [vmem:[#allocation9 + $0x110] sm:$0xf]
    %v5305 = vld [vmem:[#allocation9 + $0x114] sm:$0xff]
    %v5306 = vld [vmem:[#allocation9 + $0x11c] sm:$0xf]
    %v5307 = vld [vmem:[#allocation9 + $0x120] sm:$0xff]
    %v5308 = vld [vmem:[#allocation9 + $0x128] sm:$0xf]
    %v5309 = vld [vmem:[#allocation9 + $0x12c] sm:$0xff]
    %v5310 = vld [vmem:[#allocation9 + $0x134] sm:$0xf]
    %v5311 = vld [vmem:[#allocation9 + $0x138] sm:$0xff]
    %v5312 = vld [vmem:[#allocation9 + $0x140] sm:$0xf]
    %v5313 = vld [vmem:[#allocation9 + $0x144] sm:$0xff]
    %v5314 = vld [vmem:[#allocation9 + $0x14c] sm:$0xf]
    %v5315 = vld [vmem:[#allocation9 + $0x150] sm:$0xff]
    %v5316 = vld [vmem:[#allocation9 + $0x158] sm:$0xf]
    %v5317 = vld [vmem:[#allocation9 + $0x15c] sm:$0xff]
    %v5318 = vld [vmem:[#allocation9 + $0x164] sm:$0xf]
    %v5319 = vld [vmem:[#allocation9 + $0x168] sm:$0xff]
    %v5320 = vld [vmem:[#allocation9 + $0x170] sm:$0xf]
    %v5321 = vld [vmem:[#allocation9 + $0x174] sm:$0xff]
    %v5322 = vld [vmem:[#allocation9 + $0x17c] sm:$0xf]
    %v5323 = vld [vmem:[#allocation9 + $0x180] sm:$0xff]
    %v5324 = vld [vmem:[#allocation9 + $0x188] sm:$0xf]
    %v5325 = vld [vmem:[#allocation9 + $0x18c] sm:$0xff]
    %v5326 = vld [vmem:[#allocation9 + $0x194] sm:$0xf]
    %v5327 = vld [vmem:[#allocation9 + $0x198] sm:$0xff]
    %v5328 = vld [vmem:[#allocation9 + $0x1a0] sm:$0xf]
    %v5329 = vld [vmem:[#allocation9 + $0x1a4] sm:$0xff]
    %v5330 = vld [vmem:[#allocation9 + $0x1ac] sm:$0xf]
    %v5331 = vld [vmem:[#allocation9 + $0x1b0] sm:$0xff]
    %v5332 = vld [vmem:[#allocation9 + $0x1b8] sm:$0xf]
    %v5333 = vld [vmem:[#allocation9 + $0x1bc] sm:$0xff]
    %v5334 = vld [vmem:[#allocation9 + $0x1c4] sm:$0xf]
    %v5335 = vld [vmem:[#allocation9 + $0x1c8] sm:$0xff]
    %v5336 = vld [vmem:[#allocation9 + $0x1d0] sm:$0xf]
    %v5337 = vld [vmem:[#allocation9 + $0x1d4] sm:$0xff]
    %v5338 = vld [vmem:[#allocation9 + $0x1dc] sm:$0xf]
    %v5339 = vld [vmem:[#allocation9 + $0x1e0] sm:$0xff]
    %v5340 = vld [vmem:[#allocation9 + $0x1e8] sm:$0xf]
    %v5341 = vld [vmem:[#allocation9 + $0x1ec] sm:$0xff]
    %v5342 = vld [vmem:[#allocation9 + $0x1f4] sm:$0xf]
    %v5343 = vld [vmem:[#allocation9 + $0x1f8] sm:$0xff]
    %v5344 = vld [vmem:[#allocation9 + $0x200] sm:$0xf]
    %v5345 = vld [vmem:[#allocation9 + $0x204] sm:$0xff]
    %v5346 = vld [vmem:[#allocation9 + $0x20c] sm:$0xf]
    %v5347 = vld [vmem:[#allocation9 + $0x210] sm:$0xff]
    %v5348 = vld [vmem:[#allocation9 + $0x218] sm:$0xf]
    %v5349 = vld [vmem:[#allocation9 + $0x21c] sm:$0xff]
    %v5350 = vld [vmem:[#allocation9 + $0x224] sm:$0xf]
    %v5351 = vld [vmem:[#allocation9 + $0x228] sm:$0xff]
    %v5352 = vld [vmem:[#allocation9 + $0x230] sm:$0xf]
    %v5353 = vld [vmem:[#allocation9 + $0x234] sm:$0xff]
    %v5354 = vld [vmem:[#allocation9 + $0x23c] sm:$0xf]
    %v5355 = vld [vmem:[#allocation10] sm:$0x7]
    %v5357 = vlaneseq
    %v5358 = vshrl.u32 %v5357, 7
    %v5359 = vsub.s32 0, %v5358
    %v5360 = vrot.slane %v5355, %v5359
    %v5361 = vlaneseq
    %v5362 = vshrl.u32 %v5361, 7
    %v5363 = vsub.s32 1, %v5362
    %v5364 = vrot.slane %v5355, %v5363
    %v5365 = vlaneseq
    %v5366 = vshrl.u32 %v5365, 7
    %v5367 = vsub.s32 2, %v5366
    %v5368 = vrot.slane %v5355, %v5367
    %v5468 = vunpack.c.l.b16 %v5259
    %v5469 = vunpack.c.h.b16 %v5259
    %v5470 = vunpack.c.l.b16 %v5260
    %v5471 = vunpack.c.l.b16 %v5261
    %v5472 = vunpack.c.h.b16 %v5261
    %v5473 = vunpack.c.l.b16 %v5262
    %v5474 = vunpack.c.l.b16 %v5263
    %v5475 = vunpack.c.h.b16 %v5263
    %v5476 = vunpack.c.l.b16 %v5264
    %v5477 = vunpack.c.l.b16 %v5265
    %v5478 = vunpack.c.h.b16 %v5265
    %v5479 = vunpack.c.l.b16 %v5266
    %v5480 = vunpack.c.l.b16 %v5267
    %v5481 = vunpack.c.h.b16 %v5267
    %v5482 = vunpack.c.l.b16 %v5268
    %v5483 = vunpack.c.l.b16 %v5269
    %v5484 = vunpack.c.h.b16 %v5269
    %v5485 = vunpack.c.l.b16 %v5270
    %v5486 = vunpack.c.l.b16 %v5271
    %v5487 = vunpack.c.h.b16 %v5271
    %v5488 = vunpack.c.l.b16 %v5272
    %v5489 = vunpack.c.l.b16 %v5273
    %v5490 = vunpack.c.h.b16 %v5273
    %v5491 = vunpack.c.l.b16 %v5274
    %v5492 = vunpack.c.l.b16 %v5275
    %v5493 = vunpack.c.h.b16 %v5275
    %v5494 = vunpack.c.l.b16 %v5276
    %v5495 = vunpack.c.l.b16 %v5277
    %v5496 = vunpack.c.h.b16 %v5277
    %v5497 = vunpack.c.l.b16 %v5278
    %v5498 = vunpack.c.l.b16 %v5279
    %v5499 = vunpack.c.h.b16 %v5279
    %v5500 = vunpack.c.l.b16 %v5280
    %v5501 = vunpack.c.l.b16 %v5281
    %v5502 = vunpack.c.h.b16 %v5281
    %v5503 = vunpack.c.l.b16 %v5282
    %v5504 = vunpack.c.l.b16 %v5283
    %v5505 = vunpack.c.h.b16 %v5283
    %v5506 = vunpack.c.l.b16 %v5284
    %v5507 = vunpack.c.l.b16 %v5285
    %v5508 = vunpack.c.h.b16 %v5285
    %v5509 = vunpack.c.l.b16 %v5286
    %v5510 = vunpack.c.l.b16 %v5287
    %v5511 = vunpack.c.h.b16 %v5287
    %v5512 = vunpack.c.l.b16 %v5288
    %v5513 = vunpack.c.l.b16 %v5289
    %v5514 = vunpack.c.h.b16 %v5289
    %v5515 = vunpack.c.l.b16 %v5290
    %v5516 = vunpack.c.l.b16 %v5291
    %v5517 = vunpack.c.h.b16 %v5291
    %v5518 = vunpack.c.l.b16 %v5292
    %v5519 = vunpack.c.l.b16 %v5293
    %v5520 = vunpack.c.h.b16 %v5293
    %v5521 = vunpack.c.l.b16 %v5294
    %v5522 = vunpack.c.l.b16 %v5295
    %v5523 = vunpack.c.h.b16 %v5295
    %v5524 = vunpack.c.l.b16 %v5296
    %v5525 = vunpack.c.l.b16 %v5297
    %v5526 = vunpack.c.h.b16 %v5297
    %v5527 = vunpack.c.l.b16 %v5298
    %v5528 = vunpack.c.l.b16 %v5299
    %v5529 = vunpack.c.h.b16 %v5299
    %v5530 = vunpack.c.l.b16 %v5300
    %v5531 = vunpack.c.l.b16 %v5301
    %v5532 = vunpack.c.h.b16 %v5301
    %v5533 = vunpack.c.l.b16 %v5302
    %v5534 = vunpack.c.l.b16 %v5303
    %v5535 = vunpack.c.h.b16 %v5303
    %v5536 = vunpack.c.l.b16 %v5304
    %v5537 = vunpack.c.l.b16 %v5305
    %v5538 = vunpack.c.h.b16 %v5305
    %v5539 = vunpack.c.l.b16 %v5306
    %v5540 = vunpack.c.l.b16 %v5307
    %v5541 = vunpack.c.h.b16 %v5307
    %v5542 = vunpack.c.l.b16 %v5308
    %v5543 = vunpack.c.l.b16 %v5309
    %v5544 = vunpack.c.h.b16 %v5309
    %v5545 = vunpack.c.l.b16 %v5310
    %v5546 = vunpack.c.l.b16 %v5311
    %v5547 = vunpack.c.h.b16 %v5311
    %v5548 = vunpack.c.l.b16 %v5312
    %v5549 = vunpack.c.l.b16 %v5313
    %v5550 = vunpack.c.h.b16 %v5313
    %v5551 = vunpack.c.l.b16 %v5314
    %v5552 = vunpack.c.l.b16 %v5315
    %v5553 = vunpack.c.h.b16 %v5315
    %v5554 = vunpack.c.l.b16 %v5316
    %v5555 = vunpack.c.l.b16 %v5317
    %v5556 = vunpack.c.h.b16 %v5317
    %v5557 = vunpack.c.l.b16 %v5318
    %v5558 = vunpack.c.l.b16 %v5319
    %v5559 = vunpack.c.h.b16 %v5319
    %v5560 = vunpack.c.l.b16 %v5320
    %v5561 = vunpack.c.l.b16 %v5321
    %v5562 = vunpack.c.h.b16 %v5321
    %v5563 = vunpack.c.l.b16 %v5322
    %v5564 = vunpack.c.l.b16 %v5323
    %v5565 = vunpack.c.h.b16 %v5323
    %v5566 = vunpack.c.l.b16 %v5324
    %v5567 = vunpack.c.l.b16 %v5325
    %v5568 = vunpack.c.h.b16 %v5325
    %v5569 = vunpack.c.l.b16 %v5326
    %v5570 = vunpack.c.l.b16 %v5327
    %v5571 = vunpack.c.h.b16 %v5327
    %v5572 = vunpack.c.l.b16 %v5328
    %v5573 = vunpack.c.l.b16 %v5329
    %v5574 = vunpack.c.h.b16 %v5329
    %v5575 = vunpack.c.l.b16 %v5330
    %v5576 = vunpack.c.l.b16 %v5331
    %v5577 = vunpack.c.h.b16 %v5331
    %v5578 = vunpack.c.l.b16 %v5332
    %v5579 = vunpack.c.l.b16 %v5333
    %v5580 = vunpack.c.h.b16 %v5333
    %v5581 = vunpack.c.l.b16 %v5334
    %v5582 = vunpack.c.l.b16 %v5335
    %v5583 = vunpack.c.h.b16 %v5335
    %v5584 = vunpack.c.l.b16 %v5336
    %v5585 = vunpack.c.l.b16 %v5337
    %v5586 = vunpack.c.h.b16 %v5337
    %v5587 = vunpack.c.l.b16 %v5338
    %v5588 = vunpack.c.l.b16 %v5339
    %v5589 = vunpack.c.h.b16 %v5339
    %v5590 = vunpack.c.l.b16 %v5340
    %v5591 = vunpack.c.l.b16 %v5341
    %v5592 = vunpack.c.h.b16 %v5341
    %v5593 = vunpack.c.l.b16 %v5342
    %v5594 = vunpack.c.l.b16 %v5343
    %v5595 = vunpack.c.h.b16 %v5343
    %v5596 = vunpack.c.l.b16 %v5344
    %v5597 = vunpack.c.l.b16 %v5345
    %v5598 = vunpack.c.h.b16 %v5345
    %v5599 = vunpack.c.l.b16 %v5346
    %v5600 = vunpack.c.l.b16 %v5347
    %v5601 = vunpack.c.h.b16 %v5347
    %v5602 = vunpack.c.l.b16 %v5348
    %v5603 = vunpack.c.l.b16 %v5349
    %v5604 = vunpack.c.h.b16 %v5349
    %v5605 = vunpack.c.l.b16 %v5350
    %v5606 = vunpack.c.l.b16 %v5351
    %v5607 = vunpack.c.h.b16 %v5351
    %v5608 = vunpack.c.l.b16 %v5352
    %v5609 = vunpack.c.l.b16 %v5353
    %v5610 = vunpack.c.h.b16 %v5353
    %v5611 = vunpack.c.l.b16 %v5354
    %v5612 = vpack.c.b16 %v5471, %v5468
    %v5613 = vpack.c.b16 %v5472, %v5469
    %v5614 = vpack.c.b16 %v5473, %v5470
    %v5615 = vpack.c.b16 %v5477, %v5474
    %v5616 = vpack.c.b16 %v5478, %v5475
    %v5617 = vpack.c.b16 %v5479, %v5476
    %v5618 = vpack.c.b16 %v5483, %v5480
    %v5619 = vpack.c.b16 %v5484, %v5481
    %v5620 = vpack.c.b16 %v5485, %v5482
    %v5621 = vpack.c.b16 %v5489, %v5486
    %v5622 = vpack.c.b16 %v5490, %v5487
    %v5623 = vpack.c.b16 %v5491, %v5488
    %v5624 = vpack.c.b16 %v5495, %v5492
    %v5625 = vpack.c.b16 %v5496, %v5493
    %v5626 = vpack.c.b16 %v5497, %v5494
    %v5627 = vpack.c.b16 %v5501, %v5498
    %v5628 = vpack.c.b16 %v5502, %v5499
    %v5629 = vpack.c.b16 %v5503, %v5500
    %v5630 = vpack.c.b16 %v5507, %v5504
    %v5631 = vpack.c.b16 %v5508, %v5505
    %v5632 = vpack.c.b16 %v5509, %v5506
    %v5633 = vpack.c.b16 %v5513, %v5510
    %v5634 = vpack.c.b16 %v5514, %v5511
    %v5635 = vpack.c.b16 %v5515, %v5512
    %v5636 = vpack.c.b16 %v5519, %v5516
    %v5637 = vpack.c.b16 %v5520, %v5517
    %v5638 = vpack.c.b16 %v5521, %v5518
    %v5639 = vpack.c.b16 %v5525, %v5522
    %v5640 = vpack.c.b16 %v5526, %v5523
    %v5641 = vpack.c.b16 %v5527, %v5524
    %v5642 = vpack.c.b16 %v5531, %v5528
    %v5643 = vpack.c.b16 %v5532, %v5529
    %v5644 = vpack.c.b16 %v5533, %v5530
    %v5645 = vpack.c.b16 %v5537, %v5534
    %v5646 = vpack.c.b16 %v5538, %v5535
    %v5647 = vpack.c.b16 %v5539, %v5536
    %v5648 = vpack.c.b16 %v5543, %v5540
    %v5649 = vpack.c.b16 %v5544, %v5541
    %v5650 = vpack.c.b16 %v5545, %v5542
    %v5651 = vpack.c.b16 %v5549, %v5546
    %v5652 = vpack.c.b16 %v5550, %v5547
    %v5653 = vpack.c.b16 %v5551, %v5548
    %v5654 = vpack.c.b16 %v5555, %v5552
    %v5655 = vpack.c.b16 %v5556, %v5553
    %v5656 = vpack.c.b16 %v5557, %v5554
    %v5657 = vpack.c.b16 %v5561, %v5558
    %v5658 = vpack.c.b16 %v5562, %v5559
    %v5659 = vpack.c.b16 %v5563, %v5560
    %v5660 = vpack.c.b16 %v5567, %v5564
    %v5661 = vpack.c.b16 %v5568, %v5565
    %v5662 = vpack.c.b16 %v5569, %v5566
    %v5663 = vpack.c.b16 %v5573, %v5570
    %v5664 = vpack.c.b16 %v5574, %v5571
    %v5665 = vpack.c.b16 %v5575, %v5572
    %v5666 = vpack.c.b16 %v5579, %v5576
    %v5667 = vpack.c.b16 %v5580, %v5577
    %v5668 = vpack.c.b16 %v5581, %v5578
    %v5669 = vpack.c.b16 %v5585, %v5582
    %v5670 = vpack.c.b16 %v5586, %v5583
    %v5671 = vpack.c.b16 %v5587, %v5584
    %v5672 = vpack.c.b16 %v5591, %v5588
    %v5673 = vpack.c.b16 %v5592, %v5589
    %v5674 = vpack.c.b16 %v5593, %v5590
    %v5675 = vpack.c.b16 %v5597, %v5594
    %v5676 = vpack.c.b16 %v5598, %v5595
    %v5677 = vpack.c.b16 %v5599, %v5596
    %v5678 = vpack.c.b16 %v5603, %v5600
    %v5679 = vpack.c.b16 %v5604, %v5601
    %v5680 = vpack.c.b16 %v5605, %v5602
    %v5681 = vpack.c.b16 %v5609, %v5606
    %v5682 = vpack.c.b16 %v5610, %v5607
    %v5683 = vpack.c.b16 %v5611, %v5608
    %5756 = vmatprep.subr.bf16.mxu0 %v5613
    %5757 = vmatpush1.bf16.msra.mxu0 %v5612
    %5758 = vmatprep.subr.bf16.mxu0 %v5616
    %5759 = vmatpush1.bf16.msra.mxu0 %v5615
    %5760 = vmatprep.subr.bf16.mxu0 %v5619
    %5761 = vmatpush1.bf16.msra.mxu0 %v5618
    %5762 = vmatprep.subr.bf16.mxu0 %v5622
    %5763 = vmatpush1.bf16.msra.mxu0 %v5621
    %5764 = vmatprep.subr.bf16.mxu0 %v5625
    %5765 = vmatpush1.bf16.msra.mxu0 %v5624
    %5766 = vmatprep.subr.bf16.mxu0 %v5628
    %5767 = vmatpush1.bf16.msra.mxu0 %v5627
    %5768 = vmatprep.subr.bf16.mxu0 %v5631
    %5769 = vmatpush1.bf16.msra.mxu0 %v5630
    %5770 = vmatprep.subr.bf16.mxu0 %v5634
    %5771 = vmatpush1.bf16.msra.mxu0 %v5633
    %5772 = vmatprep.subr.bf16.mxu0 %v5637
    %5773 = vmatpush1.bf16.msra.mxu0 %v5636
    %5774 = vmatprep.subr.bf16.mxu0 %v5640
    %5775 = vmatpush1.bf16.msra.mxu0 %v5639
    %5776 = vmatprep.subr.bf16.mxu0 %v5643
    %5777 = vmatpush1.bf16.msra.mxu0 %v5642
    %5778 = vmatprep.subr.bf16.mxu0 %v5646
    %5779 = vmatpush1.bf16.msra.mxu0 %v5645
    %5780 = vmatprep.subr.bf16.mxu0 %v5649
    %5781 = vmatpush1.bf16.msra.mxu0 %v5648
    %5782 = vmatprep.subr.bf16.mxu0 %v5652
    %5783 = vmatpush1.bf16.msra.mxu0 %v5651
    %5784 = vmatprep.subr.bf16.mxu0 %v5655
    %5785 = vmatpush1.bf16.msra.mxu0 %v5654
    %5786 = vmatprep.subr.bf16.mxu0 %v5658
    %5787 = vmatpush1.bf16.msra.mxu0 %v5657
    %5788 = vmatprep.mubr.bf16.mxu0 %v5254
    %5789 = vmatmul.mubr.bf16.gmra.mrb[0].mxu0 %v5253
    %v5790 = vpop.f32.mrb[0].mxu0
    %v5791 = vadd.f32 %v5360, %v5790
    %v5792 = vpop.f32.mrb[0].mxu0
    %v5793 = vadd.f32 %v5364, %v5792
    %v5794 = vpop.f32.mrb[0].mxu0
    %v5795 = vadd.f32 %v5360, %v5794
    %v5796 = vpop.f32.mrb[0].mxu0
    %v5797 = vadd.f32 %v5364, %v5796
    %5798 = vmatprep.mubr.bf16.mxu0 %v5257
    %5799 = vmatmul.mubr.bf16.gmra.mrb[0].mxu0 %v5256
    %v5800 = vpop.f32.mrb[0].mxu0
    %v5801 = vadd.f32 %v5360, %v5800
    %v5802 = vpop.f32.mrb[0].mxu0
    %v5803 = vadd.f32 %v5364, %v5802
    %v5804 = vpop.f32.mrb[0].mxu0
    %v5805 = vadd.f32 %v5360, %v5804
    %v5806 = vpop.f32.mrb[0].mxu0
    %v5807 = vadd.f32 %v5364, %v5806
    %5808 = vdwg.mxu0
    %5809 = vmatprep.subr.bf16.mxu0 %v5661
    %5810 = vmatpush1.bf16.msra.mxu0 %v5660
    %5811 = vmatprep.subr.bf16.mxu0 %v5664
    %5812 = vmatpush1.bf16.msra.mxu0 %v5663
    %5813 = vmatprep.subr.bf16.mxu0 %v5667
    %5814 = vmatpush1.bf16.msra.mxu0 %v5666
    %5815 = vmatprep.subr.bf16.mxu0 %v5670
    %5816 = vmatpush1.bf16.msra.mxu0 %v5669
    %5817 = vmatprep.subr.bf16.mxu0 %v5673
    %5818 = vmatpush1.bf16.msra.mxu0 %v5672
    %5819 = vmatprep.subr.bf16.mxu0 %v5676
    %5820 = vmatpush1.bf16.msra.mxu0 %v5675
    %5821 = vmatprep.subr.bf16.mxu0 %v5679
    %5822 = vmatpush1.bf16.msra.mxu0 %v5678
    %5823 = vmatprep.subr.bf16.mxu0 %v5682
    %5824 = vmatpush1.bf16.msra.mxu0 %v5681
    %5825 = vmatprep.subr.bf16.mxu0 0
    %5826 = vmatpush1.bf16.msra.mxu0 0
    %5827 = vmatprep.subr.bf16.mxu0 0
    %5828 = vmatpush1.bf16.msra.mxu0 0
    %5829 = vmatprep.subr.bf16.mxu0 0
    %5830 = vmatpush1.bf16.msra.mxu0 0
    %5831 = vmatprep.subr.bf16.mxu0 0
    %5832 = vmatpush1.bf16.msra.mxu0 0
    %5833 = vmatprep.subr.bf16.mxu0 0
    %5834 = vmatpush1.bf16.msra.mxu0 0
    %5835 = vmatprep.subr.bf16.mxu0 0
    %5836 = vmatpush1.bf16.msra.mxu0 0
    %5837 = vmatprep.subr.bf16.mxu0 0
    %5838 = vmatpush1.bf16.msra.mxu0 0
    %5839 = vmatprep.subr.bf16.mxu0 0
    %5840 = vmatpush1.bf16.msra.mxu0 0
    %5841 = vmatprep.mubr.bf16.mxu0 0
    %5842 = vmatmul.mubr.bf16.gmra.mrb[0].mxu0 %v5255
    %v5843 = vpop.f32.mrb[0].mxu0
    %v5844 = vadd.f32 %v5791, %v5843
    %v5845 = vpop.f32.mrb[0].mxu0
    %v5846 = vadd.f32 %v5793, %v5845
    %v5847 = vpop.f32.mrb[0].mxu0
    %v5848 = vadd.f32 %v5795, %v5847
    %v5849 = vpop.f32.mrb[0].mxu0
    %v5850 = vadd.f32 %v5797, %v5849
    %5851 = vmatprep.mubr.bf16.mxu0 0
    %5852 = vmatmul.mubr.bf16.gmra.mrb[0].mxu0 %v5258
    %v5853 = vpop.f32.mrb[0].mxu0
    %v5854 = vadd.f32 %v5801, %v5853
    %v5855 = vpop.f32.mrb[0].mxu0
    %v5856 = vadd.f32 %v5803, %v5855
    %v5857 = vpop.f32.mrb[0].mxu0
    %v5858 = vadd.f32 %v5805, %v5857
    %v5859 = vpop.f32.mrb[0].mxu0
    %v5860 = vadd.f32 %v5807, %v5859
    %5861 = vdwg.mxu0
    %5862 = vmatprep.subr.bf16.mxu0 0
    %5863 = vmatpush1.bf16.msra.mxu0 %v5614
    %5864 = vmatprep.subr.bf16.mxu0 0
    %5865 = vmatpush1.bf16.msra.mxu0 %v5617
    %5866 = vmatprep.subr.bf16.mxu0 0
    %5867 = vmatpush1.bf16.msra.mxu0 %v5620
    %5868 = vmatprep.subr.bf16.mxu0 0
    %5869 = vmatpush1.bf16.msra.mxu0 %v5623
    %5870 = vmatprep.subr.bf16.mxu0 0
    %5871 = vmatpush1.bf16.msra.mxu0 %v5626
    %5872 = vmatprep.subr.bf16.mxu0 0
    %5873 = vmatpush1.bf16.msra.mxu0 %v5629
    %5874 = vmatprep.subr.bf16.mxu0 0
    %5875 = vmatpush1.bf16.msra.mxu0 %v5632
    %5876 = vmatprep.subr.bf16.mxu0 0
    %5877 = vmatpush1.bf16.msra.mxu0 %v5635
    %5878 = vmatprep.subr.bf16.mxu0 0
    %5879 = vmatpush1.bf16.msra.mxu0 %v5638
    %5880 = vmatprep.subr.bf16.mxu0 0
    %5881 = vmatpush1.bf16.msra.mxu0 %v5641
    %5882 = vmatprep.subr.bf16.mxu0 0
    %5883 = vmatpush1.bf16.msra.mxu0 %v5644
    %5884 = vmatprep.subr.bf16.mxu0 0
    %5885 = vmatpush1.bf16.msra.mxu0 %v5647
    %5886 = vmatprep.subr.bf16.mxu0 0
    %5887 = vmatpush1.bf16.msra.mxu0 %v5650
    %5888 = vmatprep.subr.bf16.mxu0 0
    %5889 = vmatpush1.bf16.msra.mxu0 %v5653
    %5890 = vmatprep.subr.bf16.mxu0 0
    %5891 = vmatpush1.bf16.msra.mxu0 %v5656
    %5892 = vmatprep.subr.bf16.mxu0 0
    %5893 = vmatpush1.bf16.msra.mxu0 %v5659
    %5894 = vmatprep.mubr.bf16.mxu0 %v5254
    %5895 = vmatmul.mubr.bf16.gmra.mrb[0].mxu0 %v5253
    %v5896 = vpop.f32.mrb[0].mxu0
    %v5897 = vadd.f32 %v5368, %v5896
    %v5898 = vpop.f32.mrb[0].mxu0
    %v5899 = vpop.f32.mrb[0].mxu0
    %v5900 = vadd.f32 %v5368, %v5899
    %v5901 = vpop.f32.mrb[0].mxu0
    %5902 = vmatprep.mubr.bf16.mxu0 %v5257
    %5903 = vmatmul.mubr.bf16.gmra.mrb[0].mxu0 %v5256
    %v5904 = vpop.f32.mrb[0].mxu0
    %v5905 = vadd.f32 %v5368, %v5904
    %v5906 = vpop.f32.mrb[0].mxu0
    %v5907 = vpop.f32.mrb[0].mxu0
    %v5908 = vadd.f32 %v5368, %v5907
    %v5909 = vpop.f32.mrb[0].mxu0
    %5910 = vdwg.mxu0
    %5911 = vmatprep.subr.bf16.mxu0 0
    %5912 = vmatpush1.bf16.msra.mxu0 %v5662
    %5913 = vmatprep.subr.bf16.mxu0 0
    %5914 = vmatpush1.bf16.msra.mxu0 %v5665
    %5915 = vmatprep.subr.bf16.mxu0 0
    %5916 = vmatpush1.bf16.msra.mxu0 %v5668
    %5917 = vmatprep.subr.bf16.mxu0 0
    %5918 = vmatpush1.bf16.msra.mxu0 %v5671
    %5919 = vmatprep.subr.bf16.mxu0 0
    %5920 = vmatpush1.bf16.msra.mxu0 %v5674
    %5921 = vmatprep.subr.bf16.mxu0 0
    %5922 = vmatpush1.bf16.msra.mxu0 %v5677
    %5923 = vmatprep.subr.bf16.mxu0 0
    %5924 = vmatpush1.bf16.msra.mxu0 %v5680
    %5925 = vmatprep.subr.bf16.mxu0 0
    %5926 = vmatpush1.bf16.msra.mxu0 %v5683
    %5927 = vmatprep.subr.bf16.mxu0 0
    %5928 = vmatpush1.bf16.msra.mxu0 0
    %5929 = vmatprep.subr.bf16.mxu0 0
    %5930 = vmatpush1.bf16.msra.mxu0 0
    %5931 = vmatprep.subr.bf16.mxu0 0
    %5932 = vmatpush1.bf16.msra.mxu0 0
    %5933 = vmatprep.subr.bf16.mxu0 0
    %5934 = vmatpush1.bf16.msra.mxu0 0
    %5935 = vmatprep.subr.bf16.mxu0 0
    %5936 = vmatpush1.bf16.msra.mxu0 0
    %5937 = vmatprep.subr.bf16.mxu0 0
    %5938 = vmatpush1.bf16.msra.mxu0 0
    %5939 = vmatprep.subr.bf16.mxu0 0
    %5940 = vmatpush1.bf16.msra.mxu0 0
    %5941 = vmatprep.subr.bf16.mxu0 0
    %5942 = vmatpush1.bf16.msra.mxu0 0
    %5943 = vmatprep.mubr.bf16.mxu0 0
    %5944 = vmatmul.mubr.bf16.gmra.mrb[0].mxu0 %v5255
    %v5945 = vpop.f32.mrb[0].mxu0
    %v5946 = vadd.f32 %v5897, %v5945
    %v5947 = vpop.f32.mrb[0].mxu0
    %v5948 = vpop.f32.mrb[0].mxu0
    %v5949 = vadd.f32 %v5900, %v5948
    %v5950 = vpop.f32.mrb[0].mxu0
    %5951 = vmatprep.mubr.bf16.mxu0 0
    %5952 = vmatmul.mubr.bf16.gmra.mrb[0].mxu0 %v5258
    %v5953 = vpop.f32.mrb[0].mxu0
    %v5954 = vadd.f32 %v5905, %v5953
    %v5955 = vpop.f32.mrb[0].mxu0
    %v5956 = vpop.f32.mrb[0].mxu0
    %v5957 = vadd.f32 %v5908, %v5956
    %v5958 = vpop.f32.mrb[0].mxu0
    %5959 = vdwg.mxu0
    %v5960 = vadd.f32 %v192, %v5844
    %v5961 = vadd.f32 %v193, %v5846
    %v5962 = vadd.f32 %v194, %v5946
    %v5963 = vadd.f32 %v195, %v5848
    %v5964 = vadd.f32 %v196, %v5850
    %v5965 = vadd.f32 %v197, %v5949
    %v5966 = vadd.f32 %v198, %v5854
    %v5967 = vadd.f32 %v199, %v5856
    %v5968 = vadd.f32 %v200, %v5954
    %v5969 = vadd.f32 %v201, %v5858
    %v5970 = vadd.f32 %v202, %v5860
    %v5971 = vadd.f32 %v203, %v5957
    %v5972 = vld [vmem:[#allocation15] sm:$0x7]
    %v5973 = vld [vmem:[#allocation16] sm:$0x7]
    %v5974 = vadd.f32 %v5960, %v5961
    %v5975 = vadd.f32 %v5974, %v5962
    %5976 = vadd.xlane.f32.xlu0 %v5975
    %v5977 = vpop.xlane.xlu0 %5976
    %v5978 = vadd.f32 %v5963, %v5964
    %v5979 = vadd.f32 %v5978, %v5965
    %5980 = vadd.xlane.f32.xlu0 %v5979
    %v5981 = vpop.xlane.xlu0 %5980
    %v5982 = vadd.f32 %v5966, %v5967
    %v5983 = vadd.f32 %v5982, %v5968
    %5984 = vadd.xlane.f32.xlu0 %v5983
    %v5985 = vpop.xlane.xlu0 %5984
    %v5986 = vadd.f32 %v5969, %v5970
    %v5987 = vadd.f32 %v5986, %v5971
    %5988 = vadd.xlane.f32.xlu0 %v5987
    %v5989 = vpop.xlane.xlu0 %5988
    %v5990 = vmul.f32 %v5977, %v222
    %v5991 = vmul.f32 %v5981, %v222
    %v5992 = vmul.f32 %v5985, %v222
    %v5993 = vmul.f32 %v5989, %v222
    %v5994 = vsub.f32 %v5960, %v5990
    %v5995 = vsub.f32 %v5961, %v5990
    %v5996 = vsub.f32 %v5962, %v5990
    %v5997 = vsub.f32 %v5963, %v5991
    %v5998 = vsub.f32 %v5964, %v5991
    %v5999 = vsub.f32 %v5965, %v5991
    %v6000 = vsub.f32 %v5966, %v5992
    %v6001 = vsub.f32 %v5967, %v5992
    %v6002 = vsub.f32 %v5968, %v5992
    %v6003 = vsub.f32 %v5969, %v5993
    %v6004 = vsub.f32 %v5970, %v5993
    %v6005 = vsub.f32 %v5971, %v5993
    %v6006 = vmul.f32 %v5994, %v5994
    %v6007 = vmul.f32 %v5995, %v5995
    %v6008 = vmul.f32 %v5996, %v5996
    %v6009 = vmul.f32 %v5997, %v5997
    %v6010 = vmul.f32 %v5998, %v5998
    %v6011 = vmul.f32 %v5999, %v5999
    %v6012 = vmul.f32 %v6000, %v6000
    %v6013 = vmul.f32 %v6001, %v6001
    %v6014 = vmul.f32 %v6002, %v6002
    %v6015 = vmul.f32 %v6003, %v6003
    %v6016 = vmul.f32 %v6004, %v6004
    %v6017 = vmul.f32 %v6005, %v6005
    %v6018 = vadd.f32 %v6006, %v6007
    %v6019 = vadd.f32 %v6018, %v6008
    %6020 = vadd.xlane.f32.xlu0 %v6019
    %v6021 = vpop.xlane.xlu0 %6020
    %v6022 = vadd.f32 %v6009, %v6010
    %v6023 = vadd.f32 %v6022, %v6011
    %6024 = vadd.xlane.f32.xlu0 %v6023
    %v6025 = vpop.xlane.xlu0 %6024
    %v6026 = vadd.f32 %v6012, %v6013
    %v6027 = vadd.f32 %v6026, %v6014
    %6028 = vadd.xlane.f32.xlu0 %v6027
    %v6029 = vpop.xlane.xlu0 %6028
    %v6030 = vadd.f32 %v6015, %v6016
    %v6031 = vadd.f32 %v6030, %v6017
    %6032 = vadd.xlane.f32.xlu0 %v6031
    %v6033 = vpop.xlane.xlu0 %6032
    %v6034 = vmul.f32 %v6021, %v222
    %v6035 = vmul.f32 %v6025, %v222
    %v6036 = vmul.f32 %v6029, %v222
    %v6037 = vmul.f32 %v6033, %v222
    %v6038 = vadd.f32 %v6034, 1e-05
    %v6039 = vadd.f32 %v6035, 1e-05
    %v6040 = vadd.f32 %v6036, 1e-05
    %v6041 = vadd.f32 %v6037, 1e-05
    %v6042 = vrsqrt.pop %v6038
    %v6043 = vrsqrt.pop %v6039
    %v6044 = vrsqrt.pop %v6040
    %v6045 = vrsqrt.pop %v6041
    %v6046 = vmul.f32 %v5994, %v6042
    %v6047 = vmul.f32 %v5995, %v6042
    %v6048 = vmul.f32 %v5996, %v6042
    %v6049 = vmul.f32 %v5997, %v6043
    %v6050 = vmul.f32 %v5998, %v6043
    %v6051 = vmul.f32 %v5999, %v6043
    %v6052 = vmul.f32 %v6000, %v6044
    %v6053 = vmul.f32 %v6001, %v6044
    %v6054 = vmul.f32 %v6002, %v6044
    %v6055 = vmul.f32 %v6003, %v6045
    %v6056 = vmul.f32 %v6004, %v6045
    %v6057 = vmul.f32 %v6005, %v6045
    %v6059 = vlaneseq
    %v6060 = vshrl.u32 %v6059, 7
    %v6061 = vsub.s32 0, %v6060
    %v6062 = vrot.slane %v5972, %v6061
    %v6063 = vlaneseq
    %v6064 = vshrl.u32 %v6063, 7
    %v6065 = vsub.s32 1, %v6064
    %v6066 = vrot.slane %v5972, %v6065
    %v6067 = vlaneseq
    %v6068 = vshrl.u32 %v6067, 7
    %v6069 = vsub.s32 2, %v6068
    %v6070 = vrot.slane %v5972, %v6069
    %v6074 = vmul.f32 %v6046, %v6062
    %v6075 = vmul.f32 %v6047, %v6066
    %v6076 = vmul.f32 %v6048, %v6070
    %v6077 = vmul.f32 %v6049, %v6062
    %v6078 = vmul.f32 %v6050, %v6066
    %v6079 = vmul.f32 %v6051, %v6070
    %v6080 = vmul.f32 %v6052, %v6062
    %v6081 = vmul.f32 %v6053, %v6066
    %v6082 = vmul.f32 %v6054, %v6070
    %v6083 = vmul.f32 %v6055, %v6062
    %v6084 = vmul.f32 %v6056, %v6066
    %v6085 = vmul.f32 %v6057, %v6070
    %v6087 = vlaneseq
    %v6088 = vshrl.u32 %v6087, 7
    %v6089 = vsub.s32 0, %v6088
    %v6090 = vrot.slane %v5973, %v6089
    %v6091 = vlaneseq
    %v6092 = vshrl.u32 %v6091, 7
    %v6093 = vsub.s32 1, %v6092
    %v6094 = vrot.slane %v5973, %v6093
    %v6095 = vlaneseq
    %v6096 = vshrl.u32 %v6095, 7
    %v6097 = vsub.s32 2, %v6096
    %v6098 = vrot.slane %v5973, %v6097
    %v6102 = vadd.f32 %v6074, %v6090
    %v6103 = vadd.f32 %v6075, %v6094
    %v6104 = vadd.f32 %v6076, %v6098
    %v6105 = vadd.f32 %v6077, %v6090
    %v6106 = vadd.f32 %v6078, %v6094
    %v6107 = vadd.f32 %v6079, %v6098
    %v6108 = vadd.f32 %v6080, %v6090
    %v6109 = vadd.f32 %v6081, %v6094
    %v6110 = vadd.f32 %v6082, %v6098
    %v6111 = vadd.f32 %v6083, %v6090
    %v6112 = vadd.f32 %v6084, %v6094
    %v6113 = vadd.f32 %v6085, %v6098
    %v6114 = vpack.c.bf16 %v6105, %v6102
    %v6115 = vpack.c.bf16 %v6106, %v6103
    %v6116 = vpack.c.bf16 %v6107, %v6104
    %v6117 = vpack.c.bf16 %v6111, %v6108
    %v6118 = vpack.c.bf16 %v6112, %v6109
    %v6119 = vpack.c.bf16 %v6113, %v6110
    %v6120 = vld [vmem:[#allocation18] sm:$0xff]
    %v6121 = vld [vmem:[#allocation18 + $0x8] sm:$0xff]
    %v6122 = vld [vmem:[#allocation18 + $0x10] sm:$0xff]
    %v6123 = vld [vmem:[#allocation18 + $0x18] sm:$0xff]
    %v6124 = vld [vmem:[#allocation18 + $0x20] sm:$0xff]
    %v6125 = vld [vmem:[#allocation18 + $0x28] sm:$0xff]
    %v6126 = vld [vmem:[#allocation18 + $0x30] sm:$0xff]
    %v6127 = vld [vmem:[#allocation18 + $0x38] sm:$0xff]
    %v6128 = vld [vmem:[#allocation18 + $0x40] sm:$0xff]
    %v6129 = vld [vmem:[#allocation18 + $0x48] sm:$0xff]
    %v6130 = vld [vmem:[#allocation18 + $0x50] sm:$0xff]
    %v6131 = vld [vmem:[#allocation18 + $0x58] sm:$0xff]
    %v6132 = vld [vmem:[#allocation18 + $0x60] sm:$0xff]
    %v6133 = vld [vmem:[#allocation18 + $0x68] sm:$0xff]
    %v6134 = vld [vmem:[#allocation18 + $0x70] sm:$0xff]
    %v6135 = vld [vmem:[#allocation18 + $0x78] sm:$0xff]
    %v6136 = vld [vmem:[#allocation18 + $0x80] sm:$0xff]
    %v6137 = vld [vmem:[#allocation18 + $0x88] sm:$0xff]
    %v6138 = vld [vmem:[#allocation18 + $0x90] sm:$0xff]
    %v6139 = vld [vmem:[#allocation18 + $0x98] sm:$0xff]
    %v6140 = vld [vmem:[#allocation18 + $0xa0] sm:$0xff]
    %v6141 = vld [vmem:[#allocation18 + $0xa8] sm:$0xff]
    %v6142 = vld [vmem:[#allocation18 + $0xb0] sm:$0xff]
    %v6143 = vld [vmem:[#allocation18 + $0xb8] sm:$0xff]
    %v6144 = vld [vmem:[#allocation18 + $0xc0] sm:$0xff]
    %v6145 = vld [vmem:[#allocation18 + $0xc8] sm:$0xff]
    %v6146 = vld [vmem:[#allocation18 + $0xd0] sm:$0xff]
    %v6147 = vld [vmem:[#allocation18 + $0xd8] sm:$0xff]
    %v6148 = vld [vmem:[#allocation18 + $0xe0] sm:$0xff]
    %v6149 = vld [vmem:[#allocation18 + $0xe8] sm:$0xff]
    %v6150 = vld [vmem:[#allocation18 + $0xf0] sm:$0xff]
    %v6151 = vld [vmem:[#allocation18 + $0xf8] sm:$0xff]
    %v6152 = vld [vmem:[#allocation18 + $0x100] sm:$0xff]
    %v6153 = vld [vmem:[#allocation18 + $0x108] sm:$0xff]
    %v6154 = vld [vmem:[#allocation18 + $0x110] sm:$0xff]
    %v6155 = vld [vmem:[#allocation18 + $0x118] sm:$0xff]
    %v6156 = vld [vmem:[#allocation18 + $0x120] sm:$0xff]
    %v6157 = vld [vmem:[#allocation18 + $0x128] sm:$0xff]
    %v6158 = vld [vmem:[#allocation18 + $0x130] sm:$0xff]
    %v6159 = vld [vmem:[#allocation18 + $0x138] sm:$0xff]
    %v6160 = vld [vmem:[#allocation18 + $0x140] sm:$0xff]
    %v6161 = vld [vmem:[#allocation18 + $0x148] sm:$0xff]
    %v6162 = vld [vmem:[#allocation18 + $0x150] sm:$0xff]
    %v6163 = vld [vmem:[#allocation18 + $0x158] sm:$0xff]
    %v6164 = vld [vmem:[#allocation18 + $0x160] sm:$0xff]
    %v6165 = vld [vmem:[#allocation18 + $0x168] sm:$0xff]
    %v6166 = vld [vmem:[#allocation18 + $0x170] sm:$0xff]
    %v6167 = vld [vmem:[#allocation18 + $0x178] sm:$0xff]
    %v6168 = vld [vmem:[#allocation18 + $0x180] sm:$0xff]
    %v6169 = vld [vmem:[#allocation18 + $0x188] sm:$0xff]
    %v6170 = vld [vmem:[#allocation18 + $0x190] sm:$0xff]
    %v6171 = vld [vmem:[#allocation18 + $0x198] sm:$0xff]
    %v6172 = vld [vmem:[#allocation18 + $0x1a0] sm:$0xff]
    %v6173 = vld [vmem:[#allocation18 + $0x1a8] sm:$0xff]
    %v6174 = vld [vmem:[#allocation18 + $0x1b0] sm:$0xff]
    %v6175 = vld [vmem:[#allocation18 + $0x1b8] sm:$0xff]
    %v6176 = vld [vmem:[#allocation18 + $0x1c0] sm:$0xff]
    %v6177 = vld [vmem:[#allocation18 + $0x1c8] sm:$0xff]
    %v6178 = vld [vmem:[#allocation18 + $0x1d0] sm:$0xff]
    %v6179 = vld [vmem:[#allocation18 + $0x1d8] sm:$0xff]
    %v6180 = vld [vmem:[#allocation18 + $0x1e0] sm:$0xff]
    %v6181 = vld [vmem:[#allocation18 + $0x1e8] sm:$0xff]
    %v6182 = vld [vmem:[#allocation18 + $0x1f0] sm:$0xff]
    %v6183 = vld [vmem:[#allocation18 + $0x1f8] sm:$0xff]
    %v6184 = vld [vmem:[#allocation18 + $0x200] sm:$0xff]
    %v6185 = vld [vmem:[#allocation18 + $0x208] sm:$0xff]
    %v6186 = vld [vmem:[#allocation18 + $0x210] sm:$0xff]
    %v6187 = vld [vmem:[#allocation18 + $0x218] sm:$0xff]
    %v6188 = vld [vmem:[#allocation18 + $0x220] sm:$0xff]
    %v6189 = vld [vmem:[#allocation18 + $0x228] sm:$0xff]
    %v6190 = vld [vmem:[#allocation18 + $0x230] sm:$0xff]
    %v6191 = vld [vmem:[#allocation18 + $0x238] sm:$0xff]
    %v6192 = vld [vmem:[#allocation18 + $0x240] sm:$0xff]
    %v6193 = vld [vmem:[#allocation18 + $0x248] sm:$0xff]
    %v6194 = vld [vmem:[#allocation18 + $0x250] sm:$0xff]
    %v6195 = vld [vmem:[#allocation18 + $0x258] sm:$0xff]
    %v6196 = vld [vmem:[#allocation18 + $0x260] sm:$0xff]
    %v6197 = vld [vmem:[#allocation18 + $0x268] sm:$0xff]
    %v6198 = vld [vmem:[#allocation18 + $0x270] sm:$0xff]
    %v6199 = vld [vmem:[#allocation18 + $0x278] sm:$0xff]
    %v6200 = vld [vmem:[#allocation18 + $0x280] sm:$0xff]
    %v6201 = vld [vmem:[#allocation18 + $0x288] sm:$0xff]
    %v6202 = vld [vmem:[#allocation18 + $0x290] sm:$0xff]
    %v6203 = vld [vmem:[#allocation18 + $0x298] sm:$0xff]
    %v6204 = vld [vmem:[#allocation18 + $0x2a0] sm:$0xff]
    %v6205 = vld [vmem:[#allocation18 + $0x2a8] sm:$0xff]
    %v6206 = vld [vmem:[#allocation18 + $0x2b0] sm:$0xff]
    %v6207 = vld [vmem:[#allocation18 + $0x2b8] sm:$0xff]
    %v6208 = vld [vmem:[#allocation18 + $0x2c0] sm:$0xff]
    %v6209 = vld [vmem:[#allocation18 + $0x2c8] sm:$0xff]
    %v6210 = vld [vmem:[#allocation18 + $0x2d0] sm:$0xff]
    %v6211 = vld [vmem:[#allocation18 + $0x2d8] sm:$0xff]
    %v6212 = vld [vmem:[#allocation18 + $0x2e0] sm:$0xff]
    %v6213 = vld [vmem:[#allocation18 + $0x2e8] sm:$0xff]
    %v6214 = vld [vmem:[#allocation18 + $0x2f0] sm:$0xff]
    %v6215 = vld [vmem:[#allocation18 + $0x2f8] sm:$0xff]
    %v6216 = vld [vmem:[#allocation18 + $0x300] sm:$0xff]
    %v6217 = vld [vmem:[#allocation18 + $0x308] sm:$0xff]
    %v6218 = vld [vmem:[#allocation18 + $0x310] sm:$0xff]
    %v6219 = vld [vmem:[#allocation18 + $0x318] sm:$0xff]
    %v6220 = vld [vmem:[#allocation18 + $0x320] sm:$0xff]
    %v6221 = vld [vmem:[#allocation18 + $0x328] sm:$0xff]
    %v6222 = vld [vmem:[#allocation18 + $0x330] sm:$0xff]
    %v6223 = vld [vmem:[#allocation18 + $0x338] sm:$0xff]
    %v6224 = vld [vmem:[#allocation18 + $0x340] sm:$0xff]
    %v6225 = vld [vmem:[#allocation18 + $0x348] sm:$0xff]
    %v6226 = vld [vmem:[#allocation18 + $0x350] sm:$0xff]
    %v6227 = vld [vmem:[#allocation18 + $0x358] sm:$0xff]
    %v6228 = vld [vmem:[#allocation18 + $0x360] sm:$0xff]
    %v6229 = vld [vmem:[#allocation18 + $0x368] sm:$0xff]
    %v6230 = vld [vmem:[#allocation18 + $0x370] sm:$0xff]
    %v6231 = vld [vmem:[#allocation18 + $0x378] sm:$0xff]
    %v6232 = vld [vmem:[#allocation18 + $0x380] sm:$0xff]
    %v6233 = vld [vmem:[#allocation18 + $0x388] sm:$0xff]
    %v6234 = vld [vmem:[#allocation18 + $0x390] sm:$0xff]
    %v6235 = vld [vmem:[#allocation18 + $0x398] sm:$0xff]
    %v6236 = vld [vmem:[#allocation18 + $0x3a0] sm:$0xff]
    %v6237 = vld [vmem:[#allocation18 + $0x3a8] sm:$0xff]
    %v6238 = vld [vmem:[#allocation18 + $0x3b0] sm:$0xff]
    %v6239 = vld [vmem:[#allocation18 + $0x3b8] sm:$0xff]
    %v6240 = vld [vmem:[#allocation18 + $0x3c0] sm:$0xff]
    %v6241 = vld [vmem:[#allocation18 + $0x3c8] sm:$0xff]
    %v6242 = vld [vmem:[#allocation18 + $0x3d0] sm:$0xff]
    %v6243 = vld [vmem:[#allocation18 + $0x3d8] sm:$0xff]
    %v6244 = vld [vmem:[#allocation18 + $0x3e0] sm:$0xff]
    %v6245 = vld [vmem:[#allocation18 + $0x3e8] sm:$0xff]
    %v6246 = vld [vmem:[#allocation18 + $0x3f0] sm:$0xff]
    %v6247 = vld [vmem:[#allocation18 + $0x3f8] sm:$0xff]
    %v6248 = vld [vmem:[#allocation18 + $0x400] sm:$0xff]
    %v6249 = vld [vmem:[#allocation18 + $0x408] sm:$0xff]
    %v6250 = vld [vmem:[#allocation18 + $0x410] sm:$0xff]
    %v6251 = vld [vmem:[#allocation18 + $0x418] sm:$0xff]
    %v6252 = vld [vmem:[#allocation18 + $0x420] sm:$0xff]
    %v6253 = vld [vmem:[#allocation18 + $0x428] sm:$0xff]
    %v6254 = vld [vmem:[#allocation18 + $0x430] sm:$0xff]
    %v6255 = vld [vmem:[#allocation18 + $0x438] sm:$0xff]
    %v6256 = vld [vmem:[#allocation18 + $0x440] sm:$0xff]
    %v6257 = vld [vmem:[#allocation18 + $0x448] sm:$0xff]
    %v6258 = vld [vmem:[#allocation18 + $0x450] sm:$0xff]
    %v6259 = vld [vmem:[#allocation18 + $0x458] sm:$0xff]
    %v6260 = vld [vmem:[#allocation18 + $0x460] sm:$0xff]
    %v6261 = vld [vmem:[#allocation18 + $0x468] sm:$0xff]
    %v6262 = vld [vmem:[#allocation18 + $0x470] sm:$0xff]
    %v6263 = vld [vmem:[#allocation18 + $0x478] sm:$0xff]
    %v6264 = vld [vmem:[#allocation18 + $0x480] sm:$0xff]
    %v6265 = vld [vmem:[#allocation18 + $0x488] sm:$0xff]
    %v6266 = vld [vmem:[#allocation18 + $0x490] sm:$0xff]
    %v6267 = vld [vmem:[#allocation18 + $0x498] sm:$0xff]
    %v6268 = vld [vmem:[#allocation18 + $0x4a0] sm:$0xff]
    %v6269 = vld [vmem:[#allocation18 + $0x4a8] sm:$0xff]
    %v6270 = vld [vmem:[#allocation18 + $0x4b0] sm:$0xff]
    %v6271 = vld [vmem:[#allocation18 + $0x4b8] sm:$0xff]
    %v6272 = vld [vmem:[#allocation18 + $0x4c0] sm:$0xff]
    %v6273 = vld [vmem:[#allocation18 + $0x4c8] sm:$0xff]
    %v6274 = vld [vmem:[#allocation18 + $0x4d0] sm:$0xff]
    %v6275 = vld [vmem:[#allocation18 + $0x4d8] sm:$0xff]
    %v6276 = vld [vmem:[#allocation18 + $0x4e0] sm:$0xff]
    %v6277 = vld [vmem:[#allocation18 + $0x4e8] sm:$0xff]
    %v6278 = vld [vmem:[#allocation18 + $0x4f0] sm:$0xff]
    %v6279 = vld [vmem:[#allocation18 + $0x4f8] sm:$0xff]
    %v6280 = vld [vmem:[#allocation18 + $0x500] sm:$0xff]
    %v6281 = vld [vmem:[#allocation18 + $0x508] sm:$0xff]
    %v6282 = vld [vmem:[#allocation18 + $0x510] sm:$0xff]
    %v6283 = vld [vmem:[#allocation18 + $0x518] sm:$0xff]
    %v6284 = vld [vmem:[#allocation18 + $0x520] sm:$0xff]
    %v6285 = vld [vmem:[#allocation18 + $0x528] sm:$0xff]
    %v6286 = vld [vmem:[#allocation18 + $0x530] sm:$0xff]
    %v6287 = vld [vmem:[#allocation18 + $0x538] sm:$0xff]
    %v6288 = vld [vmem:[#allocation18 + $0x540] sm:$0xff]
    %v6289 = vld [vmem:[#allocation18 + $0x548] sm:$0xff]
    %v6290 = vld [vmem:[#allocation18 + $0x550] sm:$0xff]
    %v6291 = vld [vmem:[#allocation18 + $0x558] sm:$0xff]
    %v6292 = vld [vmem:[#allocation18 + $0x560] sm:$0xff]
    %v6293 = vld [vmem:[#allocation18 + $0x568] sm:$0xff]
    %v6294 = vld [vmem:[#allocation18 + $0x570] sm:$0xff]
    %v6295 = vld [vmem:[#allocation18 + $0x578] sm:$0xff]
    %v6296 = vld [vmem:[#allocation18 + $0x580] sm:$0xff]
    %v6297 = vld [vmem:[#allocation18 + $0x588] sm:$0xff]
    %v6298 = vld [vmem:[#allocation18 + $0x590] sm:$0xff]
    %v6299 = vld [vmem:[#allocation18 + $0x598] sm:$0xff]
    %v6300 = vld [vmem:[#allocation18 + $0x5a0] sm:$0xff]
    %v6301 = vld [vmem:[#allocation18 + $0x5a8] sm:$0xff]
    %v6302 = vld [vmem:[#allocation18 + $0x5b0] sm:$0xff]
    %v6303 = vld [vmem:[#allocation18 + $0x5b8] sm:$0xff]
    %v6304 = vld [vmem:[#allocation18 + $0x5c0] sm:$0xff]
    %v6305 = vld [vmem:[#allocation18 + $0x5c8] sm:$0xff]
    %v6306 = vld [vmem:[#allocation18 + $0x5d0] sm:$0xff]
    %v6307 = vld [vmem:[#allocation18 + $0x5d8] sm:$0xff]
    %v6308 = vld [vmem:[#allocation18 + $0x5e0] sm:$0xff]
    %v6309 = vld [vmem:[#allocation18 + $0x5e8] sm:$0xff]
    %v6310 = vld [vmem:[#allocation18 + $0x5f0] sm:$0xff]
    %v6311 = vld [vmem:[#allocation18 + $0x5f8] sm:$0xff]
    %v6312 = vld [vmem:[#allocation18 + $0x600] sm:$0xff]
    %v6313 = vld [vmem:[#allocation18 + $0x608] sm:$0xff]
    %v6314 = vld [vmem:[#allocation18 + $0x610] sm:$0xff]
    %v6315 = vld [vmem:[#allocation18 + $0x618] sm:$0xff]
    %v6316 = vld [vmem:[#allocation18 + $0x620] sm:$0xff]
    %v6317 = vld [vmem:[#allocation18 + $0x628] sm:$0xff]
    %v6318 = vld [vmem:[#allocation18 + $0x630] sm:$0xff]
    %v6319 = vld [vmem:[#allocation18 + $0x638] sm:$0xff]
    %v6320 = vld [vmem:[#allocation18 + $0x640] sm:$0xff]
    %v6321 = vld [vmem:[#allocation18 + $0x648] sm:$0xff]
    %v6322 = vld [vmem:[#allocation18 + $0x650] sm:$0xff]
    %v6323 = vld [vmem:[#allocation18 + $0x658] sm:$0xff]
    %v6324 = vld [vmem:[#allocation18 + $0x660] sm:$0xff]
    %v6325 = vld [vmem:[#allocation18 + $0x668] sm:$0xff]
    %v6326 = vld [vmem:[#allocation18 + $0x670] sm:$0xff]
    %v6327 = vld [vmem:[#allocation18 + $0x678] sm:$0xff]
    %v6328 = vld [vmem:[#allocation18 + $0x680] sm:$0xff]
    %v6329 = vld [vmem:[#allocation18 + $0x688] sm:$0xff]
    %v6330 = vld [vmem:[#allocation18 + $0x690] sm:$0xff]
    %v6331 = vld [vmem:[#allocation18 + $0x698] sm:$0xff]
    %v6332 = vld [vmem:[#allocation18 + $0x6a0] sm:$0xff]
    %v6333 = vld [vmem:[#allocation18 + $0x6a8] sm:$0xff]
    %v6334 = vld [vmem:[#allocation18 + $0x6b0] sm:$0xff]
    %v6335 = vld [vmem:[#allocation18 + $0x6b8] sm:$0xff]
    %v6336 = vld [vmem:[#allocation18 + $0x6c0] sm:$0xff]
    %v6337 = vld [vmem:[#allocation18 + $0x6c8] sm:$0xff]
    %v6338 = vld [vmem:[#allocation18 + $0x6d0] sm:$0xff]
    %v6339 = vld [vmem:[#allocation18 + $0x6d8] sm:$0xff]
    %v6340 = vld [vmem:[#allocation18 + $0x6e0] sm:$0xff]
    %v6341 = vld [vmem:[#allocation18 + $0x6e8] sm:$0xff]
    %v6342 = vld [vmem:[#allocation18 + $0x6f0] sm:$0xff]
    %v6343 = vld [vmem:[#allocation18 + $0x6f8] sm:$0xff]
    %v6344 = vld [vmem:[#allocation18 + $0x700] sm:$0xff]
    %v6345 = vld [vmem:[#allocation18 + $0x708] sm:$0xff]
    %v6346 = vld [vmem:[#allocation18 + $0x710] sm:$0xff]
    %v6347 = vld [vmem:[#allocation18 + $0x718] sm:$0xff]
    %v6348 = vld [vmem:[#allocation18 + $0x720] sm:$0xff]
    %v6349 = vld [vmem:[#allocation18 + $0x728] sm:$0xff]
    %v6350 = vld [vmem:[#allocation18 + $0x730] sm:$0xff]
    %v6351 = vld [vmem:[#allocation18 + $0x738] sm:$0xff]
    %v6352 = vld [vmem:[#allocation18 + $0x740] sm:$0xff]
    %v6353 = vld [vmem:[#allocation18 + $0x748] sm:$0xff]
    %v6354 = vld [vmem:[#allocation18 + $0x750] sm:$0xff]
    %v6355 = vld [vmem:[#allocation18 + $0x758] sm:$0xff]
    %v6356 = vld [vmem:[#allocation18 + $0x760] sm:$0xff]
    %v6357 = vld [vmem:[#allocation18 + $0x768] sm:$0xff]
    %v6358 = vld [vmem:[#allocation18 + $0x770] sm:$0xff]
    %v6359 = vld [vmem:[#allocation18 + $0x778] sm:$0xff]
    %v6360 = vld [vmem:[#allocation18 + $0x780] sm:$0xff]
    %v6361 = vld [vmem:[#allocation18 + $0x788] sm:$0xff]
    %v6362 = vld [vmem:[#allocation18 + $0x790] sm:$0xff]
    %v6363 = vld [vmem:[#allocation18 + $0x798] sm:$0xff]
    %v6364 = vld [vmem:[#allocation18 + $0x7a0] sm:$0xff]
    %v6365 = vld [vmem:[#allocation18 + $0x7a8] sm:$0xff]
    %v6366 = vld [vmem:[#allocation18 + $0x7b0] sm:$0xff]
    %v6367 = vld [vmem:[#allocation18 + $0x7b8] sm:$0xff]
    %v6368 = vld [vmem:[#allocation18 + $0x7c0] sm:$0xff]
    %v6369 = vld [vmem:[#allocation18 + $0x7c8] sm:$0xff]
    %v6370 = vld [vmem:[#allocation18 + $0x7d0] sm:$0xff]
    %v6371 = vld [vmem:[#allocation18 + $0x7d8] sm:$0xff]
    %v6372 = vld [vmem:[#allocation18 + $0x7e0] sm:$0xff]
    %v6373 = vld [vmem:[#allocation18 + $0x7e8] sm:$0xff]
    %v6374 = vld [vmem:[#allocation18 + $0x7f0] sm:$0xff]
    %v6375 = vld [vmem:[#allocation18 + $0x7f8] sm:$0xff]
    %v6376 = vld [vmem:[#allocation18 + $0x800] sm:$0xff]
    %v6377 = vld [vmem:[#allocation18 + $0x808] sm:$0xff]
    %v6378 = vld [vmem:[#allocation18 + $0x810] sm:$0xff]
    %v6379 = vld [vmem:[#allocation18 + $0x818] sm:$0xff]
    %v6380 = vld [vmem:[#allocation18 + $0x820] sm:$0xff]
    %v6381 = vld [vmem:[#allocation18 + $0x828] sm:$0xff]
    %v6382 = vld [vmem:[#allocation18 + $0x830] sm:$0xff]
    %v6383 = vld [vmem:[#allocation18 + $0x838] sm:$0xff]
    %v6384 = vld [vmem:[#allocation18 + $0x840] sm:$0xff]
    %v6385 = vld [vmem:[#allocation18 + $0x848] sm:$0xff]
    %v6386 = vld [vmem:[#allocation18 + $0x850] sm:$0xff]
    %v6387 = vld [vmem:[#allocation18 + $0x858] sm:$0xff]
    %v6388 = vld [vmem:[#allocation18 + $0x860] sm:$0xff]
    %v6389 = vld [vmem:[#allocation18 + $0x868] sm:$0xff]
    %v6390 = vld [vmem:[#allocation18 + $0x870] sm:$0xff]
    %v6391 = vld [vmem:[#allocation18 + $0x878] sm:$0xff]
    %v6392 = vld [vmem:[#allocation18 + $0x880] sm:$0xff]
    %v6393 = vld [vmem:[#allocation18 + $0x888] sm:$0xff]
    %v6394 = vld [vmem:[#allocation18 + $0x890] sm:$0xff]
    %v6395 = vld [vmem:[#allocation18 + $0x898] sm:$0xff]
    %v6396 = vld [vmem:[#allocation18 + $0x8a0] sm:$0xff]
    %v6397 = vld [vmem:[#allocation18 + $0x8a8] sm:$0xff]
    %v6398 = vld [vmem:[#allocation18 + $0x8b0] sm:$0xff]
    %v6399 = vld [vmem:[#allocation18 + $0x8b8] sm:$0xff]
    %v6400 = vld [vmem:[#allocation18 + $0x8c0] sm:$0xff]
    %v6401 = vld [vmem:[#allocation18 + $0x8c8] sm:$0xff]
    %v6402 = vld [vmem:[#allocation18 + $0x8d0] sm:$0xff]
    %v6403 = vld [vmem:[#allocation18 + $0x8d8] sm:$0xff]
    %v6404 = vld [vmem:[#allocation18 + $0x8e0] sm:$0xff]
    %v6405 = vld [vmem:[#allocation18 + $0x8e8] sm:$0xff]
    %v6406 = vld [vmem:[#allocation18 + $0x8f0] sm:$0xff]
    %v6407 = vld [vmem:[#allocation18 + $0x8f8] sm:$0xff]
    %v6408 = vld [vmem:[#allocation19] sm:$0xff]
    %v6409 = vld [vmem:[#allocation19 + $0x8] sm:$0xf]
    %v6412 = vlaneseq
    %v6413 = vshrl.u32 %v6412, 7
    %v6414 = vsub.s32 0, %v6413
    %v6415 = vrot.slane %v6408, %v6414
    %v6416 = vlaneseq
    %v6417 = vshrl.u32 %v6416, 7
    %v6418 = vsub.s32 1, %v6417
    %v6419 = vrot.slane %v6408, %v6418
    %v6420 = vlaneseq
    %v6421 = vshrl.u32 %v6420, 7
    %v6422 = vsub.s32 2, %v6421
    %v6423 = vrot.slane %v6408, %v6422
    %v6424 = vlaneseq
    %v6425 = vshrl.u32 %v6424, 7
    %v6426 = vsub.s32 3, %v6425
    %v6427 = vrot.slane %v6408, %v6426
    %v6428 = vlaneseq
    %v6429 = vshrl.u32 %v6428, 7
    %v6430 = vsub.s32 4, %v6429
    %v6431 = vrot.slane %v6408, %v6430
    %v6432 = vlaneseq
    %v6433 = vshrl.u32 %v6432, 7
    %v6434 = vsub.s32 5, %v6433
    %v6435 = vrot.slane %v6408, %v6434
    %v6436 = vlaneseq
    %v6437 = vshrl.u32 %v6436, 7
    %v6438 = vsub.s32 6, %v6437
    %v6439 = vrot.slane %v6408, %v6438
    %v6440 = vlaneseq
    %v6441 = vshrl.u32 %v6440, 7
    %v6442 = vsub.s32 7, %v6441
    %v6443 = vrot.slane %v6408, %v6442
    %v6444 = vlaneseq
    %v6445 = vshrl.u32 %v6444, 7
    %v6446 = vsub.s32 0, %v6445
    %v6447 = vrot.slane %v6409, %v6446
    %v6448 = vlaneseq
    %v6449 = vshrl.u32 %v6448, 7
    %v6450 = vsub.s32 1, %v6449
    %v6451 = vrot.slane %v6409, %v6450
    %v6452 = vlaneseq
    %v6453 = vshrl.u32 %v6452, 7
    %v6454 = vsub.s32 2, %v6453
    %v6455 = vrot.slane %v6409, %v6454
    %v6456 = vlaneseq
    %v6457 = vshrl.u32 %v6456, 7
    %v6458 = vsub.s32 3, %v6457
    %v6459 = vrot.slane %v6409, %v6458
    %v6760 = vunpack.c.l.b16 %v6120
    %v6761 = vunpack.c.h.b16 %v6120
    %v6762 = vunpack.c.l.b16 %v6121
    %v6763 = vunpack.c.h.b16 %v6121
    %v6764 = vunpack.c.l.b16 %v6122
    %v6765 = vunpack.c.h.b16 %v6122
    %v6766 = vunpack.c.l.b16 %v6123
    %v6767 = vunpack.c.h.b16 %v6123
    %v6768 = vunpack.c.l.b16 %v6124
    %v6769 = vunpack.c.h.b16 %v6124
    %v6770 = vunpack.c.l.b16 %v6125
    %v6771 = vunpack.c.h.b16 %v6125
    %v6772 = vunpack.c.l.b16 %v6126
    %v6773 = vunpack.c.h.b16 %v6126
    %v6774 = vunpack.c.l.b16 %v6127
    %v6775 = vunpack.c.h.b16 %v6127
    %v6776 = vunpack.c.l.b16 %v6128
    %v6777 = vunpack.c.h.b16 %v6128
    %v6778 = vunpack.c.l.b16 %v6129
    %v6779 = vunpack.c.h.b16 %v6129
    %v6780 = vunpack.c.l.b16 %v6130
    %v6781 = vunpack.c.h.b16 %v6130
    %v6782 = vunpack.c.l.b16 %v6131
    %v6783 = vunpack.c.h.b16 %v6131
    %v6784 = vunpack.c.l.b16 %v6132
    %v6785 = vunpack.c.h.b16 %v6132
    %v6786 = vunpack.c.l.b16 %v6133
    %v6787 = vunpack.c.h.b16 %v6133
    %v6788 = vunpack.c.l.b16 %v6134
    %v6789 = vunpack.c.h.b16 %v6134
    %v6790 = vunpack.c.l.b16 %v6135
    %v6791 = vunpack.c.h.b16 %v6135
    %v6792 = vunpack.c.l.b16 %v6136
    %v6793 = vunpack.c.h.b16 %v6136
    %v6794 = vunpack.c.l.b16 %v6137
    %v6795 = vunpack.c.h.b16 %v6137
    %v6796 = vunpack.c.l.b16 %v6138
    %v6797 = vunpack.c.h.b16 %v6138
    %v6798 = vunpack.c.l.b16 %v6139
    %v6799 = vunpack.c.h.b16 %v6139
    %v6800 = vunpack.c.l.b16 %v6140
    %v6801 = vunpack.c.h.b16 %v6140
    %v6802 = vunpack.c.l.b16 %v6141
    %v6803 = vunpack.c.h.b16 %v6141
    %v6804 = vunpack.c.l.b16 %v6142
    %v6805 = vunpack.c.h.b16 %v6142
    %v6806 = vunpack.c.l.b16 %v6143
    %v6807 = vunpack.c.h.b16 %v6143
    %v6808 = vunpack.c.l.b16 %v6144
    %v6809 = vunpack.c.h.b16 %v6144
    %v6810 = vunpack.c.l.b16 %v6145
    %v6811 = vunpack.c.h.b16 %v6145
    %v6812 = vunpack.c.l.b16 %v6146
    %v6813 = vunpack.c.h.b16 %v6146
    %v6814 = vunpack.c.l.b16 %v6147
    %v6815 = vunpack.c.h.b16 %v6147
    %v6816 = vunpack.c.l.b16 %v6148
    %v6817 = vunpack.c.h.b16 %v6148
    %v6818 = vunpack.c.l.b16 %v6149
    %v6819 = vunpack.c.h.b16 %v6149
    %v6820 = vunpack.c.l.b16 %v6150
    %v6821 = vunpack.c.h.b16 %v6150
    %v6822 = vunpack.c.l.b16 %v6151
    %v6823 = vunpack.c.h.b16 %v6151
    %v6824 = vunpack.c.l.b16 %v6152
    %v6825 = vunpack.c.h.b16 %v6152
    %v6826 = vunpack.c.l.b16 %v6153
    %v6827 = vunpack.c.h.b16 %v6153
    %v6828 = vunpack.c.l.b16 %v6154
    %v6829 = vunpack.c.h.b16 %v6154
    %v6830 = vunpack.c.l.b16 %v6155
    %v6831 = vunpack.c.h.b16 %v6155
    %v6832 = vunpack.c.l.b16 %v6156
    %v6833 = vunpack.c.h.b16 %v6156
    %v6834 = vunpack.c.l.b16 %v6157
    %v6835 = vunpack.c.h.b16 %v6157
    %v6836 = vunpack.c.l.b16 %v6158
    %v6837 = vunpack.c.h.b16 %v6158
    %v6838 = vunpack.c.l.b16 %v6159
    %v6839 = vunpack.c.h.b16 %v6159
    %v6840 = vunpack.c.l.b16 %v6160
    %v6841 = vunpack.c.h.b16 %v6160
    %v6842 = vunpack.c.l.b16 %v6161
    %v6843 = vunpack.c.h.b16 %v6161
    %v6844 = vunpack.c.l.b16 %v6162
    %v6845 = vunpack.c.h.b16 %v6162
    %v6846 = vunpack.c.l.b16 %v6163
    %v6847 = vunpack.c.h.b16 %v6163
    %v6848 = vunpack.c.l.b16 %v6164
    %v6849 = vunpack.c.h.b16 %v6164
    %v6850 = vunpack.c.l.b16 %v6165
    %v6851 = vunpack.c.h.b16 %v6165
    %v6852 = vunpack.c.l.b16 %v6166
    %v6853 = vunpack.c.h.b16 %v6166
    %v6854 = vunpack.c.l.b16 %v6167
    %v6855 = vunpack.c.h.b16 %v6167
    %v6856 = vunpack.c.l.b16 %v6168
    %v6857 = vunpack.c.h.b16 %v6168
    %v6858 = vunpack.c.l.b16 %v6169
    %v6859 = vunpack.c.h.b16 %v6169
    %v6860 = vunpack.c.l.b16 %v6170
    %v6861 = vunpack.c.h.b16 %v6170
    %v6862 = vunpack.c.l.b16 %v6171
    %v6863 = vunpack.c.h.b16 %v6171
    %v6864 = vunpack.c.l.b16 %v6172
    %v6865 = vunpack.c.h.b16 %v6172
    %v6866 = vunpack.c.l.b16 %v6173
    %v6867 = vunpack.c.h.b16 %v6173
    %v6868 = vunpack.c.l.b16 %v6174
    %v6869 = vunpack.c.h.b16 %v6174
    %v6870 = vunpack.c.l.b16 %v6175
    %v6871 = vunpack.c.h.b16 %v6175
    %v6872 = vunpack.c.l.b16 %v6176
    %v6873 = vunpack.c.h.b16 %v6176
    %v6874 = vunpack.c.l.b16 %v6177
    %v6875 = vunpack.c.h.b16 %v6177
    %v6876 = vunpack.c.l.b16 %v6178
    %v6877 = vunpack.c.h.b16 %v6178
    %v6878 = vunpack.c.l.b16 %v6179
    %v6879 = vunpack.c.h.b16 %v6179
    %v6880 = vunpack.c.l.b16 %v6180
    %v6881 = vunpack.c.h.b16 %v6180
    %v6882 = vunpack.c.l.b16 %v6181
    %v6883 = vunpack.c.h.b16 %v6181
    %v6884 = vunpack.c.l.b16 %v6182
    %v6885 = vunpack.c.h.b16 %v6182
    %v6886 = vunpack.c.l.b16 %v6183
    %v6887 = vunpack.c.h.b16 %v6183
    %v6888 = vunpack.c.l.b16 %v6184
    %v6889 = vunpack.c.h.b16 %v6184
    %v6890 = vunpack.c.l.b16 %v6185
    %v6891 = vunpack.c.h.b16 %v6185
    %v6892 = vunpack.c.l.b16 %v6186
    %v6893 = vunpack.c.h.b16 %v6186
    %v6894 = vunpack.c.l.b16 %v6187
    %v6895 = vunpack.c.h.b16 %v6187
    %v6896 = vunpack.c.l.b16 %v6188
    %v6897 = vunpack.c.h.b16 %v6188
    %v6898 = vunpack.c.l.b16 %v6189
    %v6899 = vunpack.c.h.b16 %v6189
    %v6900 = vunpack.c.l.b16 %v6190
    %v6901 = vunpack.c.h.b16 %v6190
    %v6902 = vunpack.c.l.b16 %v6191
    %v6903 = vunpack.c.h.b16 %v6191
    %v6904 = vunpack.c.l.b16 %v6192
    %v6905 = vunpack.c.h.b16 %v6192
    %v6906 = vunpack.c.l.b16 %v6193
    %v6907 = vunpack.c.h.b16 %v6193
    %v6908 = vunpack.c.l.b16 %v6194
    %v6909 = vunpack.c.h.b16 %v6194
    %v6910 = vunpack.c.l.b16 %v6195
    %v6911 = vunpack.c.h.b16 %v6195
    %v6912 = vunpack.c.l.b16 %v6196
    %v6913 = vunpack.c.h.b16 %v6196
    %v6914 = vunpack.c.l.b16 %v6197
    %v6915 = vunpack.c.h.b16 %v6197
    %v6916 = vunpack.c.l.b16 %v6198
    %v6917 = vunpack.c.h.b16 %v6198
    %v6918 = vunpack.c.l.b16 %v6199
    %v6919 = vunpack.c.h.b16 %v6199
    %v6920 = vunpack.c.l.b16 %v6200
    %v6921 = vunpack.c.h.b16 %v6200
    %v6922 = vunpack.c.l.b16 %v6201
    %v6923 = vunpack.c.h.b16 %v6201
    %v6924 = vunpack.c.l.b16 %v6202
    %v6925 = vunpack.c.h.b16 %v6202
    %v6926 = vunpack.c.l.b16 %v6203
    %v6927 = vunpack.c.h.b16 %v6203
    %v6928 = vunpack.c.l.b16 %v6204
    %v6929 = vunpack.c.h.b16 %v6204
    %v6930 = vunpack.c.l.b16 %v6205
    %v6931 = vunpack.c.h.b16 %v6205
    %v6932 = vunpack.c.l.b16 %v6206
    %v6933 = vunpack.c.h.b16 %v6206
    %v6934 = vunpack.c.l.b16 %v6207
    %v6935 = vunpack.c.h.b16 %v6207
    %v6936 = vunpack.c.l.b16 %v6208
    %v6937 = vunpack.c.h.b16 %v6208
    %v6938 = vunpack.c.l.b16 %v6209
    %v6939 = vunpack.c.h.b16 %v6209
    %v6940 = vunpack.c.l.b16 %v6210
    %v6941 = vunpack.c.h.b16 %v6210
    %v6942 = vunpack.c.l.b16 %v6211
    %v6943 = vunpack.c.h.b16 %v6211
    %v6944 = vunpack.c.l.b16 %v6212
    %v6945 = vunpack.c.h.b16 %v6212
    %v6946 = vunpack.c.l.b16 %v6213
    %v6947 = vunpack.c.h.b16 %v6213
    %v6948 = vunpack.c.l.b16 %v6214
    %v6949 = vunpack.c.h.b16 %v6214
    %v6950 = vunpack.c.l.b16 %v6215
    %v6951 = vunpack.c.h.b16 %v6215
    %v6952 = vunpack.c.l.b16 %v6216
    %v6953 = vunpack.c.h.b16 %v6216
    %v6954 = vunpack.c.l.b16 %v6217
    %v6955 = vunpack.c.h.b16 %v6217
    %v6956 = vunpack.c.l.b16 %v6218
    %v6957 = vunpack.c.h.b16 %v6218
    %v6958 = vunpack.c.l.b16 %v6219
    %v6959 = vunpack.c.h.b16 %v6219
    %v6960 = vunpack.c.l.b16 %v6220
    %v6961 = vunpack.c.h.b16 %v6220
    %v6962 = vunpack.c.l.b16 %v6221
    %v6963 = vunpack.c.h.b16 %v6221
    %v6964 = vunpack.c.l.b16 %v6222
    %v6965 = vunpack.c.h.b16 %v6222
    %v6966 = vunpack.c.l.b16 %v6223
    %v6967 = vunpack.c.h.b16 %v6223
    %v6968 = vunpack.c.l.b16 %v6224
    %v6969 = vunpack.c.h.b16 %v6224
    %v6970 = vunpack.c.l.b16 %v6225
    %v6971 = vunpack.c.h.b16 %v6225
    %v6972 = vunpack.c.l.b16 %v6226
    %v6973 = vunpack.c.h.b16 %v6226
    %v6974 = vunpack.c.l.b16 %v6227
    %v6975 = vunpack.c.h.b16 %v6227
    %v6976 = vunpack.c.l.b16 %v6228
    %v6977 = vunpack.c.h.b16 %v6228
    %v6978 = vunpack.c.l.b16 %v6229
    %v6979 = vunpack.c.h.b16 %v6229
    %v6980 = vunpack.c.l.b16 %v6230
    %v6981 = vunpack.c.h.b16 %v6230
    %v6982 = vunpack.c.l.b16 %v6231
    %v6983 = vunpack.c.h.b16 %v6231
    %v6984 = vunpack.c.l.b16 %v6232
    %v6985 = vunpack.c.h.b16 %v6232
    %v6986 = vunpack.c.l.b16 %v6233
    %v6987 = vunpack.c.h.b16 %v6233
    %v6988 = vunpack.c.l.b16 %v6234
    %v6989 = vunpack.c.h.b16 %v6234
    %v6990 = vunpack.c.l.b16 %v6235
    %v6991 = vunpack.c.h.b16 %v6235
    %v6992 = vunpack.c.l.b16 %v6236
    %v6993 = vunpack.c.h.b16 %v6236
    %v6994 = vunpack.c.l.b16 %v6237
    %v6995 = vunpack.c.h.b16 %v6237
    %v6996 = vunpack.c.l.b16 %v6238
    %v6997 = vunpack.c.h.b16 %v6238
    %v6998 = vunpack.c.l.b16 %v6239
    %v6999 = vunpack.c.h.b16 %v6239
    %v7000 = vunpack.c.l.b16 %v6240
    %v7001 = vunpack.c.h.b16 %v6240
    %v7002 = vunpack.c.l.b16 %v6241
    %v7003 = vunpack.c.h.b16 %v6241
    %v7004 = vunpack.c.l.b16 %v6242
    %v7005 = vunpack.c.h.b16 %v6242
    %v7006 = vunpack.c.l.b16 %v6243
    %v7007 = vunpack.c.h.b16 %v6243
    %v7008 = vunpack.c.l.b16 %v6244
    %v7009 = vunpack.c.h.b16 %v6244
    %v7010 = vunpack.c.l.b16 %v6245
    %v7011 = vunpack.c.h.b16 %v6245
    %v7012 = vunpack.c.l.b16 %v6246
    %v7013 = vunpack.c.h.b16 %v6246
    %v7014 = vunpack.c.l.b16 %v6247
    %v7015 = vunpack.c.h.b16 %v6247
    %v7016 = vunpack.c.l.b16 %v6248
    %v7017 = vunpack.c.h.b16 %v6248
    %v7018 = vunpack.c.l.b16 %v6249
    %v7019 = vunpack.c.h.b16 %v6249
    %v7020 = vunpack.c.l.b16 %v6250
    %v7021 = vunpack.c.h.b16 %v6250
    %v7022 = vunpack.c.l.b16 %v6251
    %v7023 = vunpack.c.h.b16 %v6251
    %v7024 = vunpack.c.l.b16 %v6252
    %v7025 = vunpack.c.h.b16 %v6252
    %v7026 = vunpack.c.l.b16 %v6253
    %v7027 = vunpack.c.h.b16 %v6253
    %v7028 = vunpack.c.l.b16 %v6254
    %v7029 = vunpack.c.h.b16 %v6254
    %v7030 = vunpack.c.l.b16 %v6255
    %v7031 = vunpack.c.h.b16 %v6255
    %v7032 = vunpack.c.l.b16 %v6256
    %v7033 = vunpack.c.h.b16 %v6256
    %v7034 = vunpack.c.l.b16 %v6257
    %v7035 = vunpack.c.h.b16 %v6257
    %v7036 = vunpack.c.l.b16 %v6258
    %v7037 = vunpack.c.h.b16 %v6258
    %v7038 = vunpack.c.l.b16 %v6259
    %v7039 = vunpack.c.h.b16 %v6259
    %v7040 = vunpack.c.l.b16 %v6260
    %v7041 = vunpack.c.h.b16 %v6260
    %v7042 = vunpack.c.l.b16 %v6261
    %v7043 = vunpack.c.h.b16 %v6261
    %v7044 = vunpack.c.l.b16 %v6262
    %v7045 = vunpack.c.h.b16 %v6262
    %v7046 = vunpack.c.l.b16 %v6263
    %v7047 = vunpack.c.h.b16 %v6263
    %v7048 = vunpack.c.l.b16 %v6264
    %v7049 = vunpack.c.h.b16 %v6264
    %v7050 = vunpack.c.l.b16 %v6265
    %v7051 = vunpack.c.h.b16 %v6265
    %v7052 = vunpack.c.l.b16 %v6266
    %v7053 = vunpack.c.h.b16 %v6266
    %v7054 = vunpack.c.l.b16 %v6267
    %v7055 = vunpack.c.h.b16 %v6267
    %v7056 = vunpack.c.l.b16 %v6268
    %v7057 = vunpack.c.h.b16 %v6268
    %v7058 = vunpack.c.l.b16 %v6269
    %v7059 = vunpack.c.h.b16 %v6269
    %v7060 = vunpack.c.l.b16 %v6270
    %v7061 = vunpack.c.h.b16 %v6270
    %v7062 = vunpack.c.l.b16 %v6271
    %v7063 = vunpack.c.h.b16 %v6271
    %v7064 = vunpack.c.l.b16 %v6272
    %v7065 = vunpack.c.h.b16 %v6272
    %v7066 = vunpack.c.l.b16 %v6273
    %v7067 = vunpack.c.h.b16 %v6273
    %v7068 = vunpack.c.l.b16 %v6274
    %v7069 = vunpack.c.h.b16 %v6274
    %v7070 = vunpack.c.l.b16 %v6275
    %v7071 = vunpack.c.h.b16 %v6275
    %v7072 = vunpack.c.l.b16 %v6276
    %v7073 = vunpack.c.h.b16 %v6276
    %v7074 = vunpack.c.l.b16 %v6277
    %v7075 = vunpack.c.h.b16 %v6277
    %v7076 = vunpack.c.l.b16 %v6278
    %v7077 = vunpack.c.h.b16 %v6278
    %v7078 = vunpack.c.l.b16 %v6279
    %v7079 = vunpack.c.h.b16 %v6279
    %v7080 = vunpack.c.l.b16 %v6280
    %v7081 = vunpack.c.h.b16 %v6280
    %v7082 = vunpack.c.l.b16 %v6281
    %v7083 = vunpack.c.h.b16 %v6281
    %v7084 = vunpack.c.l.b16 %v6282
    %v7085 = vunpack.c.h.b16 %v6282
    %v7086 = vunpack.c.l.b16 %v6283
    %v7087 = vunpack.c.h.b16 %v6283
    %v7088 = vunpack.c.l.b16 %v6284
    %v7089 = vunpack.c.h.b16 %v6284
    %v7090 = vunpack.c.l.b16 %v6285
    %v7091 = vunpack.c.h.b16 %v6285
    %v7092 = vunpack.c.l.b16 %v6286
    %v7093 = vunpack.c.h.b16 %v6286
    %v7094 = vunpack.c.l.b16 %v6287
    %v7095 = vunpack.c.h.b16 %v6287
    %v7096 = vunpack.c.l.b16 %v6288
    %v7097 = vunpack.c.h.b16 %v6288
    %v7098 = vunpack.c.l.b16 %v6289
    %v7099 = vunpack.c.h.b16 %v6289
    %v7100 = vunpack.c.l.b16 %v6290
    %v7101 = vunpack.c.h.b16 %v6290
    %v7102 = vunpack.c.l.b16 %v6291
    %v7103 = vunpack.c.h.b16 %v6291
    %v7104 = vunpack.c.l.b16 %v6292
    %v7105 = vunpack.c.h.b16 %v6292
    %v7106 = vunpack.c.l.b16 %v6293
    %v7107 = vunpack.c.h.b16 %v6293
    %v7108 = vunpack.c.l.b16 %v6294
    %v7109 = vunpack.c.h.b16 %v6294
    %v7110 = vunpack.c.l.b16 %v6295
    %v7111 = vunpack.c.h.b16 %v6295
    %v7112 = vunpack.c.l.b16 %v6296
    %v7113 = vunpack.c.h.b16 %v6296
    %v7114 = vunpack.c.l.b16 %v6297
    %v7115 = vunpack.c.h.b16 %v6297
    %v7116 = vunpack.c.l.b16 %v6298
    %v7117 = vunpack.c.h.b16 %v6298
    %v7118 = vunpack.c.l.b16 %v6299
    %v7119 = vunpack.c.h.b16 %v6299
    %v7120 = vunpack.c.l.b16 %v6300
    %v7121 = vunpack.c.h.b16 %v6300
    %v7122 = vunpack.c.l.b16 %v6301
    %v7123 = vunpack.c.h.b16 %v6301
    %v7124 = vunpack.c.l.b16 %v6302
    %v7125 = vunpack.c.h.b16 %v6302
    %v7126 = vunpack.c.l.b16 %v6303
    %v7127 = vunpack.c.h.b16 %v6303
    %v7128 = vunpack.c.l.b16 %v6304
    %v7129 = vunpack.c.h.b16 %v6304
    %v7130 = vunpack.c.l.b16 %v6305
    %v7131 = vunpack.c.h.b16 %v6305
    %v7132 = vunpack.c.l.b16 %v6306
    %v7133 = vunpack.c.h.b16 %v6306
    %v7134 = vunpack.c.l.b16 %v6307
    %v7135 = vunpack.c.h.b16 %v6307
    %v7136 = vunpack.c.l.b16 %v6308
    %v7137 = vunpack.c.h.b16 %v6308
    %v7138 = vunpack.c.l.b16 %v6309
    %v7139 = vunpack.c.h.b16 %v6309
    %v7140 = vunpack.c.l.b16 %v6310
    %v7141 = vunpack.c.h.b16 %v6310
    %v7142 = vunpack.c.l.b16 %v6311
    %v7143 = vunpack.c.h.b16 %v6311
    %v7144 = vunpack.c.l.b16 %v6312
    %v7145 = vunpack.c.h.b16 %v6312
    %v7146 = vunpack.c.l.b16 %v6313
    %v7147 = vunpack.c.h.b16 %v6313
    %v7148 = vunpack.c.l.b16 %v6314
    %v7149 = vunpack.c.h.b16 %v6314
    %v7150 = vunpack.c.l.b16 %v6315
    %v7151 = vunpack.c.h.b16 %v6315
    %v7152 = vunpack.c.l.b16 %v6316
    %v7153 = vunpack.c.h.b16 %v6316
    %v7154 = vunpack.c.l.b16 %v6317
    %v7155 = vunpack.c.h.b16 %v6317
    %v7156 = vunpack.c.l.b16 %v6318
    %v7157 = vunpack.c.h.b16 %v6318
    %v7158 = vunpack.c.l.b16 %v6319
    %v7159 = vunpack.c.h.b16 %v6319
    %v7160 = vunpack.c.l.b16 %v6320
    %v7161 = vunpack.c.h.b16 %v6320
    %v7162 = vunpack.c.l.b16 %v6321
    %v7163 = vunpack.c.h.b16 %v6321
    %v7164 = vunpack.c.l.b16 %v6322
    %v7165 = vunpack.c.h.b16 %v6322
    %v7166 = vunpack.c.l.b16 %v6323
    %v7167 = vunpack.c.h.b16 %v6323
    %v7168 = vunpack.c.l.b16 %v6324
    %v7169 = vunpack.c.h.b16 %v6324
    %v7170 = vunpack.c.l.b16 %v6325
    %v7171 = vunpack.c.h.b16 %v6325
    %v7172 = vunpack.c.l.b16 %v6326
    %v7173 = vunpack.c.h.b16 %v6326
    %v7174 = vunpack.c.l.b16 %v6327
    %v7175 = vunpack.c.h.b16 %v6327
    %v7176 = vunpack.c.l.b16 %v6328
    %v7177 = vunpack.c.h.b16 %v6328
    %v7178 = vunpack.c.l.b16 %v6329
    %v7179 = vunpack.c.h.b16 %v6329
    %v7180 = vunpack.c.l.b16 %v6330
    %v7181 = vunpack.c.h.b16 %v6330
    %v7182 = vunpack.c.l.b16 %v6331
    %v7183 = vunpack.c.h.b16 %v6331
    %v7184 = vunpack.c.l.b16 %v6332
    %v7185 = vunpack.c.h.b16 %v6332
    %v7186 = vunpack.c.l.b16 %v6333
    %v7187 = vunpack.c.h.b16 %v6333
    %v7188 = vunpack.c.l.b16 %v6334
    %v7189 = vunpack.c.h.b16 %v6334
    %v7190 = vunpack.c.l.b16 %v6335
    %v7191 = vunpack.c.h.b16 %v6335
    %v7192 = vunpack.c.l.b16 %v6336
    %v7193 = vunpack.c.h.b16 %v6336
    %v7194 = vunpack.c.l.b16 %v6337
    %v7195 = vunpack.c.h.b16 %v6337
    %v7196 = vunpack.c.l.b16 %v6338
    %v7197 = vunpack.c.h.b16 %v6338
    %v7198 = vunpack.c.l.b16 %v6339
    %v7199 = vunpack.c.h.b16 %v6339
    %v7200 = vunpack.c.l.b16 %v6340
    %v7201 = vunpack.c.h.b16 %v6340
    %v7202 = vunpack.c.l.b16 %v6341
    %v7203 = vunpack.c.h.b16 %v6341
    %v7204 = vunpack.c.l.b16 %v6342
    %v7205 = vunpack.c.h.b16 %v6342
    %v7206 = vunpack.c.l.b16 %v6343
    %v7207 = vunpack.c.h.b16 %v6343
    %v7208 = vunpack.c.l.b16 %v6344
    %v7209 = vunpack.c.h.b16 %v6344
    %v7210 = vunpack.c.l.b16 %v6345
    %v7211 = vunpack.c.h.b16 %v6345
    %v7212 = vunpack.c.l.b16 %v6346
    %v7213 = vunpack.c.h.b16 %v6346
    %v7214 = vunpack.c.l.b16 %v6347
    %v7215 = vunpack.c.h.b16 %v6347
    %v7216 = vunpack.c.l.b16 %v6348
    %v7217 = vunpack.c.h.b16 %v6348
    %v7218 = vunpack.c.l.b16 %v6349
    %v7219 = vunpack.c.h.b16 %v6349
    %v7220 = vunpack.c.l.b16 %v6350
    %v7221 = vunpack.c.h.b16 %v6350
    %v7222 = vunpack.c.l.b16 %v6351
    %v7223 = vunpack.c.h.b16 %v6351
    %v7224 = vunpack.c.l.b16 %v6352
    %v7225 = vunpack.c.h.b16 %v6352
    %v7226 = vunpack.c.l.b16 %v6353
    %v7227 = vunpack.c.h.b16 %v6353
    %v7228 = vunpack.c.l.b16 %v6354
    %v7229 = vunpack.c.h.b16 %v6354
    %v7230 = vunpack.c.l.b16 %v6355
    %v7231 = vunpack.c.h.b16 %v6355
    %v7232 = vunpack.c.l.b16 %v6356
    %v7233 = vunpack.c.h.b16 %v6356
    %v7234 = vunpack.c.l.b16 %v6357
    %v7235 = vunpack.c.h.b16 %v6357
    %v7236 = vunpack.c.l.b16 %v6358
    %v7237 = vunpack.c.h.b16 %v6358
    %v7238 = vunpack.c.l.b16 %v6359
    %v7239 = vunpack.c.h.b16 %v6359
    %v7240 = vunpack.c.l.b16 %v6360
    %v7241 = vunpack.c.h.b16 %v6360
    %v7242 = vunpack.c.l.b16 %v6361
    %v7243 = vunpack.c.h.b16 %v6361
    %v7244 = vunpack.c.l.b16 %v6362
    %v7245 = vunpack.c.h.b16 %v6362
    %v7246 = vunpack.c.l.b16 %v6363
    %v7247 = vunpack.c.h.b16 %v6363
    %v7248 = vunpack.c.l.b16 %v6364
    %v7249 = vunpack.c.h.b16 %v6364
    %v7250 = vunpack.c.l.b16 %v6365
    %v7251 = vunpack.c.h.b16 %v6365
    %v7252 = vunpack.c.l.b16 %v6366
    %v7253 = vunpack.c.h.b16 %v6366
    %v7254 = vunpack.c.l.b16 %v6367
    %v7255 = vunpack.c.h.b16 %v6367
    %v7256 = vunpack.c.l.b16 %v6368
    %v7257 = vunpack.c.h.b16 %v6368
    %v7258 = vunpack.c.l.b16 %v6369
    %v7259 = vunpack.c.h.b16 %v6369
    %v7260 = vunpack.c.l.b16 %v6370
    %v7261 = vunpack.c.h.b16 %v6370
    %v7262 = vunpack.c.l.b16 %v6371
    %v7263 = vunpack.c.h.b16 %v6371
    %v7264 = vunpack.c.l.b16 %v6372
    %v7265 = vunpack.c.h.b16 %v6372
    %v7266 = vunpack.c.l.b16 %v6373
    %v7267 = vunpack.c.h.b16 %v6373
    %v7268 = vunpack.c.l.b16 %v6374
    %v7269 = vunpack.c.h.b16 %v6374
    %v7270 = vunpack.c.l.b16 %v6375
    %v7271 = vunpack.c.h.b16 %v6375
    %v7272 = vunpack.c.l.b16 %v6376
    %v7273 = vunpack.c.h.b16 %v6376
    %v7274 = vunpack.c.l.b16 %v6377
    %v7275 = vunpack.c.h.b16 %v6377
    %v7276 = vunpack.c.l.b16 %v6378
    %v7277 = vunpack.c.h.b16 %v6378
    %v7278 = vunpack.c.l.b16 %v6379
    %v7279 = vunpack.c.h.b16 %v6379
    %v7280 = vunpack.c.l.b16 %v6380
    %v7281 = vunpack.c.h.b16 %v6380
    %v7282 = vunpack.c.l.b16 %v6381
    %v7283 = vunpack.c.h.b16 %v6381
    %v7284 = vunpack.c.l.b16 %v6382
    %v7285 = vunpack.c.h.b16 %v6382
    %v7286 = vunpack.c.l.b16 %v6383
    %v7287 = vunpack.c.h.b16 %v6383
    %v7288 = vunpack.c.l.b16 %v6384
    %v7289 = vunpack.c.h.b16 %v6384
    %v7290 = vunpack.c.l.b16 %v6385
    %v7291 = vunpack.c.h.b16 %v6385
    %v7292 = vunpack.c.l.b16 %v6386
    %v7293 = vunpack.c.h.b16 %v6386
    %v7294 = vunpack.c.l.b16 %v6387
    %v7295 = vunpack.c.h.b16 %v6387
    %v7296 = vunpack.c.l.b16 %v6388
    %v7297 = vunpack.c.h.b16 %v6388
    %v7298 = vunpack.c.l.b16 %v6389
    %v7299 = vunpack.c.h.b16 %v6389
    %v7300 = vunpack.c.l.b16 %v6390
    %v7301 = vunpack.c.h.b16 %v6390
    %v7302 = vunpack.c.l.b16 %v6391
    %v7303 = vunpack.c.h.b16 %v6391
    %v7304 = vunpack.c.l.b16 %v6392
    %v7305 = vunpack.c.h.b16 %v6392
    %v7306 = vunpack.c.l.b16 %v6393
    %v7307 = vunpack.c.h.b16 %v6393
    %v7308 = vunpack.c.l.b16 %v6394
    %v7309 = vunpack.c.h.b16 %v6394
    %v7310 = vunpack.c.l.b16 %v6395
    %v7311 = vunpack.c.h.b16 %v6395
    %v7312 = vunpack.c.l.b16 %v6396
    %v7313 = vunpack.c.h.b16 %v6396
    %v7314 = vunpack.c.l.b16 %v6397
    %v7315 = vunpack.c.h.b16 %v6397
    %v7316 = vunpack.c.l.b16 %v6398
    %v7317 = vunpack.c.h.b16 %v6398
    %v7318 = vunpack.c.l.b16 %v6399
    %v7319 = vunpack.c.h.b16 %v6399
    %v7320 = vunpack.c.l.b16 %v6400
    %v7321 = vunpack.c.h.b16 %v6400
    %v7322 = vunpack.c.l.b16 %v6401
    %v7323 = vunpack.c.h.b16 %v6401
    %v7324 = vunpack.c.l.b16 %v6402
    %v7325 = vunpack.c.h.b16 %v6402
    %v7326 = vunpack.c.l.b16 %v6403
    %v7327 = vunpack.c.h.b16 %v6403
    %v7328 = vunpack.c.l.b16 %v6404
    %v7329 = vunpack.c.h.b16 %v6404
    %v7330 = vunpack.c.l.b16 %v6405
    %v7331 = vunpack.c.h.b16 %v6405
    %v7332 = vunpack.c.l.b16 %v6406
    %v7333 = vunpack.c.h.b16 %v6406
    %v7334 = vunpack.c.l.b16 %v6407
    %v7335 = vunpack.c.h.b16 %v6407
    %v7336 = vpack.c.b16 %v6772, %v6760
    %v7337 = vpack.c.b16 %v6773, %v6761
    %v7338 = vpack.c.b16 %v6774, %v6762
    %v7339 = vpack.c.b16 %v6775, %v6763
    %v7340 = vpack.c.b16 %v6776, %v6764
    %v7341 = vpack.c.b16 %v6777, %v6765
    %v7342 = vpack.c.b16 %v6778, %v6766
    %v7343 = vpack.c.b16 %v6779, %v6767
    %v7344 = vpack.c.b16 %v6780, %v6768
    %v7345 = vpack.c.b16 %v6781, %v6769
    %v7346 = vpack.c.b16 %v6782, %v6770
    %v7347 = vpack.c.b16 %v6783, %v6771
    %v7348 = vpack.c.b16 %v6796, %v6784
    %v7349 = vpack.c.b16 %v6797, %v6785
    %v7350 = vpack.c.b16 %v6798, %v6786
    %v7351 = vpack.c.b16 %v6799, %v6787
    %v7352 = vpack.c.b16 %v6800, %v6788
    %v7353 = vpack.c.b16 %v6801, %v6789
    %v7354 = vpack.c.b16 %v6802, %v6790
    %v7355 = vpack.c.b16 %v6803, %v6791
    %v7356 = vpack.c.b16 %v6804, %v6792
    %v7357 = vpack.c.b16 %v6805, %v6793
    %v7358 = vpack.c.b16 %v6806, %v6794
    %v7359 = vpack.c.b16 %v6807, %v6795
    %v7360 = vpack.c.b16 %v6820, %v6808
    %v7361 = vpack.c.b16 %v6821, %v6809
    %v7362 = vpack.c.b16 %v6822, %v6810
    %v7363 = vpack.c.b16 %v6823, %v6811
    %v7364 = vpack.c.b16 %v6824, %v6812
    %v7365 = vpack.c.b16 %v6825, %v6813
    %v7366 = vpack.c.b16 %v6826, %v6814
    %v7367 = vpack.c.b16 %v6827, %v6815
    %v7368 = vpack.c.b16 %v6828, %v6816
    %v7369 = vpack.c.b16 %v6829, %v6817
    %v7370 = vpack.c.b16 %v6830, %v6818
    %v7371 = vpack.c.b16 %v6831, %v6819
    %v7372 = vpack.c.b16 %v6844, %v6832
    %v7373 = vpack.c.b16 %v6845, %v6833
    %v7374 = vpack.c.b16 %v6846, %v6834
    %v7375 = vpack.c.b16 %v6847, %v6835
    %v7376 = vpack.c.b16 %v6848, %v6836
    %v7377 = vpack.c.b16 %v6849, %v6837
    %v7378 = vpack.c.b16 %v6850, %v6838
    %v7379 = vpack.c.b16 %v6851, %v6839
    %v7380 = vpack.c.b16 %v6852, %v6840
    %v7381 = vpack.c.b16 %v6853, %v6841
    %v7382 = vpack.c.b16 %v6854, %v6842
    %v7383 = vpack.c.b16 %v6855, %v6843
    %v7384 = vpack.c.b16 %v6868, %v6856
    %v7385 = vpack.c.b16 %v6869, %v6857
    %v7386 = vpack.c.b16 %v6870, %v6858
    %v7387 = vpack.c.b16 %v6871, %v6859
    %v7388 = vpack.c.b16 %v6872, %v6860
    %v7389 = vpack.c.b16 %v6873, %v6861
    %v7390 = vpack.c.b16 %v6874, %v6862
    %v7391 = vpack.c.b16 %v6875, %v6863
    %v7392 = vpack.c.b16 %v6876, %v6864
    %v7393 = vpack.c.b16 %v6877, %v6865
    %v7394 = vpack.c.b16 %v6878, %v6866
    %v7395 = vpack.c.b16 %v6879, %v6867
    %v7396 = vpack.c.b16 %v6892, %v6880
    %v7397 = vpack.c.b16 %v6893, %v6881
    %v7398 = vpack.c.b16 %v6894, %v6882
    %v7399 = vpack.c.b16 %v6895, %v6883
    %v7400 = vpack.c.b16 %v6896, %v6884
    %v7401 = vpack.c.b16 %v6897, %v6885
    %v7402 = vpack.c.b16 %v6898, %v6886
    %v7403 = vpack.c.b16 %v6899, %v6887
    %v7404 = vpack.c.b16 %v6900, %v6888
    %v7405 = vpack.c.b16 %v6901, %v6889
    %v7406 = vpack.c.b16 %v6902, %v6890
    %v7407 = vpack.c.b16 %v6903, %v6891
    %v7408 = vpack.c.b16 %v6916, %v6904
    %v7409 = vpack.c.b16 %v6917, %v6905
    %v7410 = vpack.c.b16 %v6918, %v6906
    %v7411 = vpack.c.b16 %v6919, %v6907
    %v7412 = vpack.c.b16 %v6920, %v6908
    %v7413 = vpack.c.b16 %v6921, %v6909
    %v7414 = vpack.c.b16 %v6922, %v6910
    %v7415 = vpack.c.b16 %v6923, %v6911
    %v7416 = vpack.c.b16 %v6924, %v6912
    %v7417 = vpack.c.b16 %v6925, %v6913
    %v7418 = vpack.c.b16 %v6926, %v6914
    %v7419 = vpack.c.b16 %v6927, %v6915
    %v7420 = vpack.c.b16 %v6940, %v6928
    %v7421 = vpack.c.b16 %v6941, %v6929
    %v7422 = vpack.c.b16 %v6942, %v6930
    %v7423 = vpack.c.b16 %v6943, %v6931
    %v7424 = vpack.c.b16 %v6944, %v6932
    %v7425 = vpack.c.b16 %v6945, %v6933
    %v7426 = vpack.c.b16 %v6946, %v6934
    %v7427 = vpack.c.b16 %v6947, %v6935
    %v7428 = vpack.c.b16 %v6948, %v6936
    %v7429 = vpack.c.b16 %v6949, %v6937
    %v7430 = vpack.c.b16 %v6950, %v6938
    %v7431 = vpack.c.b16 %v6951, %v6939
    %v7432 = vpack.c.b16 %v6964, %v6952
    %v7433 = vpack.c.b16 %v6965, %v6953
    %v7434 = vpack.c.b16 %v6966, %v6954
    %v7435 = vpack.c.b16 %v6967, %v6955
    %v7436 = vpack.c.b16 %v6968, %v6956
    %v7437 = vpack.c.b16 %v6969, %v6957
    %v7438 = vpack.c.b16 %v6970, %v6958
    %v7439 = vpack.c.b16 %v6971, %v6959
    %v7440 = vpack.c.b16 %v6972, %v6960
    %v7441 = vpack.c.b16 %v6973, %v6961
    %v7442 = vpack.c.b16 %v6974, %v6962
    %v7443 = vpack.c.b16 %v6975, %v6963
    %v7444 = vpack.c.b16 %v6988, %v6976
    %v7445 = vpack.c.b16 %v6989, %v6977
    %v7446 = vpack.c.b16 %v6990, %v6978
    %v7447 = vpack.c.b16 %v6991, %v6979
    %v7448 = vpack.c.b16 %v6992, %v6980
    %v7449 = vpack.c.b16 %v6993, %v6981
    %v7450 = vpack.c.b16 %v6994, %v6982
    %v7451 = vpack.c.b16 %v6995, %v6983
    %v7452 = vpack.c.b16 %v6996, %v6984
    %v7453 = vpack.c.b16 %v6997, %v6985
    %v7454 = vpack.c.b16 %v6998, %v6986
    %v7455 = vpack.c.b16 %v6999, %v6987
    %v7456 = vpack.c.b16 %v7012, %v7000
    %v7457 = vpack.c.b16 %v7013, %v7001
    %v7458 = vpack.c.b16 %v7014, %v7002
    %v7459 = vpack.c.b16 %v7015, %v7003
    %v7460 = vpack.c.b16 %v7016, %v7004
    %v7461 = vpack.c.b16 %v7017, %v7005
    %v7462 = vpack.c.b16 %v7018, %v7006
    %v7463 = vpack.c.b16 %v7019, %v7007
    %v7464 = vpack.c.b16 %v7020, %v7008
    %v7465 = vpack.c.b16 %v7021, %v7009
    %v7466 = vpack.c.b16 %v7022, %v7010
    %v7467 = vpack.c.b16 %v7023, %v7011
    %v7468 = vpack.c.b16 %v7036, %v7024
    %v7469 = vpack.c.b16 %v7037, %v7025
    %v7470 = vpack.c.b16 %v7038, %v7026
    %v7471 = vpack.c.b16 %v7039, %v7027
    %v7472 = vpack.c.b16 %v7040, %v7028
    %v7473 = vpack.c.b16 %v7041, %v7029
    %v7474 = vpack.c.b16 %v7042, %v7030
    %v7475 = vpack.c.b16 %v7043, %v7031
    %v7476 = vpack.c.b16 %v7044, %v7032
    %v7477 = vpack.c.b16 %v7045, %v7033
    %v7478 = vpack.c.b16 %v7046, %v7034
    %v7479 = vpack.c.b16 %v7047, %v7035
    %v7480 = vpack.c.b16 %v7060, %v7048
    %v7481 = vpack.c.b16 %v7061, %v7049
    %v7482 = vpack.c.b16 %v7062, %v7050
    %v7483 = vpack.c.b16 %v7063, %v7051
    %v7484 = vpack.c.b16 %v7064, %v7052
    %v7485 = vpack.c.b16 %v7065, %v7053
    %v7486 = vpack.c.b16 %v7066, %v7054
    %v7487 = vpack.c.b16 %v7067, %v7055
    %v7488 = vpack.c.b16 %v7068, %v7056
    %v7489 = vpack.c.b16 %v7069, %v7057
    %v7490 = vpack.c.b16 %v7070, %v7058
    %v7491 = vpack.c.b16 %v7071, %v7059
    %v7492 = vpack.c.b16 %v7084, %v7072
    %v7493 = vpack.c.b16 %v7085, %v7073
    %v7494 = vpack.c.b16 %v7086, %v7074
    %v7495 = vpack.c.b16 %v7087, %v7075
    %v7496 = vpack.c.b16 %v7088, %v7076
    %v7497 = vpack.c.b16 %v7089, %v7077
    %v7498 = vpack.c.b16 %v7090, %v7078
    %v7499 = vpack.c.b16 %v7091, %v7079
    %v7500 = vpack.c.b16 %v7092, %v7080
    %v7501 = vpack.c.b16 %v7093, %v7081
    %v7502 = vpack.c.b16 %v7094, %v7082
    %v7503 = vpack.c.b16 %v7095, %v7083
    %v7504 = vpack.c.b16 %v7108, %v7096
    %v7505 = vpack.c.b16 %v7109, %v7097
    %v7506 = vpack.c.b16 %v7110, %v7098
    %v7507 = vpack.c.b16 %v7111, %v7099
    %v7508 = vpack.c.b16 %v7112, %v7100
    %v7509 = vpack.c.b16 %v7113, %v7101
    %v7510 = vpack.c.b16 %v7114, %v7102
    %v7511 = vpack.c.b16 %v7115, %v7103
    %v7512 = vpack.c.b16 %v7116, %v7104
    %v7513 = vpack.c.b16 %v7117, %v7105
    %v7514 = vpack.c.b16 %v7118, %v7106
    %v7515 = vpack.c.b16 %v7119, %v7107
    %v7516 = vpack.c.b16 %v7132, %v7120
    %v7517 = vpack.c.b16 %v7133, %v7121
    %v7518 = vpack.c.b16 %v7134, %v7122
    %v7519 = vpack.c.b16 %v7135, %v7123
    %v7520 = vpack.c.b16 %v7136, %v7124
    %v7521 = vpack.c.b16 %v7137, %v7125
    %v7522 = vpack.c.b16 %v7138, %v7126
    %v7523 = vpack.c.b16 %v7139, %v7127
    %v7524 = vpack.c.b16 %v7140, %v7128
    %v7525 = vpack.c.b16 %v7141, %v7129
    %v7526 = vpack.c.b16 %v7142, %v7130
    %v7527 = vpack.c.b16 %v7143, %v7131
    %v7528 = vpack.c.b16 %v7156, %v7144
    %v7529 = vpack.c.b16 %v7157, %v7145
    %v7530 = vpack.c.b16 %v7158, %v7146
    %v7531 = vpack.c.b16 %v7159, %v7147
    %v7532 = vpack.c.b16 %v7160, %v7148
    %v7533 = vpack.c.b16 %v7161, %v7149
    %v7534 = vpack.c.b16 %v7162, %v7150
    %v7535 = vpack.c.b16 %v7163, %v7151
    %v7536 = vpack.c.b16 %v7164, %v7152
    %v7537 = vpack.c.b16 %v7165, %v7153
    %v7538 = vpack.c.b16 %v7166, %v7154
    %v7539 = vpack.c.b16 %v7167, %v7155
    %v7540 = vpack.c.b16 %v7180, %v7168
    %v7541 = vpack.c.b16 %v7181, %v7169
    %v7542 = vpack.c.b16 %v7182, %v7170
    %v7543 = vpack.c.b16 %v7183, %v7171
    %v7544 = vpack.c.b16 %v7184, %v7172
    %v7545 = vpack.c.b16 %v7185, %v7173
    %v7546 = vpack.c.b16 %v7186, %v7174
    %v7547 = vpack.c.b16 %v7187, %v7175
    %v7548 = vpack.c.b16 %v7188, %v7176
    %v7549 = vpack.c.b16 %v7189, %v7177
    %v7550 = vpack.c.b16 %v7190, %v7178
    %v7551 = vpack.c.b16 %v7191, %v7179
    %v7552 = vpack.c.b16 %v7204, %v7192
    %v7553 = vpack.c.b16 %v7205, %v7193
    %v7554 = vpack.c.b16 %v7206, %v7194
    %v7555 = vpack.c.b16 %v7207, %v7195
    %v7556 = vpack.c.b16 %v7208, %v7196
    %v7557 = vpack.c.b16 %v7209, %v7197
    %v7558 = vpack.c.b16 %v7210, %v7198
    %v7559 = vpack.c.b16 %v7211, %v7199
    %v7560 = vpack.c.b16 %v7212, %v7200
    %v7561 = vpack.c.b16 %v7213, %v7201
    %v7562 = vpack.c.b16 %v7214, %v7202
    %v7563 = vpack.c.b16 %v7215, %v7203
    %v7564 = vpack.c.b16 %v7228, %v7216
    %v7565 = vpack.c.b16 %v7229, %v7217
    %v7566 = vpack.c.b16 %v7230, %v7218
    %v7567 = vpack.c.b16 %v7231, %v7219
    %v7568 = vpack.c.b16 %v7232, %v7220
    %v7569 = vpack.c.b16 %v7233, %v7221
    %v7570 = vpack.c.b16 %v7234, %v7222
    %v7571 = vpack.c.b16 %v7235, %v7223
    %v7572 = vpack.c.b16 %v7236, %v7224
    %v7573 = vpack.c.b16 %v7237, %v7225
    %v7574 = vpack.c.b16 %v7238, %v7226
    %v7575 = vpack.c.b16 %v7239, %v7227
    %v7576 = vpack.c.b16 %v7252, %v7240
    %v7577 = vpack.c.b16 %v7253, %v7241
    %v7578 = vpack.c.b16 %v7254, %v7242
    %v7579 = vpack.c.b16 %v7255, %v7243
    %v7580 = vpack.c.b16 %v7256, %v7244
    %v7581 = vpack.c.b16 %v7257, %v7245
    %v7582 = vpack.c.b16 %v7258, %v7246
    %v7583 = vpack.c.b16 %v7259, %v7247
    %v7584 = vpack.c.b16 %v7260, %v7248
    %v7585 = vpack.c.b16 %v7261, %v7249
    %v7586 = vpack.c.b16 %v7262, %v7250
    %v7587 = vpack.c.b16 %v7263, %v7251
    %v7588 = vpack.c.b16 %v7276, %v7264
    %v7589 = vpack.c.b16 %v7277, %v7265
    %v7590 = vpack.c.b16 %v7278, %v7266
    %v7591 = vpack.c.b16 %v7279, %v7267
    %v7592 = vpack.c.b16 %v7280, %v7268
    %v7593 = vpack.c.b16 %v7281, %v7269
    %v7594 = vpack.c.b16 %v7282, %v7270
    %v7595 = vpack.c.b16 %v7283, %v7271
    %v7596 = vpack.c.b16 %v7284, %v7272
    %v7597 = vpack.c.b16 %v7285, %v7273
    %v7598 = vpack.c.b16 %v7286, %v7274
    %v7599 = vpack.c.b16 %v7287, %v7275
    %v7600 = vpack.c.b16 %v7300, %v7288
    %v7601 = vpack.c.b16 %v7301, %v7289
    %v7602 = vpack.c.b16 %v7302, %v7290
    %v7603 = vpack.c.b16 %v7303, %v7291
    %v7604 = vpack.c.b16 %v7304, %v7292
    %v7605 = vpack.c.b16 %v7305, %v7293
    %v7606 = vpack.c.b16 %v7306, %v7294
    %v7607 = vpack.c.b16 %v7307, %v7295
    %v7608 = vpack.c.b16 %v7308, %v7296
    %v7609 = vpack.c.b16 %v7309, %v7297
    %v7610 = vpack.c.b16 %v7310, %v7298
    %v7611 = vpack.c.b16 %v7311, %v7299
    %v7612 = vpack.c.b16 %v7324, %v7312
    %v7613 = vpack.c.b16 %v7325, %v7313
    %v7614 = vpack.c.b16 %v7326, %v7314
    %v7615 = vpack.c.b16 %v7327, %v7315
    %v7616 = vpack.c.b16 %v7328, %v7316
    %v7617 = vpack.c.b16 %v7329, %v7317
    %v7618 = vpack.c.b16 %v7330, %v7318
    %v7619 = vpack.c.b16 %v7331, %v7319
    %v7620 = vpack.c.b16 %v7332, %v7320
    %v7621 = vpack.c.b16 %v7333, %v7321
    %v7622 = vpack.c.b16 %v7334, %v7322
    %v7623 = vpack.c.b16 %v7335, %v7323
    %7912 = vmatprep.subr.bf16.mxu0 %v7337
    %7913 = vmatpush1.bf16.msra.mxu0 %v7336
    %7914 = vmatprep.subr.bf16.mxu0 %v7349
    %7915 = vmatpush1.bf16.msra.mxu0 %v7348
    %7916 = vmatprep.subr.bf16.mxu0 %v7361
    %7917 = vmatpush1.bf16.msra.mxu0 %v7360
    %7918 = vmatprep.subr.bf16.mxu0 %v7373
    %7919 = vmatpush1.bf16.msra.mxu0 %v7372
    %7920 = vmatprep.subr.bf16.mxu0 %v7385
    %7921 = vmatpush1.bf16.msra.mxu0 %v7384
    %7922 = vmatprep.subr.bf16.mxu0 %v7397
    %7923 = vmatpush1.bf16.msra.mxu0 %v7396
    %7924 = vmatprep.subr.bf16.mxu0 %v7409
    %7925 = vmatpush1.bf16.msra.mxu0 %v7408
    %7926 = vmatprep.subr.bf16.mxu0 %v7421
    %7927 = vmatpush1.bf16.msra.mxu0 %v7420
    %7928 = vmatprep.subr.bf16.mxu0 %v7433
    %7929 = vmatpush1.bf16.msra.mxu0 %v7432
    %7930 = vmatprep.subr.bf16.mxu0 %v7445
    %7931 = vmatpush1.bf16.msra.mxu0 %v7444
    %7932 = vmatprep.subr.bf16.mxu0 %v7457
    %7933 = vmatpush1.bf16.msra.mxu0 %v7456
    %7934 = vmatprep.subr.bf16.mxu0 %v7469
    %7935 = vmatpush1.bf16.msra.mxu0 %v7468
    %7936 = vmatprep.subr.bf16.mxu0 %v7481
    %7937 = vmatpush1.bf16.msra.mxu0 %v7480
    %7938 = vmatprep.subr.bf16.mxu0 %v7493
    %7939 = vmatpush1.bf16.msra.mxu0 %v7492
    %7940 = vmatprep.subr.bf16.mxu0 %v7505
    %7941 = vmatpush1.bf16.msra.mxu0 %v7504
    %7942 = vmatprep.subr.bf16.mxu0 %v7517
    %7943 = vmatpush1.bf16.msra.mxu0 %v7516
    %7944 = vmatprep.mubr.bf16.mxu0 %v6115
    %7945 = vmatmul.mubr.bf16.gmra.mrb[0].mxu0 %v6114
    %v7946 = vpop.f32.mrb[0].mxu0
    %v7947 = vadd.f32 %v6415, %v7946
    %v7948 = vpop.f32.mrb[0].mxu0
    %v7949 = vadd.f32 %v6419, %v7948
    %v7950 = vpop.f32.mrb[0].mxu0
    %v7951 = vadd.f32 %v6415, %v7950
    %v7952 = vpop.f32.mrb[0].mxu0
    %v7953 = vadd.f32 %v6419, %v7952
    %7954 = vmatprep.mubr.bf16.mxu0 %v6118
    %7955 = vmatmul.mubr.bf16.gmra.mrb[0].mxu0 %v6117
    %v7956 = vpop.f32.mrb[0].mxu0
    %v7957 = vadd.f32 %v6415, %v7956
    %v7958 = vpop.f32.mrb[0].mxu0
    %v7959 = vadd.f32 %v6419, %v7958
    %v7960 = vpop.f32.mrb[0].mxu0
    %v7961 = vadd.f32 %v6415, %v7960
    %v7962 = vpop.f32.mrb[0].mxu0
    %v7963 = vadd.f32 %v6419, %v7962
    %7964 = vdwg.mxu0
    %7965 = vmatprep.subr.bf16.mxu0 %v7529
    %7966 = vmatpush1.bf16.msra.mxu0 %v7528
    %7967 = vmatprep.subr.bf16.mxu0 %v7541
    %7968 = vmatpush1.bf16.msra.mxu0 %v7540
    %7969 = vmatprep.subr.bf16.mxu0 %v7553
    %7970 = vmatpush1.bf16.msra.mxu0 %v7552
    %7971 = vmatprep.subr.bf16.mxu0 %v7565
    %7972 = vmatpush1.bf16.msra.mxu0 %v7564
    %7973 = vmatprep.subr.bf16.mxu0 %v7577
    %7974 = vmatpush1.bf16.msra.mxu0 %v7576
    %7975 = vmatprep.subr.bf16.mxu0 %v7589
    %7976 = vmatpush1.bf16.msra.mxu0 %v7588
    %7977 = vmatprep.subr.bf16.mxu0 %v7601
    %7978 = vmatpush1.bf16.msra.mxu0 %v7600
    %7979 = vmatprep.subr.bf16.mxu0 %v7613
    %7980 = vmatpush1.bf16.msra.mxu0 %v7612
    %7981 = vmatprep.subr.bf16.mxu0 0
    %7982 = vmatpush1.bf16.msra.mxu0 0
    %7983 = vmatprep.subr.bf16.mxu0 0
    %7984 = vmatpush1.bf16.msra.mxu0 0
    %7985 = vmatprep.subr.bf16.mxu0 0
    %7986 = vmatpush1.bf16.msra.mxu0 0
    %7987 = vmatprep.subr.bf16.mxu0 0
    %7988 = vmatpush1.bf16.msra.mxu0 0
    %7989 = vmatprep.subr.bf16.mxu0 0
    %7990 = vmatpush1.bf16.msra.mxu0 0
    %7991 = vmatprep.subr.bf16.mxu0 0
    %7992 = vmatpush1.bf16.msra.mxu0 0
    %7993 = vmatprep.subr.bf16.mxu0 0
    %7994 = vmatpush1.bf16.msra.mxu0 0
    %7995 = vmatprep.subr.bf16.mxu0 0
    %7996 = vmatpush1.bf16.msra.mxu0 0
    %7997 = vmatprep.mubr.bf16.mxu0 0
    %7998 = vmatmul.mubr.bf16.gmra.mrb[0].mxu0 %v6116
    %v7999 = vpop.f32.mrb[0].mxu0
    %v8000 = vadd.f32 %v7947, %v7999
    %v8001 = vpop.f32.mrb[0].mxu0
    %v8002 = vadd.f32 %v7949, %v8001
    %v8003 = vpop.f32.mrb[0].mxu0
    %v8004 = vadd.f32 %v7951, %v8003
    %v8005 = vpop.f32.mrb[0].mxu0
    %v8006 = vadd.f32 %v7953, %v8005
    %8007 = vmatprep.mubr.bf16.mxu0 0
    %8008 = vmatmul.mubr.bf16.gmra.mrb[0].mxu0 %v6119
    %v8009 = vpop.f32.mrb[0].mxu0
    %v8010 = vadd.f32 %v7957, %v8009
    %v8011 = vpop.f32.mrb[0].mxu0
    %v8012 = vadd.f32 %v7959, %v8011
    %v8013 = vpop.f32.mrb[0].mxu0
    %v8014 = vadd.f32 %v7961, %v8013
    %v8015 = vpop.f32.mrb[0].mxu0
    %v8016 = vadd.f32 %v7963, %v8015
    %8017 = vdwg.mxu0
    %8018 = vmatprep.subr.bf16.mxu0 %v7339
    %8019 = vmatpush1.bf16.msra.mxu0 %v7338
    %8020 = vmatprep.subr.bf16.mxu0 %v7351
    %8021 = vmatpush1.bf16.msra.mxu0 %v7350
    %8022 = vmatprep.subr.bf16.mxu0 %v7363
    %8023 = vmatpush1.bf16.msra.mxu0 %v7362
    %8024 = vmatprep.subr.bf16.mxu0 %v7375
    %8025 = vmatpush1.bf16.msra.mxu0 %v7374
    %8026 = vmatprep.subr.bf16.mxu0 %v7387
    %8027 = vmatpush1.bf16.msra.mxu0 %v7386
    %8028 = vmatprep.subr.bf16.mxu0 %v7399
    %8029 = vmatpush1.bf16.msra.mxu0 %v7398
    %8030 = vmatprep.subr.bf16.mxu0 %v7411
    %8031 = vmatpush1.bf16.msra.mxu0 %v7410
    %8032 = vmatprep.subr.bf16.mxu0 %v7423
    %8033 = vmatpush1.bf16.msra.mxu0 %v7422
    %8034 = vmatprep.subr.bf16.mxu0 %v7435
    %8035 = vmatpush1.bf16.msra.mxu0 %v7434
    %8036 = vmatprep.subr.bf16.mxu0 %v7447
    %8037 = vmatpush1.bf16.msra.mxu0 %v7446
    %8038 = vmatprep.subr.bf16.mxu0 %v7459
    %8039 = vmatpush1.bf16.msra.mxu0 %v7458
    %8040 = vmatprep.subr.bf16.mxu0 %v7471
    %8041 = vmatpush1.bf16.msra.mxu0 %v7470
    %8042 = vmatprep.subr.bf16.mxu0 %v7483
    %8043 = vmatpush1.bf16.msra.mxu0 %v7482
    %8044 = vmatprep.subr.bf16.mxu0 %v7495
    %8045 = vmatpush1.bf16.msra.mxu0 %v7494
    %8046 = vmatprep.subr.bf16.mxu0 %v7507
    %8047 = vmatpush1.bf16.msra.mxu0 %v7506
    %8048 = vmatprep.subr.bf16.mxu0 %v7519
    %8049 = vmatpush1.bf16.msra.mxu0 %v7518
    %8050 = vmatprep.mubr.bf16.mxu0 %v6115
    %8051 = vmatmul.mubr.bf16.gmra.mrb[0].mxu0 %v6114
    %v8052 = vpop.f32.mrb[0].mxu0
    %v8053 = vadd.f32 %v6423, %v8052
    %v8054 = vpop.f32.mrb[0].mxu0
    %v8055 = vadd.f32 %v6427, %v8054
    %v8056 = vpop.f32.mrb[0].mxu0
    %v8057 = vadd.f32 %v6423, %v8056
    %v8058 = vpop.f32.mrb[0].mxu0
    %v8059 = vadd.f32 %v6427, %v8058
    %8060 = vmatprep.mubr.bf16.mxu0 %v6118
    %8061 = vmatmul.mubr.bf16.gmra.mrb[0].mxu0 %v6117
    %v8062 = vpop.f32.mrb[0].mxu0
    %v8063 = vadd.f32 %v6423, %v8062
    %v8064 = vpop.f32.mrb[0].mxu0
    %v8065 = vadd.f32 %v6427, %v8064
    %v8066 = vpop.f32.mrb[0].mxu0
    %v8067 = vadd.f32 %v6423, %v8066
    %v8068 = vpop.f32.mrb[0].mxu0
    %v8069 = vadd.f32 %v6427, %v8068
    %8070 = vdwg.mxu0
    %8071 = vmatprep.subr.bf16.mxu0 %v7531
    %8072 = vmatpush1.bf16.msra.mxu0 %v7530
    %8073 = vmatprep.subr.bf16.mxu0 %v7543
    %8074 = vmatpush1.bf16.msra.mxu0 %v7542
    %8075 = vmatprep.subr.bf16.mxu0 %v7555
    %8076 = vmatpush1.bf16.msra.mxu0 %v7554
    %8077 = vmatprep.subr.bf16.mxu0 %v7567
    %8078 = vmatpush1.bf16.msra.mxu0 %v7566
    %8079 = vmatprep.subr.bf16.mxu0 %v7579
    %8080 = vmatpush1.bf16.msra.mxu0 %v7578
    %8081 = vmatprep.subr.bf16.mxu0 %v7591
    %8082 = vmatpush1.bf16.msra.mxu0 %v7590
    %8083 = vmatprep.subr.bf16.mxu0 %v7603
    %8084 = vmatpush1.bf16.msra.mxu0 %v7602
    %8085 = vmatprep.subr.bf16.mxu0 %v7615
    %8086 = vmatpush1.bf16.msra.mxu0 %v7614
    %8087 = vmatprep.subr.bf16.mxu0 0
    %8088 = vmatpush1.bf16.msra.mxu0 0
    %8089 = vmatprep.subr.bf16.mxu0 0
    %8090 = vmatpush1.bf16.msra.mxu0 0
    %8091 = vmatprep.subr.bf16.mxu0 0
    %8092 = vmatpush1.bf16.msra.mxu0 0
    %8093 = vmatprep.subr.bf16.mxu0 0
    %8094 = vmatpush1.bf16.msra.mxu0 0
    %8095 = vmatprep.subr.bf16.mxu0 0
    %8096 = vmatpush1.bf16.msra.mxu0 0
    %8097 = vmatprep.subr.bf16.mxu0 0
    %8098 = vmatpush1.bf16.msra.mxu0 0
    %8099 = vmatprep.subr.bf16.mxu0 0
    %8100 = vmatpush1.bf16.msra.mxu0 0
    %8101 = vmatprep.subr.bf16.mxu0 0
    %8102 = vmatpush1.bf16.msra.mxu0 0
    %8103 = vmatprep.mubr.bf16.mxu0 0
    %8104 = vmatmul.mubr.bf16.gmra.mrb[0].mxu0 %v6116
    %v8105 = vpop.f32.mrb[0].mxu0
    %v8106 = vadd.f32 %v8053, %v8105
    %v8107 = vpop.f32.mrb[0].mxu0
    %v8108 = vadd.f32 %v8055, %v8107
    %v8109 = vpop.f32.mrb[0].mxu0
    %v8110 = vadd.f32 %v8057, %v8109
    %v8111 = vpop.f32.mrb[0].mxu0
    %v8112 = vadd.f32 %v8059, %v8111
    %8113 = vmatprep.mubr.bf16.mxu0 0
    %8114 = vmatmul.mubr.bf16.gmra.mrb[0].mxu0 %v6119
    %v8115 = vpop.f32.mrb[0].mxu0
    %v8116 = vadd.f32 %v8063, %v8115
    %v8117 = vpop.f32.mrb[0].mxu0
    %v8118 = vadd.f32 %v8065, %v8117
    %v8119 = vpop.f32.mrb[0].mxu0
    %v8120 = vadd.f32 %v8067, %v8119
    %v8121 = vpop.f32.mrb[0].mxu0
    %v8122 = vadd.f32 %v8069, %v8121
    %8123 = vdwg.mxu0
    %8124 = vmatprep.subr.bf16.mxu0 %v7341
    %8125 = vmatpush1.bf16.msra.mxu0 %v7340
    %8126 = vmatprep.subr.bf16.mxu0 %v7353
    %8127 = vmatpush1.bf16.msra.mxu0 %v7352
    %8128 = vmatprep.subr.bf16.mxu0 %v7365
    %8129 = vmatpush1.bf16.msra.mxu0 %v7364
    %8130 = vmatprep.subr.bf16.mxu0 %v7377
    %8131 = vmatpush1.bf16.msra.mxu0 %v7376
    %8132 = vmatprep.subr.bf16.mxu0 %v7389
    %8133 = vmatpush1.bf16.msra.mxu0 %v7388
    %8134 = vmatprep.subr.bf16.mxu0 %v7401
    %8135 = vmatpush1.bf16.msra.mxu0 %v7400
    %8136 = vmatprep.subr.bf16.mxu0 %v7413
    %8137 = vmatpush1.bf16.msra.mxu0 %v7412
    %8138 = vmatprep.subr.bf16.mxu0 %v7425
    %8139 = vmatpush1.bf16.msra.mxu0 %v7424
    %8140 = vmatprep.subr.bf16.mxu0 %v7437
    %8141 = vmatpush1.bf16.msra.mxu0 %v7436
    %8142 = vmatprep.subr.bf16.mxu0 %v7449
    %8143 = vmatpush1.bf16.msra.mxu0 %v7448
    %8144 = vmatprep.subr.bf16.mxu0 %v7461
    %8145 = vmatpush1.bf16.msra.mxu0 %v7460
    %8146 = vmatprep.subr.bf16.mxu0 %v7473
    %8147 = vmatpush1.bf16.msra.mxu0 %v7472
    %8148 = vmatprep.subr.bf16.mxu0 %v7485
    %8149 = vmatpush1.bf16.msra.mxu0 %v7484
    %8150 = vmatprep.subr.bf16.mxu0 %v7497
    %8151 = vmatpush1.bf16.msra.mxu0 %v7496
    %8152 = vmatprep.subr.bf16.mxu0 %v7509
    %8153 = vmatpush1.bf16.msra.mxu0 %v7508
    %8154 = vmatprep.subr.bf16.mxu0 %v7521
    %8155 = vmatpush1.bf16.msra.mxu0 %v7520
    %8156 = vmatprep.mubr.bf16.mxu0 %v6115
    %8157 = vmatmul.mubr.bf16.gmra.mrb[0].mxu0 %v6114
    %v8158 = vpop.f32.mrb[0].mxu0
    %v8159 = vadd.f32 %v6431, %v8158
    %v8160 = vpop.f32.mrb[0].mxu0
    %v8161 = vadd.f32 %v6435, %v8160
    %v8162 = vpop.f32.mrb[0].mxu0
    %v8163 = vadd.f32 %v6431, %v8162
    %v8164 = vpop.f32.mrb[0].mxu0
    %v8165 = vadd.f32 %v6435, %v8164
    %8166 = vmatprep.mubr.bf16.mxu0 %v6118
    %8167 = vmatmul.mubr.bf16.gmra.mrb[0].mxu0 %v6117
    %v8168 = vpop.f32.mrb[0].mxu0
    %v8169 = vadd.f32 %v6431, %v8168
    %v8170 = vpop.f32.mrb[0].mxu0
    %v8171 = vadd.f32 %v6435, %v8170
    %v8172 = vpop.f32.mrb[0].mxu0
    %v8173 = vadd.f32 %v6431, %v8172
    %v8174 = vpop.f32.mrb[0].mxu0
    %v8175 = vadd.f32 %v6435, %v8174
    %8176 = vdwg.mxu0
    %8177 = vmatprep.subr.bf16.mxu0 %v7533
    %8178 = vmatpush1.bf16.msra.mxu0 %v7532
    %8179 = vmatprep.subr.bf16.mxu0 %v7545
    %8180 = vmatpush1.bf16.msra.mxu0 %v7544
    %8181 = vmatprep.subr.bf16.mxu0 %v7557
    %8182 = vmatpush1.bf16.msra.mxu0 %v7556
    %8183 = vmatprep.subr.bf16.mxu0 %v7569
    %8184 = vmatpush1.bf16.msra.mxu0 %v7568
    %8185 = vmatprep.subr.bf16.mxu0 %v7581
    %8186 = vmatpush1.bf16.msra.mxu0 %v7580
    %8187 = vmatprep.subr.bf16.mxu0 %v7593
    %8188 = vmatpush1.bf16.msra.mxu0 %v7592
    %8189 = vmatprep.subr.bf16.mxu0 %v7605
    %8190 = vmatpush1.bf16.msra.mxu0 %v7604
    %8191 = vmatprep.subr.bf16.mxu0 %v7617
    %8192 = vmatpush1.bf16.msra.mxu0 %v7616
    %8193 = vmatprep.subr.bf16.mxu0 0
    %8194 = vmatpush1.bf16.msra.mxu0 0
    %8195 = vmatprep.subr.bf16.mxu0 0
    %8196 = vmatpush1.bf16.msra.mxu0 0
    %8197 = vmatprep.subr.bf16.mxu0 0
    %8198 = vmatpush1.bf16.msra.mxu0 0
    %8199 = vmatprep.subr.bf16.mxu0 0
    %8200 = vmatpush1.bf16.msra.mxu0 0
    %8201 = vmatprep.subr.bf16.mxu0 0
    %8202 = vmatpush1.bf16.msra.mxu0 0
    %8203 = vmatprep.subr.bf16.mxu0 0
    %8204 = vmatpush1.bf16.msra.mxu0 0
    %8205 = vmatprep.subr.bf16.mxu0 0
    %8206 = vmatpush1.bf16.msra.mxu0 0
    %8207 = vmatprep.subr.bf16.mxu0 0
    %8208 = vmatpush1.bf16.msra.mxu0 0
    %8209 = vmatprep.mubr.bf16.mxu0 0
    %8210 = vmatmul.mubr.bf16.gmra.mrb[0].mxu0 %v6116
    %v8211 = vpop.f32.mrb[0].mxu0
    %v8212 = vadd.f32 %v8159, %v8211
    %v8213 = vpop.f32.mrb[0].mxu0
    %v8214 = vadd.f32 %v8161, %v8213
    %v8215 = vpop.f32.mrb[0].mxu0
    %v8216 = vadd.f32 %v8163, %v8215
    %v8217 = vpop.f32.mrb[0].mxu0
    %v8218 = vadd.f32 %v8165, %v8217
    %8219 = vmatprep.mubr.bf16.mxu0 0
    %8220 = vmatmul.mubr.bf16.gmra.mrb[0].mxu0 %v6119
    %v8221 = vpop.f32.mrb[0].mxu0
    %v8222 = vadd.f32 %v8169, %v8221
    %v8223 = vpop.f32.mrb[0].mxu0
    %v8224 = vadd.f32 %v8171, %v8223
    %v8225 = vpop.f32.mrb[0].mxu0
    %v8226 = vadd.f32 %v8173, %v8225
    %v8227 = vpop.f32.mrb[0].mxu0
    %v8228 = vadd.f32 %v8175, %v8227
    %8229 = vdwg.mxu0
    %8230 = vmatprep.subr.bf16.mxu0 %v7343
    %8231 = vmatpush1.bf16.msra.mxu0 %v7342
    %8232 = vmatprep.subr.bf16.mxu0 %v7355
    %8233 = vmatpush1.bf16.msra.mxu0 %v7354
    %8234 = vmatprep.subr.bf16.mxu0 %v7367
    %8235 = vmatpush1.bf16.msra.mxu0 %v7366
    %8236 = vmatprep.subr.bf16.mxu0 %v7379
    %8237 = vmatpush1.bf16.msra.mxu0 %v7378
    %8238 = vmatprep.subr.bf16.mxu0 %v7391
    %8239 = vmatpush1.bf16.msra.mxu0 %v7390
    %8240 = vmatprep.subr.bf16.mxu0 %v7403
    %8241 = vmatpush1.bf16.msra.mxu0 %v7402
    %8242 = vmatprep.subr.bf16.mxu0 %v7415
    %8243 = vmatpush1.bf16.msra.mxu0 %v7414
    %8244 = vmatprep.subr.bf16.mxu0 %v7427
    %8245 = vmatpush1.bf16.msra.mxu0 %v7426
    %8246 = vmatprep.subr.bf16.mxu0 %v7439
    %8247 = vmatpush1.bf16.msra.mxu0 %v7438
    %8248 = vmatprep.subr.bf16.mxu0 %v7451
    %8249 = vmatpush1.bf16.msra.mxu0 %v7450
    %8250 = vmatprep.subr.bf16.mxu0 %v7463
    %8251 = vmatpush1.bf16.msra.mxu0 %v7462
    %8252 = vmatprep.subr.bf16.mxu0 %v7475
    %8253 = vmatpush1.bf16.msra.mxu0 %v7474
    %8254 = vmatprep.subr.bf16.mxu0 %v7487
    %8255 = vmatpush1.bf16.msra.mxu0 %v7486
    %8256 = vmatprep.subr.bf16.mxu0 %v7499
    %8257 = vmatpush1.bf16.msra.mxu0 %v7498
    %8258 = vmatprep.subr.bf16.mxu0 %v7511
    %8259 = vmatpush1.bf16.msra.mxu0 %v7510
    %8260 = vmatprep.subr.bf16.mxu0 %v7523
    %8261 = vmatpush1.bf16.msra.mxu0 %v7522
    %8262 = vmatprep.mubr.bf16.mxu0 %v6115
    %8263 = vmatmul.mubr.bf16.gmra.mrb[0].mxu0 %v6114
    %v8264 = vpop.f32.mrb[0].mxu0
    %v8265 = vadd.f32 %v6439, %v8264
    %v8266 = vpop.f32.mrb[0].mxu0
    %v8267 = vadd.f32 %v6443, %v8266
    %v8268 = vpop.f32.mrb[0].mxu0
    %v8269 = vadd.f32 %v6439, %v8268
    %v8270 = vpop.f32.mrb[0].mxu0
    %v8271 = vadd.f32 %v6443, %v8270
    %8272 = vmatprep.mubr.bf16.mxu0 %v6118
    %8273 = vmatmul.mubr.bf16.gmra.mrb[0].mxu0 %v6117
    %v8274 = vpop.f32.mrb[0].mxu0
    %v8275 = vadd.f32 %v6439, %v8274
    %v8276 = vpop.f32.mrb[0].mxu0
    %v8277 = vadd.f32 %v6443, %v8276
    %v8278 = vpop.f32.mrb[0].mxu0
    %v8279 = vadd.f32 %v6439, %v8278
    %v8280 = vpop.f32.mrb[0].mxu0
    %v8281 = vadd.f32 %v6443, %v8280
    %8282 = vdwg.mxu0
    %8283 = vmatprep.subr.bf16.mxu0 %v7535
    %8284 = vmatpush1.bf16.msra.mxu0 %v7534
    %8285 = vmatprep.subr.bf16.mxu0 %v7547
    %8286 = vmatpush1.bf16.msra.mxu0 %v7546
    %8287 = vmatprep.subr.bf16.mxu0 %v7559
    %8288 = vmatpush1.bf16.msra.mxu0 %v7558
    %8289 = vmatprep.subr.bf16.mxu0 %v7571
    %8290 = vmatpush1.bf16.msra.mxu0 %v7570
    %8291 = vmatprep.subr.bf16.mxu0 %v7583
    %8292 = vmatpush1.bf16.msra.mxu0 %v7582
    %8293 = vmatprep.subr.bf16.mxu0 %v7595
    %8294 = vmatpush1.bf16.msra.mxu0 %v7594
    %8295 = vmatprep.subr.bf16.mxu0 %v7607
    %8296 = vmatpush1.bf16.msra.mxu0 %v7606
    %8297 = vmatprep.subr.bf16.mxu0 %v7619
    %8298 = vmatpush1.bf16.msra.mxu0 %v7618
    %8299 = vmatprep.subr.bf16.mxu0 0
    %8300 = vmatpush1.bf16.msra.mxu0 0
    %8301 = vmatprep.subr.bf16.mxu0 0
    %8302 = vmatpush1.bf16.msra.mxu0 0
    %8303 = vmatprep.subr.bf16.mxu0 0
    %8304 = vmatpush1.bf16.msra.mxu0 0
    %8305 = vmatprep.subr.bf16.mxu0 0
    %8306 = vmatpush1.bf16.msra.mxu0 0
    %8307 = vmatprep.subr.bf16.mxu0 0
    %8308 = vmatpush1.bf16.msra.mxu0 0
    %8309 = vmatprep.subr.bf16.mxu0 0
    %8310 = vmatpush1.bf16.msra.mxu0 0
    %8311 = vmatprep.subr.bf16.mxu0 0
    %8312 = vmatpush1.bf16.msra.mxu0 0
    %8313 = vmatprep.subr.bf16.mxu0 0
    %8314 = vmatpush1.bf16.msra.mxu0 0
    %8315 = vmatprep.mubr.bf16.mxu0 0
    %8316 = vmatmul.mubr.bf16.gmra.mrb[0].mxu0 %v6116
    %v8317 = vpop.f32.mrb[0].mxu0
    %v8318 = vadd.f32 %v8265, %v8317
    %v8319 = vpop.f32.mrb[0].mxu0
    %v8320 = vadd.f32 %v8267, %v8319
    %v8321 = vpop.f32.mrb[0].mxu0
    %v8322 = vadd.f32 %v8269, %v8321
    %v8323 = vpop.f32.mrb[0].mxu0
    %v8324 = vadd.f32 %v8271, %v8323
    %8325 = vmatprep.mubr.bf16.mxu0 0
    %8326 = vmatmul.mubr.bf16.gmra.mrb[0].mxu0 %v6119
    %v8327 = vpop.f32.mrb[0].mxu0
    %v8328 = vadd.f32 %v8275, %v8327
    %v8329 = vpop.f32.mrb[0].mxu0
    %v8330 = vadd.f32 %v8277, %v8329
    %v8331 = vpop.f32.mrb[0].mxu0
    %v8332 = vadd.f32 %v8279, %v8331
    %v8333 = vpop.f32.mrb[0].mxu0
    %v8334 = vadd.f32 %v8281, %v8333
    %8335 = vdwg.mxu0
    %8336 = vmatprep.subr.bf16.mxu0 %v7345
    %8337 = vmatpush1.bf16.msra.mxu0 %v7344
    %8338 = vmatprep.subr.bf16.mxu0 %v7357
    %8339 = vmatpush1.bf16.msra.mxu0 %v7356
    %8340 = vmatprep.subr.bf16.mxu0 %v7369
    %8341 = vmatpush1.bf16.msra.mxu0 %v7368
    %8342 = vmatprep.subr.bf16.mxu0 %v7381
    %8343 = vmatpush1.bf16.msra.mxu0 %v7380
    %8344 = vmatprep.subr.bf16.mxu0 %v7393
    %8345 = vmatpush1.bf16.msra.mxu0 %v7392
    %8346 = vmatprep.subr.bf16.mxu0 %v7405
    %8347 = vmatpush1.bf16.msra.mxu0 %v7404
    %8348 = vmatprep.subr.bf16.mxu0 %v7417
    %8349 = vmatpush1.bf16.msra.mxu0 %v7416
    %8350 = vmatprep.subr.bf16.mxu0 %v7429
    %8351 = vmatpush1.bf16.msra.mxu0 %v7428
    %8352 = vmatprep.subr.bf16.mxu0 %v7441
    %8353 = vmatpush1.bf16.msra.mxu0 %v7440
    %8354 = vmatprep.subr.bf16.mxu0 %v7453
    %8355 = vmatpush1.bf16.msra.mxu0 %v7452
    %8356 = vmatprep.subr.bf16.mxu0 %v7465
    %8357 = vmatpush1.bf16.msra.mxu0 %v7464
    %8358 = vmatprep.subr.bf16.mxu0 %v7477
    %8359 = vmatpush1.bf16.msra.mxu0 %v7476
    %8360 = vmatprep.subr.bf16.mxu0 %v7489
    %8361 = vmatpush1.bf16.msra.mxu0 %v7488
    %8362 = vmatprep.subr.bf16.mxu0 %v7501
    %8363 = vmatpush1.bf16.msra.mxu0 %v7500
    %8364 = vmatprep.subr.bf16.mxu0 %v7513
    %8365 = vmatpush1.bf16.msra.mxu0 %v7512
    %8366 = vmatprep.subr.bf16.mxu0 %v7525
    %8367 = vmatpush1.bf16.msra.mxu0 %v7524
    %8368 = vmatprep.mubr.bf16.mxu0 %v6115
    %8369 = vmatmul.mubr.bf16.gmra.mrb[0].mxu0 %v6114
    %v8370 = vpop.f32.mrb[0].mxu0
    %v8371 = vadd.f32 %v6447, %v8370
    %v8372 = vpop.f32.mrb[0].mxu0
    %v8373 = vadd.f32 %v6451, %v8372
    %v8374 = vpop.f32.mrb[0].mxu0
    %v8375 = vadd.f32 %v6447, %v8374
    %v8376 = vpop.f32.mrb[0].mxu0
    %v8377 = vadd.f32 %v6451, %v8376
    %8378 = vmatprep.mubr.bf16.mxu0 %v6118
    %8379 = vmatmul.mubr.bf16.gmra.mrb[0].mxu0 %v6117
    %v8380 = vpop.f32.mrb[0].mxu0
    %v8381 = vadd.f32 %v6447, %v8380
    %v8382 = vpop.f32.mrb[0].mxu0
    %v8383 = vadd.f32 %v6451, %v8382
    %v8384 = vpop.f32.mrb[0].mxu0
    %v8385 = vadd.f32 %v6447, %v8384
    %v8386 = vpop.f32.mrb[0].mxu0
    %v8387 = vadd.f32 %v6451, %v8386
    %8388 = vdwg.mxu0
    %8389 = vmatprep.subr.bf16.mxu0 %v7537
    %8390 = vmatpush1.bf16.msra.mxu0 %v7536
    %8391 = vmatprep.subr.bf16.mxu0 %v7549
    %8392 = vmatpush1.bf16.msra.mxu0 %v7548
    %8393 = vmatprep.subr.bf16.mxu0 %v7561
    %8394 = vmatpush1.bf16.msra.mxu0 %v7560
    %8395 = vmatprep.subr.bf16.mxu0 %v7573
    %8396 = vmatpush1.bf16.msra.mxu0 %v7572
    %8397 = vmatprep.subr.bf16.mxu0 %v7585
    %8398 = vmatpush1.bf16.msra.mxu0 %v7584
    %8399 = vmatprep.subr.bf16.mxu0 %v7597
    %8400 = vmatpush1.bf16.msra.mxu0 %v7596
    %8401 = vmatprep.subr.bf16.mxu0 %v7609
    %8402 = vmatpush1.bf16.msra.mxu0 %v7608
    %8403 = vmatprep.subr.bf16.mxu0 %v7621
    %8404 = vmatpush1.bf16.msra.mxu0 %v7620
    %8405 = vmatprep.subr.bf16.mxu0 0
    %8406 = vmatpush1.bf16.msra.mxu0 0
    %8407 = vmatprep.subr.bf16.mxu0 0
    %8408 = vmatpush1.bf16.msra.mxu0 0
    %8409 = vmatprep.subr.bf16.mxu0 0
    %8410 = vmatpush1.bf16.msra.mxu0 0
    %8411 = vmatprep.subr.bf16.mxu0 0
    %8412 = vmatpush1.bf16.msra.mxu0 0
    %8413 = vmatprep.subr.bf16.mxu0 0
    %8414 = vmatpush1.bf16.msra.mxu0 0
    %8415 = vmatprep.subr.bf16.mxu0 0
    %8416 = vmatpush1.bf16.msra.mxu0 0
    %8417 = vmatprep.subr.bf16.mxu0 0
    %8418 = vmatpush1.bf16.msra.mxu0 0
    %8419 = vmatprep.subr.bf16.mxu0 0
    %8420 = vmatpush1.bf16.msra.mxu0 0
    %8421 = vmatprep.mubr.bf16.mxu0 0
    %8422 = vmatmul.mubr.bf16.gmra.mrb[0].mxu0 %v6116
    %v8423 = vpop.f32.mrb[0].mxu0
    %v8424 = vadd.f32 %v8371, %v8423
    %v8425 = vpop.f32.mrb[0].mxu0
    %v8426 = vadd.f32 %v8373, %v8425
    %v8427 = vpop.f32.mrb[0].mxu0
    %v8428 = vadd.f32 %v8375, %v8427
    %v8429 = vpop.f32.mrb[0].mxu0
    %v8430 = vadd.f32 %v8377, %v8429
    %8431 = vmatprep.mubr.bf16.mxu0 0
    %8432 = vmatmul.mubr.bf16.gmra.mrb[0].mxu0 %v6119
    %v8433 = vpop.f32.mrb[0].mxu0
    %v8434 = vadd.f32 %v8381, %v8433
    %v8435 = vpop.f32.mrb[0].mxu0
    %v8436 = vadd.f32 %v8383, %v8435
    %v8437 = vpop.f32.mrb[0].mxu0
    %v8438 = vadd.f32 %v8385, %v8437
    %v8439 = vpop.f32.mrb[0].mxu0
    %v8440 = vadd.f32 %v8387, %v8439
    %8441 = vdwg.mxu0
    %8442 = vmatprep.subr.bf16.mxu0 %v7347
    %8443 = vmatpush1.bf16.msra.mxu0 %v7346
    %8444 = vmatprep.subr.bf16.mxu0 %v7359
    %8445 = vmatpush1.bf16.msra.mxu0 %v7358
    %8446 = vmatprep.subr.bf16.mxu0 %v7371
    %8447 = vmatpush1.bf16.msra.mxu0 %v7370
    %8448 = vmatprep.subr.bf16.mxu0 %v7383
    %8449 = vmatpush1.bf16.msra.mxu0 %v7382
    %8450 = vmatprep.subr.bf16.mxu0 %v7395
    %8451 = vmatpush1.bf16.msra.mxu0 %v7394
    %8452 = vmatprep.subr.bf16.mxu0 %v7407
    %8453 = vmatpush1.bf16.msra.mxu0 %v7406
    %8454 = vmatprep.subr.bf16.mxu0 %v7419
    %8455 = vmatpush1.bf16.msra.mxu0 %v7418
    %8456 = vmatprep.subr.bf16.mxu0 %v7431
    %8457 = vmatpush1.bf16.msra.mxu0 %v7430
    %8458 = vmatprep.subr.bf16.mxu0 %v7443
    %8459 = vmatpush1.bf16.msra.mxu0 %v7442
    %8460 = vmatprep.subr.bf16.mxu0 %v7455
    %8461 = vmatpush1.bf16.msra.mxu0 %v7454
    %8462 = vmatprep.subr.bf16.mxu0 %v7467
    %8463 = vmatpush1.bf16.msra.mxu0 %v7466
    %8464 = vmatprep.subr.bf16.mxu0 %v7479
    %8465 = vmatpush1.bf16.msra.mxu0 %v7478
    %8466 = vmatprep.subr.bf16.mxu0 %v7491
    %8467 = vmatpush1.bf16.msra.mxu0 %v7490
    %8468 = vmatprep.subr.bf16.mxu0 %v7503
    %8469 = vmatpush1.bf16.msra.mxu0 %v7502
    %8470 = vmatprep.subr.bf16.mxu0 %v7515
    %8471 = vmatpush1.bf16.msra.mxu0 %v7514
    %8472 = vmatprep.subr.bf16.mxu0 %v7527
    %8473 = vmatpush1.bf16.msra.mxu0 %v7526
    %8474 = vmatprep.mubr.bf16.mxu0 %v6115
    %8475 = vmatmul.mubr.bf16.gmra.mrb[0].mxu0 %v6114
    %v8476 = vpop.f32.mrb[0].mxu0
    %v8477 = vadd.f32 %v6455, %v8476
    %v8478 = vpop.f32.mrb[0].mxu0
    %v8479 = vadd.f32 %v6459, %v8478
    %v8480 = vpop.f32.mrb[0].mxu0
    %v8481 = vadd.f32 %v6455, %v8480
    %v8482 = vpop.f32.mrb[0].mxu0
    %v8483 = vadd.f32 %v6459, %v8482
    %8484 = vmatprep.mubr.bf16.mxu0 %v6118
    %8485 = vmatmul.mubr.bf16.gmra.mrb[0].mxu0 %v6117
    %v8486 = vpop.f32.mrb[0].mxu0
    %v8487 = vadd.f32 %v6455, %v8486
    %v8488 = vpop.f32.mrb[0].mxu0
    %v8489 = vadd.f32 %v6459, %v8488
    %v8490 = vpop.f32.mrb[0].mxu0
    %v8491 = vadd.f32 %v6455, %v8490
    %v8492 = vpop.f32.mrb[0].mxu0
    %v8493 = vadd.f32 %v6459, %v8492
    %8494 = vdwg.mxu0
    %8495 = vmatprep.subr.bf16.mxu0 %v7539
    %8496 = vmatpush1.bf16.msra.mxu0 %v7538
    %8497 = vmatprep.subr.bf16.mxu0 %v7551
    %8498 = vmatpush1.bf16.msra.mxu0 %v7550
    %8499 = vmatprep.subr.bf16.mxu0 %v7563
    %8500 = vmatpush1.bf16.msra.mxu0 %v7562
    %8501 = vmatprep.subr.bf16.mxu0 %v7575
    %8502 = vmatpush1.bf16.msra.mxu0 %v7574
    %8503 = vmatprep.subr.bf16.mxu0 %v7587
    %8504 = vmatpush1.bf16.msra.mxu0 %v7586
    %8505 = vmatprep.subr.bf16.mxu0 %v7599
    %8506 = vmatpush1.bf16.msra.mxu0 %v7598
    %8507 = vmatprep.subr.bf16.mxu0 %v7611
    %8508 = vmatpush1.bf16.msra.mxu0 %v7610
    %8509 = vmatprep.subr.bf16.mxu0 %v7623
    %8510 = vmatpush1.bf16.msra.mxu0 %v7622
    %8511 = vmatprep.subr.bf16.mxu0 0
    %8512 = vmatpush1.bf16.msra.mxu0 0
    %8513 = vmatprep.subr.bf16.mxu0 0
    %8514 = vmatpush1.bf16.msra.mxu0 0
    %8515 = vmatprep.subr.bf16.mxu0 0
    %8516 = vmatpush1.bf16.msra.mxu0 0
    %8517 = vmatprep.subr.bf16.mxu0 0
    %8518 = vmatpush1.bf16.msra.mxu0 0
    %8519 = vmatprep.subr.bf16.mxu0 0
    %8520 = vmatpush1.bf16.msra.mxu0 0
    %8521 = vmatprep.subr.bf16.mxu0 0
    %8522 = vmatpush1.bf16.msra.mxu0 0
    %8523 = vmatprep.subr.bf16.mxu0 0
    %8524 = vmatpush1.bf16.msra.mxu0 0
    %8525 = vmatprep.subr.bf16.mxu0 0
    %8526 = vmatpush1.bf16.msra.mxu0 0
    %8527 = vmatprep.mubr.bf16.mxu0 0
    %8528 = vmatmul.mubr.bf16.gmra.mrb[0].mxu0 %v6116
    %v8529 = vpop.f32.mrb[0].mxu0
    %v8530 = vadd.f32 %v8477, %v8529
    %v8531 = vpop.f32.mrb[0].mxu0
    %v8532 = vadd.f32 %v8479, %v8531
    %v8533 = vpop.f32.mrb[0].mxu0
    %v8534 = vadd.f32 %v8481, %v8533
    %v8535 = vpop.f32.mrb[0].mxu0
    %v8536 = vadd.f32 %v8483, %v8535
    %8537 = vmatprep.mubr.bf16.mxu0 0
    %8538 = vmatmul.mubr.bf16.gmra.mrb[0].mxu0 %v6119
    %v8539 = vpop.f32.mrb[0].mxu0
    %v8540 = vadd.f32 %v8487, %v8539
    %v8541 = vpop.f32.mrb[0].mxu0
    %v8542 = vadd.f32 %v8489, %v8541
    %v8543 = vpop.f32.mrb[0].mxu0
    %v8544 = vadd.f32 %v8491, %v8543
    %v8545 = vpop.f32.mrb[0].mxu0
    %v8546 = vadd.f32 %v8493, %v8545
    %8547 = vdwg.mxu0
    %v8548 = vmax.f32 %v8000, 0.0
    %v8549 = vmax.f32 %v8002, 0.0
    %v8550 = vmax.f32 %v8106, 0.0
    %v8551 = vmax.f32 %v8108, 0.0
    %v8552 = vmax.f32 %v8212, 0.0
    %v8553 = vmax.f32 %v8214, 0.0
    %v8554 = vmax.f32 %v8318, 0.0
    %v8555 = vmax.f32 %v8320, 0.0
    %v8556 = vmax.f32 %v8424, 0.0
    %v8557 = vmax.f32 %v8426, 0.0
    %v8558 = vmax.f32 %v8530, 0.0
    %v8559 = vmax.f32 %v8532, 0.0
    %v8560 = vmax.f32 %v8004, 0.0
    %v8561 = vmax.f32 %v8006, 0.0
    %v8562 = vmax.f32 %v8110, 0.0
    %v8563 = vmax.f32 %v8112, 0.0
    %v8564 = vmax.f32 %v8216, 0.0
    %v8565 = vmax.f32 %v8218, 0.0
    %v8566 = vmax.f32 %v8322, 0.0
    %v8567 = vmax.f32 %v8324, 0.0
    %v8568 = vmax.f32 %v8428, 0.0
    %v8569 = vmax.f32 %v8430, 0.0
    %v8570 = vmax.f32 %v8534, 0.0
    %v8571 = vmax.f32 %v8536, 0.0
    %v8572 = vmax.f32 %v8010, 0.0
    %v8573 = vmax.f32 %v8012, 0.0
    %v8574 = vmax.f32 %v8116, 0.0
    %v8575 = vmax.f32 %v8118, 0.0
    %v8576 = vmax.f32 %v8222, 0.0
    %v8577 = vmax.f32 %v8224, 0.0
    %v8578 = vmax.f32 %v8328, 0.0
    %v8579 = vmax.f32 %v8330, 0.0
    %v8580 = vmax.f32 %v8434, 0.0
    %v8581 = vmax.f32 %v8436, 0.0
    %v8582 = vmax.f32 %v8540, 0.0
    %v8583 = vmax.f32 %v8542, 0.0
    %v8584 = vmax.f32 %v8014, 0.0
    %v8585 = vmax.f32 %v8016, 0.0
    %v8586 = vmax.f32 %v8120, 0.0
    %v8587 = vmax.f32 %v8122, 0.0
    %v8588 = vmax.f32 %v8226, 0.0
    %v8589 = vmax.f32 %v8228, 0.0
    %v8590 = vmax.f32 %v8332, 0.0
    %v8591 = vmax.f32 %v8334, 0.0
    %v8592 = vmax.f32 %v8438, 0.0
    %v8593 = vmax.f32 %v8440, 0.0
    %v8594 = vmax.f32 %v8544, 0.0
    %v8595 = vmax.f32 %v8546, 0.0
    %v8596 = vpack.c.bf16 %v8560, %v8548
    %v8597 = vpack.c.bf16 %v8561, %v8549
    %v8598 = vpack.c.bf16 %v8562, %v8550
    %v8599 = vpack.c.bf16 %v8563, %v8551
    %v8600 = vpack.c.bf16 %v8564, %v8552
    %v8601 = vpack.c.bf16 %v8565, %v8553
    %v8602 = vpack.c.bf16 %v8566, %v8554
    %v8603 = vpack.c.bf16 %v8567, %v8555
    %v8604 = vpack.c.bf16 %v8568, %v8556
    %v8605 = vpack.c.bf16 %v8569, %v8557
    %v8606 = vpack.c.bf16 %v8570, %v8558
    %v8607 = vpack.c.bf16 %v8571, %v8559
    %v8608 = vpack.c.bf16 %v8584, %v8572
    %v8609 = vpack.c.bf16 %v8585, %v8573
    %v8610 = vpack.c.bf16 %v8586, %v8574
    %v8611 = vpack.c.bf16 %v8587, %v8575
    %v8612 = vpack.c.bf16 %v8588, %v8576
    %v8613 = vpack.c.bf16 %v8589, %v8577
    %v8614 = vpack.c.bf16 %v8590, %v8578
    %v8615 = vpack.c.bf16 %v8591, %v8579
    %v8616 = vpack.c.bf16 %v8592, %v8580
    %v8617 = vpack.c.bf16 %v8593, %v8581
    %v8618 = vpack.c.bf16 %v8594, %v8582
    %v8619 = vpack.c.bf16 %v8595, %v8583
    %v8620 = vld [vmem:[#allocation21] sm:$0xff]
    %v8621 = vld [vmem:[#allocation21 + $0x8] sm:$0xf]
    %v8622 = vld [vmem:[#allocation21 + $0xc] sm:$0xff]
    %v8623 = vld [vmem:[#allocation21 + $0x14] sm:$0xf]
    %v8624 = vld [vmem:[#allocation21 + $0x18] sm:$0xff]
    %v8625 = vld [vmem:[#allocation21 + $0x20] sm:$0xf]
    %v8626 = vld [vmem:[#allocation21 + $0x24] sm:$0xff]
    %v8627 = vld [vmem:[#allocation21 + $0x2c] sm:$0xf]
    %v8628 = vld [vmem:[#allocation21 + $0x30] sm:$0xff]
    %v8629 = vld [vmem:[#allocation21 + $0x38] sm:$0xf]
    %v8630 = vld [vmem:[#allocation21 + $0x3c] sm:$0xff]
    %v8631 = vld [vmem:[#allocation21 + $0x44] sm:$0xf]
    %v8632 = vld [vmem:[#allocation21 + $0x48] sm:$0xff]
    %v8633 = vld [vmem:[#allocation21 + $0x50] sm:$0xf]
    %v8634 = vld [vmem:[#allocation21 + $0x54] sm:$0xff]
    %v8635 = vld [vmem:[#allocation21 + $0x5c] sm:$0xf]
    %v8636 = vld [vmem:[#allocation21 + $0x60] sm:$0xff]
    %v8637 = vld [vmem:[#allocation21 + $0x68] sm:$0xf]
    %v8638 = vld [vmem:[#allocation21 + $0x6c] sm:$0xff]
    %v8639 = vld [vmem:[#allocation21 + $0x74] sm:$0xf]
    %v8640 = vld [vmem:[#allocation21 + $0x78] sm:$0xff]
    %v8641 = vld [vmem:[#allocation21 + $0x80] sm:$0xf]
    %v8642 = vld [vmem:[#allocation21 + $0x84] sm:$0xff]
    %v8643 = vld [vmem:[#allocation21 + $0x8c] sm:$0xf]
    %v8644 = vld [vmem:[#allocation21 + $0x90] sm:$0xff]
    %v8645 = vld [vmem:[#allocation21 + $0x98] sm:$0xf]
    %v8646 = vld [vmem:[#allocation21 + $0x9c] sm:$0xff]
    %v8647 = vld [vmem:[#allocation21 + $0xa4] sm:$0xf]
    %v8648 = vld [vmem:[#allocation21 + $0xa8] sm:$0xff]
    %v8649 = vld [vmem:[#allocation21 + $0xb0] sm:$0xf]
    %v8650 = vld [vmem:[#allocation21 + $0xb4] sm:$0xff]
    %v8651 = vld [vmem:[#allocation21 + $0xbc] sm:$0xf]
    %v8652 = vld [vmem:[#allocation21 + $0xc0] sm:$0xff]
    %v8653 = vld [vmem:[#allocation21 + $0xc8] sm:$0xf]
    %v8654 = vld [vmem:[#allocation21 + $0xcc] sm:$0xff]
    %v8655 = vld [vmem:[#allocation21 + $0xd4] sm:$0xf]
    %v8656 = vld [vmem:[#allocation21 + $0xd8] sm:$0xff]
    %v8657 = vld [vmem:[#allocation21 + $0xe0] sm:$0xf]
    %v8658 = vld [vmem:[#allocation21 + $0xe4] sm:$0xff]
    %v8659 = vld [vmem:[#allocation21 + $0xec] sm:$0xf]
    %v8660 = vld [vmem:[#allocation21 + $0xf0] sm:$0xff]
    %v8661 = vld [vmem:[#allocation21 + $0xf8] sm:$0xf]
    %v8662 = vld [vmem:[#allocation21 + $0xfc] sm:$0xff]
    %v8663 = vld [vmem:[#allocation21 + $0x104] sm:$0xf]
    %v8664 = vld [vmem:[#allocation21 + $0x108] sm:$0xff]
    %v8665 = vld [vmem:[#allocation21 + $0x110] sm:$0xf]
    %v8666 = vld [vmem:[#allocation21 + $0x114] sm:$0xff]
    %v8667 = vld [vmem:[#allocation21 + $0x11c] sm:$0xf]
    %v8668 = vld [vmem:[#allocation21 + $0x120] sm:$0xff]
    %v8669 = vld [vmem:[#allocation21 + $0x128] sm:$0xf]
    %v8670 = vld [vmem:[#allocation21 + $0x12c] sm:$0xff]
    %v8671 = vld [vmem:[#allocation21 + $0x134] sm:$0xf]
    %v8672 = vld [vmem:[#allocation21 + $0x138] sm:$0xff]
    %v8673 = vld [vmem:[#allocation21 + $0x140] sm:$0xf]
    %v8674 = vld [vmem:[#allocation21 + $0x144] sm:$0xff]
    %v8675 = vld [vmem:[#allocation21 + $0x14c] sm:$0xf]
    %v8676 = vld [vmem:[#allocation21 + $0x150] sm:$0xff]
    %v8677 = vld [vmem:[#allocation21 + $0x158] sm:$0xf]
    %v8678 = vld [vmem:[#allocation21 + $0x15c] sm:$0xff]
    %v8679 = vld [vmem:[#allocation21 + $0x164] sm:$0xf]
    %v8680 = vld [vmem:[#allocation21 + $0x168] sm:$0xff]
    %v8681 = vld [vmem:[#allocation21 + $0x170] sm:$0xf]
    %v8682 = vld [vmem:[#allocation21 + $0x174] sm:$0xff]
    %v8683 = vld [vmem:[#allocation21 + $0x17c] sm:$0xf]
    %v8684 = vld [vmem:[#allocation21 + $0x180] sm:$0xff]
    %v8685 = vld [vmem:[#allocation21 + $0x188] sm:$0xf]
    %v8686 = vld [vmem:[#allocation21 + $0x18c] sm:$0xff]
    %v8687 = vld [vmem:[#allocation21 + $0x194] sm:$0xf]
    %v8688 = vld [vmem:[#allocation21 + $0x198] sm:$0xff]
    %v8689 = vld [vmem:[#allocation21 + $0x1a0] sm:$0xf]
    %v8690 = vld [vmem:[#allocation21 + $0x1a4] sm:$0xff]
    %v8691 = vld [vmem:[#allocation21 + $0x1ac] sm:$0xf]
    %v8692 = vld [vmem:[#allocation21 + $0x1b0] sm:$0xff]
    %v8693 = vld [vmem:[#allocation21 + $0x1b8] sm:$0xf]
    %v8694 = vld [vmem:[#allocation21 + $0x1bc] sm:$0xff]
    %v8695 = vld [vmem:[#allocation21 + $0x1c4] sm:$0xf]
    %v8696 = vld [vmem:[#allocation21 + $0x1c8] sm:$0xff]
    %v8697 = vld [vmem:[#allocation21 + $0x1d0] sm:$0xf]
    %v8698 = vld [vmem:[#allocation21 + $0x1d4] sm:$0xff]
    %v8699 = vld [vmem:[#allocation21 + $0x1dc] sm:$0xf]
    %v8700 = vld [vmem:[#allocation21 + $0x1e0] sm:$0xff]
    %v8701 = vld [vmem:[#allocation21 + $0x1e8] sm:$0xf]
    %v8702 = vld [vmem:[#allocation21 + $0x1ec] sm:$0xff]
    %v8703 = vld [vmem:[#allocation21 + $0x1f4] sm:$0xf]
    %v8704 = vld [vmem:[#allocation21 + $0x1f8] sm:$0xff]
    %v8705 = vld [vmem:[#allocation21 + $0x200] sm:$0xf]
    %v8706 = vld [vmem:[#allocation21 + $0x204] sm:$0xff]
    %v8707 = vld [vmem:[#allocation21 + $0x20c] sm:$0xf]
    %v8708 = vld [vmem:[#allocation21 + $0x210] sm:$0xff]
    %v8709 = vld [vmem:[#allocation21 + $0x218] sm:$0xf]
    %v8710 = vld [vmem:[#allocation21 + $0x21c] sm:$0xff]
    %v8711 = vld [vmem:[#allocation21 + $0x224] sm:$0xf]
    %v8712 = vld [vmem:[#allocation21 + $0x228] sm:$0xff]
    %v8713 = vld [vmem:[#allocation21 + $0x230] sm:$0xf]
    %v8714 = vld [vmem:[#allocation21 + $0x234] sm:$0xff]
    %v8715 = vld [vmem:[#allocation21 + $0x23c] sm:$0xf]
    %v8716 = vld [vmem:[#allocation21 + $0x240] sm:$0xff]
    %v8717 = vld [vmem:[#allocation21 + $0x248] sm:$0xf]
    %v8718 = vld [vmem:[#allocation21 + $0x24c] sm:$0xff]
    %v8719 = vld [vmem:[#allocation21 + $0x254] sm:$0xf]
    %v8720 = vld [vmem:[#allocation21 + $0x258] sm:$0xff]
    %v8721 = vld [vmem:[#allocation21 + $0x260] sm:$0xf]
    %v8722 = vld [vmem:[#allocation21 + $0x264] sm:$0xff]
    %v8723 = vld [vmem:[#allocation21 + $0x26c] sm:$0xf]
    %v8724 = vld [vmem:[#allocation21 + $0x270] sm:$0xff]
    %v8725 = vld [vmem:[#allocation21 + $0x278] sm:$0xf]
    %v8726 = vld [vmem:[#allocation21 + $0x27c] sm:$0xff]
    %v8727 = vld [vmem:[#allocation21 + $0x284] sm:$0xf]
    %v8728 = vld [vmem:[#allocation21 + $0x288] sm:$0xff]
    %v8729 = vld [vmem:[#allocation21 + $0x290] sm:$0xf]
    %v8730 = vld [vmem:[#allocation21 + $0x294] sm:$0xff]
    %v8731 = vld [vmem:[#allocation21 + $0x29c] sm:$0xf]
    %v8732 = vld [vmem:[#allocation21 + $0x2a0] sm:$0xff]
    %v8733 = vld [vmem:[#allocation21 + $0x2a8] sm:$0xf]
    %v8734 = vld [vmem:[#allocation21 + $0x2ac] sm:$0xff]
    %v8735 = vld [vmem:[#allocation21 + $0x2b4] sm:$0xf]
    %v8736 = vld [vmem:[#allocation21 + $0x2b8] sm:$0xff]
    %v8737 = vld [vmem:[#allocation21 + $0x2c0] sm:$0xf]
    %v8738 = vld [vmem:[#allocation21 + $0x2c4] sm:$0xff]
    %v8739 = vld [vmem:[#allocation21 + $0x2cc] sm:$0xf]
    %v8740 = vld [vmem:[#allocation21 + $0x2d0] sm:$0xff]
    %v8741 = vld [vmem:[#allocation21 + $0x2d8] sm:$0xf]
    %v8742 = vld [vmem:[#allocation21 + $0x2dc] sm:$0xff]
    %v8743 = vld [vmem:[#allocation21 + $0x2e4] sm:$0xf]
    %v8744 = vld [vmem:[#allocation21 + $0x2e8] sm:$0xff]
    %v8745 = vld [vmem:[#allocation21 + $0x2f0] sm:$0xf]
    %v8746 = vld [vmem:[#allocation21 + $0x2f4] sm:$0xff]
    %v8747 = vld [vmem:[#allocation21 + $0x2fc] sm:$0xf]
    %v8748 = vld [vmem:[#allocation21 + $0x300] sm:$0xff]
    %v8749 = vld [vmem:[#allocation21 + $0x308] sm:$0xf]
    %v8750 = vld [vmem:[#allocation21 + $0x30c] sm:$0xff]
    %v8751 = vld [vmem:[#allocation21 + $0x314] sm:$0xf]
    %v8752 = vld [vmem:[#allocation21 + $0x318] sm:$0xff]
    %v8753 = vld [vmem:[#allocation21 + $0x320] sm:$0xf]
    %v8754 = vld [vmem:[#allocation21 + $0x324] sm:$0xff]
    %v8755 = vld [vmem:[#allocation21 + $0x32c] sm:$0xf]
    %v8756 = vld [vmem:[#allocation21 + $0x330] sm:$0xff]
    %v8757 = vld [vmem:[#allocation21 + $0x338] sm:$0xf]
    %v8758 = vld [vmem:[#allocation21 + $0x33c] sm:$0xff]
    %v8759 = vld [vmem:[#allocation21 + $0x344] sm:$0xf]
    %v8760 = vld [vmem:[#allocation21 + $0x348] sm:$0xff]
    %v8761 = vld [vmem:[#allocation21 + $0x350] sm:$0xf]
    %v8762 = vld [vmem:[#allocation21 + $0x354] sm:$0xff]
    %v8763 = vld [vmem:[#allocation21 + $0x35c] sm:$0xf]
    %v8764 = vld [vmem:[#allocation21 + $0x360] sm:$0xff]
    %v8765 = vld [vmem:[#allocation21 + $0x368] sm:$0xf]
    %v8766 = vld [vmem:[#allocation21 + $0x36c] sm:$0xff]
    %v8767 = vld [vmem:[#allocation21 + $0x374] sm:$0xf]
    %v8768 = vld [vmem:[#allocation21 + $0x378] sm:$0xff]
    %v8769 = vld [vmem:[#allocation21 + $0x380] sm:$0xf]
    %v8770 = vld [vmem:[#allocation21 + $0x384] sm:$0xff]
    %v8771 = vld [vmem:[#allocation21 + $0x38c] sm:$0xf]
    %v8772 = vld [vmem:[#allocation21 + $0x390] sm:$0xff]
    %v8773 = vld [vmem:[#allocation21 + $0x398] sm:$0xf]
    %v8774 = vld [vmem:[#allocation21 + $0x39c] sm:$0xff]
    %v8775 = vld [vmem:[#allocation21 + $0x3a4] sm:$0xf]
    %v8776 = vld [vmem:[#allocation21 + $0x3a8] sm:$0xff]
    %v8777 = vld [vmem:[#allocation21 + $0x3b0] sm:$0xf]
    %v8778 = vld [vmem:[#allocation21 + $0x3b4] sm:$0xff]
    %v8779 = vld [vmem:[#allocation21 + $0x3bc] sm:$0xf]
    %v8780 = vld [vmem:[#allocation21 + $0x3c0] sm:$0xff]
    %v8781 = vld [vmem:[#allocation21 + $0x3c8] sm:$0xf]
    %v8782 = vld [vmem:[#allocation21 + $0x3cc] sm:$0xff]
    %v8783 = vld [vmem:[#allocation21 + $0x3d4] sm:$0xf]
    %v8784 = vld [vmem:[#allocation21 + $0x3d8] sm:$0xff]
    %v8785 = vld [vmem:[#allocation21 + $0x3e0] sm:$0xf]
    %v8786 = vld [vmem:[#allocation21 + $0x3e4] sm:$0xff]
    %v8787 = vld [vmem:[#allocation21 + $0x3ec] sm:$0xf]
    %v8788 = vld [vmem:[#allocation21 + $0x3f0] sm:$0xff]
    %v8789 = vld [vmem:[#allocation21 + $0x3f8] sm:$0xf]
    %v8790 = vld [vmem:[#allocation21 + $0x3fc] sm:$0xff]
    %v8791 = vld [vmem:[#allocation21 + $0x404] sm:$0xf]
    %v8792 = vld [vmem:[#allocation21 + $0x408] sm:$0xff]
    %v8793 = vld [vmem:[#allocation21 + $0x410] sm:$0xf]
    %v8794 = vld [vmem:[#allocation21 + $0x414] sm:$0xff]
    %v8795 = vld [vmem:[#allocation21 + $0x41c] sm:$0xf]
    %v8796 = vld [vmem:[#allocation21 + $0x420] sm:$0xff]
    %v8797 = vld [vmem:[#allocation21 + $0x428] sm:$0xf]
    %v8798 = vld [vmem:[#allocation21 + $0x42c] sm:$0xff]
    %v8799 = vld [vmem:[#allocation21 + $0x434] sm:$0xf]
    %v8800 = vld [vmem:[#allocation21 + $0x438] sm:$0xff]
    %v8801 = vld [vmem:[#allocation21 + $0x440] sm:$0xf]
    %v8802 = vld [vmem:[#allocation21 + $0x444] sm:$0xff]
    %v8803 = vld [vmem:[#allocation21 + $0x44c] sm:$0xf]
    %v8804 = vld [vmem:[#allocation21 + $0x450] sm:$0xff]
    %v8805 = vld [vmem:[#allocation21 + $0x458] sm:$0xf]
    %v8806 = vld [vmem:[#allocation21 + $0x45c] sm:$0xff]
    %v8807 = vld [vmem:[#allocation21 + $0x464] sm:$0xf]
    %v8808 = vld [vmem:[#allocation21 + $0x468] sm:$0xff]
    %v8809 = vld [vmem:[#allocation21 + $0x470] sm:$0xf]
    %v8810 = vld [vmem:[#allocation21 + $0x474] sm:$0xff]
    %v8811 = vld [vmem:[#allocation21 + $0x47c] sm:$0xf]
    %v8812 = vld [vmem:[#allocation21 + $0x480] sm:$0xff]
    %v8813 = vld [vmem:[#allocation21 + $0x488] sm:$0xf]
    %v8814 = vld [vmem:[#allocation21 + $0x48c] sm:$0xff]
    %v8815 = vld [vmem:[#allocation21 + $0x494] sm:$0xf]
    %v8816 = vld [vmem:[#allocation21 + $0x498] sm:$0xff]
    %v8817 = vld [vmem:[#allocation21 + $0x4a0] sm:$0xf]
    %v8818 = vld [vmem:[#allocation21 + $0x4a4] sm:$0xff]
    %v8819 = vld [vmem:[#allocation21 + $0x4ac] sm:$0xf]
    %v8820 = vld [vmem:[#allocation21 + $0x4b0] sm:$0xff]
    %v8821 = vld [vmem:[#allocation21 + $0x4b8] sm:$0xf]
    %v8822 = vld [vmem:[#allocation21 + $0x4bc] sm:$0xff]
    %v8823 = vld [vmem:[#allocation21 + $0x4c4] sm:$0xf]
    %v8824 = vld [vmem:[#allocation21 + $0x4c8] sm:$0xff]
    %v8825 = vld [vmem:[#allocation21 + $0x4d0] sm:$0xf]
    %v8826 = vld [vmem:[#allocation21 + $0x4d4] sm:$0xff]
    %v8827 = vld [vmem:[#allocation21 + $0x4dc] sm:$0xf]
    %v8828 = vld [vmem:[#allocation21 + $0x4e0] sm:$0xff]
    %v8829 = vld [vmem:[#allocation21 + $0x4e8] sm:$0xf]
    %v8830 = vld [vmem:[#allocation21 + $0x4ec] sm:$0xff]
    %v8831 = vld [vmem:[#allocation21 + $0x4f4] sm:$0xf]
    %v8832 = vld [vmem:[#allocation21 + $0x4f8] sm:$0xff]
    %v8833 = vld [vmem:[#allocation21 + $0x500] sm:$0xf]
    %v8834 = vld [vmem:[#allocation21 + $0x504] sm:$0xff]
    %v8835 = vld [vmem:[#allocation21 + $0x50c] sm:$0xf]
    %v8836 = vld [vmem:[#allocation21 + $0x510] sm:$0xff]
    %v8837 = vld [vmem:[#allocation21 + $0x518] sm:$0xf]
    %v8838 = vld [vmem:[#allocation21 + $0x51c] sm:$0xff]
    %v8839 = vld [vmem:[#allocation21 + $0x524] sm:$0xf]
    %v8840 = vld [vmem:[#allocation21 + $0x528] sm:$0xff]
    %v8841 = vld [vmem:[#allocation21 + $0x530] sm:$0xf]
    %v8842 = vld [vmem:[#allocation21 + $0x534] sm:$0xff]
    %v8843 = vld [vmem:[#allocation21 + $0x53c] sm:$0xf]
    %v8844 = vld [vmem:[#allocation21 + $0x540] sm:$0xff]
    %v8845 = vld [vmem:[#allocation21 + $0x548] sm:$0xf]
    %v8846 = vld [vmem:[#allocation21 + $0x54c] sm:$0xff]
    %v8847 = vld [vmem:[#allocation21 + $0x554] sm:$0xf]
    %v8848 = vld [vmem:[#allocation21 + $0x558] sm:$0xff]
    %v8849 = vld [vmem:[#allocation21 + $0x560] sm:$0xf]
    %v8850 = vld [vmem:[#allocation21 + $0x564] sm:$0xff]
    %v8851 = vld [vmem:[#allocation21 + $0x56c] sm:$0xf]
    %v8852 = vld [vmem:[#allocation21 + $0x570] sm:$0xff]
    %v8853 = vld [vmem:[#allocation21 + $0x578] sm:$0xf]
    %v8854 = vld [vmem:[#allocation21 + $0x57c] sm:$0xff]
    %v8855 = vld [vmem:[#allocation21 + $0x584] sm:$0xf]
    %v8856 = vld [vmem:[#allocation21 + $0x588] sm:$0xff]
    %v8857 = vld [vmem:[#allocation21 + $0x590] sm:$0xf]
    %v8858 = vld [vmem:[#allocation21 + $0x594] sm:$0xff]
    %v8859 = vld [vmem:[#allocation21 + $0x59c] sm:$0xf]
    %v8860 = vld [vmem:[#allocation21 + $0x5a0] sm:$0xff]
    %v8861 = vld [vmem:[#allocation21 + $0x5a8] sm:$0xf]
    %v8862 = vld [vmem:[#allocation21 + $0x5ac] sm:$0xff]
    %v8863 = vld [vmem:[#allocation21 + $0x5b4] sm:$0xf]
    %v8864 = vld [vmem:[#allocation21 + $0x5b8] sm:$0xff]
    %v8865 = vld [vmem:[#allocation21 + $0x5c0] sm:$0xf]
    %v8866 = vld [vmem:[#allocation21 + $0x5c4] sm:$0xff]
    %v8867 = vld [vmem:[#allocation21 + $0x5cc] sm:$0xf]
    %v8868 = vld [vmem:[#allocation21 + $0x5d0] sm:$0xff]
    %v8869 = vld [vmem:[#allocation21 + $0x5d8] sm:$0xf]
    %v8870 = vld [vmem:[#allocation21 + $0x5dc] sm:$0xff]
    %v8871 = vld [vmem:[#allocation21 + $0x5e4] sm:$0xf]
    %v8872 = vld [vmem:[#allocation21 + $0x5e8] sm:$0xff]
    %v8873 = vld [vmem:[#allocation21 + $0x5f0] sm:$0xf]
    %v8874 = vld [vmem:[#allocation21 + $0x5f4] sm:$0xff]
    %v8875 = vld [vmem:[#allocation21 + $0x5fc] sm:$0xf]
    %v8876 = vld [vmem:[#allocation21 + $0x600] sm:$0xff]
    %v8877 = vld [vmem:[#allocation21 + $0x608] sm:$0xf]
    %v8878 = vld [vmem:[#allocation21 + $0x60c] sm:$0xff]
    %v8879 = vld [vmem:[#allocation21 + $0x614] sm:$0xf]
    %v8880 = vld [vmem:[#allocation21 + $0x618] sm:$0xff]
    %v8881 = vld [vmem:[#allocation21 + $0x620] sm:$0xf]
    %v8882 = vld [vmem:[#allocation21 + $0x624] sm:$0xff]
    %v8883 = vld [vmem:[#allocation21 + $0x62c] sm:$0xf]
    %v8884 = vld [vmem:[#allocation21 + $0x630] sm:$0xff]
    %v8885 = vld [vmem:[#allocation21 + $0x638] sm:$0xf]
    %v8886 = vld [vmem:[#allocation21 + $0x63c] sm:$0xff]
    %v8887 = vld [vmem:[#allocation21 + $0x644] sm:$0xf]
    %v8888 = vld [vmem:[#allocation21 + $0x648] sm:$0xff]
    %v8889 = vld [vmem:[#allocation21 + $0x650] sm:$0xf]
    %v8890 = vld [vmem:[#allocation21 + $0x654] sm:$0xff]
    %v8891 = vld [vmem:[#allocation21 + $0x65c] sm:$0xf]
    %v8892 = vld [vmem:[#allocation21 + $0x660] sm:$0xff]
    %v8893 = vld [vmem:[#allocation21 + $0x668] sm:$0xf]
    %v8894 = vld [vmem:[#allocation21 + $0x66c] sm:$0xff]
    %v8895 = vld [vmem:[#allocation21 + $0x674] sm:$0xf]
    %v8896 = vld [vmem:[#allocation21 + $0x678] sm:$0xff]
    %v8897 = vld [vmem:[#allocation21 + $0x680] sm:$0xf]
    %v8898 = vld [vmem:[#allocation21 + $0x684] sm:$0xff]
    %v8899 = vld [vmem:[#allocation21 + $0x68c] sm:$0xf]
    %v8900 = vld [vmem:[#allocation21 + $0x690] sm:$0xff]
    %v8901 = vld [vmem:[#allocation21 + $0x698] sm:$0xf]
    %v8902 = vld [vmem:[#allocation21 + $0x69c] sm:$0xff]
    %v8903 = vld [vmem:[#allocation21 + $0x6a4] sm:$0xf]
    %v8904 = vld [vmem:[#allocation21 + $0x6a8] sm:$0xff]
    %v8905 = vld [vmem:[#allocation21 + $0x6b0] sm:$0xf]
    %v8906 = vld [vmem:[#allocation21 + $0x6b4] sm:$0xff]
    %v8907 = vld [vmem:[#allocation21 + $0x6bc] sm:$0xf]
    %v8908 = vld [vmem:[#allocation21 + $0x6c0] sm:$0xff]
    %v8909 = vld [vmem:[#allocation21 + $0x6c8] sm:$0xf]
    %v8910 = vld [vmem:[#allocation21 + $0x6cc] sm:$0xff]
    %v8911 = vld [vmem:[#allocation21 + $0x6d4] sm:$0xf]
    %v8912 = vld [vmem:[#allocation21 + $0x6d8] sm:$0xff]
    %v8913 = vld [vmem:[#allocation21 + $0x6e0] sm:$0xf]
    %v8914 = vld [vmem:[#allocation21 + $0x6e4] sm:$0xff]
    %v8915 = vld [vmem:[#allocation21 + $0x6ec] sm:$0xf]
    %v8916 = vld [vmem:[#allocation21 + $0x6f0] sm:$0xff]
    %v8917 = vld [vmem:[#allocation21 + $0x6f8] sm:$0xf]
    %v8918 = vld [vmem:[#allocation21 + $0x6fc] sm:$0xff]
    %v8919 = vld [vmem:[#allocation21 + $0x704] sm:$0xf]
    %v8920 = vld [vmem:[#allocation21 + $0x708] sm:$0xff]
    %v8921 = vld [vmem:[#allocation21 + $0x710] sm:$0xf]
    %v8922 = vld [vmem:[#allocation21 + $0x714] sm:$0xff]
    %v8923 = vld [vmem:[#allocation21 + $0x71c] sm:$0xf]
    %v8924 = vld [vmem:[#allocation21 + $0x720] sm:$0xff]
    %v8925 = vld [vmem:[#allocation21 + $0x728] sm:$0xf]
    %v8926 = vld [vmem:[#allocation21 + $0x72c] sm:$0xff]
    %v8927 = vld [vmem:[#allocation21 + $0x734] sm:$0xf]
    %v8928 = vld [vmem:[#allocation21 + $0x738] sm:$0xff]
    %v8929 = vld [vmem:[#allocation21 + $0x740] sm:$0xf]
    %v8930 = vld [vmem:[#allocation21 + $0x744] sm:$0xff]
    %v8931 = vld [vmem:[#allocation21 + $0x74c] sm:$0xf]
    %v8932 = vld [vmem:[#allocation21 + $0x750] sm:$0xff]
    %v8933 = vld [vmem:[#allocation21 + $0x758] sm:$0xf]
    %v8934 = vld [vmem:[#allocation21 + $0x75c] sm:$0xff]
    %v8935 = vld [vmem:[#allocation21 + $0x764] sm:$0xf]
    %v8936 = vld [vmem:[#allocation21 + $0x768] sm:$0xff]
    %v8937 = vld [vmem:[#allocation21 + $0x770] sm:$0xf]
    %v8938 = vld [vmem:[#allocation21 + $0x774] sm:$0xff]
    %v8939 = vld [vmem:[#allocation21 + $0x77c] sm:$0xf]
    %v8940 = vld [vmem:[#allocation21 + $0x780] sm:$0xff]
    %v8941 = vld [vmem:[#allocation21 + $0x788] sm:$0xf]
    %v8942 = vld [vmem:[#allocation21 + $0x78c] sm:$0xff]
    %v8943 = vld [vmem:[#allocation21 + $0x794] sm:$0xf]
    %v8944 = vld [vmem:[#allocation21 + $0x798] sm:$0xff]
    %v8945 = vld [vmem:[#allocation21 + $0x7a0] sm:$0xf]
    %v8946 = vld [vmem:[#allocation21 + $0x7a4] sm:$0xff]
    %v8947 = vld [vmem:[#allocation21 + $0x7ac] sm:$0xf]
    %v8948 = vld [vmem:[#allocation21 + $0x7b0] sm:$0xff]
    %v8949 = vld [vmem:[#allocation21 + $0x7b8] sm:$0xf]
    %v8950 = vld [vmem:[#allocation21 + $0x7bc] sm:$0xff]
    %v8951 = vld [vmem:[#allocation21 + $0x7c4] sm:$0xf]
    %v8952 = vld [vmem:[#allocation21 + $0x7c8] sm:$0xff]
    %v8953 = vld [vmem:[#allocation21 + $0x7d0] sm:$0xf]
    %v8954 = vld [vmem:[#allocation21 + $0x7d4] sm:$0xff]
    %v8955 = vld [vmem:[#allocation21 + $0x7dc] sm:$0xf]
    %v8956 = vld [vmem:[#allocation21 + $0x7e0] sm:$0xff]
    %v8957 = vld [vmem:[#allocation21 + $0x7e8] sm:$0xf]
    %v8958 = vld [vmem:[#allocation21 + $0x7ec] sm:$0xff]
    %v8959 = vld [vmem:[#allocation21 + $0x7f4] sm:$0xf]
    %v8960 = vld [vmem:[#allocation21 + $0x7f8] sm:$0xff]
    %v8961 = vld [vmem:[#allocation21 + $0x800] sm:$0xf]
    %v8962 = vld [vmem:[#allocation21 + $0x804] sm:$0xff]
    %v8963 = vld [vmem:[#allocation21 + $0x80c] sm:$0xf]
    %v8964 = vld [vmem:[#allocation21 + $0x810] sm:$0xff]
    %v8965 = vld [vmem:[#allocation21 + $0x818] sm:$0xf]
    %v8966 = vld [vmem:[#allocation21 + $0x81c] sm:$0xff]
    %v8967 = vld [vmem:[#allocation21 + $0x824] sm:$0xf]
    %v8968 = vld [vmem:[#allocation21 + $0x828] sm:$0xff]
    %v8969 = vld [vmem:[#allocation21 + $0x830] sm:$0xf]
    %v8970 = vld [vmem:[#allocation21 + $0x834] sm:$0xff]
    %v8971 = vld [vmem:[#allocation21 + $0x83c] sm:$0xf]
    %v8972 = vld [vmem:[#allocation21 + $0x840] sm:$0xff]
    %v8973 = vld [vmem:[#allocation21 + $0x848] sm:$0xf]
    %v8974 = vld [vmem:[#allocation21 + $0x84c] sm:$0xff]
    %v8975 = vld [vmem:[#allocation21 + $0x854] sm:$0xf]
    %v8976 = vld [vmem:[#allocation21 + $0x858] sm:$0xff]
    %v8977 = vld [vmem:[#allocation21 + $0x860] sm:$0xf]
    %v8978 = vld [vmem:[#allocation21 + $0x864] sm:$0xff]
    %v8979 = vld [vmem:[#allocation21 + $0x86c] sm:$0xf]
    %v8980 = vld [vmem:[#allocation21 + $0x870] sm:$0xff]
    %v8981 = vld [vmem:[#allocation21 + $0x878] sm:$0xf]
    %v8982 = vld [vmem:[#allocation21 + $0x87c] sm:$0xff]
    %v8983 = vld [vmem:[#allocation21 + $0x884] sm:$0xf]
    %v8984 = vld [vmem:[#allocation21 + $0x888] sm:$0xff]
    %v8985 = vld [vmem:[#allocation21 + $0x890] sm:$0xf]
    %v8986 = vld [vmem:[#allocation21 + $0x894] sm:$0xff]
    %v8987 = vld [vmem:[#allocation21 + $0x89c] sm:$0xf]
    %v8988 = vld [vmem:[#allocation21 + $0x8a0] sm:$0xff]
    %v8989 = vld [vmem:[#allocation21 + $0x8a8] sm:$0xf]
    %v8990 = vld [vmem:[#allocation21 + $0x8ac] sm:$0xff]
    %v8991 = vld [vmem:[#allocation21 + $0x8b4] sm:$0xf]
    %v8992 = vld [vmem:[#allocation21 + $0x8b8] sm:$0xff]
    %v8993 = vld [vmem:[#allocation21 + $0x8c0] sm:$0xf]
    %v8994 = vld [vmem:[#allocation21 + $0x8c4] sm:$0xff]
    %v8995 = vld [vmem:[#allocation21 + $0x8cc] sm:$0xf]
    %v8996 = vld [vmem:[#allocation21 + $0x8d0] sm:$0xff]
    %v8997 = vld [vmem:[#allocation21 + $0x8d8] sm:$0xf]
    %v8998 = vld [vmem:[#allocation21 + $0x8dc] sm:$0xff]
    %v8999 = vld [vmem:[#allocation21 + $0x8e4] sm:$0xf]
    %v9000 = vld [vmem:[#allocation21 + $0x8e8] sm:$0xff]
    %v9001 = vld [vmem:[#allocation21 + $0x8f0] sm:$0xf]
    %v9002 = vld [vmem:[#allocation21 + $0x8f4] sm:$0xff]
    %v9003 = vld [vmem:[#allocation21 + $0x8fc] sm:$0xf]
    %v9004 = vld [vmem:[#allocation22] sm:$0x7]
    %v9006 = vlaneseq
    %v9007 = vshrl.u32 %v9006, 7
    %v9008 = vsub.s32 0, %v9007
    %v9009 = vrot.slane %v9004, %v9008
    %v9010 = vlaneseq
    %v9011 = vshrl.u32 %v9010, 7
    %v9012 = vsub.s32 1, %v9011
    %v9013 = vrot.slane %v9004, %v9012
    %v9014 = vlaneseq
    %v9015 = vshrl.u32 %v9014, 7
    %v9016 = vsub.s32 2, %v9015
    %v9017 = vrot.slane %v9004, %v9016
    %v9405 = vunpack.c.l.b16 %v8620
    %v9406 = vunpack.c.h.b16 %v8620
    %v9407 = vunpack.c.l.b16 %v8621
    %v9408 = vunpack.c.l.b16 %v8622
    %v9409 = vunpack.c.h.b16 %v8622
    %v9410 = vunpack.c.l.b16 %v8623
    %v9411 = vunpack.c.l.b16 %v8624
    %v9412 = vunpack.c.h.b16 %v8624
    %v9413 = vunpack.c.l.b16 %v8625
    %v9414 = vunpack.c.l.b16 %v8626
    %v9415 = vunpack.c.h.b16 %v8626
    %v9416 = vunpack.c.l.b16 %v8627
    %v9417 = vunpack.c.l.b16 %v8628
    %v9418 = vunpack.c.h.b16 %v8628
    %v9419 = vunpack.c.l.b16 %v8629
    %v9420 = vunpack.c.l.b16 %v8630
    %v9421 = vunpack.c.h.b16 %v8630
    %v9422 = vunpack.c.l.b16 %v8631
    %v9423 = vunpack.c.l.b16 %v8632
    %v9424 = vunpack.c.h.b16 %v8632
    %v9425 = vunpack.c.l.b16 %v8633
    %v9426 = vunpack.c.l.b16 %v8634
    %v9427 = vunpack.c.h.b16 %v8634
    %v9428 = vunpack.c.l.b16 %v8635
    %v9429 = vunpack.c.l.b16 %v8636
    %v9430 = vunpack.c.h.b16 %v8636
    %v9431 = vunpack.c.l.b16 %v8637
    %v9432 = vunpack.c.l.b16 %v8638
    %v9433 = vunpack.c.h.b16 %v8638
    %v9434 = vunpack.c.l.b16 %v8639
    %v9435 = vunpack.c.l.b16 %v8640
    %v9436 = vunpack.c.h.b16 %v8640
    %v9437 = vunpack.c.l.b16 %v8641
    %v9438 = vunpack.c.l.b16 %v8642
    %v9439 = vunpack.c.h.b16 %v8642
    %v9440 = vunpack.c.l.b16 %v8643
    %v9441 = vunpack.c.l.b16 %v8644
    %v9442 = vunpack.c.h.b16 %v8644
    %v9443 = vunpack.c.l.b16 %v8645
    %v9444 = vunpack.c.l.b16 %v8646
    %v9445 = vunpack.c.h.b16 %v8646
    %v9446 = vunpack.c.l.b16 %v8647
    %v9447 = vunpack.c.l.b16 %v8648
    %v9448 = vunpack.c.h.b16 %v8648
    %v9449 = vunpack.c.l.b16 %v8649
    %v9450 = vunpack.c.l.b16 %v8650
    %v9451 = vunpack.c.h.b16 %v8650
    %v9452 = vunpack.c.l.b16 %v8651
    %v9453 = vunpack.c.l.b16 %v8652
    %v9454 = vunpack.c.h.b16 %v8652
    %v9455 = vunpack.c.l.b16 %v8653
    %v9456 = vunpack.c.l.b16 %v8654
    %v9457 = vunpack.c.h.b16 %v8654
    %v9458 = vunpack.c.l.b16 %v8655
    %v9459 = vunpack.c.l.b16 %v8656
    %v9460 = vunpack.c.h.b16 %v8656
    %v9461 = vunpack.c.l.b16 %v8657
    %v9462 = vunpack.c.l.b16 %v8658
    %v9463 = vunpack.c.h.b16 %v8658
    %v9464 = vunpack.c.l.b16 %v8659
    %v9465 = vunpack.c.l.b16 %v8660
    %v9466 = vunpack.c.h.b16 %v8660
    %v9467 = vunpack.c.l.b16 %v8661
    %v9468 = vunpack.c.l.b16 %v8662
    %v9469 = vunpack.c.h.b16 %v8662
    %v9470 = vunpack.c.l.b16 %v8663
    %v9471 = vunpack.c.l.b16 %v8664
    %v9472 = vunpack.c.h.b16 %v8664
    %v9473 = vunpack.c.l.b16 %v8665
    %v9474 = vunpack.c.l.b16 %v8666
    %v9475 = vunpack.c.h.b16 %v8666
    %v9476 = vunpack.c.l.b16 %v8667
    %v9477 = vunpack.c.l.b16 %v8668
    %v9478 = vunpack.c.h.b16 %v8668
    %v9479 = vunpack.c.l.b16 %v8669
    %v9480 = vunpack.c.l.b16 %v8670
    %v9481 = vunpack.c.h.b16 %v8670
    %v9482 = vunpack.c.l.b16 %v8671
    %v9483 = vunpack.c.l.b16 %v8672
    %v9484 = vunpack.c.h.b16 %v8672
    %v9485 = vunpack.c.l.b16 %v8673
    %v9486 = vunpack.c.l.b16 %v8674
    %v9487 = vunpack.c.h.b16 %v8674
    %v9488 = vunpack.c.l.b16 %v8675
    %v9489 = vunpack.c.l.b16 %v8676
    %v9490 = vunpack.c.h.b16 %v8676
    %v9491 = vunpack.c.l.b16 %v8677
    %v9492 = vunpack.c.l.b16 %v8678
    %v9493 = vunpack.c.h.b16 %v8678
    %v9494 = vunpack.c.l.b16 %v8679
    %v9495 = vunpack.c.l.b16 %v8680
    %v9496 = vunpack.c.h.b16 %v8680
    %v9497 = vunpack.c.l.b16 %v8681
    %v9498 = vunpack.c.l.b16 %v8682
    %v9499 = vunpack.c.h.b16 %v8682
    %v9500 = vunpack.c.l.b16 %v8683
    %v9501 = vunpack.c.l.b16 %v8684
    %v9502 = vunpack.c.h.b16 %v8684
    %v9503 = vunpack.c.l.b16 %v8685
    %v9504 = vunpack.c.l.b16 %v8686
    %v9505 = vunpack.c.h.b16 %v8686
    %v9506 = vunpack.c.l.b16 %v8687
    %v9507 = vunpack.c.l.b16 %v8688
    %v9508 = vunpack.c.h.b16 %v8688
    %v9509 = vunpack.c.l.b16 %v8689
    %v9510 = vunpack.c.l.b16 %v8690
    %v9511 = vunpack.c.h.b16 %v8690
    %v9512 = vunpack.c.l.b16 %v8691
    %v9513 = vunpack.c.l.b16 %v8692
    %v9514 = vunpack.c.h.b16 %v8692
    %v9515 = vunpack.c.l.b16 %v8693
    %v9516 = vunpack.c.l.b16 %v8694
    %v9517 = vunpack.c.h.b16 %v8694
    %v9518 = vunpack.c.l.b16 %v8695
    %v9519 = vunpack.c.l.b16 %v8696
    %v9520 = vunpack.c.h.b16 %v8696
    %v9521 = vunpack.c.l.b16 %v8697
    %v9522 = vunpack.c.l.b16 %v8698
    %v9523 = vunpack.c.h.b16 %v8698
    %v9524 = vunpack.c.l.b16 %v8699
    %v9525 = vunpack.c.l.b16 %v8700
    %v9526 = vunpack.c.h.b16 %v8700
    %v9527 = vunpack.c.l.b16 %v8701
    %v9528 = vunpack.c.l.b16 %v8702
    %v9529 = vunpack.c.h.b16 %v8702
    %v9530 = vunpack.c.l.b16 %v8703
    %v9531 = vunpack.c.l.b16 %v8704
    %v9532 = vunpack.c.h.b16 %v8704
    %v9533 = vunpack.c.l.b16 %v8705
    %v9534 = vunpack.c.l.b16 %v8706
    %v9535 = vunpack.c.h.b16 %v8706
    %v9536 = vunpack.c.l.b16 %v8707
    %v9537 = vunpack.c.l.b16 %v8708
    %v9538 = vunpack.c.h.b16 %v8708
    %v9539 = vunpack.c.l.b16 %v8709
    %v9540 = vunpack.c.l.b16 %v8710
    %v9541 = vunpack.c.h.b16 %v8710
    %v9542 = vunpack.c.l.b16 %v8711
    %v9543 = vunpack.c.l.b16 %v8712
    %v9544 = vunpack.c.h.b16 %v8712
    %v9545 = vunpack.c.l.b16 %v8713
    %v9546 = vunpack.c.l.b16 %v8714
    %v9547 = vunpack.c.h.b16 %v8714
    %v9548 = vunpack.c.l.b16 %v8715
    %v9549 = vunpack.c.l.b16 %v8716
    %v9550 = vunpack.c.h.b16 %v8716
    %v9551 = vunpack.c.l.b16 %v8717
    %v9552 = vunpack.c.l.b16 %v8718
    %v9553 = vunpack.c.h.b16 %v8718
    %v9554 = vunpack.c.l.b16 %v8719
    %v9555 = vunpack.c.l.b16 %v8720
    %v9556 = vunpack.c.h.b16 %v8720
    %v9557 = vunpack.c.l.b16 %v8721
    %v9558 = vunpack.c.l.b16 %v8722
    %v9559 = vunpack.c.h.b16 %v8722
    %v9560 = vunpack.c.l.b16 %v8723
    %v9561 = vunpack.c.l.b16 %v8724
    %v9562 = vunpack.c.h.b16 %v8724
    %v9563 = vunpack.c.l.b16 %v8725
    %v9564 = vunpack.c.l.b16 %v8726
    %v9565 = vunpack.c.h.b16 %v8726
    %v9566 = vunpack.c.l.b16 %v8727
    %v9567 = vunpack.c.l.b16 %v8728
    %v9568 = vunpack.c.h.b16 %v8728
    %v9569 = vunpack.c.l.b16 %v8729
    %v9570 = vunpack.c.l.b16 %v8730
    %v9571 = vunpack.c.h.b16 %v8730
    %v9572 = vunpack.c.l.b16 %v8731
    %v9573 = vunpack.c.l.b16 %v8732
    %v9574 = vunpack.c.h.b16 %v8732
    %v9575 = vunpack.c.l.b16 %v8733
    %v9576 = vunpack.c.l.b16 %v8734
    %v9577 = vunpack.c.h.b16 %v8734
    %v9578 = vunpack.c.l.b16 %v8735
    %v9579 = vunpack.c.l.b16 %v8736
    %v9580 = vunpack.c.h.b16 %v8736
    %v9581 = vunpack.c.l.b16 %v8737
    %v9582 = vunpack.c.l.b16 %v8738
    %v9583 = vunpack.c.h.b16 %v8738
    %v9584 = vunpack.c.l.b16 %v8739
    %v9585 = vunpack.c.l.b16 %v8740
    %v9586 = vunpack.c.h.b16 %v8740
    %v9587 = vunpack.c.l.b16 %v8741
    %v9588 = vunpack.c.l.b16 %v8742
    %v9589 = vunpack.c.h.b16 %v8742
    %v9590 = vunpack.c.l.b16 %v8743
    %v9591 = vunpack.c.l.b16 %v8744
    %v9592 = vunpack.c.h.b16 %v8744
    %v9593 = vunpack.c.l.b16 %v8745
    %v9594 = vunpack.c.l.b16 %v8746
    %v9595 = vunpack.c.h.b16 %v8746
    %v9596 = vunpack.c.l.b16 %v8747
    %v9597 = vunpack.c.l.b16 %v8748
    %v9598 = vunpack.c.h.b16 %v8748
    %v9599 = vunpack.c.l.b16 %v8749
    %v9600 = vunpack.c.l.b16 %v8750
    %v9601 = vunpack.c.h.b16 %v8750
    %v9602 = vunpack.c.l.b16 %v8751
    %v9603 = vunpack.c.l.b16 %v8752
    %v9604 = vunpack.c.h.b16 %v8752
    %v9605 = vunpack.c.l.b16 %v8753
    %v9606 = vunpack.c.l.b16 %v8754
    %v9607 = vunpack.c.h.b16 %v8754
    %v9608 = vunpack.c.l.b16 %v8755
    %v9609 = vunpack.c.l.b16 %v8756
    %v9610 = vunpack.c.h.b16 %v8756
    %v9611 = vunpack.c.l.b16 %v8757
    %v9612 = vunpack.c.l.b16 %v8758
    %v9613 = vunpack.c.h.b16 %v8758
    %v9614 = vunpack.c.l.b16 %v8759
    %v9615 = vunpack.c.l.b16 %v8760
    %v9616 = vunpack.c.h.b16 %v8760
    %v9617 = vunpack.c.l.b16 %v8761
    %v9618 = vunpack.c.l.b16 %v8762
    %v9619 = vunpack.c.h.b16 %v8762
    %v9620 = vunpack.c.l.b16 %v8763
    %v9621 = vunpack.c.l.b16 %v8764
    %v9622 = vunpack.c.h.b16 %v8764
    %v9623 = vunpack.c.l.b16 %v8765
    %v9624 = vunpack.c.l.b16 %v8766
    %v9625 = vunpack.c.h.b16 %v8766
    %v9626 = vunpack.c.l.b16 %v8767
    %v9627 = vunpack.c.l.b16 %v8768
    %v9628 = vunpack.c.h.b16 %v8768
    %v9629 = vunpack.c.l.b16 %v8769
    %v9630 = vunpack.c.l.b16 %v8770
    %v9631 = vunpack.c.h.b16 %v8770
    %v9632 = vunpack.c.l.b16 %v8771
    %v9633 = vunpack.c.l.b16 %v8772
    %v9634 = vunpack.c.h.b16 %v8772
    %v9635 = vunpack.c.l.b16 %v8773
    %v9636 = vunpack.c.l.b16 %v8774
    %v9637 = vunpack.c.h.b16 %v8774
    %v9638 = vunpack.c.l.b16 %v8775
    %v9639 = vunpack.c.l.b16 %v8776
    %v9640 = vunpack.c.h.b16 %v8776
    %v9641 = vunpack.c.l.b16 %v8777
    %v9642 = vunpack.c.l.b16 %v8778
    %v9643 = vunpack.c.h.b16 %v8778
    %v9644 = vunpack.c.l.b16 %v8779
    %v9645 = vunpack.c.l.b16 %v8780
    %v9646 = vunpack.c.h.b16 %v8780
    %v9647 = vunpack.c.l.b16 %v8781
    %v9648 = vunpack.c.l.b16 %v8782
    %v9649 = vunpack.c.h.b16 %v8782
    %v9650 = vunpack.c.l.b16 %v8783
    %v9651 = vunpack.c.l.b16 %v8784
    %v9652 = vunpack.c.h.b16 %v8784
    %v9653 = vunpack.c.l.b16 %v8785
    %v9654 = vunpack.c.l.b16 %v8786
    %v9655 = vunpack.c.h.b16 %v8786
    %v9656 = vunpack.c.l.b16 %v8787
    %v9657 = vunpack.c.l.b16 %v8788
    %v9658 = vunpack.c.h.b16 %v8788
    %v9659 = vunpack.c.l.b16 %v8789
    %v9660 = vunpack.c.l.b16 %v8790
    %v9661 = vunpack.c.h.b16 %v8790
    %v9662 = vunpack.c.l.b16 %v8791
    %v9663 = vunpack.c.l.b16 %v8792
    %v9664 = vunpack.c.h.b16 %v8792
    %v9665 = vunpack.c.l.b16 %v8793
    %v9666 = vunpack.c.l.b16 %v8794
    %v9667 = vunpack.c.h.b16 %v8794
    %v9668 = vunpack.c.l.b16 %v8795
    %v9669 = vunpack.c.l.b16 %v8796
    %v9670 = vunpack.c.h.b16 %v8796
    %v9671 = vunpack.c.l.b16 %v8797
    %v9672 = vunpack.c.l.b16 %v8798
    %v9673 = vunpack.c.h.b16 %v8798
    %v9674 = vunpack.c.l.b16 %v8799
    %v9675 = vunpack.c.l.b16 %v8800
    %v9676 = vunpack.c.h.b16 %v8800
    %v9677 = vunpack.c.l.b16 %v8801
    %v9678 = vunpack.c.l.b16 %v8802
    %v9679 = vunpack.c.h.b16 %v8802
    %v9680 = vunpack.c.l.b16 %v8803
    %v9681 = vunpack.c.l.b16 %v8804
    %v9682 = vunpack.c.h.b16 %v8804
    %v9683 = vunpack.c.l.b16 %v8805
    %v9684 = vunpack.c.l.b16 %v8806
    %v9685 = vunpack.c.h.b16 %v8806
    %v9686 = vunpack.c.l.b16 %v8807
    %v9687 = vunpack.c.l.b16 %v8808
    %v9688 = vunpack.c.h.b16 %v8808
    %v9689 = vunpack.c.l.b16 %v8809
    %v9690 = vunpack.c.l.b16 %v8810
    %v9691 = vunpack.c.h.b16 %v8810
    %v9692 = vunpack.c.l.b16 %v8811
    %v9693 = vunpack.c.l.b16 %v8812
    %v9694 = vunpack.c.h.b16 %v8812
    %v9695 = vunpack.c.l.b16 %v8813
    %v9696 = vunpack.c.l.b16 %v8814
    %v9697 = vunpack.c.h.b16 %v8814
    %v9698 = vunpack.c.l.b16 %v8815
    %v9699 = vunpack.c.l.b16 %v8816
    %v9700 = vunpack.c.h.b16 %v8816
    %v9701 = vunpack.c.l.b16 %v8817
    %v9702 = vunpack.c.l.b16 %v8818
    %v9703 = vunpack.c.h.b16 %v8818
    %v9704 = vunpack.c.l.b16 %v8819
    %v9705 = vunpack.c.l.b16 %v8820
    %v9706 = vunpack.c.h.b16 %v8820
    %v9707 = vunpack.c.l.b16 %v8821
    %v9708 = vunpack.c.l.b16 %v8822
    %v9709 = vunpack.c.h.b16 %v8822
    %v9710 = vunpack.c.l.b16 %v8823
    %v9711 = vunpack.c.l.b16 %v8824
    %v9712 = vunpack.c.h.b16 %v8824
    %v9713 = vunpack.c.l.b16 %v8825
    %v9714 = vunpack.c.l.b16 %v8826
    %v9715 = vunpack.c.h.b16 %v8826
    %v9716 = vunpack.c.l.b16 %v8827
    %v9717 = vunpack.c.l.b16 %v8828
    %v9718 = vunpack.c.h.b16 %v8828
    %v9719 = vunpack.c.l.b16 %v8829
    %v9720 = vunpack.c.l.b16 %v8830
    %v9721 = vunpack.c.h.b16 %v8830
    %v9722 = vunpack.c.l.b16 %v8831
    %v9723 = vunpack.c.l.b16 %v8832
    %v9724 = vunpack.c.h.b16 %v8832
    %v9725 = vunpack.c.l.b16 %v8833
    %v9726 = vunpack.c.l.b16 %v8834
    %v9727 = vunpack.c.h.b16 %v8834
    %v9728 = vunpack.c.l.b16 %v8835
    %v9729 = vunpack.c.l.b16 %v8836
    %v9730 = vunpack.c.h.b16 %v8836
    %v9731 = vunpack.c.l.b16 %v8837
    %v9732 = vunpack.c.l.b16 %v8838
    %v9733 = vunpack.c.h.b16 %v8838
    %v9734 = vunpack.c.l.b16 %v8839
    %v9735 = vunpack.c.l.b16 %v8840
    %v9736 = vunpack.c.h.b16 %v8840
    %v9737 = vunpack.c.l.b16 %v8841
    %v9738 = vunpack.c.l.b16 %v8842
    %v9739 = vunpack.c.h.b16 %v8842
    %v9740 = vunpack.c.l.b16 %v8843
    %v9741 = vunpack.c.l.b16 %v8844
    %v9742 = vunpack.c.h.b16 %v8844
    %v9743 = vunpack.c.l.b16 %v8845
    %v9744 = vunpack.c.l.b16 %v8846
    %v9745 = vunpack.c.h.b16 %v8846
    %v9746 = vunpack.c.l.b16 %v8847
    %v9747 = vunpack.c.l.b16 %v8848
    %v9748 = vunpack.c.h.b16 %v8848
    %v9749 = vunpack.c.l.b16 %v8849
    %v9750 = vunpack.c.l.b16 %v8850
    %v9751 = vunpack.c.h.b16 %v8850
    %v9752 = vunpack.c.l.b16 %v8851
    %v9753 = vunpack.c.l.b16 %v8852
    %v9754 = vunpack.c.h.b16 %v8852
    %v9755 = vunpack.c.l.b16 %v8853
    %v9756 = vunpack.c.l.b16 %v8854
    %v9757 = vunpack.c.h.b16 %v8854
    %v9758 = vunpack.c.l.b16 %v8855
    %v9759 = vunpack.c.l.b16 %v8856
    %v9760 = vunpack.c.h.b16 %v8856
    %v9761 = vunpack.c.l.b16 %v8857
    %v9762 = vunpack.c.l.b16 %v8858
    %v9763 = vunpack.c.h.b16 %v8858
    %v9764 = vunpack.c.l.b16 %v8859
    %v9765 = vunpack.c.l.b16 %v8860
    %v9766 = vunpack.c.h.b16 %v8860
    %v9767 = vunpack.c.l.b16 %v8861
    %v9768 = vunpack.c.l.b16 %v8862
    %v9769 = vunpack.c.h.b16 %v8862
    %v9770 = vunpack.c.l.b16 %v8863
    %v9771 = vunpack.c.l.b16 %v8864
    %v9772 = vunpack.c.h.b16 %v8864
    %v9773 = vunpack.c.l.b16 %v8865
    %v9774 = vunpack.c.l.b16 %v8866
    %v9775 = vunpack.c.h.b16 %v8866
    %v9776 = vunpack.c.l.b16 %v8867
    %v9777 = vunpack.c.l.b16 %v8868
    %v9778 = vunpack.c.h.b16 %v8868
    %v9779 = vunpack.c.l.b16 %v8869
    %v9780 = vunpack.c.l.b16 %v8870
    %v9781 = vunpack.c.h.b16 %v8870
    %v9782 = vunpack.c.l.b16 %v8871
    %v9783 = vunpack.c.l.b16 %v8872
    %v9784 = vunpack.c.h.b16 %v8872
    %v9785 = vunpack.c.l.b16 %v8873
    %v9786 = vunpack.c.l.b16 %v8874
    %v9787 = vunpack.c.h.b16 %v8874
    %v9788 = vunpack.c.l.b16 %v8875
    %v9789 = vunpack.c.l.b16 %v8876
    %v9790 = vunpack.c.h.b16 %v8876
    %v9791 = vunpack.c.l.b16 %v8877
    %v9792 = vunpack.c.l.b16 %v8878
    %v9793 = vunpack.c.h.b16 %v8878
    %v9794 = vunpack.c.l.b16 %v8879
    %v9795 = vunpack.c.l.b16 %v8880
    %v9796 = vunpack.c.h.b16 %v8880
    %v9797 = vunpack.c.l.b16 %v8881
    %v9798 = vunpack.c.l.b16 %v8882
    %v9799 = vunpack.c.h.b16 %v8882
    %v9800 = vunpack.c.l.b16 %v8883
    %v9801 = vunpack.c.l.b16 %v8884
    %v9802 = vunpack.c.h.b16 %v8884
    %v9803 = vunpack.c.l.b16 %v8885
    %v9804 = vunpack.c.l.b16 %v8886
    %v9805 = vunpack.c.h.b16 %v8886
    %v9806 = vunpack.c.l.b16 %v8887
    %v9807 = vunpack.c.l.b16 %v8888
    %v9808 = vunpack.c.h.b16 %v8888
    %v9809 = vunpack.c.l.b16 %v8889
    %v9810 = vunpack.c.l.b16 %v8890
    %v9811 = vunpack.c.h.b16 %v8890
    %v9812 = vunpack.c.l.b16 %v8891
    %v9813 = vunpack.c.l.b16 %v8892
    %v9814 = vunpack.c.h.b16 %v8892
    %v9815 = vunpack.c.l.b16 %v8893
    %v9816 = vunpack.c.l.b16 %v8894
    %v9817 = vunpack.c.h.b16 %v8894
    %v9818 = vunpack.c.l.b16 %v8895
    %v9819 = vunpack.c.l.b16 %v8896
    %v9820 = vunpack.c.h.b16 %v8896
    %v9821 = vunpack.c.l.b16 %v8897
    %v9822 = vunpack.c.l.b16 %v8898
    %v9823 = vunpack.c.h.b16 %v8898
    %v9824 = vunpack.c.l.b16 %v8899
    %v9825 = vunpack.c.l.b16 %v8900
    %v9826 = vunpack.c.h.b16 %v8900
    %v9827 = vunpack.c.l.b16 %v8901
    %v9828 = vunpack.c.l.b16 %v8902
    %v9829 = vunpack.c.h.b16 %v8902
    %v9830 = vunpack.c.l.b16 %v8903
    %v9831 = vunpack.c.l.b16 %v8904
    %v9832 = vunpack.c.h.b16 %v8904
    %v9833 = vunpack.c.l.b16 %v8905
    %v9834 = vunpack.c.l.b16 %v8906
    %v9835 = vunpack.c.h.b16 %v8906
    %v9836 = vunpack.c.l.b16 %v8907
    %v9837 = vunpack.c.l.b16 %v8908
    %v9838 = vunpack.c.h.b16 %v8908
    %v9839 = vunpack.c.l.b16 %v8909
    %v9840 = vunpack.c.l.b16 %v8910
    %v9841 = vunpack.c.h.b16 %v8910
    %v9842 = vunpack.c.l.b16 %v8911
    %v9843 = vunpack.c.l.b16 %v8912
    %v9844 = vunpack.c.h.b16 %v8912
    %v9845 = vunpack.c.l.b16 %v8913
    %v9846 = vunpack.c.l.b16 %v8914
    %v9847 = vunpack.c.h.b16 %v8914
    %v9848 = vunpack.c.l.b16 %v8915
    %v9849 = vunpack.c.l.b16 %v8916
    %v9850 = vunpack.c.h.b16 %v8916
    %v9851 = vunpack.c.l.b16 %v8917
    %v9852 = vunpack.c.l.b16 %v8918
    %v9853 = vunpack.c.h.b16 %v8918
    %v9854 = vunpack.c.l.b16 %v8919
    %v9855 = vunpack.c.l.b16 %v8920
    %v9856 = vunpack.c.h.b16 %v8920
    %v9857 = vunpack.c.l.b16 %v8921
    %v9858 = vunpack.c.l.b16 %v8922
    %v9859 = vunpack.c.h.b16 %v8922
    %v9860 = vunpack.c.l.b16 %v8923
    %v9861 = vunpack.c.l.b16 %v8924
    %v9862 = vunpack.c.h.b16 %v8924
    %v9863 = vunpack.c.l.b16 %v8925
    %v9864 = vunpack.c.l.b16 %v8926
    %v9865 = vunpack.c.h.b16 %v8926
    %v9866 = vunpack.c.l.b16 %v8927
    %v9867 = vunpack.c.l.b16 %v8928
    %v9868 = vunpack.c.h.b16 %v8928
    %v9869 = vunpack.c.l.b16 %v8929
    %v9870 = vunpack.c.l.b16 %v8930
    %v9871 = vunpack.c.h.b16 %v8930
    %v9872 = vunpack.c.l.b16 %v8931
    %v9873 = vunpack.c.l.b16 %v8932
    %v9874 = vunpack.c.h.b16 %v8932
    %v9875 = vunpack.c.l.b16 %v8933
    %v9876 = vunpack.c.l.b16 %v8934
    %v9877 = vunpack.c.h.b16 %v8934
    %v9878 = vunpack.c.l.b16 %v8935
    %v9879 = vunpack.c.l.b16 %v8936
    %v9880 = vunpack.c.h.b16 %v8936
    %v9881 = vunpack.c.l.b16 %v8937
    %v9882 = vunpack.c.l.b16 %v8938
    %v9883 = vunpack.c.h.b16 %v8938
    %v9884 = vunpack.c.l.b16 %v8939
    %v9885 = vunpack.c.l.b16 %v8940
    %v9886 = vunpack.c.h.b16 %v8940
    %v9887 = vunpack.c.l.b16 %v8941
    %v9888 = vunpack.c.l.b16 %v8942
    %v9889 = vunpack.c.h.b16 %v8942
    %v9890 = vunpack.c.l.b16 %v8943
    %v9891 = vunpack.c.l.b16 %v8944
    %v9892 = vunpack.c.h.b16 %v8944
    %v9893 = vunpack.c.l.b16 %v8945
    %v9894 = vunpack.c.l.b16 %v8946
    %v9895 = vunpack.c.h.b16 %v8946
    %v9896 = vunpack.c.l.b16 %v8947
    %v9897 = vunpack.c.l.b16 %v8948
    %v9898 = vunpack.c.h.b16 %v8948
    %v9899 = vunpack.c.l.b16 %v8949
    %v9900 = vunpack.c.l.b16 %v8950
    %v9901 = vunpack.c.h.b16 %v8950
    %v9902 = vunpack.c.l.b16 %v8951
    %v9903 = vunpack.c.l.b16 %v8952
    %v9904 = vunpack.c.h.b16 %v8952
    %v9905 = vunpack.c.l.b16 %v8953
    %v9906 = vunpack.c.l.b16 %v8954
    %v9907 = vunpack.c.h.b16 %v8954
    %v9908 = vunpack.c.l.b16 %v8955
    %v9909 = vunpack.c.l.b16 %v8956
    %v9910 = vunpack.c.h.b16 %v8956
    %v9911 = vunpack.c.l.b16 %v8957
    %v9912 = vunpack.c.l.b16 %v8958
    %v9913 = vunpack.c.h.b16 %v8958
    %v9914 = vunpack.c.l.b16 %v8959
    %v9915 = vunpack.c.l.b16 %v8960
    %v9916 = vunpack.c.h.b16 %v8960
    %v9917 = vunpack.c.l.b16 %v8961
    %v9918 = vunpack.c.l.b16 %v8962
    %v9919 = vunpack.c.h.b16 %v8962
    %v9920 = vunpack.c.l.b16 %v8963
    %v9921 = vunpack.c.l.b16 %v8964
    %v9922 = vunpack.c.h.b16 %v8964
    %v9923 = vunpack.c.l.b16 %v8965
    %v9924 = vunpack.c.l.b16 %v8966
    %v9925 = vunpack.c.h.b16 %v8966
    %v9926 = vunpack.c.l.b16 %v8967
    %v9927 = vunpack.c.l.b16 %v8968
    %v9928 = vunpack.c.h.b16 %v8968
    %v9929 = vunpack.c.l.b16 %v8969
    %v9930 = vunpack.c.l.b16 %v8970
    %v9931 = vunpack.c.h.b16 %v8970
    %v9932 = vunpack.c.l.b16 %v8971
    %v9933 = vunpack.c.l.b16 %v8972
    %v9934 = vunpack.c.h.b16 %v8972
    %v9935 = vunpack.c.l.b16 %v8973
    %v9936 = vunpack.c.l.b16 %v8974
    %v9937 = vunpack.c.h.b16 %v8974
    %v9938 = vunpack.c.l.b16 %v8975
    %v9939 = vunpack.c.l.b16 %v8976
    %v9940 = vunpack.c.h.b16 %v8976
    %v9941 = vunpack.c.l.b16 %v8977
    %v9942 = vunpack.c.l.b16 %v8978
    %v9943 = vunpack.c.h.b16 %v8978
    %v9944 = vunpack.c.l.b16 %v8979
    %v9945 = vunpack.c.l.b16 %v8980
    %v9946 = vunpack.c.h.b16 %v8980
    %v9947 = vunpack.c.l.b16 %v8981
    %v9948 = vunpack.c.l.b16 %v8982
    %v9949 = vunpack.c.h.b16 %v8982
    %v9950 = vunpack.c.l.b16 %v8983
    %v9951 = vunpack.c.l.b16 %v8984
    %v9952 = vunpack.c.h.b16 %v8984
    %v9953 = vunpack.c.l.b16 %v8985
    %v9954 = vunpack.c.l.b16 %v8986
    %v9955 = vunpack.c.h.b16 %v8986
    %v9956 = vunpack.c.l.b16 %v8987
    %v9957 = vunpack.c.l.b16 %v8988
    %v9958 = vunpack.c.h.b16 %v8988
    %v9959 = vunpack.c.l.b16 %v8989
    %v9960 = vunpack.c.l.b16 %v8990
    %v9961 = vunpack.c.h.b16 %v8990
    %v9962 = vunpack.c.l.b16 %v8991
    %v9963 = vunpack.c.l.b16 %v8992
    %v9964 = vunpack.c.h.b16 %v8992
    %v9965 = vunpack.c.l.b16 %v8993
    %v9966 = vunpack.c.l.b16 %v8994
    %v9967 = vunpack.c.h.b16 %v8994
    %v9968 = vunpack.c.l.b16 %v8995
    %v9969 = vunpack.c.l.b16 %v8996
    %v9970 = vunpack.c.h.b16 %v8996
    %v9971 = vunpack.c.l.b16 %v8997
    %v9972 = vunpack.c.l.b16 %v8998
    %v9973 = vunpack.c.h.b16 %v8998
    %v9974 = vunpack.c.l.b16 %v8999
    %v9975 = vunpack.c.l.b16 %v9000
    %v9976 = vunpack.c.h.b16 %v9000
    %v9977 = vunpack.c.l.b16 %v9001
    %v9978 = vunpack.c.l.b16 %v9002
    %v9979 = vunpack.c.h.b16 %v9002
    %v9980 = vunpack.c.l.b16 %v9003
    %v9981 = vpack.c.b16 %v9408, %v9405
    %v9982 = vpack.c.b16 %v9409, %v9406
    %v9983 = vpack.c.b16 %v9410, %v9407
    %v9984 = vpack.c.b16 %v9414, %v9411
    %v9985 = vpack.c.b16 %v9415, %v9412
    %v9986 = vpack.c.b16 %v9416, %v9413
    %v9987 = vpack.c.b16 %v9420, %v9417
    %v9988 = vpack.c.b16 %v9421, %v9418
    %v9989 = vpack.c.b16 %v9422, %v9419
    %v9990 = vpack.c.b16 %v9426, %v9423
    %v9991 = vpack.c.b16 %v9427, %v9424
    %v9992 = vpack.c.b16 %v9428, %v9425
    %v9993 = vpack.c.b16 %v9432, %v9429
    %v9994 = vpack.c.b16 %v9433, %v9430
    %v9995 = vpack.c.b16 %v9434, %v9431
    %v9996 = vpack.c.b16 %v9438, %v9435
    %v9997 = vpack.c.b16 %v9439, %v9436
    %v9998 = vpack.c.b16 %v9440, %v9437
    %v9999 = vpack.c.b16 %v9444, %v9441
    %v10000 = vpack.c.b16 %v9445, %v9442
    %v10001 = vpack.c.b16 %v9446, %v9443
    %v10002 = vpack.c.b16 %v9450, %v9447
    %v10003 = vpack.c.b16 %v9451, %v9448
    %v10004 = vpack.c.b16 %v9452, %v9449
    %v10005 = vpack.c.b16 %v9456, %v9453
    %v10006 = vpack.c.b16 %v9457, %v9454
    %v10007 = vpack.c.b16 %v9458, %v9455
    %v10008 = vpack.c.b16 %v9462, %v9459
    %v10009 = vpack.c.b16 %v9463, %v9460
    %v10010 = vpack.c.b16 %v9464, %v9461
    %v10011 = vpack.c.b16 %v9468, %v9465
    %v10012 = vpack.c.b16 %v9469, %v9466
    %v10013 = vpack.c.b16 %v9470, %v9467
    %v10014 = vpack.c.b16 %v9474, %v9471
    %v10015 = vpack.c.b16 %v9475, %v9472
    %v10016 = vpack.c.b16 %v9476, %v9473
    %v10017 = vpack.c.b16 %v9480, %v9477
    %v10018 = vpack.c.b16 %v9481, %v9478
    %v10019 = vpack.c.b16 %v9482, %v9479
    %v10020 = vpack.c.b16 %v9486, %v9483
    %v10021 = vpack.c.b16 %v9487, %v9484
    %v10022 = vpack.c.b16 %v9488, %v9485
    %v10023 = vpack.c.b16 %v9492, %v9489
    %v10024 = vpack.c.b16 %v9493, %v9490
    %v10025 = vpack.c.b16 %v9494, %v9491
    %v10026 = vpack.c.b16 %v9498, %v9495
    %v10027 = vpack.c.b16 %v9499, %v9496
    %v10028 = vpack.c.b16 %v9500, %v9497
    %v10029 = vpack.c.b16 %v9504, %v9501
    %v10030 = vpack.c.b16 %v9505, %v9502
    %v10031 = vpack.c.b16 %v9506, %v9503
    %v10032 = vpack.c.b16 %v9510, %v9507
    %v10033 = vpack.c.b16 %v9511, %v9508
    %v10034 = vpack.c.b16 %v9512, %v9509
    %v10035 = vpack.c.b16 %v9516, %v9513
    %v10036 = vpack.c.b16 %v9517, %v9514
    %v10037 = vpack.c.b16 %v9518, %v9515
    %v10038 = vpack.c.b16 %v9522, %v9519
    %v10039 = vpack.c.b16 %v9523, %v9520
    %v10040 = vpack.c.b16 %v9524, %v9521
    %v10041 = vpack.c.b16 %v9528, %v9525
    %v10042 = vpack.c.b16 %v9529, %v9526
    %v10043 = vpack.c.b16 %v9530, %v9527
    %v10044 = vpack.c.b16 %v9534, %v9531
    %v10045 = vpack.c.b16 %v9535, %v9532
    %v10046 = vpack.c.b16 %v9536, %v9533
    %v10047 = vpack.c.b16 %v9540, %v9537
    %v10048 = vpack.c.b16 %v9541, %v9538
    %v10049 = vpack.c.b16 %v9542, %v9539
    %v10050 = vpack.c.b16 %v9546, %v9543
    %v10051 = vpack.c.b16 %v9547, %v9544
    %v10052 = vpack.c.b16 %v9548, %v9545
    %v10053 = vpack.c.b16 %v9552, %v9549
    %v10054 = vpack.c.b16 %v9553, %v9550
    %v10055 = vpack.c.b16 %v9554, %v9551
    %v10056 = vpack.c.b16 %v9558, %v9555
    %v10057 = vpack.c.b16 %v9559, %v9556
    %v10058 = vpack.c.b16 %v9560, %v9557
    %v10059 = vpack.c.b16 %v9564, %v9561
    %v10060 = vpack.c.b16 %v9565, %v9562
    %v10061 = vpack.c.b16 %v9566, %v9563
    %v10062 = vpack.c.b16 %v9570, %v9567
    %v10063 = vpack.c.b16 %v9571, %v9568
    %v10064 = vpack.c.b16 %v9572, %v9569
    %v10065 = vpack.c.b16 %v9576, %v9573
    %v10066 = vpack.c.b16 %v9577, %v9574
    %v10067 = vpack.c.b16 %v9578, %v9575
    %v10068 = vpack.c.b16 %v9582, %v9579
    %v10069 = vpack.c.b16 %v9583, %v9580
    %v10070 = vpack.c.b16 %v9584, %v9581
    %v10071 = vpack.c.b16 %v9588, %v9585
    %v10072 = vpack.c.b16 %v9589, %v9586
    %v10073 = vpack.c.b16 %v9590, %v9587
    %v10074 = vpack.c.b16 %v9594, %v9591
    %v10075 = vpack.c.b16 %v9595, %v9592
    %v10076 = vpack.c.b16 %v9596, %v9593
    %v10077 = vpack.c.b16 %v9600, %v9597
    %v10078 = vpack.c.b16 %v9601, %v9598
    %v10079 = vpack.c.b16 %v9602, %v9599
    %v10080 = vpack.c.b16 %v9606, %v9603
    %v10081 = vpack.c.b16 %v9607, %v9604
    %v10082 = vpack.c.b16 %v9608, %v9605
    %v10083 = vpack.c.b16 %v9612, %v9609
    %v10084 = vpack.c.b16 %v9613, %v9610
    %v10085 = vpack.c.b16 %v9614, %v9611
    %v10086 = vpack.c.b16 %v9618, %v9615
    %v10087 = vpack.c.b16 %v9619, %v9616
    %v10088 = vpack.c.b16 %v9620, %v9617
    %v10089 = vpack.c.b16 %v9624, %v9621
    %v10090 = vpack.c.b16 %v9625, %v9622
    %v10091 = vpack.c.b16 %v9626, %v9623
    %v10092 = vpack.c.b16 %v9630, %v9627
    %v10093 = vpack.c.b16 %v9631, %v9628
    %v10094 = vpack.c.b16 %v9632, %v9629
    %v10095 = vpack.c.b16 %v9636, %v9633
    %v10096 = vpack.c.b16 %v9637, %v9634
    %v10097 = vpack.c.b16 %v9638, %v9635
    %v10098 = vpack.c.b16 %v9642, %v9639
    %v10099 = vpack.c.b16 %v9643, %v9640
    %v10100 = vpack.c.b16 %v9644, %v9641
    %v10101 = vpack.c.b16 %v9648, %v9645
    %v10102 = vpack.c.b16 %v9649, %v9646
    %v10103 = vpack.c.b16 %v9650, %v9647
    %v10104 = vpack.c.b16 %v9654, %v9651
    %v10105 = vpack.c.b16 %v9655, %v9652
    %v10106 = vpack.c.b16 %v9656, %v9653
    %v10107 = vpack.c.b16 %v9660, %v9657
    %v10108 = vpack.c.b16 %v9661, %v9658
    %v10109 = vpack.c.b16 %v9662, %v9659
    %v10110 = vpack.c.b16 %v9666, %v9663
    %v10111 = vpack.c.b16 %v9667, %v9664
    %v10112 = vpack.c.b16 %v9668, %v9665
    %v10113 = vpack.c.b16 %v9672, %v9669
    %v10114 = vpack.c.b16 %v9673, %v9670
    %v10115 = vpack.c.b16 %v9674, %v9671
    %v10116 = vpack.c.b16 %v9678, %v9675
    %v10117 = vpack.c.b16 %v9679, %v9676
    %v10118 = vpack.c.b16 %v9680, %v9677
    %v10119 = vpack.c.b16 %v9684, %v9681
    %v10120 = vpack.c.b16 %v9685, %v9682
    %v10121 = vpack.c.b16 %v9686, %v9683
    %v10122 = vpack.c.b16 %v9690, %v9687
    %v10123 = vpack.c.b16 %v9691, %v9688
    %v10124 = vpack.c.b16 %v9692, %v9689
    %v10125 = vpack.c.b16 %v9696, %v9693
    %v10126 = vpack.c.b16 %v9697, %v9694
    %v10127 = vpack.c.b16 %v9698, %v9695
    %v10128 = vpack.c.b16 %v9702, %v9699
    %v10129 = vpack.c.b16 %v9703, %v9700
    %v10130 = vpack.c.b16 %v9704, %v9701
    %v10131 = vpack.c.b16 %v9708, %v9705
    %v10132 = vpack.c.b16 %v9709, %v9706
    %v10133 = vpack.c.b16 %v9710, %v9707
    %v10134 = vpack.c.b16 %v9714, %v9711
    %v10135 = vpack.c.b16 %v9715, %v9712
    %v10136 = vpack.c.b16 %v9716, %v9713
    %v10137 = vpack.c.b16 %v9720, %v9717
    %v10138 = vpack.c.b16 %v9721, %v9718
    %v10139 = vpack.c.b16 %v9722, %v9719
    %v10140 = vpack.c.b16 %v9726, %v9723
    %v10141 = vpack.c.b16 %v9727, %v9724
    %v10142 = vpack.c.b16 %v9728, %v9725
    %v10143 = vpack.c.b16 %v9732, %v9729
    %v10144 = vpack.c.b16 %v9733, %v9730
    %v10145 = vpack.c.b16 %v9734, %v9731
    %v10146 = vpack.c.b16 %v9738, %v9735
    %v10147 = vpack.c.b16 %v9739, %v9736
    %v10148 = vpack.c.b16 %v9740, %v9737
    %v10149 = vpack.c.b16 %v9744, %v9741
    %v10150 = vpack.c.b16 %v9745, %v9742
    %v10151 = vpack.c.b16 %v9746, %v9743
    %v10152 = vpack.c.b16 %v9750, %v9747
    %v10153 = vpack.c.b16 %v9751, %v9748
    %v10154 = vpack.c.b16 %v9752, %v9749
    %v10155 = vpack.c.b16 %v9756, %v9753
    %v10156 = vpack.c.b16 %v9757, %v9754
    %v10157 = vpack.c.b16 %v9758, %v9755
    %v10158 = vpack.c.b16 %v9762, %v9759
    %v10159 = vpack.c.b16 %v9763, %v9760
    %v10160 = vpack.c.b16 %v9764, %v9761
    %v10161 = vpack.c.b16 %v9768, %v9765
    %v10162 = vpack.c.b16 %v9769, %v9766
    %v10163 = vpack.c.b16 %v9770, %v9767
    %v10164 = vpack.c.b16 %v9774, %v9771
    %v10165 = vpack.c.b16 %v9775, %v9772
    %v10166 = vpack.c.b16 %v9776, %v9773
    %v10167 = vpack.c.b16 %v9780, %v9777
    %v10168 = vpack.c.b16 %v9781, %v9778
    %v10169 = vpack.c.b16 %v9782, %v9779
    %v10170 = vpack.c.b16 %v9786, %v9783
    %v10171 = vpack.c.b16 %v9787, %v9784
    %v10172 = vpack.c.b16 %v9788, %v9785
    %v10173 = vpack.c.b16 %v9792, %v9789
    %v10174 = vpack.c.b16 %v9793, %v9790
    %v10175 = vpack.c.b16 %v9794, %v9791
    %v10176 = vpack.c.b16 %v9798, %v9795
    %v10177 = vpack.c.b16 %v9799, %v9796
    %v10178 = vpack.c.b16 %v9800, %v9797
    %v10179 = vpack.c.b16 %v9804, %v9801
    %v10180 = vpack.c.b16 %v9805, %v9802
    %v10181 = vpack.c.b16 %v9806, %v9803
    %v10182 = vpack.c.b16 %v9810, %v9807
    %v10183 = vpack.c.b16 %v9811, %v9808
    %v10184 = vpack.c.b16 %v9812, %v9809
    %v10185 = vpack.c.b16 %v9816, %v9813
    %v10186 = vpack.c.b16 %v9817, %v9814
    %v10187 = vpack.c.b16 %v9818, %v9815
    %v10188 = vpack.c.b16 %v9822, %v9819
    %v10189 = vpack.c.b16 %v9823, %v9820
    %v10190 = vpack.c.b16 %v9824, %v9821
    %v10191 = vpack.c.b16 %v9828, %v9825
    %v10192 = vpack.c.b16 %v9829, %v9826
    %v10193 = vpack.c.b16 %v9830, %v9827
    %v10194 = vpack.c.b16 %v9834, %v9831
    %v10195 = vpack.c.b16 %v9835, %v9832
    %v10196 = vpack.c.b16 %v9836, %v9833
    %v10197 = vpack.c.b16 %v9840, %v9837
    %v10198 = vpack.c.b16 %v9841, %v9838
    %v10199 = vpack.c.b16 %v9842, %v9839
    %v10200 = vpack.c.b16 %v9846, %v9843
    %v10201 = vpack.c.b16 %v9847, %v9844
    %v10202 = vpack.c.b16 %v9848, %v9845
    %v10203 = vpack.c.b16 %v9852, %v9849
    %v10204 = vpack.c.b16 %v9853, %v9850
    %v10205 = vpack.c.b16 %v9854, %v9851
    %v10206 = vpack.c.b16 %v9858, %v9855
    %v10207 = vpack.c.b16 %v9859, %v9856
    %v10208 = vpack.c.b16 %v9860, %v9857
    %v10209 = vpack.c.b16 %v9864, %v9861
    %v10210 = vpack.c.b16 %v9865, %v9862
    %v10211 = vpack.c.b16 %v9866, %v9863
    %v10212 = vpack.c.b16 %v9870, %v9867
    %v10213 = vpack.c.b16 %v9871, %v9868
    %v10214 = vpack.c.b16 %v9872, %v9869
    %v10215 = vpack.c.b16 %v9876, %v9873
    %v10216 = vpack.c.b16 %v9877, %v9874
    %v10217 = vpack.c.b16 %v9878, %v9875
    %v10218 = vpack.c.b16 %v9882, %v9879
    %v10219 = vpack.c.b16 %v9883, %v9880
    %v10220 = vpack.c.b16 %v9884, %v9881
    %v10221 = vpack.c.b16 %v9888, %v9885
    %v10222 = vpack.c.b16 %v9889, %v9886
    %v10223 = vpack.c.b16 %v9890, %v9887
    %v10224 = vpack.c.b16 %v9894, %v9891
    %v10225 = vpack.c.b16 %v9895, %v9892
    %v10226 = vpack.c.b16 %v9896, %v9893
    %v10227 = vpack.c.b16 %v9900, %v9897
    %v10228 = vpack.c.b16 %v9901, %v9898
    %v10229 = vpack.c.b16 %v9902, %v9899
    %v10230 = vpack.c.b16 %v9906, %v9903
    %v10231 = vpack.c.b16 %v9907, %v9904
    %v10232 = vpack.c.b16 %v9908, %v9905
    %v10233 = vpack.c.b16 %v9912, %v9909
    %v10234 = vpack.c.b16 %v9913, %v9910
    %v10235 = vpack.c.b16 %v9914, %v9911
    %v10236 = vpack.c.b16 %v9918, %v9915
    %v10237 = vpack.c.b16 %v9919, %v9916
    %v10238 = vpack.c.b16 %v9920, %v9917
    %v10239 = vpack.c.b16 %v9924, %v9921
    %v10240 = vpack.c.b16 %v9925, %v9922
    %v10241 = vpack.c.b16 %v9926, %v9923
    %v10242 = vpack.c.b16 %v9930, %v9927
    %v10243 = vpack.c.b16 %v9931, %v9928
    %v10244 = vpack.c.b16 %v9932, %v9929
    %v10245 = vpack.c.b16 %v9936, %v9933
    %v10246 = vpack.c.b16 %v9937, %v9934
    %v10247 = vpack.c.b16 %v9938, %v9935
    %v10248 = vpack.c.b16 %v9942, %v9939
    %v10249 = vpack.c.b16 %v9943, %v9940
    %v10250 = vpack.c.b16 %v9944, %v9941
    %v10251 = vpack.c.b16 %v9948, %v9945
    %v10252 = vpack.c.b16 %v9949, %v9946
    %v10253 = vpack.c.b16 %v9950, %v9947
    %v10254 = vpack.c.b16 %v9954, %v9951
    %v10255 = vpack.c.b16 %v9955, %v9952
    %v10256 = vpack.c.b16 %v9956, %v9953
    %v10257 = vpack.c.b16 %v9960, %v9957
    %v10258 = vpack.c.b16 %v9961, %v9958
    %v10259 = vpack.c.b16 %v9962, %v9959
    %v10260 = vpack.c.b16 %v9966, %v9963
    %v10261 = vpack.c.b16 %v9967, %v9964
    %v10262 = vpack.c.b16 %v9968, %v9965
    %v10263 = vpack.c.b16 %v9972, %v9969
    %v10264 = vpack.c.b16 %v9973, %v9970
    %v10265 = vpack.c.b16 %v9974, %v9971
    %v10266 = vpack.c.b16 %v9978, %v9975
    %v10267 = vpack.c.b16 %v9979, %v9976
    %v10268 = vpack.c.b16 %v9980, %v9977
    %10557 = vmatprep.subr.bf16.mxu0 %v9982
    %10558 = vmatpush1.bf16.msra.mxu0 %v9981
    %10559 = vmatprep.subr.bf16.mxu0 %v9985
    %10560 = vmatpush1.bf16.msra.mxu0 %v9984
    %10561 = vmatprep.subr.bf16.mxu0 %v9988
    %10562 = vmatpush1.bf16.msra.mxu0 %v9987
    %10563 = vmatprep.subr.bf16.mxu0 %v9991
    %10564 = vmatpush1.bf16.msra.mxu0 %v9990
    %10565 = vmatprep.subr.bf16.mxu0 %v9994
    %10566 = vmatpush1.bf16.msra.mxu0 %v9993
    %10567 = vmatprep.subr.bf16.mxu0 %v9997
    %10568 = vmatpush1.bf16.msra.mxu0 %v9996
    %10569 = vmatprep.subr.bf16.mxu0 %v10000
    %10570 = vmatpush1.bf16.msra.mxu0 %v9999
    %10571 = vmatprep.subr.bf16.mxu0 %v10003
    %10572 = vmatpush1.bf16.msra.mxu0 %v10002
    %10573 = vmatprep.subr.bf16.mxu0 %v10006
    %10574 = vmatpush1.bf16.msra.mxu0 %v10005
    %10575 = vmatprep.subr.bf16.mxu0 %v10009
    %10576 = vmatpush1.bf16.msra.mxu0 %v10008
    %10577 = vmatprep.subr.bf16.mxu0 %v10012
    %10578 = vmatpush1.bf16.msra.mxu0 %v10011
    %10579 = vmatprep.subr.bf16.mxu0 %v10015
    %10580 = vmatpush1.bf16.msra.mxu0 %v10014
    %10581 = vmatprep.subr.bf16.mxu0 %v10018
    %10582 = vmatpush1.bf16.msra.mxu0 %v10017
    %10583 = vmatprep.subr.bf16.mxu0 %v10021
    %10584 = vmatpush1.bf16.msra.mxu0 %v10020
    %10585 = vmatprep.subr.bf16.mxu0 %v10024
    %10586 = vmatpush1.bf16.msra.mxu0 %v10023
    %10587 = vmatprep.subr.bf16.mxu0 %v10027
    %10588 = vmatpush1.bf16.msra.mxu0 %v10026
    %10589 = vmatprep.mubr.bf16.mxu0 %v8597
    %10590 = vmatmul.mubr.bf16.gmra.mrb[0].mxu0 %v8596
    %v10591 = vpop.f32.mrb[0].mxu0
    %v10592 = vadd.f32 %v9009, %v10591
    %v10593 = vpop.f32.mrb[0].mxu0
    %v10594 = vadd.f32 %v9013, %v10593
    %v10595 = vpop.f32.mrb[0].mxu0
    %v10596 = vadd.f32 %v9009, %v10595
    %v10597 = vpop.f32.mrb[0].mxu0
    %v10598 = vadd.f32 %v9013, %v10597
    %10599 = vmatprep.mubr.bf16.mxu0 %v8609
    %10600 = vmatmul.mubr.bf16.gmra.mrb[0].mxu0 %v8608
    %v10601 = vpop.f32.mrb[0].mxu0
    %v10602 = vadd.f32 %v9009, %v10601
    %v10603 = vpop.f32.mrb[0].mxu0
    %v10604 = vadd.f32 %v9013, %v10603
    %v10605 = vpop.f32.mrb[0].mxu0
    %v10606 = vadd.f32 %v9009, %v10605
    %v10607 = vpop.f32.mrb[0].mxu0
    %v10608 = vadd.f32 %v9013, %v10607
    %10609 = vdwg.mxu0
    %10610 = vmatprep.subr.bf16.mxu0 %v10030
    %10611 = vmatpush1.bf16.msra.mxu0 %v10029
    %10612 = vmatprep.subr.bf16.mxu0 %v10033
    %10613 = vmatpush1.bf16.msra.mxu0 %v10032
    %10614 = vmatprep.subr.bf16.mxu0 %v10036
    %10615 = vmatpush1.bf16.msra.mxu0 %v10035
    %10616 = vmatprep.subr.bf16.mxu0 %v10039
    %10617 = vmatpush1.bf16.msra.mxu0 %v10038
    %10618 = vmatprep.subr.bf16.mxu0 %v10042
    %10619 = vmatpush1.bf16.msra.mxu0 %v10041
    %10620 = vmatprep.subr.bf16.mxu0 %v10045
    %10621 = vmatpush1.bf16.msra.mxu0 %v10044
    %10622 = vmatprep.subr.bf16.mxu0 %v10048
    %10623 = vmatpush1.bf16.msra.mxu0 %v10047
    %10624 = vmatprep.subr.bf16.mxu0 %v10051
    %10625 = vmatpush1.bf16.msra.mxu0 %v10050
    %10626 = vmatprep.subr.bf16.mxu0 %v10054
    %10627 = vmatpush1.bf16.msra.mxu0 %v10053
    %10628 = vmatprep.subr.bf16.mxu0 %v10057
    %10629 = vmatpush1.bf16.msra.mxu0 %v10056
    %10630 = vmatprep.subr.bf16.mxu0 %v10060
    %10631 = vmatpush1.bf16.msra.mxu0 %v10059
    %10632 = vmatprep.subr.bf16.mxu0 %v10063
    %10633 = vmatpush1.bf16.msra.mxu0 %v10062
    %10634 = vmatprep.subr.bf16.mxu0 %v10066
    %10635 = vmatpush1.bf16.msra.mxu0 %v10065
    %10636 = vmatprep.subr.bf16.mxu0 %v10069
    %10637 = vmatpush1.bf16.msra.mxu0 %v10068
    %10638 = vmatprep.subr.bf16.mxu0 %v10072
    %10639 = vmatpush1.bf16.msra.mxu0 %v10071
    %10640 = vmatprep.subr.bf16.mxu0 %v10075
    %10641 = vmatpush1.bf16.msra.mxu0 %v10074
    %10642 = vmatprep.mubr.bf16.mxu0 %v8599
    %10643 = vmatmul.mubr.bf16.gmra.mrb[0].mxu0 %v8598
    %v10644 = vpop.f32.mrb[0].mxu0
    %v10645 = vadd.f32 %v10592, %v10644
    %v10646 = vpop.f32.mrb[0].mxu0
    %v10647 = vadd.f32 %v10594, %v10646
    %v10648 = vpop.f32.mrb[0].mxu0
    %v10649 = vadd.f32 %v10596, %v10648
    %v10650 = vpop.f32.mrb[0].mxu0
    %v10651 = vadd.f32 %v10598, %v10650
    %10652 = vmatprep.mubr.bf16.mxu0 %v8611
    %10653 = vmatmul.mubr.bf16.gmra.mrb[0].mxu0 %v8610
    %v10654 = vpop.f32.mrb[0].mxu0
    %v10655 = vadd.f32 %v10602, %v10654
    %v10656 = vpop.f32.mrb[0].mxu0
    %v10657 = vadd.f32 %v10604, %v10656
    %v10658 = vpop.f32.mrb[0].mxu0
    %v10659 = vadd.f32 %v10606, %v10658
    %v10660 = vpop.f32.mrb[0].mxu0
    %v10661 = vadd.f32 %v10608, %v10660
    %10662 = vdwg.mxu0
    %10663 = vmatprep.subr.bf16.mxu0 %v10078
    %10664 = vmatpush1.bf16.msra.mxu0 %v10077
    %10665 = vmatprep.subr.bf16.mxu0 %v10081
    %10666 = vmatpush1.bf16.msra.mxu0 %v10080
    %10667 = vmatprep.subr.bf16.mxu0 %v10084
    %10668 = vmatpush1.bf16.msra.mxu0 %v10083
    %10669 = vmatprep.subr.bf16.mxu0 %v10087
    %10670 = vmatpush1.bf16.msra.mxu0 %v10086
    %10671 = vmatprep.subr.bf16.mxu0 %v10090
    %10672 = vmatpush1.bf16.msra.mxu0 %v10089
    %10673 = vmatprep.subr.bf16.mxu0 %v10093
    %10674 = vmatpush1.bf16.msra.mxu0 %v10092
    %10675 = vmatprep.subr.bf16.mxu0 %v10096
    %10676 = vmatpush1.bf16.msra.mxu0 %v10095
    %10677 = vmatprep.subr.bf16.mxu0 %v10099
    %10678 = vmatpush1.bf16.msra.mxu0 %v10098
    %10679 = vmatprep.subr.bf16.mxu0 %v10102
    %10680 = vmatpush1.bf16.msra.mxu0 %v10101
    %10681 = vmatprep.subr.bf16.mxu0 %v10105
    %10682 = vmatpush1.bf16.msra.mxu0 %v10104
    %10683 = vmatprep.subr.bf16.mxu0 %v10108
    %10684 = vmatpush1.bf16.msra.mxu0 %v10107
    %10685 = vmatprep.subr.bf16.mxu0 %v10111
    %10686 = vmatpush1.bf16.msra.mxu0 %v10110
    %10687 = vmatprep.subr.bf16.mxu0 %v10114
    %10688 = vmatpush1.bf16.msra.mxu0 %v10113
    %10689 = vmatprep.subr.bf16.mxu0 %v10117
    %10690 = vmatpush1.bf16.msra.mxu0 %v10116
    %10691 = vmatprep.subr.bf16.mxu0 %v10120
    %10692 = vmatpush1.bf16.msra.mxu0 %v10119
    %10693 = vmatprep.subr.bf16.mxu0 %v10123
    %10694 = vmatpush1.bf16.msra.mxu0 %v10122
    %10695 = vmatprep.mubr.bf16.mxu0 %v8601
    %10696 = vmatmul.mubr.bf16.gmra.mrb[0].mxu0 %v8600
    %v10697 = vpop.f32.mrb[0].mxu0
    %v10698 = vadd.f32 %v10645, %v10697
    %v10699 = vpop.f32.mrb[0].mxu0
    %v10700 = vadd.f32 %v10647, %v10699
    %v10701 = vpop.f32.mrb[0].mxu0
    %v10702 = vadd.f32 %v10649, %v10701
    %v10703 = vpop.f32.mrb[0].mxu0
    %v10704 = vadd.f32 %v10651, %v10703
    %10705 = vmatprep.mubr.bf16.mxu0 %v8613
    %10706 = vmatmul.mubr.bf16.gmra.mrb[0].mxu0 %v8612
    %v10707 = vpop.f32.mrb[0].mxu0
    %v10708 = vadd.f32 %v10655, %v10707
    %v10709 = vpop.f32.mrb[0].mxu0
    %v10710 = vadd.f32 %v10657, %v10709
    %v10711 = vpop.f32.mrb[0].mxu0
    %v10712 = vadd.f32 %v10659, %v10711
    %v10713 = vpop.f32.mrb[0].mxu0
    %v10714 = vadd.f32 %v10661, %v10713
    %10715 = vdwg.mxu0
    %10716 = vmatprep.subr.bf16.mxu0 %v10126
    %10717 = vmatpush1.bf16.msra.mxu0 %v10125
    %10718 = vmatprep.subr.bf16.mxu0 %v10129
    %10719 = vmatpush1.bf16.msra.mxu0 %v10128
    %10720 = vmatprep.subr.bf16.mxu0 %v10132
    %10721 = vmatpush1.bf16.msra.mxu0 %v10131
    %10722 = vmatprep.subr.bf16.mxu0 %v10135
    %10723 = vmatpush1.bf16.msra.mxu0 %v10134
    %10724 = vmatprep.subr.bf16.mxu0 %v10138
    %10725 = vmatpush1.bf16.msra.mxu0 %v10137
    %10726 = vmatprep.subr.bf16.mxu0 %v10141
    %10727 = vmatpush1.bf16.msra.mxu0 %v10140
    %10728 = vmatprep.subr.bf16.mxu0 %v10144
    %10729 = vmatpush1.bf16.msra.mxu0 %v10143
    %10730 = vmatprep.subr.bf16.mxu0 %v10147
    %10731 = vmatpush1.bf16.msra.mxu0 %v10146
    %10732 = vmatprep.subr.bf16.mxu0 %v10150
    %10733 = vmatpush1.bf16.msra.mxu0 %v10149
    %10734 = vmatprep.subr.bf16.mxu0 %v10153
    %10735 = vmatpush1.bf16.msra.mxu0 %v10152
    %10736 = vmatprep.subr.bf16.mxu0 %v10156
    %10737 = vmatpush1.bf16.msra.mxu0 %v10155
    %10738 = vmatprep.subr.bf16.mxu0 %v10159
    %10739 = vmatpush1.bf16.msra.mxu0 %v10158
    %10740 = vmatprep.subr.bf16.mxu0 %v10162
    %10741 = vmatpush1.bf16.msra.mxu0 %v10161
    %10742 = vmatprep.subr.bf16.mxu0 %v10165
    %10743 = vmatpush1.bf16.msra.mxu0 %v10164
    %10744 = vmatprep.subr.bf16.mxu0 %v10168
    %10745 = vmatpush1.bf16.msra.mxu0 %v10167
    %10746 = vmatprep.subr.bf16.mxu0 %v10171
    %10747 = vmatpush1.bf16.msra.mxu0 %v10170
    %10748 = vmatprep.mubr.bf16.mxu0 %v8603
    %10749 = vmatmul.mubr.bf16.gmra.mrb[0].mxu0 %v8602
    %v10750 = vpop.f32.mrb[0].mxu0
    %v10751 = vadd.f32 %v10698, %v10750
    %v10752 = vpop.f32.mrb[0].mxu0
    %v10753 = vadd.f32 %v10700, %v10752
    %v10754 = vpop.f32.mrb[0].mxu0
    %v10755 = vadd.f32 %v10702, %v10754
    %v10756 = vpop.f32.mrb[0].mxu0
    %v10757 = vadd.f32 %v10704, %v10756
    %10758 = vmatprep.mubr.bf16.mxu0 %v8615
    %10759 = vmatmul.mubr.bf16.gmra.mrb[0].mxu0 %v8614
    %v10760 = vpop.f32.mrb[0].mxu0
    %v10761 = vadd.f32 %v10708, %v10760
    %v10762 = vpop.f32.mrb[0].mxu0
    %v10763 = vadd.f32 %v10710, %v10762
    %v10764 = vpop.f32.mrb[0].mxu0
    %v10765 = vadd.f32 %v10712, %v10764
    %v10766 = vpop.f32.mrb[0].mxu0
    %v10767 = vadd.f32 %v10714, %v10766
    %10768 = vdwg.mxu0
    %10769 = vmatprep.subr.bf16.mxu0 %v10174
    %10770 = vmatpush1.bf16.msra.mxu0 %v10173
    %10771 = vmatprep.subr.bf16.mxu0 %v10177
    %10772 = vmatpush1.bf16.msra.mxu0 %v10176
    %10773 = vmatprep.subr.bf16.mxu0 %v10180
    %10774 = vmatpush1.bf16.msra.mxu0 %v10179
    %10775 = vmatprep.subr.bf16.mxu0 %v10183
    %10776 = vmatpush1.bf16.msra.mxu0 %v10182
    %10777 = vmatprep.subr.bf16.mxu0 %v10186
    %10778 = vmatpush1.bf16.msra.mxu0 %v10185
    %10779 = vmatprep.subr.bf16.mxu0 %v10189
    %10780 = vmatpush1.bf16.msra.mxu0 %v10188
    %10781 = vmatprep.subr.bf16.mxu0 %v10192
    %10782 = vmatpush1.bf16.msra.mxu0 %v10191
    %10783 = vmatprep.subr.bf16.mxu0 %v10195
    %10784 = vmatpush1.bf16.msra.mxu0 %v10194
    %10785 = vmatprep.subr.bf16.mxu0 %v10198
    %10786 = vmatpush1.bf16.msra.mxu0 %v10197
    %10787 = vmatprep.subr.bf16.mxu0 %v10201
    %10788 = vmatpush1.bf16.msra.mxu0 %v10200
    %10789 = vmatprep.subr.bf16.mxu0 %v10204
    %10790 = vmatpush1.bf16.msra.mxu0 %v10203
    %10791 = vmatprep.subr.bf16.mxu0 %v10207
    %10792 = vmatpush1.bf16.msra.mxu0 %v10206
    %10793 = vmatprep.subr.bf16.mxu0 %v10210
    %10794 = vmatpush1.bf16.msra.mxu0 %v10209
    %10795 = vmatprep.subr.bf16.mxu0 %v10213
    %10796 = vmatpush1.bf16.msra.mxu0 %v10212
    %10797 = vmatprep.subr.bf16.mxu0 %v10216
    %10798 = vmatpush1.bf16.msra.mxu0 %v10215
    %10799 = vmatprep.subr.bf16.mxu0 %v10219
    %10800 = vmatpush1.bf16.msra.mxu0 %v10218
    %10801 = vmatprep.mubr.bf16.mxu0 %v8605
    %10802 = vmatmul.mubr.bf16.gmra.mrb[0].mxu0 %v8604
    %v10803 = vpop.f32.mrb[0].mxu0
    %v10804 = vadd.f32 %v10751, %v10803
    %v10805 = vpop.f32.mrb[0].mxu0
    %v10806 = vadd.f32 %v10753, %v10805
    %v10807 = vpop.f32.mrb[0].mxu0
    %v10808 = vadd.f32 %v10755, %v10807
    %v10809 = vpop.f32.mrb[0].mxu0
    %v10810 = vadd.f32 %v10757, %v10809
    %10811 = vmatprep.mubr.bf16.mxu0 %v8617
    %10812 = vmatmul.mubr.bf16.gmra.mrb[0].mxu0 %v8616
    %v10813 = vpop.f32.mrb[0].mxu0
    %v10814 = vadd.f32 %v10761, %v10813
    %v10815 = vpop.f32.mrb[0].mxu0
    %v10816 = vadd.f32 %v10763, %v10815
    %v10817 = vpop.f32.mrb[0].mxu0
    %v10818 = vadd.f32 %v10765, %v10817
    %v10819 = vpop.f32.mrb[0].mxu0
    %v10820 = vadd.f32 %v10767, %v10819
    %10821 = vdwg.mxu0
    %10822 = vmatprep.subr.bf16.mxu0 %v10222
    %10823 = vmatpush1.bf16.msra.mxu0 %v10221
    %10824 = vmatprep.subr.bf16.mxu0 %v10225
    %10825 = vmatpush1.bf16.msra.mxu0 %v10224
    %10826 = vmatprep.subr.bf16.mxu0 %v10228
    %10827 = vmatpush1.bf16.msra.mxu0 %v10227
    %10828 = vmatprep.subr.bf16.mxu0 %v10231
    %10829 = vmatpush1.bf16.msra.mxu0 %v10230
    %10830 = vmatprep.subr.bf16.mxu0 %v10234
    %10831 = vmatpush1.bf16.msra.mxu0 %v10233
    %10832 = vmatprep.subr.bf16.mxu0 %v10237
    %10833 = vmatpush1.bf16.msra.mxu0 %v10236
    %10834 = vmatprep.subr.bf16.mxu0 %v10240
    %10835 = vmatpush1.bf16.msra.mxu0 %v10239
    %10836 = vmatprep.subr.bf16.mxu0 %v10243
    %10837 = vmatpush1.bf16.msra.mxu0 %v10242
    %10838 = vmatprep.subr.bf16.mxu0 %v10246
    %10839 = vmatpush1.bf16.msra.mxu0 %v10245
    %10840 = vmatprep.subr.bf16.mxu0 %v10249
    %10841 = vmatpush1.bf16.msra.mxu0 %v10248
    %10842 = vmatprep.subr.bf16.mxu0 %v10252
    %10843 = vmatpush1.bf16.msra.mxu0 %v10251
    %10844 = vmatprep.subr.bf16.mxu0 %v10255
    %10845 = vmatpush1.bf16.msra.mxu0 %v10254
    %10846 = vmatprep.subr.bf16.mxu0 %v10258
    %10847 = vmatpush1.bf16.msra.mxu0 %v10257
    %10848 = vmatprep.subr.bf16.mxu0 %v10261
    %10849 = vmatpush1.bf16.msra.mxu0 %v10260
    %10850 = vmatprep.subr.bf16.mxu0 %v10264
    %10851 = vmatpush1.bf16.msra.mxu0 %v10263
    %10852 = vmatprep.subr.bf16.mxu0 %v10267
    %10853 = vmatpush1.bf16.msra.mxu0 %v10266
    %10854 = vmatprep.mubr.bf16.mxu0 %v8607
    %10855 = vmatmul.mubr.bf16.gmra.mrb[0].mxu0 %v8606
    %v10856 = vpop.f32.mrb[0].mxu0
    %v10857 = vadd.f32 %v10804, %v10856
    %v10858 = vpop.f32.mrb[0].mxu0
    %v10859 = vadd.f32 %v10806, %v10858
    %v10860 = vpop.f32.mrb[0].mxu0
    %v10861 = vadd.f32 %v10808, %v10860
    %v10862 = vpop.f32.mrb[0].mxu0
    %v10863 = vadd.f32 %v10810, %v10862
    %10864 = vmatprep.mubr.bf16.mxu0 %v8619
    %10865 = vmatmul.mubr.bf16.gmra.mrb[0].mxu0 %v8618
    %v10866 = vpop.f32.mrb[0].mxu0
    %v10867 = vadd.f32 %v10814, %v10866
    %v10868 = vpop.f32.mrb[0].mxu0
    %v10869 = vadd.f32 %v10816, %v10868
    %v10870 = vpop.f32.mrb[0].mxu0
    %v10871 = vadd.f32 %v10818, %v10870
    %v10872 = vpop.f32.mrb[0].mxu0
    %v10873 = vadd.f32 %v10820, %v10872
    %10874 = vdwg.mxu0
    %10875 = vmatprep.subr.bf16.mxu0 0
    %10876 = vmatpush1.bf16.msra.mxu0 %v9983
    %10877 = vmatprep.subr.bf16.mxu0 0
    %10878 = vmatpush1.bf16.msra.mxu0 %v9986
    %10879 = vmatprep.subr.bf16.mxu0 0
    %10880 = vmatpush1.bf16.msra.mxu0 %v9989
    %10881 = vmatprep.subr.bf16.mxu0 0
    %10882 = vmatpush1.bf16.msra.mxu0 %v9992
    %10883 = vmatprep.subr.bf16.mxu0 0
    %10884 = vmatpush1.bf16.msra.mxu0 %v9995
    %10885 = vmatprep.subr.bf16.mxu0 0
    %10886 = vmatpush1.bf16.msra.mxu0 %v9998
    %10887 = vmatprep.subr.bf16.mxu0 0
    %10888 = vmatpush1.bf16.msra.mxu0 %v10001
    %10889 = vmatprep.subr.bf16.mxu0 0
    %10890 = vmatpush1.bf16.msra.mxu0 %v10004
    %10891 = vmatprep.subr.bf16.mxu0 0
    %10892 = vmatpush1.bf16.msra.mxu0 %v10007
    %10893 = vmatprep.subr.bf16.mxu0 0
    %10894 = vmatpush1.bf16.msra.mxu0 %v10010
    %10895 = vmatprep.subr.bf16.mxu0 0
    %10896 = vmatpush1.bf16.msra.mxu0 %v10013
    %10897 = vmatprep.subr.bf16.mxu0 0
    %10898 = vmatpush1.bf16.msra.mxu0 %v10016
    %10899 = vmatprep.subr.bf16.mxu0 0
    %10900 = vmatpush1.bf16.msra.mxu0 %v10019
    %10901 = vmatprep.subr.bf16.mxu0 0
    %10902 = vmatpush1.bf16.msra.mxu0 %v10022
    %10903 = vmatprep.subr.bf16.mxu0 0
    %10904 = vmatpush1.bf16.msra.mxu0 %v10025
    %10905 = vmatprep.subr.bf16.mxu0 0
    %10906 = vmatpush1.bf16.msra.mxu0 %v10028
    %10907 = vmatprep.mubr.bf16.mxu0 %v8597
    %10908 = vmatmul.mubr.bf16.gmra.mrb[0].mxu0 %v8596
    %v10909 = vpop.f32.mrb[0].mxu0
    %v10910 = vadd.f32 %v9017, %v10909
    %v10911 = vpop.f32.mrb[0].mxu0
    %v10912 = vpop.f32.mrb[0].mxu0
    %v10913 = vadd.f32 %v9017, %v10912
    %v10914 = vpop.f32.mrb[0].mxu0
    %10915 = vmatprep.mubr.bf16.mxu0 %v8609
    %10916 = vmatmul.mubr.bf16.gmra.mrb[0].mxu0 %v8608
    %v10917 = vpop.f32.mrb[0].mxu0
    %v10918 = vadd.f32 %v9017, %v10917
    %v10919 = vpop.f32.mrb[0].mxu0
    %v10920 = vpop.f32.mrb[0].mxu0
    %v10921 = vadd.f32 %v9017, %v10920
    %v10922 = vpop.f32.mrb[0].mxu0
    %10923 = vdwg.mxu0
    %10924 = vmatprep.subr.bf16.mxu0 0
    %10925 = vmatpush1.bf16.msra.mxu0 %v10031
    %10926 = vmatprep.subr.bf16.mxu0 0
    %10927 = vmatpush1.bf16.msra.mxu0 %v10034
    %10928 = vmatprep.subr.bf16.mxu0 0
    %10929 = vmatpush1.bf16.msra.mxu0 %v10037
    %10930 = vmatprep.subr.bf16.mxu0 0
    %10931 = vmatpush1.bf16.msra.mxu0 %v10040
    %10932 = vmatprep.subr.bf16.mxu0 0
    %10933 = vmatpush1.bf16.msra.mxu0 %v10043
    %10934 = vmatprep.subr.bf16.mxu0 0
    %10935 = vmatpush1.bf16.msra.mxu0 %v10046
    %10936 = vmatprep.subr.bf16.mxu0 0
    %10937 = vmatpush1.bf16.msra.mxu0 %v10049
    %10938 = vmatprep.subr.bf16.mxu0 0
    %10939 = vmatpush1.bf16.msra.mxu0 %v10052
    %10940 = vmatprep.subr.bf16.mxu0 0
    %10941 = vmatpush1.bf16.msra.mxu0 %v10055
    %10942 = vmatprep.subr.bf16.mxu0 0
    %10943 = vmatpush1.bf16.msra.mxu0 %v10058
    %10944 = vmatprep.subr.bf16.mxu0 0
    %10945 = vmatpush1.bf16.msra.mxu0 %v10061
    %10946 = vmatprep.subr.bf16.mxu0 0
    %10947 = vmatpush1.bf16.msra.mxu0 %v10064
    %10948 = vmatprep.subr.bf16.mxu0 0
    %10949 = vmatpush1.bf16.msra.mxu0 %v10067
    %10950 = vmatprep.subr.bf16.mxu0 0
    %10951 = vmatpush1.bf16.msra.mxu0 %v10070
    %10952 = vmatprep.subr.bf16.mxu0 0
    %10953 = vmatpush1.bf16.msra.mxu0 %v10073
    %10954 = vmatprep.subr.bf16.mxu0 0
    %10955 = vmatpush1.bf16.msra.mxu0 %v10076
    %10956 = vmatprep.mubr.bf16.mxu0 %v8599
    %10957 = vmatmul.mubr.bf16.gmra.mrb[0].mxu0 %v8598
    %v10958 = vpop.f32.mrb[0].mxu0
    %v10959 = vadd.f32 %v10910, %v10958
    %v10960 = vpop.f32.mrb[0].mxu0
    %v10961 = vpop.f32.mrb[0].mxu0
    %v10962 = vadd.f32 %v10913, %v10961
    %v10963 = vpop.f32.mrb[0].mxu0
    %10964 = vmatprep.mubr.bf16.mxu0 %v8611
    %10965 = vmatmul.mubr.bf16.gmra.mrb[0].mxu0 %v8610
    %v10966 = vpop.f32.mrb[0].mxu0
    %v10967 = vadd.f32 %v10918, %v10966
    %v10968 = vpop.f32.mrb[0].mxu0
    %v10969 = vpop.f32.mrb[0].mxu0
    %v10970 = vadd.f32 %v10921, %v10969
    %v10971 = vpop.f32.mrb[0].mxu0
    %10972 = vdwg.mxu0
    %10973 = vmatprep.subr.bf16.mxu0 0
    %10974 = vmatpush1.bf16.msra.mxu0 %v10079
    %10975 = vmatprep.subr.bf16.mxu0 0
    %10976 = vmatpush1.bf16.msra.mxu0 %v10082
    %10977 = vmatprep.subr.bf16.mxu0 0
    %10978 = vmatpush1.bf16.msra.mxu0 %v10085
    %10979 = vmatprep.subr.bf16.mxu0 0
    %10980 = vmatpush1.bf16.msra.mxu0 %v10088
    %10981 = vmatprep.subr.bf16.mxu0 0
    %10982 = vmatpush1.bf16.msra.mxu0 %v10091
    %10983 = vmatprep.subr.bf16.mxu0 0
    %10984 = vmatpush1.bf16.msra.mxu0 %v10094
    %10985 = vmatprep.subr.bf16.mxu0 0
    %10986 = vmatpush1.bf16.msra.mxu0 %v10097
    %10987 = vmatprep.subr.bf16.mxu0 0
    %10988 = vmatpush1.bf16.msra.mxu0 %v10100
    %10989 = vmatprep.subr.bf16.mxu0 0
    %10990 = vmatpush1.bf16.msra.mxu0 %v10103
    %10991 = vmatprep.subr.bf16.mxu0 0
    %10992 = vmatpush1.bf16.msra.mxu0 %v10106
    %10993 = vmatprep.subr.bf16.mxu0 0
    %10994 = vmatpush1.bf16.msra.mxu0 %v10109
    %10995 = vmatprep.subr.bf16.mxu0 0
    %10996 = vmatpush1.bf16.msra.mxu0 %v10112
    %10997 = vmatprep.subr.bf16.mxu0 0
    %10998 = vmatpush1.bf16.msra.mxu0 %v10115
    %10999 = vmatprep.subr.bf16.mxu0 0
    %11000 = vmatpush1.bf16.msra.mxu0 %v10118
    %11001 = vmatprep.subr.bf16.mxu0 0
    %11002 = vmatpush1.bf16.msra.mxu0 %v10121
    %11003 = vmatprep.subr.bf16.mxu0 0
    %11004 = vmatpush1.bf16.msra.mxu0 %v10124
    %11005 = vmatprep.mubr.bf16.mxu0 %v8601
    %11006 = vmatmul.mubr.bf16.gmra.mrb[0].mxu0 %v8600
    %v11007 = vpop.f32.mrb[0].mxu0
    %v11008 = vadd.f32 %v10959, %v11007
    %v11009 = vpop.f32.mrb[0].mxu0
    %v11010 = vpop.f32.mrb[0].mxu0
    %v11011 = vadd.f32 %v10962, %v11010
    %v11012 = vpop.f32.mrb[0].mxu0
    %11013 = vmatprep.mubr.bf16.mxu0 %v8613
    %11014 = vmatmul.mubr.bf16.gmra.mrb[0].mxu0 %v8612
    %v11015 = vpop.f32.mrb[0].mxu0
    %v11016 = vadd.f32 %v10967, %v11015
    %v11017 = vpop.f32.mrb[0].mxu0
    %v11018 = vpop.f32.mrb[0].mxu0
    %v11019 = vadd.f32 %v10970, %v11018
    %v11020 = vpop.f32.mrb[0].mxu0
    %11021 = vdwg.mxu0
    %11022 = vmatprep.subr.bf16.mxu0 0
    %11023 = vmatpush1.bf16.msra.mxu0 %v10127
    %11024 = vmatprep.subr.bf16.mxu0 0
    %11025 = vmatpush1.bf16.msra.mxu0 %v10130
    %11026 = vmatprep.subr.bf16.mxu0 0
    %11027 = vmatpush1.bf16.msra.mxu0 %v10133
    %11028 = vmatprep.subr.bf16.mxu0 0
    %11029 = vmatpush1.bf16.msra.mxu0 %v10136
    %11030 = vmatprep.subr.bf16.mxu0 0
    %11031 = vmatpush1.bf16.msra.mxu0 %v10139
    %11032 = vmatprep.subr.bf16.mxu0 0
    %11033 = vmatpush1.bf16.msra.mxu0 %v10142
    %11034 = vmatprep.subr.bf16.mxu0 0
    %11035 = vmatpush1.bf16.msra.mxu0 %v10145
    %11036 = vmatprep.subr.bf16.mxu0 0
    %11037 = vmatpush1.bf16.msra.mxu0 %v10148
    %11038 = vmatprep.subr.bf16.mxu0 0
    %11039 = vmatpush1.bf16.msra.mxu0 %v10151
    %11040 = vmatprep.subr.bf16.mxu0 0
    %11041 = vmatpush1.bf16.msra.mxu0 %v10154
    %11042 = vmatprep.subr.bf16.mxu0 0
    %11043 = vmatpush1.bf16.msra.mxu0 %v10157
    %11044 = vmatprep.subr.bf16.mxu0 0
    %11045 = vmatpush1.bf16.msra.mxu0 %v10160
    %11046 = vmatprep.subr.bf16.mxu0 0
    %11047 = vmatpush1.bf16.msra.mxu0 %v10163
    %11048 = vmatprep.subr.bf16.mxu0 0
    %11049 = vmatpush1.bf16.msra.mxu0 %v10166
    %11050 = vmatprep.subr.bf16.mxu0 0
    %11051 = vmatpush1.bf16.msra.mxu0 %v10169
    %11052 = vmatprep.subr.bf16.mxu0 0
    %11053 = vmatpush1.bf16.msra.mxu0 %v10172
    %11054 = vmatprep.mubr.bf16.mxu0 %v8603
    %11055 = vmatmul.mubr.bf16.gmra.mrb[0].mxu0 %v8602
    %v11056 = vpop.f32.mrb[0].mxu0
    %v11057 = vadd.f32 %v11008, %v11056
    %v11058 = vpop.f32.mrb[0].mxu0
    %v11059 = vpop.f32.mrb[0].mxu0
    %v11060 = vadd.f32 %v11011, %v11059
    %v11061 = vpop.f32.mrb[0].mxu0
    %11062 = vmatprep.mubr.bf16.mxu0 %v8615
    %11063 = vmatmul.mubr.bf16.gmra.mrb[0].mxu0 %v8614
    %v11064 = vpop.f32.mrb[0].mxu0
    %v11065 = vadd.f32 %v11016, %v11064
    %v11066 = vpop.f32.mrb[0].mxu0
    %v11067 = vpop.f32.mrb[0].mxu0
    %v11068 = vadd.f32 %v11019, %v11067
    %v11069 = vpop.f32.mrb[0].mxu0
    %11070 = vdwg.mxu0
    %11071 = vmatprep.subr.bf16.mxu0 0
    %11072 = vmatpush1.bf16.msra.mxu0 %v10175
    %11073 = vmatprep.subr.bf16.mxu0 0
    %11074 = vmatpush1.bf16.msra.mxu0 %v10178
    %11075 = vmatprep.subr.bf16.mxu0 0
    %11076 = vmatpush1.bf16.msra.mxu0 %v10181
    %11077 = vmatprep.subr.bf16.mxu0 0
    %11078 = vmatpush1.bf16.msra.mxu0 %v10184
    %11079 = vmatprep.subr.bf16.mxu0 0
    %11080 = vmatpush1.bf16.msra.mxu0 %v10187
    %11081 = vmatprep.subr.bf16.mxu0 0
    %11082 = vmatpush1.bf16.msra.mxu0 %v10190
    %11083 = vmatprep.subr.bf16.mxu0 0
    %11084 = vmatpush1.bf16.msra.mxu0 %v10193
    %11085 = vmatprep.subr.bf16.mxu0 0
    %11086 = vmatpush1.bf16.msra.mxu0 %v10196
    %11087 = vmatprep.subr.bf16.mxu0 0
    %11088 = vmatpush1.bf16.msra.mxu0 %v10199
    %11089 = vmatprep.subr.bf16.mxu0 0
    %11090 = vmatpush1.bf16.msra.mxu0 %v10202
    %11091 = vmatprep.subr.bf16.mxu0 0
    %11092 = vmatpush1.bf16.msra.mxu0 %v10205
    %11093 = vmatprep.subr.bf16.mxu0 0
    %11094 = vmatpush1.bf16.msra.mxu0 %v10208
    %11095 = vmatprep.subr.bf16.mxu0 0
    %11096 = vmatpush1.bf16.msra.mxu0 %v10211
    %11097 = vmatprep.subr.bf16.mxu0 0
    %11098 = vmatpush1.bf16.msra.mxu0 %v10214
    %11099 = vmatprep.subr.bf16.mxu0 0
    %11100 = vmatpush1.bf16.msra.mxu0 %v10217
    %11101 = vmatprep.subr.bf16.mxu0 0
    %11102 = vmatpush1.bf16.msra.mxu0 %v10220
    %11103 = vmatprep.mubr.bf16.mxu0 %v8605
    %11104 = vmatmul.mubr.bf16.gmra.mrb[0].mxu0 %v8604
    %v11105 = vpop.f32.mrb[0].mxu0
    %v11106 = vadd.f32 %v11057, %v11105
    %v11107 = vpop.f32.mrb[0].mxu0
    %v11108 = vpop.f32.mrb[0].mxu0
    %v11109 = vadd.f32 %v11060, %v11108
    %v11110 = vpop.f32.mrb[0].mxu0
    %11111 = vmatprep.mubr.bf16.mxu0 %v8617
    %11112 = vmatmul.mubr.bf16.gmra.mrb[0].mxu0 %v8616
    %v11113 = vpop.f32.mrb[0].mxu0
    %v11114 = vadd.f32 %v11065, %v11113
    %v11115 = vpop.f32.mrb[0].mxu0
    %v11116 = vpop.f32.mrb[0].mxu0
    %v11117 = vadd.f32 %v11068, %v11116
    %v11118 = vpop.f32.mrb[0].mxu0
    %11119 = vdwg.mxu0
    %11120 = vmatprep.subr.bf16.mxu0 0
    %11121 = vmatpush1.bf16.msra.mxu0 %v10223
    %11122 = vmatprep.subr.bf16.mxu0 0
    %11123 = vmatpush1.bf16.msra.mxu0 %v10226
    %11124 = vmatprep.subr.bf16.mxu0 0
    %11125 = vmatpush1.bf16.msra.mxu0 %v10229
    %11126 = vmatprep.subr.bf16.mxu0 0
    %11127 = vmatpush1.bf16.msra.mxu0 %v10232
    %11128 = vmatprep.subr.bf16.mxu0 0
    %11129 = vmatpush1.bf16.msra.mxu0 %v10235
    %11130 = vmatprep.subr.bf16.mxu0 0
    %11131 = vmatpush1.bf16.msra.mxu0 %v10238
    %11132 = vmatprep.subr.bf16.mxu0 0
    %11133 = vmatpush1.bf16.msra.mxu0 %v10241
    %11134 = vmatprep.subr.bf16.mxu0 0
    %11135 = vmatpush1.bf16.msra.mxu0 %v10244
    %11136 = vmatprep.subr.bf16.mxu0 0
    %11137 = vmatpush1.bf16.msra.mxu0 %v10247
    %11138 = vmatprep.subr.bf16.mxu0 0
    %11139 = vmatpush1.bf16.msra.mxu0 %v10250
    %11140 = vmatprep.subr.bf16.mxu0 0
    %11141 = vmatpush1.bf16.msra.mxu0 %v10253
    %11142 = vmatprep.subr.bf16.mxu0 0
    %11143 = vmatpush1.bf16.msra.mxu0 %v10256
    %11144 = vmatprep.subr.bf16.mxu0 0
    %11145 = vmatpush1.bf16.msra.mxu0 %v10259
    %11146 = vmatprep.subr.bf16.mxu0 0
    %11147 = vmatpush1.bf16.msra.mxu0 %v10262
    %11148 = vmatprep.subr.bf16.mxu0 0
    %11149 = vmatpush1.bf16.msra.mxu0 %v10265
    %11150 = vmatprep.subr.bf16.mxu0 0
    %11151 = vmatpush1.bf16.msra.mxu0 %v10268
    %11152 = vmatprep.mubr.bf16.mxu0 %v8607
    %11153 = vmatmul.mubr.bf16.gmra.mrb[0].mxu0 %v8606
    %v11154 = vpop.f32.mrb[0].mxu0
    %v11155 = vadd.f32 %v11106, %v11154
    %v11156 = vpop.f32.mrb[0].mxu0
    %v11157 = vpop.f32.mrb[0].mxu0
    %v11158 = vadd.f32 %v11109, %v11157
    %v11159 = vpop.f32.mrb[0].mxu0
    %11160 = vmatprep.mubr.bf16.mxu0 %v8619
    %11161 = vmatmul.mubr.bf16.gmra.mrb[0].mxu0 %v8618
    %v11162 = vpop.f32.mrb[0].mxu0
    %v11163 = vadd.f32 %v11114, %v11162
    %v11164 = vpop.f32.mrb[0].mxu0
    %v11165 = vpop.f32.mrb[0].mxu0
    %v11166 = vadd.f32 %v11117, %v11165
    %v11167 = vpop.f32.mrb[0].mxu0
    %11168 = vdwg.mxu0
    %v11169 = vadd.f32 %v5960, %v10857
    %v11170 = vadd.f32 %v5961, %v10859
    %v11171 = vadd.f32 %v5962, %v11155
    %v11172 = vadd.f32 %v5963, %v10861
    %v11173 = vadd.f32 %v5964, %v10863
    %v11174 = vadd.f32 %v5965, %v11158
    %v11175 = vadd.f32 %v5966, %v10867
    %v11176 = vadd.f32 %v5967, %v10869
    %v11177 = vadd.f32 %v5968, %v11163
    %v11178 = vadd.f32 %v5969, %v10871
    %v11179 = vadd.f32 %v5970, %v10873
    %v11180 = vadd.f32 %v5971, %v11166
    %11181 = vst [vmem:[#allocation24] sm:$0xff] %v11169
    %11182 = vst [vmem:[#allocation24 + $0x8] sm:$0xff] %v11170
    %11183 = vst [vmem:[#allocation24 + $0x10] sm:$0xff] %v11171
    %11184 = vst [vmem:[#allocation24 + $0x18] sm:$0xff] %v11172
    %11185 = vst [vmem:[#allocation24 + $0x20] sm:$0xff] %v11173
    %11186 = vst [vmem:[#allocation24 + $0x28] sm:$0xff] %v11174
    %11187 = vst [vmem:[#allocation24 + $0x30] sm:$0xff] %v11175
    %11188 = vst [vmem:[#allocation24 + $0x38] sm:$0xff] %v11176
    %11189 = vst [vmem:[#allocation24 + $0x40] sm:$0xff] %v11177
    %11190 = vst [vmem:[#allocation24 + $0x48] sm:$0xff] %v11178
    %11191 = vst [vmem:[#allocation24 + $0x50] sm:$0xff] %v11179
    %11192 = vst [vmem:[#allocation24 + $0x58] sm:$0xff] %v11180
    // Predicated region
    $region98: #{tpu_custom_call.1} parent=1 // pred_check
      _
    $region99: #{tpu_custom_call.1} parent=1 // pred_check_branch
      %11194 = sbr.rel (0) target = $region101
    $region100: #{tpu_custom_call.1} parent=1 // pred_region
      %s11196 = ssub.s32 1536, 1536
      %11197 = vsyncadd [#allocation6], %s11196
      %s11198 = sshll.u32 [#allocation24], 4
      %s11199 = int_to_ptr.vmem [resolvable:$true] %s11198
      %11204 = dma.vmem_to_hbm [thread:$0]  %s11199, 1536, %s12, [#allocation6], 384, 384, 24
    $region101: #{tpu_custom_call.1} parent=1 // pred_fallthru
      _
    // Predicated region
    $region102: #{tpu_custom_call.1} parent=1 // pred_check
      _
    $region103: #{tpu_custom_call.1} parent=1 // pred_check_branch
      %11206 = sbr.rel (0) target = $region105
    $region104: #{tpu_custom_call.1} parent=1 // pred_region
      %11207 = dma.done [#allocation6], 1536
    $region105: #{tpu_custom_call.1} parent=1 // pred_fallthru
      _
    %11208 = vsyncpa [#allocation5], 1
    %11209 = vsyncpa [#allocation8], 1
    %11210 = vsyncpa [#allocation11], 1
    %11211 = vsyncpa [#allocation14], 1
    %11212 = vsyncpa [#allocation17], 1
    %11213 = vsyncpa [#allocation20], 1
    %11214 = vsyncpa [#allocation23], 1
    %11215 = vsyncpa [#allocation6], 1

</llo_original>
